<compile_context>
chip_gen: v7x
topology: tpu7x:2x2x1
jax: 0.10.0
libtpu: 0.0.40
codegen_flags: <defaults>
</compile_context>

<pallas_src>
import numpy as np
import jax
import jax.numpy as jnp
from jax import lax
from jax.experimental import pallas as pl
from jax.experimental.pallas import tpu as pltpu


# --------------------------------------------------------------------------
# Fused kernel: conv1/bn1/relu -> conv2/bn2/relu -> conv3/bn3
#               + (1x1 conv + bn) residual -> add -> LeakyReLU(0.1) -> 2x2 max-pool
# One grid step per batch image.  Channels are padded to Cp (multiple of 128).
# --------------------------------------------------------------------------
def _block_kernel(x_ref, w1_ref, w2_ref, w3_ref, wres_ref, scale_ref, bias_ref,
                  y_ref, xpad, col):
    H, W, Cp = x_ref.shape
    HW = H * W
    Ho, Wo = H // 2, W // 2

    # H-halo rows of the padded-activation scratch.  Only 2*(W,Cp) rows; re-zero
    # every step (cheap, and safe under megacore sharding of the batch axis).
    xpad[0:1, :, :] = jnp.zeros((1, W, Cp), xpad.dtype)
    xpad[H + 1:H + 2, :, :] = jnp.zeros((1, W, Cp), xpad.dtype)

    scales = scale_ref[...]          # (4, Cp): bn1, bn2, bn3, res_bn (folded eval BN)
    biases = bias_ref[...]

    def bn(v, i):
        return v * scales[i:i + 1, :] + biases[i:i + 1, :]

    def lrelu(v):
        return jnp.where(v >= 0, v, 0.1 * v)

    # Hoisted once (reused by all three convs): W-edge masks for the rolled
    # (x-1) / (x+1) taps.
    wcol = lax.broadcasted_iota(jnp.int32, (W, Cp), 0)
    mask_l = (wcol >= 1)             # valid where x-1 exists
    mask_r = (wcol <= W - 2)         # valid where x+1 exists

    def conv3x3(w_ref):
        # Build the im2col matrix (HW, 9*Cp) from the H-padded activations,
        # then ONE MXU matmul with K = 9*Cp.
        xc = xpad[...]                                    # (H+2, W, Cp) f32
        flat = xc.reshape((H + 2) * W, Cp)
        # W-shifted taps via XLU roll on the flattened sublane axis; the rows
        # contaminated by the wrap-around land exactly in the masked columns.
        left = pltpu.roll(flat, 1, 0).reshape(H + 2, W, Cp)
        left = jnp.where(mask_l, left, 0.0)               # in(y, x-1)
        right = pltpu.roll(flat, (H + 2) * W - 1, 0).reshape(H + 2, W, Cp)
        right = jnp.where(mask_r, right, 0.0)             # in(y, x+1)
        taps = (left, xc, right)                          # kx = 0, 1, 2
        for ky in range(3):
            for kx in range(3):
                k = ky * 3 + kx
                # lane offset k*Cp is a multiple of 128 -> aligned store
                col[:, k * Cp:(k + 1) * Cp] = (
                    taps[kx][ky:ky + H].reshape(HW, Cp).astype(col.dtype))
        return jnp.dot(col[...], w_ref[...],
                       preferred_element_type=jnp.float32)

    # ---- main branch -------------------------------------------------------
    xpad[1:H + 1, :, :] = x_ref[...].astype(xpad.dtype)   # aligned interior write
    o = lrelu(bn(conv3x3(w1_ref), 0))
    xpad[1:H + 1, :, :] = o.reshape(H, W, Cp)
    o = lrelu(bn(conv3x3(w2_ref), 1))
    xpad[1:H + 1, :, :] = o.reshape(H, W, Cp)
    o = bn(conv3x3(w3_ref), 2)

    # ---- residual branch: 1x1 conv == channel matmul ------------------------
    r = bn(jnp.dot(x_ref[...].reshape(HW, Cp), wres_ref[...],
                   preferred_element_type=jnp.float32), 3)

    y = lrelu(o + r)                                       # (HW, Cp) f32

    # ---- fused 2x2 max-pool --------------------------------------------------
    y4 = y.reshape(Ho, 2, W, Cp)                  # split H (W % 8 == 0 -> aligned)
    yh = jnp.maximum(y4[:, 0], y4[:, 1])          # pool over H   (Ho, W, Cp)
    yh2 = yh.reshape(Ho, Wo, 2 * Cp)              # adjacent W pairs -> lane halves
    yp = jnp.maximum(yh2[:, :, :Cp], yh2[:, :, Cp:])       # pool over W
    y_ref[...] = yp.astype(y_ref.dtype)           # lane-dense (Ho, Wo, Cp) store


# --------------------------------------------------------------------------
# Wrapper: layout plumbing (NCHW<->NHWC, channel padding, weight packing)
# --------------------------------------------------------------------------
def _round_up(v, m):
    return (v + m - 1) // m * m


def block_forward(x_nchw, w1, w2, w3, wres, scales, biases):
    N, Cin, H, W = x_nchw.shape
    P = w1.shape[-1]
    assert H % 2 == 0 and W % 8 == 0, "kernel assumes even H and W % 8 == 0"
    Ho, Wo = H // 2, W // 2
    Cp = _round_up(max(Cin, P), 128)              # lane-dense channel count

    # NCHW -> NHWC, zero-pad channels to Cp, bf16 for HBM traffic / MXU inputs.
    x = jnp.transpose(x_nchw, (0, 2, 3, 1))
    x = jnp.pad(x, ((0, 0), (0, 0), (0, 0), (0, Cp - Cin))).astype(jnp.bfloat16)

    def pack3x3(w):
        # HWIO (3,3,cin,P) -> (9*Cp, Cp) with K index = (ky*3+kx)*Cp + cin.
        cin = w.shape[2]
        wp = jnp.zeros((3, 3, Cp, Cp), jnp.float32).at[:, :, :cin, :P].set(w)
        return wp.reshape(9 * Cp, Cp).astype(jnp.bfloat16)

    w1m, w2m, w3m = pack3x3(w1), pack3x3(w2), pack3x3(w3)
    wrm = (jnp.zeros((Cp, Cp), jnp.float32)
           .at[:Cin, :P].set(wres.reshape(Cin, P)).astype(jnp.bfloat16))
    sc = jnp.zeros((4, Cp), jnp.float32).at[:, :P].set(scales)
    bi = jnp.zeros((4, Cp), jnp.float32).at[:, :P].set(biases)

    flops = N * (3 * 2 * H * W * 9 * Cp * Cp + 2 * H * W * Cp * Cp)
    bytes_accessed = (x.size * 2 + 3 * w1m.size * 2 + wrm.size * 2
                      + (sc.size + bi.size) * 4 + N * Ho * Wo * Cp * 4)

    pooled = pl.pallas_call(
        _block_kernel,
        out_shape=jax.ShapeDtypeStruct((N, Ho, Wo, Cp), jnp.float32),
        grid=(N,),
        in_specs=[
            pl.BlockSpec((None, H, W, Cp), lambda n: (n, 0, 0, 0)),
            pl.BlockSpec((9 * Cp, Cp), lambda n: (0, 0)),
            pl.BlockSpec((9 * Cp, Cp), lambda n: (0, 0)),
            pl.BlockSpec((9 * Cp, Cp), lambda n: (0, 0)),
            pl.BlockSpec((Cp, Cp), lambda n: (0, 0)),
            pl.BlockSpec((4, Cp), lambda n: (0, 0)),
            pl.BlockSpec((4, Cp), lambda n: (0, 0)),
        ],
        out_specs=pl.BlockSpec((None, Ho, Wo, Cp), lambda n: (n, 0, 0, 0)),
        scratch_shapes=[
            pltpu.VMEM((H + 2, W, Cp), jnp.float32),      # H-padded activations
            pltpu.VMEM((H * W, 9 * Cp), jnp.bfloat16),    # im2col buffer
        ],
        compiler_params=pltpu.CompilerParams(
            dimension_semantics=("parallel",),
            vmem_limit_bytes=32 * 1024 * 1024),           # fits v7x 64 MiB budget
        cost_estimate=pl.CostEstimate(flops=flops, transcendentals=0,
                                      bytes_accessed=bytes_accessed),
    )(x, w1m, w2m, w3m, wrm, sc, bi)

    # Drop channel padding, NHWC -> NCHW.
    return jnp.transpose(pooled[:, :, :, :P], (0, 3, 1, 2))


# --------------------------------------------------------------------------
# Deterministic parameter init (shapes from Block.__init__) + folded eval BN
# --------------------------------------------------------------------------
def init_params(key, in_planes, planes):
    ks = jax.random.split(key, 8)

    def conv_w(k, kh, kw, cin, cout):        # HWIO
        fan_in = kh * kw * cin
        return jax.random.normal(k, (kh, kw, cin, cout), jnp.float32) / np.sqrt(fan_in)

    w1 = conv_w(ks[0], 3, 3, in_planes, planes)
    w2 = conv_w(ks[1], 3, 3, planes, planes)
    w3 = conv_w(ks[2], 3, 3, planes, planes)
    wres = conv_w(ks[3], 1, 1, in_planes, planes)

    eps = 1e-5

    def bn_fold(k):
        kg, kb, km, kv = jax.random.split(k, 4)
        gamma = 1.0 + 0.1 * jax.random.normal(kg, (planes,), jnp.float32)
        beta = 0.1 * jax.random.normal(kb, (planes,), jnp.float32)
        mean = 0.1 * jax.random.normal(km, (planes,), jnp.float32)
        var = jax.random.uniform(kv, (planes,), jnp.float32, minval=0.5, maxval=1.5)
        scale = gamma / jnp.sqrt(var + eps)
        bias = beta - mean * scale
        return scale, bias

    folded = [bn_fold(ks[4 + i]) for i in range(4)]   # bn1, bn2, bn3, res_bn
    scales = jnp.stack([f[0] for f in folded])
    biases = jnp.stack([f[1] for f in folded])
    return w1, w2, w3, wres, scales, biases


# --------------------------------------------------------------------------
# Pure-JAX reference (mirrors the PyTorch forward; conv inputs rounded to bf16
# to match the kernel's bf16-MXU / f32-accumulation precision)
# --------------------------------------------------------------------------
def block_ref(x, w1, w2, w3, wres, scales, biases):
    bf = jnp.bfloat16

    def conv(v, w, pad):
        return lax.conv_general_dilated(
            v.astype(bf), w.astype(bf), window_strides=(1, 1),
            padding=((pad, pad), (pad, pad)),
            dimension_numbers=('NCHW', 'HWIO', 'NCHW'),
            preferred_element_type=jnp.float32)

    def bn(v, i):
        return v * scales[i][None, :, None, None] + biases[i][None, :, None, None]

    def lrelu(v):
        return jnp.where(v >= 0, v, 0.1 * v)

    o = lrelu(bn(conv(x, w1, 1), 0))
    o = lrelu(bn(conv(o, w2, 1), 1))
    o = bn(conv(o, w3, 1), 2)
    r = bn(conv(x, wres, 0), 3)
    y = lrelu(o + r)
    N, C, H, W = y.shape
    return y.reshape(N, C, H // 2, 2, W // 2, 2).max(axis=(3, 5))


if __name__ == "__main__":
    key = jax.random.PRNGKey(0)
    kx, kp = jax.random.split(key)

    N, Cin, P, H, W = 2, 4, 8, 16, 16
    x = jax.random.normal(kx, (N, Cin, H, W), jnp.float32)
    params = init_params(kp, Cin, P)

    out = jax.jit(block_forward)(x, *params)
    out = jax.block_until_ready(out)

    ref = block_ref(x, *params)
    assert out.shape == (N, P, H // 2, W // 2), out.shape
    np.testing.assert_allclose(np.asarray(out, dtype=np.float32),
                               np.asarray(ref, dtype=np.float32),
                               rtol=1e-2, atol=1e-2)

    print("KERNEL_OK")
</pallas_src>

<mosaic_0001>
module attributes {stable_mosaic.version = 11 : i64} {
  func.func @_block_kernel(%arg0: i32, %arg1: memref<1x16x16x128xbf16, #tpu.memory_space<vmem>>, %arg2: memref<1152x128xbf16, #tpu.memory_space<vmem>>, %arg3: memref<1152x128xbf16, #tpu.memory_space<vmem>>, %arg4: memref<1152x128xbf16, #tpu.memory_space<vmem>>, %arg5: memref<128x128xbf16, #tpu.memory_space<vmem>>, %arg6: memref<4x128xf32, #tpu.memory_space<vmem>>, %arg7: memref<4x128xf32, #tpu.memory_space<vmem>>, %arg8: memref<1x8x8x128xf32, #tpu.memory_space<vmem>>, %arg9: memref<18x16x128xf32, #tpu.memory_space<vmem>>, %arg10: memref<256x1152xbf16, #tpu.memory_space<vmem>>) attributes {dimension_semantics = [#tpu.dimension_semantics<parallel>], iteration_bounds = array<i64: 2>, scalar_prefetch = 0 : i64, scratch_operands = 2 : i64, tpu.core_type = #tpu.core_type<tc>, window_params = [{transform_indices = @transform_0, window_bounds = array<i64: 1, 16, 16, 128>}, {pipeline_mode = #tpu.pipeline_mode<synchronous>, transform_indices = @transform_1, window_bounds = array<i64: 1152, 128>}, {pipeline_mode = #tpu.pipeline_mode<synchronous>, transform_indices = @transform_2, window_bounds = array<i64: 1152, 128>}, {pipeline_mode = #tpu.pipeline_mode<synchronous>, transform_indices = @transform_3, window_bounds = array<i64: 1152, 128>}, {pipeline_mode = #tpu.pipeline_mode<synchronous>, transform_indices = @transform_4, window_bounds = array<i64: 128, 128>}, {pipeline_mode = #tpu.pipeline_mode<synchronous>, transform_indices = @transform_5, window_bounds = array<i64: 4, 128>}, {pipeline_mode = #tpu.pipeline_mode<synchronous>, transform_indices = @transform_6, window_bounds = array<i64: 4, 128>}, {transform_indices = @transform_7, window_bounds = array<i64: 1, 8, 8, 128>}]} {
    %cst = arith.constant 0.000000e+00 : f32
    %0 = vector.broadcast %cst : f32 to vector<1x16x128xf32>
    %c0 = arith.constant 0 : index
    %c0_0 = arith.constant 0 : index
    %c0_1 = arith.constant 0 : index
    %1 = vector.load %arg9[%c0, %c0_0, %c0_1] : memref<18x16x128xf32, #tpu.memory_space<vmem>>, vector<1x16x128xf32>
    tpu.vector_store %arg9[%c0, %c0_0, %c0_1], %0 {strides = array<i32>} : memref<18x16x128xf32, #tpu.memory_space<vmem>>, vector<1x16x128xf32>,
    %cst_2 = arith.constant 0.000000e+00 : f32
    %2 = vector.broadcast %cst_2 : f32 to vector<1x16x128xf32>
    %c17 = arith.constant 17 : index
    %c0_3 = arith.constant 0 : index
    %c0_4 = arith.constant 0 : index
    %3 = vector.load %arg9[%c17, %c0_3, %c0_4] : memref<18x16x128xf32, #tpu.memory_space<vmem>>, vector<1x16x128xf32>
    tpu.vector_store %arg9[%c17, %c0_3, %c0_4], %2 {strides = array<i32>} : memref<18x16x128xf32, #tpu.memory_space<vmem>>, vector<1x16x128xf32>,
    %c0_5 = arith.constant 0 : index
    %c0_6 = arith.constant 0 : index
    %4 = vector.load %arg6[%c0_5, %c0_6] : memref<4x128xf32, #tpu.memory_space<vmem>>, vector<4x128xf32>
    %c0_7 = arith.constant 0 : index
    %c0_8 = arith.constant 0 : index
    %5 = vector.load %arg7[%c0_7, %c0_8] : memref<4x128xf32, #tpu.memory_space<vmem>>, vector<4x128xf32>
    %6 = tpu.iota {dimensions = array<i32: 0>} : vector<16x128xi32>
    %c1_i32 = arith.constant 1 : i32
    %7 = vector.broadcast %c1_i32 : i32 to vector<16x128xi32>
    %8 = arith.cmpi sge, %6, %7 : vector<16x128xi32>
    %c14_i32 = arith.constant 14 : i32
    %9 = vector.broadcast %c14_i32 : i32 to vector<16x128xi32>
    %10 = arith.cmpi sle, %6, %9 : vector<16x128xi32>
    %c0_9 = arith.constant 0 : index
    %c0_10 = arith.constant 0 : index
    %c0_11 = arith.constant 0 : index
    %c0_12 = arith.constant 0 : index
    %11 = vector.load %arg1[%c0_9, %c0_10, %c0_11, %c0_12] : memref<1x16x16x128xbf16, #tpu.memory_space<vmem>>, vector<1x16x16x128xbf16>
    %12 = vector.shape_cast %11 : vector<1x16x16x128xbf16> to vector<16x16x128xbf16>
    %13 = arith.extf %12 : vector<16x16x128xbf16> to vector<16x16x128xf32>
    %c1 = arith.constant 1 : index
    %c0_13 = arith.constant 0 : index
    %c0_14 = arith.constant 0 : index
    %14 = vector.load %arg9[%c1, %c0_13, %c0_14] : memref<18x16x128xf32, #tpu.memory_space<vmem>>, vector<16x16x128xf32>
    tpu.vector_store %arg9[%c1, %c0_13, %c0_14], %13 {strides = array<i32>} : memref<18x16x128xf32, #tpu.memory_space<vmem>>, vector<16x16x128xf32>,
    %c0_15 = arith.constant 0 : index
    %c0_16 = arith.constant 0 : index
    %c0_17 = arith.constant 0 : index
    %15 = vector.load %arg9[%c0_15, %c0_16, %c0_17] : memref<18x16x128xf32, #tpu.memory_space<vmem>>, vector<18x16x128xf32>
    %16 = vector.shape_cast %15 : vector<18x16x128xf32> to vector<288x128xf32>
    %c1_i32_18 = arith.constant 1 : i32
    %17 = tpu.dynamic_rotate %16 by %c1_i32_18 dim 0 : vector<288x128xf32>, i32 -> vector<288x128xf32>
    %18 = vector.shape_cast %17 : vector<288x128xf32> to vector<18x16x128xf32>
    %cst_19 = arith.constant 0.000000e+00 : f32
    %19 = vector.shape_cast %8 : vector<16x128xi1> to vector<1x16x128xi1>
    %20 = vector.broadcast %19 : vector<1x16x128xi1> to vector<18x16x128xi1>
    %21 = vector.broadcast %cst_19 : f32 to vector<18x16x128xf32>
    %22 = arith.select %20, %18, %21 : vector<18x16x128xi1>, vector<18x16x128xf32>
    %c287_i32 = arith.constant 287 : i32
    %23 = tpu.dynamic_rotate %16 by %c287_i32 dim 0 : vector<288x128xf32>, i32 -> vector<288x128xf32>
    %24 = vector.shape_cast %23 : vector<288x128xf32> to vector<18x16x128xf32>
    %cst_20 = arith.constant 0.000000e+00 : f32
    %25 = vector.shape_cast %10 : vector<16x128xi1> to vector<1x16x128xi1>
    %26 = vector.broadcast %25 : vector<1x16x128xi1> to vector<18x16x128xi1>
    %27 = vector.broadcast %cst_20 : f32 to vector<18x16x128xf32>
    %28 = arith.select %26, %24, %27 : vector<18x16x128xi1>, vector<18x16x128xf32>
    %29 = vector.extract_strided_slice %22 {offsets = [0, 0, 0], sizes = [16, 16, 128], strides = [1, 1, 1]} : vector<18x16x128xf32> to vector<16x16x128xf32>
    %30 = vector.shape_cast %29 : vector<16x16x128xf32> to vector<256x128xf32>
    %31 = arith.truncf %30 : vector<256x128xf32> to vector<256x128xbf16>
    %c0_21 = arith.constant 0 : index
    %c0_22 = arith.constant 0 : index
    %32 = vector.load %arg10[%c0_21, %c0_22] : memref<256x1152xbf16, #tpu.memory_space<vmem>>, vector<256x128xbf16>
    tpu.vector_store %arg10[%c0_21, %c0_22], %31 {strides = array<i32>} : memref<256x1152xbf16, #tpu.memory_space<vmem>>, vector<256x128xbf16>,
    %33 = vector.extract_strided_slice %15 {offsets = [0, 0, 0], sizes = [16, 16, 128], strides = [1, 1, 1]} : vector<18x16x128xf32> to vector<16x16x128xf32>
    %34 = vector.shape_cast %33 : vector<16x16x128xf32> to vector<256x128xf32>
    %35 = arith.truncf %34 : vector<256x128xf32> to vector<256x128xbf16>
    %c0_23 = arith.constant 0 : index
    %c128 = arith.constant 128 : index
    %36 = vector.load %arg10[%c0_23, %c128] : memref<256x1152xbf16, #tpu.memory_space<vmem>>, vector<256x128xbf16>
    tpu.vector_store %arg10[%c0_23, %c128], %35 {strides = array<i32>} : memref<256x1152xbf16, #tpu.memory_space<vmem>>, vector<256x128xbf16>,
    %37 = vector.extract_strided_slice %28 {offsets = [0, 0, 0], sizes = [16, 16, 128], strides = [1, 1, 1]} : vector<18x16x128xf32> to vector<16x16x128xf32>
    %38 = vector.shape_cast %37 : vector<16x16x128xf32> to vector<256x128xf32>
    %39 = arith.truncf %38 : vector<256x128xf32> to vector<256x128xbf16>
    %c0_24 = arith.constant 0 : index
    %c256 = arith.constant 256 : index
    %40 = vector.load %arg10[%c0_24, %c256] : memref<256x1152xbf16, #tpu.memory_space<vmem>>, vector<256x128xbf16>
    tpu.vector_store %arg10[%c0_24, %c256], %39 {strides = array<i32>} : memref<256x1152xbf16, #tpu.memory_space<vmem>>, vector<256x128xbf16>,
    %41 = vector.extract_strided_slice %22 {offsets = [1, 0, 0], sizes = [16, 16, 128], strides = [1, 1, 1]} : vector<18x16x128xf32> to vector<16x16x128xf32>
    %42 = vector.shape_cast %41 : vector<16x16x128xf32> to vector<256x128xf32>
    %43 = arith.truncf %42 : vector<256x128xf32> to vector<256x128xbf16>
    %c0_25 = arith.constant 0 : index
    %c384 = arith.constant 384 : index
    %44 = vector.load %arg10[%c0_25, %c384] : memref<256x1152xbf16, #tpu.memory_space<vmem>>, vector<256x128xbf16>
    tpu.vector_store %arg10[%c0_25, %c384], %43 {strides = array<i32>} : memref<256x1152xbf16, #tpu.memory_space<vmem>>, vector<256x128xbf16>,
    %45 = vector.extract_strided_slice %15 {offsets = [1, 0, 0], sizes = [16, 16, 128], strides = [1, 1, 1]} : vector<18x16x128xf32> to vector<16x16x128xf32>
    %46 = vector.shape_cast %45 : vector<16x16x128xf32> to vector<256x128xf32>
    %47 = arith.truncf %46 : vector<256x128xf32> to vector<256x128xbf16>
    %c0_26 = arith.constant 0 : index
    %c512 = arith.constant 512 : index
    %48 = vector.load %arg10[%c0_26, %c512] : memref<256x1152xbf16, #tpu.memory_space<vmem>>, vector<256x128xbf16>
    tpu.vector_store %arg10[%c0_26, %c512], %47 {strides = array<i32>} : memref<256x1152xbf16, #tpu.memory_space<vmem>>, vector<256x128xbf16>,
    %49 = vector.extract_strided_slice %28 {offsets = [1, 0, 0], sizes = [16, 16, 128], strides = [1, 1, 1]} : vector<18x16x128xf32> to vector<16x16x128xf32>
    %50 = vector.shape_cast %49 : vector<16x16x128xf32> to vector<256x128xf32>
    %51 = arith.truncf %50 : vector<256x128xf32> to vector<256x128xbf16>
    %c0_27 = arith.constant 0 : index
    %c640 = arith.constant 640 : index
    %52 = vector.load %arg10[%c0_27, %c640] : memref<256x1152xbf16, #tpu.memory_space<vmem>>, vector<256x128xbf16>
    tpu.vector_store %arg10[%c0_27, %c640], %51 {strides = array<i32>} : memref<256x1152xbf16, #tpu.memory_space<vmem>>, vector<256x128xbf16>,
    %53 = vector.extract_strided_slice %22 {offsets = [2, 0, 0], sizes = [16, 16, 128], strides = [1, 1, 1]} : vector<18x16x128xf32> to vector<16x16x128xf32>
    %54 = vector.shape_cast %53 : vector<16x16x128xf32> to vector<256x128xf32>
    %55 = arith.truncf %54 : vector<256x128xf32> to vector<256x128xbf16>
    %c0_28 = arith.constant 0 : index
    %c768 = arith.constant 768 : index
    %56 = vector.load %arg10[%c0_28, %c768] : memref<256x1152xbf16, #tpu.memory_space<vmem>>, vector<256x128xbf16>
    tpu.vector_store %arg10[%c0_28, %c768], %55 {strides = array<i32>} : memref<256x1152xbf16, #tpu.memory_space<vmem>>, vector<256x128xbf16>,
    %57 = vector.extract_strided_slice %15 {offsets = [2, 0, 0], sizes = [16, 16, 128], strides = [1, 1, 1]} : vector<18x16x128xf32> to vector<16x16x128xf32>
    %58 = vector.shape_cast %57 : vector<16x16x128xf32> to vector<256x128xf32>
    %59 = arith.truncf %58 : vector<256x128xf32> to vector<256x128xbf16>
    %c0_29 = arith.constant 0 : index
    %c896 = arith.constant 896 : index
    %60 = vector.load %arg10[%c0_29, %c896] : memref<256x1152xbf16, #tpu.memory_space<vmem>>, vector<256x128xbf16>
    tpu.vector_store %arg10[%c0_29, %c896], %59 {strides = array<i32>} : memref<256x1152xbf16, #tpu.memory_space<vmem>>, vector<256x128xbf16>,
    %61 = vector.extract_strided_slice %28 {offsets = [2, 0, 0], sizes = [16, 16, 128], strides = [1, 1, 1]} : vector<18x16x128xf32> to vector<16x16x128xf32>
    %62 = vector.shape_cast %61 : vector<16x16x128xf32> to vector<256x128xf32>
    %63 = arith.truncf %62 : vector<256x128xf32> to vector<256x128xbf16>
    %c0_30 = arith.constant 0 : index
    %c1024 = arith.constant 1024 : index
    %64 = vector.load %arg10[%c0_30, %c1024] : memref<256x1152xbf16, #tpu.memory_space<vmem>>, vector<256x128xbf16>
    tpu.vector_store %arg10[%c0_30, %c1024], %63 {strides = array<i32>} : memref<256x1152xbf16, #tpu.memory_space<vmem>>, vector<256x128xbf16>,
    %c0_31 = arith.constant 0 : index
    %c0_32 = arith.constant 0 : index
    %65 = vector.load %arg10[%c0_31, %c0_32] : memref<256x1152xbf16, #tpu.memory_space<vmem>>, vector<256x1152xbf16>
    %c0_33 = arith.constant 0 : index
    %c0_34 = arith.constant 0 : index
    %66 = vector.load %arg2[%c0_33, %c0_34] : memref<1152x128xbf16, #tpu.memory_space<vmem>>, vector<1152x128xbf16>
    %cst_35 = arith.constant dense<0.000000e+00> : vector<256x128xf32>
    %67 = tpu.matmul %65, %66, %cst_35 {dimension_numbers = #tpu.dot_dimension_numbers<[1], [0], [0], [1], [0, 0, 1, 1], [], []>} : vector<256x1152xbf16>, vector<1152x128xbf16>, vector<256x128xf32> -> vector<256x128xf32>
    %68 = vector.extract_strided_slice %4 {offsets = [0, 0], sizes = [1, 128], strides = [1, 1]} : vector<4x128xf32> to vector<1x128xf32>
    %69 = vector.broadcast %68 : vector<1x128xf32> to vector<256x128xf32>
    %70 = arith.mulf %67, %69 : vector<256x128xf32>
    %71 = vector.extract_strided_slice %5 {offsets = [0, 0], sizes = [1, 128], strides = [1, 1]} : vector<4x128xf32> to vector<1x128xf32>
    %72 = vector.broadcast %71 : vector<1x128xf32> to vector<256x128xf32>
    %73 = arith.addf %70, %72 : vector<256x128xf32>
    %cst_36 = arith.constant 0.000000e+00 : f32
    %74 = vector.broadcast %cst_36 : f32 to vector<256x128xf32>
    %75 = arith.cmpf oge, %73, %74 : vector<256x128xf32>
    %cst_37 = arith.constant 1.000000e-01 : f32
    %76 = vector.broadcast %cst_37 : f32 to vector<256x128xf32>
    %77 = arith.mulf %76, %73 : vector<256x128xf32>
    %78 = arith.select %75, %73, %77 : vector<256x128xi1>, vector<256x128xf32>
    %79 = vector.shape_cast %78 : vector<256x128xf32> to vector<16x16x128xf32>
    %c1_38 = arith.constant 1 : index
    %c0_39 = arith.constant 0 : index
    %c0_40 = arith.constant 0 : index
    %80 = vector.load %arg9[%c1_38, %c0_39, %c0_40] : memref<18x16x128xf32, #tpu.memory_space<vmem>>, vector<16x16x128xf32>
    tpu.vector_store %arg9[%c1_38, %c0_39, %c0_40], %79 {strides = array<i32>} : memref<18x16x128xf32, #tpu.memory_space<vmem>>, vector<16x16x128xf32>,
    %c0_41 = arith.constant 0 : index
    %c0_42 = arith.constant 0 : index
    %c0_43 = arith.constant 0 : index
    %81 = vector.load %arg9[%c0_41, %c0_42, %c0_43] : memref<18x16x128xf32, #tpu.memory_space<vmem>>, vector<18x16x128xf32>
    %82 = vector.shape_cast %81 : vector<18x16x128xf32> to vector<288x128xf32>
    %c1_i32_44 = arith.constant 1 : i32
    %83 = tpu.dynamic_rotate %82 by %c1_i32_44 dim 0 : vector<288x128xf32>, i32 -> vector<288x128xf32>
    %84 = vector.shape_cast %83 : vector<288x128xf32> to vector<18x16x128xf32>
    %cst_45 = arith.constant 0.000000e+00 : f32
    %85 = vector.shape_cast %8 : vector<16x128xi1> to vector<1x16x128xi1>
    %86 = vector.broadcast %85 : vector<1x16x128xi1> to vector<18x16x128xi1>
    %87 = vector.broadcast %cst_45 : f32 to vector<18x16x128xf32>
    %88 = arith.select %86, %84, %87 : vector<18x16x128xi1>, vector<18x16x128xf32>
    %c287_i32_46 = arith.constant 287 : i32
    %89 = tpu.dynamic_rotate %82 by %c287_i32_46 dim 0 : vector<288x128xf32>, i32 -> vector<288x128xf32>
    %90 = vector.shape_cast %89 : vector<288x128xf32> to vector<18x16x128xf32>
    %cst_47 = arith.constant 0.000000e+00 : f32
    %91 = vector.shape_cast %10 : vector<16x128xi1> to vector<1x16x128xi1>
    %92 = vector.broadcast %91 : vector<1x16x128xi1> to vector<18x16x128xi1>
    %93 = vector.broadcast %cst_47 : f32 to vector<18x16x128xf32>
    %94 = arith.select %92, %90, %93 : vector<18x16x128xi1>, vector<18x16x128xf32>
    %95 = vector.extract_strided_slice %88 {offsets = [0, 0, 0], sizes = [16, 16, 128], strides = [1, 1, 1]} : vector<18x16x128xf32> to vector<16x16x128xf32>
    %96 = vector.shape_cast %95 : vector<16x16x128xf32> to vector<256x128xf32>
    %97 = arith.truncf %96 : vector<256x128xf32> to vector<256x128xbf16>
    %c0_48 = arith.constant 0 : index
    %c0_49 = arith.constant 0 : index
    %98 = vector.load %arg10[%c0_48, %c0_49] : memref<256x1152xbf16, #tpu.memory_space<vmem>>, vector<256x128xbf16>
    tpu.vector_store %arg10[%c0_48, %c0_49], %97 {strides = array<i32>} : memref<256x1152xbf16, #tpu.memory_space<vmem>>, vector<256x128xbf16>,
    %99 = vector.extract_strided_slice %81 {offsets = [0, 0, 0], sizes = [16, 16, 128], strides = [1, 1, 1]} : vector<18x16x128xf32> to vector<16x16x128xf32>
    %100 = vector.shape_cast %99 : vector<16x16x128xf32> to vector<256x128xf32>
    %101 = arith.truncf %100 : vector<256x128xf32> to vector<256x128xbf16>
    %c0_50 = arith.constant 0 : index
    %c128_51 = arith.constant 128 : index
    %102 = vector.load %arg10[%c0_50, %c128_51] : memref<256x1152xbf16, #tpu.memory_space<vmem>>, vector<256x128xbf16>
    tpu.vector_store %arg10[%c0_50, %c128_51], %101 {strides = array<i32>} : memref<256x1152xbf16, #tpu.memory_space<vmem>>, vector<256x128xbf16>,
    %103 = vector.extract_strided_slice %94 {offsets = [0, 0, 0], sizes = [16, 16, 128], strides = [1, 1, 1]} : vector<18x16x128xf32> to vector<16x16x128xf32>
    %104 = vector.shape_cast %103 : vector<16x16x128xf32> to vector<256x128xf32>
    %105 = arith.truncf %104 : vector<256x128xf32> to vector<256x128xbf16>
    %c0_52 = arith.constant 0 : index
    %c256_53 = arith.constant 256 : index
    %106 = vector.load %arg10[%c0_52, %c256_53] : memref<256x1152xbf16, #tpu.memory_space<vmem>>, vector<256x128xbf16>
    tpu.vector_store %arg10[%c0_52, %c256_53], %105 {strides = array<i32>} : memref<256x1152xbf16, #tpu.memory_space<vmem>>, vector<256x128xbf16>,
    %107 = vector.extract_strided_slice %88 {offsets = [1, 0, 0], sizes = [16, 16, 128], strides = [1, 1, 1]} : vector<18x16x128xf32> to vector<16x16x128xf32>
    %108 = vector.shape_cast %107 : vector<16x16x128xf32> to vector<256x128xf32>
    %109 = arith.truncf %108 : vector<256x128xf32> to vector<256x128xbf16>
    %c0_54 = arith.constant 0 : index
    %c384_55 = arith.constant 384 : index
    %110 = vector.load %arg10[%c0_54, %c384_55] : memref<256x1152xbf16, #tpu.memory_space<vmem>>, vector<256x128xbf16>
    tpu.vector_store %arg10[%c0_54, %c384_55], %109 {strides = array<i32>} : memref<256x1152xbf16, #tpu.memory_space<vmem>>, vector<256x128xbf16>,
    %111 = vector.extract_strided_slice %81 {offsets = [1, 0, 0], sizes = [16, 16, 128], strides = [1, 1, 1]} : vector<18x16x128xf32> to vector<16x16x128xf32>
    %112 = vector.shape_cast %111 : vector<16x16x128xf32> to vector<256x128xf32>
    %113 = arith.truncf %112 : vector<256x128xf32> to vector<256x128xbf16>
    %c0_56 = arith.constant 0 : index
    %c512_57 = arith.constant 512 : index
    %114 = vector.load %arg10[%c0_56, %c512_57] : memref<256x1152xbf16, #tpu.memory_space<vmem>>, vector<256x128xbf16>
    tpu.vector_store %arg10[%c0_56, %c512_57], %113 {strides = array<i32>} : memref<256x1152xbf16, #tpu.memory_space<vmem>>, vector<256x128xbf16>,
    %115 = vector.extract_strided_slice %94 {offsets = [1, 0, 0], sizes = [16, 16, 128], strides = [1, 1, 1]} : vector<18x16x128xf32> to vector<16x16x128xf32>
    %116 = vector.shape_cast %115 : vector<16x16x128xf32> to vector<256x128xf32>
    %117 = arith.truncf %116 : vector<256x128xf32> to vector<256x128xbf16>
    %c0_58 = arith.constant 0 : index
    %c640_59 = arith.constant 640 : index
    %118 = vector.load %arg10[%c0_58, %c640_59] : memref<256x1152xbf16, #tpu.memory_space<vmem>>, vector<256x128xbf16>
    tpu.vector_store %arg10[%c0_58, %c640_59], %117 {strides = array<i32>} : memref<256x1152xbf16, #tpu.memory_space<vmem>>, vector<256x128xbf16>,
    %119 = vector.extract_strided_slice %88 {offsets = [2, 0, 0], sizes = [16, 16, 128], strides = [1, 1, 1]} : vector<18x16x128xf32> to vector<16x16x128xf32>
    %120 = vector.shape_cast %119 : vector<16x16x128xf32> to vector<256x128xf32>
    %121 = arith.truncf %120 : vector<256x128xf32> to vector<256x128xbf16>
    %c0_60 = arith.constant 0 : index
    %c768_61 = arith.constant 768 : index
    %122 = vector.load %arg10[%c0_60, %c768_61] : memref<256x1152xbf16, #tpu.memory_space<vmem>>, vector<256x128xbf16>
    tpu.vector_store %arg10[%c0_60, %c768_61], %121 {strides = array<i32>} : memref<256x1152xbf16, #tpu.memory_space<vmem>>, vector<256x128xbf16>,
    %123 = vector.extract_strided_slice %81 {offsets = [2, 0, 0], sizes = [16, 16, 128], strides = [1, 1, 1]} : vector<18x16x128xf32> to vector<16x16x128xf32>
    %124 = vector.shape_cast %123 : vector<16x16x128xf32> to vector<256x128xf32>
    %125 = arith.truncf %124 : vector<256x128xf32> to vector<256x128xbf16>
    %c0_62 = arith.constant 0 : index
    %c896_63 = arith.constant 896 : index
    %126 = vector.load %arg10[%c0_62, %c896_63] : memref<256x1152xbf16, #tpu.memory_space<vmem>>, vector<256x128xbf16>
    tpu.vector_store %arg10[%c0_62, %c896_63], %125 {strides = array<i32>} : memref<256x1152xbf16, #tpu.memory_space<vmem>>, vector<256x128xbf16>,
    %127 = vector.extract_strided_slice %94 {offsets = [2, 0, 0], sizes = [16, 16, 128], strides = [1, 1, 1]} : vector<18x16x128xf32> to vector<16x16x128xf32>
    %128 = vector.shape_cast %127 : vector<16x16x128xf32> to vector<256x128xf32>
    %129 = arith.truncf %128 : vector<256x128xf32> to vector<256x128xbf16>
    %c0_64 = arith.constant 0 : index
    %c1024_65 = arith.constant 1024 : index
    %130 = vector.load %arg10[%c0_64, %c1024_65] : memref<256x1152xbf16, #tpu.memory_space<vmem>>, vector<256x128xbf16>
    tpu.vector_store %arg10[%c0_64, %c1024_65], %129 {strides = array<i32>} : memref<256x1152xbf16, #tpu.memory_space<vmem>>, vector<256x128xbf16>,
    %c0_66 = arith.constant 0 : index
    %c0_67 = arith.constant 0 : index
    %131 = vector.load %arg10[%c0_66, %c0_67] : memref<256x1152xbf16, #tpu.memory_space<vmem>>, vector<256x1152xbf16>
    %c0_68 = arith.constant 0 : index
    %c0_69 = arith.constant 0 : index
    %132 = vector.load %arg3[%c0_68, %c0_69] : memref<1152x128xbf16, #tpu.memory_space<vmem>>, vector<1152x128xbf16>
    %cst_70 = arith.constant dense<0.000000e+00> : vector<256x128xf32>
    %133 = tpu.matmul %131, %132, %cst_70 {dimension_numbers = #tpu.dot_dimension_numbers<[1], [0], [0], [1], [0, 0, 1, 1], [], []>} : vector<256x1152xbf16>, vector<1152x128xbf16>, vector<256x128xf32> -> vector<256x128xf32>
    %134 = vector.extract_strided_slice %4 {offsets = [1, 0], sizes = [1, 128], strides = [1, 1]} : vector<4x128xf32> to vector<1x128xf32>
    %135 = vector.broadcast %134 : vector<1x128xf32> to vector<256x128xf32>
    %136 = arith.mulf %133, %135 : vector<256x128xf32>
    %137 = vector.extract_strided_slice %5 {offsets = [1, 0], sizes = [1, 128], strides = [1, 1]} : vector<4x128xf32> to vector<1x128xf32>
    %138 = vector.broadcast %137 : vector<1x128xf32> to vector<256x128xf32>
    %139 = arith.addf %136, %138 : vector<256x128xf32>
    %cst_71 = arith.constant 0.000000e+00 : f32
    %140 = vector.broadcast %cst_71 : f32 to vector<256x128xf32>
    %141 = arith.cmpf oge, %139, %140 : vector<256x128xf32>
    %cst_72 = arith.constant 1.000000e-01 : f32
    %142 = vector.broadcast %cst_72 : f32 to vector<256x128xf32>
    %143 = arith.mulf %142, %139 : vector<256x128xf32>
    %144 = arith.select %141, %139, %143 : vector<256x128xi1>, vector<256x128xf32>
    %145 = vector.shape_cast %144 : vector<256x128xf32> to vector<16x16x128xf32>
    %c1_73 = arith.constant 1 : index
    %c0_74 = arith.constant 0 : index
    %c0_75 = arith.constant 0 : index
    %146 = vector.load %arg9[%c1_73, %c0_74, %c0_75] : memref<18x16x128xf32, #tpu.memory_space<vmem>>, vector<16x16x128xf32>
    tpu.vector_store %arg9[%c1_73, %c0_74, %c0_75], %145 {strides = array<i32>} : memref<18x16x128xf32, #tpu.memory_space<vmem>>, vector<16x16x128xf32>,
    %c0_76 = arith.constant 0 : index
    %c0_77 = arith.constant 0 : index
    %c0_78 = arith.constant 0 : index
    %147 = vector.load %arg9[%c0_76, %c0_77, %c0_78] : memref<18x16x128xf32, #tpu.memory_space<vmem>>, vector<18x16x128xf32>
    %148 = vector.shape_cast %147 : vector<18x16x128xf32> to vector<288x128xf32>
    %c1_i32_79 = arith.constant 1 : i32
    %149 = tpu.dynamic_rotate %148 by %c1_i32_79 dim 0 : vector<288x128xf32>, i32 -> vector<288x128xf32>
    %150 = vector.shape_cast %149 : vector<288x128xf32> to vector<18x16x128xf32>
    %cst_80 = arith.constant 0.000000e+00 : f32
    %151 = vector.shape_cast %8 : vector<16x128xi1> to vector<1x16x128xi1>
    %152 = vector.broadcast %151 : vector<1x16x128xi1> to vector<18x16x128xi1>
    %153 = vector.broadcast %cst_80 : f32 to vector<18x16x128xf32>
    %154 = arith.select %152, %150, %153 : vector<18x16x128xi1>, vector<18x16x128xf32>
    %c287_i32_81 = arith.constant 287 : i32
    %155 = tpu.dynamic_rotate %148 by %c287_i32_81 dim 0 : vector<288x128xf32>, i32 -> vector<288x128xf32>
    %156 = vector.shape_cast %155 : vector<288x128xf32> to vector<18x16x128xf32>
    %cst_82 = arith.constant 0.000000e+00 : f32
    %157 = vector.shape_cast %10 : vector<16x128xi1> to vector<1x16x128xi1>
    %158 = vector.broadcast %157 : vector<1x16x128xi1> to vector<18x16x128xi1>
    %159 = vector.broadcast %cst_82 : f32 to vector<18x16x128xf32>
    %160 = arith.select %158, %156, %159 : vector<18x16x128xi1>, vector<18x16x128xf32>
    %161 = vector.extract_strided_slice %154 {offsets = [0, 0, 0], sizes = [16, 16, 128], strides = [1, 1, 1]} : vector<18x16x128xf32> to vector<16x16x128xf32>
    %162 = vector.shape_cast %161 : vector<16x16x128xf32> to vector<256x128xf32>
    %163 = arith.truncf %162 : vector<256x128xf32> to vector<256x128xbf16>
    %c0_83 = arith.constant 0 : index
    %c0_84 = arith.constant 0 : index
    %164 = vector.load %arg10[%c0_83, %c0_84] : memref<256x1152xbf16, #tpu.memory_space<vmem>>, vector<256x128xbf16>
    tpu.vector_store %arg10[%c0_83, %c0_84], %163 {strides = array<i32>} : memref<256x1152xbf16, #tpu.memory_space<vmem>>, vector<256x128xbf16>,
    %165 = vector.extract_strided_slice %147 {offsets = [0, 0, 0], sizes = [16, 16, 128], strides = [1, 1, 1]} : vector<18x16x128xf32> to vector<16x16x128xf32>
    %166 = vector.shape_cast %165 : vector<16x16x128xf32> to vector<256x128xf32>
    %167 = arith.truncf %166 : vector<256x128xf32> to vector<256x128xbf16>
    %c0_85 = arith.constant 0 : index
    %c128_86 = arith.constant 128 : index
    %168 = vector.load %arg10[%c0_85, %c128_86] : memref<256x1152xbf16, #tpu.memory_space<vmem>>, vector<256x128xbf16>
    tpu.vector_store %arg10[%c0_85, %c128_86], %167 {strides = array<i32>} : memref<256x1152xbf16, #tpu.memory_space<vmem>>, vector<256x128xbf16>,
    %169 = vector.extract_strided_slice %160 {offsets = [0, 0, 0], sizes = [16, 16, 128], strides = [1, 1, 1]} : vector<18x16x128xf32> to vector<16x16x128xf32>
    %170 = vector.shape_cast %169 : vector<16x16x128xf32> to vector<256x128xf32>
    %171 = arith.truncf %170 : vector<256x128xf32> to vector<256x128xbf16>
    %c0_87 = arith.constant 0 : index
    %c256_88 = arith.constant 256 : index
    %172 = vector.load %arg10[%c0_87, %c256_88] : memref<256x1152xbf16, #tpu.memory_space<vmem>>, vector<256x128xbf16>
    tpu.vector_store %arg10[%c0_87, %c256_88], %171 {strides = array<i32>} : memref<256x1152xbf16, #tpu.memory_space<vmem>>, vector<256x128xbf16>,
    %173 = vector.extract_strided_slice %154 {offsets = [1, 0, 0], sizes = [16, 16, 128], strides = [1, 1, 1]} : vector<18x16x128xf32> to vector<16x16x128xf32>
    %174 = vector.shape_cast %173 : vector<16x16x128xf32> to vector<256x128xf32>
    %175 = arith.truncf %174 : vector<256x128xf32> to vector<256x128xbf16>
    %c0_89 = arith.constant 0 : index
    %c384_90 = arith.constant 384 : index
    %176 = vector.load %arg10[%c0_89, %c384_90] : memref<256x1152xbf16, #tpu.memory_space<vmem>>, vector<256x128xbf16>
    tpu.vector_store %arg10[%c0_89, %c384_90], %175 {strides = array<i32>} : memref<256x1152xbf16, #tpu.memory_space<vmem>>, vector<256x128xbf16>,
    %177 = vector.extract_strided_slice %147 {offsets = [1, 0, 0], sizes = [16, 16, 128], strides = [1, 1, 1]} : vector<18x16x128xf32> to vector<16x16x128xf32>
    %178 = vector.shape_cast %177 : vector<16x16x128xf32> to vector<256x128xf32>
    %179 = arith.truncf %178 : vector<256x128xf32> to vector<256x128xbf16>
    %c0_91 = arith.constant 0 : index
    %c512_92 = arith.constant 512 : index
    %180 = vector.load %arg10[%c0_91, %c512_92] : memref<256x1152xbf16, #tpu.memory_space<vmem>>, vector<256x128xbf16>
    tpu.vector_store %arg10[%c0_91, %c512_92], %179 {strides = array<i32>} : memref<256x1152xbf16, #tpu.memory_space<vmem>>, vector<256x128xbf16>,
    %181 = vector.extract_strided_slice %160 {offsets = [1, 0, 0], sizes = [16, 16, 128], strides = [1, 1, 1]} : vector<18x16x128xf32> to vector<16x16x128xf32>
    %182 = vector.shape_cast %181 : vector<16x16x128xf32> to vector<256x128xf32>
    %183 = arith.truncf %182 : vector<256x128xf32> to vector<256x128xbf16>
    %c0_93 = arith.constant 0 : index
    %c640_94 = arith.constant 640 : index
    %184 = vector.load %arg10[%c0_93, %c640_94] : memref<256x1152xbf16, #tpu.memory_space<vmem>>, vector<256x128xbf16>
    tpu.vector_store %arg10[%c0_93, %c640_94], %183 {strides = array<i32>} : memref<256x1152xbf16, #tpu.memory_space<vmem>>, vector<256x128xbf16>,
    %185 = vector.extract_strided_slice %154 {offsets = [2, 0, 0], sizes = [16, 16, 128], strides = [1, 1, 1]} : vector<18x16x128xf32> to vector<16x16x128xf32>
    %186 = vector.shape_cast %185 : vector<16x16x128xf32> to vector<256x128xf32>
    %187 = arith.truncf %186 : vector<256x128xf32> to vector<256x128xbf16>
    %c0_95 = arith.constant 0 : index
    %c768_96 = arith.constant 768 : index
    %188 = vector.load %arg10[%c0_95, %c768_96] : memref<256x1152xbf16, #tpu.memory_space<vmem>>, vector<256x128xbf16>
    tpu.vector_store %arg10[%c0_95, %c768_96], %187 {strides = array<i32>} : memref<256x1152xbf16, #tpu.memory_space<vmem>>, vector<256x128xbf16>,
    %189 = vector.extract_strided_slice %147 {offsets = [2, 0, 0], sizes = [16, 16, 128], strides = [1, 1, 1]} : vector<18x16x128xf32> to vector<16x16x128xf32>
    %190 = vector.shape_cast %189 : vector<16x16x128xf32> to vector<256x128xf32>
    %191 = arith.truncf %190 : vector<256x128xf32> to vector<256x128xbf16>
    %c0_97 = arith.constant 0 : index
    %c896_98 = arith.constant 896 : index
    %192 = vector.load %arg10[%c0_97, %c896_98] : memref<256x1152xbf16, #tpu.memory_space<vmem>>, vector<256x128xbf16>
    tpu.vector_store %arg10[%c0_97, %c896_98], %191 {strides = array<i32>} : memref<256x1152xbf16, #tpu.memory_space<vmem>>, vector<256x128xbf16>,
    %193 = vector.extract_strided_slice %160 {offsets = [2, 0, 0], sizes = [16, 16, 128], strides = [1, 1, 1]} : vector<18x16x128xf32> to vector<16x16x128xf32>
    %194 = vector.shape_cast %193 : vector<16x16x128xf32> to vector<256x128xf32>
    %195 = arith.truncf %194 : vector<256x128xf32> to vector<256x128xbf16>
    %c0_99 = arith.constant 0 : index
    %c1024_100 = arith.constant 1024 : index
    %196 = vector.load %arg10[%c0_99, %c1024_100] : memref<256x1152xbf16, #tpu.memory_space<vmem>>, vector<256x128xbf16>
    tpu.vector_store %arg10[%c0_99, %c1024_100], %195 {strides = array<i32>} : memref<256x1152xbf16, #tpu.memory_space<vmem>>, vector<256x128xbf16>,
    %c0_101 = arith.constant 0 : index
    %c0_102 = arith.constant 0 : index
    %197 = vector.load %arg10[%c0_101, %c0_102] : memref<256x1152xbf16, #tpu.memory_space<vmem>>, vector<256x1152xbf16>
    %c0_103 = arith.constant 0 : index
    %c0_104 = arith.constant 0 : index
    %198 = vector.load %arg4[%c0_103, %c0_104] : memref<1152x128xbf16, #tpu.memory_space<vmem>>, vector<1152x128xbf16>
    %cst_105 = arith.constant dense<0.000000e+00> : vector<256x128xf32>
    %199 = tpu.matmul %197, %198, %cst_105 {dimension_numbers = #tpu.dot_dimension_numbers<[1], [0], [0], [1], [0, 0, 1, 1], [], []>} : vector<256x1152xbf16>, vector<1152x128xbf16>, vector<256x128xf32> -> vector<256x128xf32>
    %200 = vector.extract_strided_slice %4 {offsets = [2, 0], sizes = [1, 128], strides = [1, 1]} : vector<4x128xf32> to vector<1x128xf32>
    %201 = vector.broadcast %200 : vector<1x128xf32> to vector<256x128xf32>
    %202 = arith.mulf %199, %201 : vector<256x128xf32>
    %203 = vector.extract_strided_slice %5 {offsets = [2, 0], sizes = [1, 128], strides = [1, 1]} : vector<4x128xf32> to vector<1x128xf32>
    %204 = vector.broadcast %203 : vector<1x128xf32> to vector<256x128xf32>
    %205 = arith.addf %202, %204 : vector<256x128xf32>
    %c0_106 = arith.constant 0 : index
    %c0_107 = arith.constant 0 : index
    %c0_108 = arith.constant 0 : index
    %c0_109 = arith.constant 0 : index
    %206 = vector.load %arg1[%c0_106, %c0_107, %c0_108, %c0_109] : memref<1x16x16x128xbf16, #tpu.memory_space<vmem>>, vector<1x16x16x128xbf16>
    %207 = vector.shape_cast %206 : vector<1x16x16x128xbf16> to vector<16x16x128xbf16>
    %208 = vector.shape_cast %207 : vector<16x16x128xbf16> to vector<256x128xbf16>
    %c0_110 = arith.constant 0 : index
    %c0_111 = arith.constant 0 : index
    %209 = vector.load %arg5[%c0_110, %c0_111] : memref<128x128xbf16, #tpu.memory_space<vmem>>, vector<128x128xbf16>
    %cst_112 = arith.constant dense<0.000000e+00> : vector<256x128xf32>
    %210 = tpu.matmul %208, %209, %cst_112 {dimension_numbers = #tpu.dot_dimension_numbers<[1], [0], [0], [1], [0, 0, 1, 1], [], []>} : vector<256x128xbf16>, vector<128x128xbf16>, vector<256x128xf32> -> vector<256x128xf32>
    %211 = vector.extract_strided_slice %4 {offsets = [3, 0], sizes = [1, 128], strides = [1, 1]} : vector<4x128xf32> to vector<1x128xf32>
    %212 = vector.broadcast %211 : vector<1x128xf32> to vector<256x128xf32>
    %213 = arith.mulf %210, %212 : vector<256x128xf32>
    %214 = vector.extract_strided_slice %5 {offsets = [3, 0], sizes = [1, 128], strides = [1, 1]} : vector<4x128xf32> to vector<1x128xf32>
    %215 = vector.broadcast %214 : vector<1x128xf32> to vector<256x128xf32>
    %216 = arith.addf %213, %215 : vector<256x128xf32>
    %217 = arith.addf %205, %216 : vector<256x128xf32>
    %cst_113 = arith.constant 0.000000e+00 : f32
    %218 = vector.broadcast %cst_113 : f32 to vector<256x128xf32>
    %219 = arith.cmpf oge, %217, %218 : vector<256x128xf32>
    %cst_114 = arith.constant 1.000000e-01 : f32
    %220 = vector.broadcast %cst_114 : f32 to vector<256x128xf32>
    %221 = arith.mulf %220, %217 : vector<256x128xf32>
    %222 = arith.select %219, %217, %221 : vector<256x128xi1>, vector<256x128xf32>
    %223 = vector.shape_cast %222 : vector<256x128xf32> to vector<8x2x16x128xf32>
    %224 = vector.extract_strided_slice %223 {offsets = [0, 0, 0, 0], sizes = [8, 1, 16, 128], strides = [1, 1, 1, 1]} : vector<8x2x16x128xf32> to vector<8x1x16x128xf32>
    %225 = vector.shape_cast %224 : vector<8x1x16x128xf32> to vector<8x16x128xf32>
    %226 = vector.extract_strided_slice %223 {offsets = [0, 1, 0, 0], sizes = [8, 1, 16, 128], strides = [1, 1, 1, 1]} : vector<8x2x16x128xf32> to vector<8x1x16x128xf32>
    %227 = vector.shape_cast %226 : vector<8x1x16x128xf32> to vector<8x16x128xf32>
    %228 = arith.maximumf %225, %227 : vector<8x16x128xf32>
    %229 = vector.shape_cast %228 : vector<8x16x128xf32> to vector<8x8x256xf32>
    %230 = vector.extract_strided_slice %229 {offsets = [0, 0, 0], sizes = [8, 8, 128], strides = [1, 1, 1]} : vector<8x8x256xf32> to vector<8x8x128xf32>
    %231 = vector.extract_strided_slice %229 {offsets = [0, 0, 128], sizes = [8, 8, 128], strides = [1, 1, 1]} : vector<8x8x256xf32> to vector<8x8x128xf32>
    %232 = arith.maximumf %230, %231 : vector<8x8x128xf32>
    %c0_115 = arith.constant 0 : index
    %c0_116 = arith.constant 0 : index
    %c0_117 = arith.constant 0 : index
    %c0_118 = arith.constant 0 : index
    %233 = vector.load %arg8[%c0_115, %c0_116, %c0_117, %c0_118] : memref<1x8x8x128xf32, #tpu.memory_space<vmem>>, vector<1x8x8x128xf32>
    %234 = vector.shape_cast %233 : vector<1x8x8x128xf32> to vector<8x8x128xf32>
    %235 = vector.shape_cast %232 : vector<8x8x128xf32> to vector<1x8x8x128xf32>
    tpu.vector_store %arg8[%c0_115, %c0_116, %c0_117, %c0_118], %235 {strides = array<i32>} : memref<1x8x8x128xf32, #tpu.memory_space<vmem>>, vector<1x8x8x128xf32>,
    return
  }
  func.func @transform_0(%arg0: i32) -> (i32, i32, i32, i32) {
    %c0_i32 = arith.constant 0 : i32
    %c0_i32_0 = arith.constant 0 : i32
    %c0_i32_1 = arith.constant 0 : i32
    %c0_i32_2 = arith.constant 0 : i32
    return %arg0, %c0_i32, %c0_i32_0, %c0_i32_1 : i32, i32, i32, i32
  }
  func.func @transform_1(%arg0: i32) -> (i32, i32) {
    %c0_i32 = arith.constant 0 : i32
    %c0_i32_0 = arith.constant 0 : i32
    %c0_i32_1 = arith.constant 0 : i32
    return %c0_i32, %c0_i32_0 : i32, i32
  }
  func.func @transform_2(%arg0: i32) -> (i32, i32) {
    %c0_i32 = arith.constant 0 : i32
    %c0_i32_0 = arith.constant 0 : i32
    %c0_i32_1 = arith.constant 0 : i32
    return %c0_i32, %c0_i32_0 : i32, i32
  }
  func.func @transform_3(%arg0: i32) -> (i32, i32) {
    %c0_i32 = arith.constant 0 : i32
    %c0_i32_0 = arith.constant 0 : i32
    %c0_i32_1 = arith.constant 0 : i32
    return %c0_i32, %c0_i32_0 : i32, i32
  }
  func.func @transform_4(%arg0: i32) -> (i32, i32) {
    %c0_i32 = arith.constant 0 : i32
    %c0_i32_0 = arith.constant 0 : i32
    %c0_i32_1 = arith.constant 0 : i32
    return %c0_i32, %c0_i32_0 : i32, i32
  }
  func.func @transform_5(%arg0: i32) -> (i32, i32) {
    %c0_i32 = arith.constant 0 : i32
    %c0_i32_0 = arith.constant 0 : i32
    %c0_i32_1 = arith.constant 0 : i32
    return %c0_i32, %c0_i32_0 : i32, i32
  }
  func.func @transform_6(%arg0: i32) -> (i32, i32) {
    %c0_i32 = arith.constant 0 : i32
    %c0_i32_0 = arith.constant 0 : i32
    %c0_i32_1 = arith.constant 0 : i32
    return %c0_i32, %c0_i32_0 : i32, i32
  }
  func.func @transform_7(%arg0: i32) -> (i32, i32, i32, i32) {
    %c0_i32 = arith.constant 0 : i32
    %c0_i32_0 = arith.constant 0 : i32
    %c0_i32_1 = arith.constant 0 : i32
    %c0_i32_2 = arith.constant 0 : i32
    return %arg0, %c0_i32, %c0_i32_0, %c0_i32_1 : i32, i32, i32, i32
  }
}

</mosaic_0001>

<llo_original>
// kernel: block_forward.1
$region0: #{block_forward.1}
  #allocation0 [shape = 'u32[]', space=smem, size = 0x4, offset = 0x4, fixed_abs, tag = 'smem constant byte address 0x4 - core index']
  #allocation1 [shape = 'u32[144,128]{1,0:T(1,128)}', space=vmem, size = 0x12000, scoped, tag = 'internal scratch']
  #allocation2 [shape = 'f32[18,16,128]{2,1,0:T(8,128)}', space=vmem, size = 0x24000, scoped, tag = 'scratch operand']
  #allocation3 [shape = 'bf16[256,1152]{1,0:T(16,128)(2,1)}', space=vmem, size = 0x90000, scoped, tag = 'scratch operand']
  %s0 = inlined_call_operand.vmem [shape: bf16[2,16,16,128], index: 0, kind: input, shape index: {}]
  %s1 = inlined_call_operand.vmem [shape: bf16[1152,128], index: 1, kind: input, shape index: {}]
  %s2 = inlined_call_operand.vmem [shape: bf16[1152,128], index: 2, kind: input, shape index: {}]
  %s3 = inlined_call_operand.vmem [shape: bf16[1152,128], index: 3, kind: input, shape index: {}]
  %s4 = inlined_call_operand.vmem [shape: bf16[128,128], index: 4, kind: input, shape index: {}]
  %s5 = inlined_call_operand.vmem [shape: f32[4,128], index: 5, kind: input, shape index: {}]
  %s6 = inlined_call_operand.vmem [shape: f32[4,128], index: 6, kind: input, shape index: {}]
  %s7 = inlined_call_operand.vmem [shape: f32[2,8,8,128], index: 7, kind: output, shape index: {}]
  %s8 = sld [smem:[#allocation0]]
  $region61: #{block_forward.1} parent=0
    _
  %s10 = ssub.s32 1, %s8
  %s11 = scalar_select 0, %s10, %s8
  loop: start=0, step=1, limit=4
  $region2: #{block_forward.1} parent=0 // loop_pre_header
    _
  $region3: #{block_forward.1} parent=0 // loop_header
    %s13 = sphi 0, %s17
    %p14 = scmp.ge.s32.totalorder %s13, 4
    %s23 = sphi 0, %s25
    %s26 = sphi 0, %s23
    %s27 = sphi 0, %s26
    %s43 = sphi 0, %s27
    %s47 = sphi 0, %s47
    %s49 = sphi 0, %s47
    %s50 = sphi 0, %s49
    %s64 = sphi 0, %s50
    %s68 = sphi 0, %s68
    %s70 = sphi 0, %s68
    %s71 = sphi 0, %s70
    %s85 = sphi 0, %s71
    %s89 = sphi 0, %s89
    %s91 = sphi 0, %s89
    %s92 = sphi 0, %s91
    %s106 = sphi 0, %s92
    %s110 = sphi 0, %s110
    %s112 = sphi 0, %s110
    %s113 = sphi 0, %s112
    %s127 = sphi 0, %s113
    %s131 = sphi 0, %s131
    %s133 = sphi 0, %s131
    %s134 = sphi 0, %s133
    %s148 = sphi 0, %s134
    %s152 = sphi 0, %s152
    %s154 = sphi 0, %s152
    %s155 = sphi 0, %s154
    %s169 = sphi 0, %s155
    %s175 = sphi 0, %s177
    %s178 = sphi 0, %s175
    %s179 = sphi 0, %s178
    %s195 = sphi 0, %s179
  $region4: #{block_forward.1} parent=0 // loop_header_branch
    %16 = sbr.rel (%p14) target = $region8
  $region5: #{block_forward.1} parent=0 // loop_body
    %s18 = ssub.s32 %s13, 1
    %s19 = ssub.s32 %s13, 2
    %s20 = sadd.s32 %s13, 1
    %s21 = ssub.s32 %s13, %s20
    %p22 = scmp.eq.s32.totalorder %s21, 0
    %s24 = sadd.s32 %s23, 1
    %s25 = scalar_select %p22, %s23, %s24
    %p28 = pneg %p22
    %p29 = scmp.eq.s32.totalorder %s13, 1
    %p30 = por %p28, %p29
    %p31 = scmp.ne.s32.totalorder %s23, %s26
    %p32 = scmp.eq.s32.totalorder %s13, 0
    %p33 = por %p31, %p32
    %p34 = scmp.ne.s32.totalorder %s23, %s26
    %p35 = scmp.eq.s32.totalorder %s18, 1
    %p36 = por %p34, %p35
    %p37 = scmp.ne.s32.totalorder %s26, %s27
    %p38 = scmp.eq.s32.totalorder %s18, 0
    %p39 = por %p37, %p38
    %p40 = scmp.ne.s32.totalorder %s26, %s27
    %p41 = scmp.eq.s32.totalorder %s19, 1
    %p42 = por %p40, %p41
    %p44 = scmp.ne.s32.totalorder %s27, %s43
    %p45 = scmp.eq.s32.totalorder %s19, 0
    %p46 = por %p44, %p45
    %s48 = sadd.s32 %s47, 1
    %p51 = scmp.eq.s32.totalorder %s13, 1
    %p52 = scmp.ne.s32.totalorder %s47, %s49
    %p53 = scmp.eq.s32.totalorder %s13, 0
    %p54 = por %p52, %p53
    %p55 = scmp.ne.s32.totalorder %s47, %s49
    %p56 = scmp.eq.s32.totalorder %s18, 1
    %p57 = por %p55, %p56
    %p58 = scmp.ne.s32.totalorder %s49, %s50
    %p59 = scmp.eq.s32.totalorder %s18, 0
    %p60 = por %p58, %p59
    %p61 = scmp.ne.s32.totalorder %s49, %s50
    %p62 = scmp.eq.s32.totalorder %s19, 1
    %p63 = por %p61, %p62
    %p65 = scmp.ne.s32.totalorder %s50, %s64
    %p66 = scmp.eq.s32.totalorder %s19, 0
    %p67 = por %p65, %p66
    %s69 = sadd.s32 %s68, 1
    %p72 = scmp.eq.s32.totalorder %s13, 1
    %p73 = scmp.ne.s32.totalorder %s68, %s70
    %p74 = scmp.eq.s32.totalorder %s13, 0
    %p75 = por %p73, %p74
    %p76 = scmp.ne.s32.totalorder %s68, %s70
    %p77 = scmp.eq.s32.totalorder %s18, 1
    %p78 = por %p76, %p77
    %p79 = scmp.ne.s32.totalorder %s70, %s71
    %p80 = scmp.eq.s32.totalorder %s18, 0
    %p81 = por %p79, %p80
    %p82 = scmp.ne.s32.totalorder %s70, %s71
    %p83 = scmp.eq.s32.totalorder %s19, 1
    %p84 = por %p82, %p83
    %p86 = scmp.ne.s32.totalorder %s71, %s85
    %p87 = scmp.eq.s32.totalorder %s19, 0
    %p88 = por %p86, %p87
    %s90 = sadd.s32 %s89, 1
    %p93 = scmp.eq.s32.totalorder %s13, 1
    %p94 = scmp.ne.s32.totalorder %s89, %s91
    %p95 = scmp.eq.s32.totalorder %s13, 0
    %p96 = por %p94, %p95
    %p97 = scmp.ne.s32.totalorder %s89, %s91
    %p98 = scmp.eq.s32.totalorder %s18, 1
    %p99 = por %p97, %p98
    %p100 = scmp.ne.s32.totalorder %s91, %s92
    %p101 = scmp.eq.s32.totalorder %s18, 0
    %p102 = por %p100, %p101
    %p103 = scmp.ne.s32.totalorder %s91, %s92
    %p104 = scmp.eq.s32.totalorder %s19, 1
    %p105 = por %p103, %p104
    %p107 = scmp.ne.s32.totalorder %s92, %s106
    %p108 = scmp.eq.s32.totalorder %s19, 0
    %p109 = por %p107, %p108
    %s111 = sadd.s32 %s110, 1
    %p114 = scmp.eq.s32.totalorder %s13, 1
    %p115 = scmp.ne.s32.totalorder %s110, %s112
    %p116 = scmp.eq.s32.totalorder %s13, 0
    %p117 = por %p115, %p116
    %p118 = scmp.ne.s32.totalorder %s110, %s112
    %p119 = scmp.eq.s32.totalorder %s18, 1
    %p120 = por %p118, %p119
    %p121 = scmp.ne.s32.totalorder %s112, %s113
    %p122 = scmp.eq.s32.totalorder %s18, 0
    %p123 = por %p121, %p122
    %p124 = scmp.ne.s32.totalorder %s112, %s113
    %p125 = scmp.eq.s32.totalorder %s19, 1
    %p126 = por %p124, %p125
    %p128 = scmp.ne.s32.totalorder %s113, %s127
    %p129 = scmp.eq.s32.totalorder %s19, 0
    %p130 = por %p128, %p129
    %s132 = sadd.s32 %s131, 1
    %p135 = scmp.eq.s32.totalorder %s13, 1
    %p136 = scmp.ne.s32.totalorder %s131, %s133
    %p137 = scmp.eq.s32.totalorder %s13, 0
    %p138 = por %p136, %p137
    %p139 = scmp.ne.s32.totalorder %s131, %s133
    %p140 = scmp.eq.s32.totalorder %s18, 1
    %p141 = por %p139, %p140
    %p142 = scmp.ne.s32.totalorder %s133, %s134
    %p143 = scmp.eq.s32.totalorder %s18, 0
    %p144 = por %p142, %p143
    %p145 = scmp.ne.s32.totalorder %s133, %s134
    %p146 = scmp.eq.s32.totalorder %s19, 1
    %p147 = por %p145, %p146
    %p149 = scmp.ne.s32.totalorder %s134, %s148
    %p150 = scmp.eq.s32.totalorder %s19, 0
    %p151 = por %p149, %p150
    %s153 = sadd.s32 %s152, 1
    %p156 = scmp.eq.s32.totalorder %s13, 1
    %p157 = scmp.ne.s32.totalorder %s152, %s154
    %p158 = scmp.eq.s32.totalorder %s13, 0
    %p159 = por %p157, %p158
    %p160 = scmp.ne.s32.totalorder %s152, %s154
    %p161 = scmp.eq.s32.totalorder %s18, 1
    %p162 = por %p160, %p161
    %p163 = scmp.ne.s32.totalorder %s154, %s155
    %p164 = scmp.eq.s32.totalorder %s18, 0
    %p165 = por %p163, %p164
    %p166 = scmp.ne.s32.totalorder %s154, %s155
    %p167 = scmp.eq.s32.totalorder %s19, 1
    %p168 = por %p166, %p167
    %p170 = scmp.ne.s32.totalorder %s155, %s169
    %p171 = scmp.eq.s32.totalorder %s19, 0
    %p172 = por %p170, %p171
    %s173 = ssub.s32 %s13, %s20
    %p174 = scmp.eq.s32.totalorder %s173, 0
    %s176 = sadd.s32 %s175, 1
    %s177 = scalar_select %p174, %s175, %s176
    %p180 = pneg %p174
    %p181 = scmp.eq.s32.totalorder %s13, 1
    %p182 = por %p180, %p181
    %p183 = scmp.ne.s32.totalorder %s175, %s178
    %p184 = scmp.eq.s32.totalorder %s13, 0
    %p185 = por %p183, %p184
    %p186 = scmp.ne.s32.totalorder %s175, %s178
    %p187 = scmp.eq.s32.totalorder %s18, 1
    %p188 = por %p186, %p187
    %p189 = scmp.ne.s32.totalorder %s178, %s179
    %p190 = scmp.eq.s32.totalorder %s18, 0
    %p191 = por %p189, %p190
    %p192 = scmp.ne.s32.totalorder %s178, %s179
    %p193 = scmp.eq.s32.totalorder %s19, 1
    %p194 = por %p192, %p193
    %p196 = scmp.ne.s32.totalorder %s179, %s195
    %p197 = scmp.eq.s32.totalorder %s19, 0
    %p198 = por %p196, %p197
    %p199 = scmp.le.s32.totalorder 1, %s13
    %p200 = scmp.lt.s32.totalorder %s13, 3
    %p201 = pnand %p199, %p200
    %p202 = pneg %p201
    // Predicated region
    $region9: #{block_forward.1} parent=5 // pred_check
      _
    $region10: #{block_forward.1} parent=5 // pred_check_branch
      %204 = sbr.rel (%p201) target = $region12
    $region11: #{block_forward.1} parent=5 // pred_region
      %s205 = ssub.s32 %s13, 1
      // Predicated region
      $region13: #{block_forward.1} parent=11 // pred_check
        %p206 = pneg %p60
      $region14: #{block_forward.1} parent=11 // pred_check_branch
        %208 = sbr.rel (%p206) target = $region16
      $region15: #{block_forward.1} parent=11 // pred_region
        _
      $region16: #{block_forward.1} parent=11 // pred_fallthru
        _
      // Predicated region
      $region17: #{block_forward.1} parent=11 // pred_check
        %p209 = pneg %p81
      $region18: #{block_forward.1} parent=11 // pred_check_branch
        %211 = sbr.rel (%p209) target = $region20
      $region19: #{block_forward.1} parent=11 // pred_region
        _
      $region20: #{block_forward.1} parent=11 // pred_fallthru
        _
      // Predicated region
      $region21: #{block_forward.1} parent=11 // pred_check
        %p212 = pneg %p102
      $region22: #{block_forward.1} parent=11 // pred_check_branch
        %214 = sbr.rel (%p212) target = $region24
      $region23: #{block_forward.1} parent=11 // pred_region
        _
      $region24: #{block_forward.1} parent=11 // pred_fallthru
        _
      // Predicated region
      $region25: #{block_forward.1} parent=11 // pred_check
        %p215 = pneg %p123
      $region26: #{block_forward.1} parent=11 // pred_check_branch
        %217 = sbr.rel (%p215) target = $region28
      $region27: #{block_forward.1} parent=11 // pred_region
        _
      $region28: #{block_forward.1} parent=11 // pred_fallthru
        _
      // Predicated region
      $region29: #{block_forward.1} parent=11 // pred_check
        %p218 = pneg %p144
      $region30: #{block_forward.1} parent=11 // pred_check_branch
        %220 = sbr.rel (%p218) target = $region32
      $region31: #{block_forward.1} parent=11 // pred_region
        _
      $region32: #{block_forward.1} parent=11 // pred_fallthru
        _
      // Predicated region
      $region33: #{block_forward.1} parent=11 // pred_check
        %p221 = pneg %p165
      $region34: #{block_forward.1} parent=11 // pred_check_branch
        %223 = sbr.rel (%p221) target = $region36
      $region35: #{block_forward.1} parent=11 // pred_region
        _
      $region36: #{block_forward.1} parent=11 // pred_fallthru
        _
    $region12: #{block_forward.1} parent=5 // pred_fallthru
      _
    %p224 = scmp.lt.s32.totalorder %s13, 2
    // Predicated region
    $region37: #{block_forward.1} parent=5 // pred_check
      %p225 = pneg %p224
    $region38: #{block_forward.1} parent=5 // pred_check_branch
      %227 = sbr.rel (%p225) target = $region40
    $region39: #{block_forward.1} parent=5 // pred_region
      // Predicated region
      $region41: #{block_forward.1} parent=39 // pred_check
        %p228 = pneg %p33
      $region42: #{block_forward.1} parent=39 // pred_check_branch
        %230 = sbr.rel (%p228) target = $region44
      $region43: #{block_forward.1} parent=39 // pred_region
        %p231 = scmp.lt.s32.totalorder %s13, 1
        %s232 = scalar_select %p231, %s13, 1
        %s233 = smul.addr %s232, 32
        %s234 = smul.addr %s233, 4
        %s235 = scalar_lea.vmem %s0, %s234
      $region44: #{block_forward.1} parent=39 // pred_fallthru
        _
    $region40: #{block_forward.1} parent=5 // pred_fallthru
      _
    %p236 = scmp.le.s32.totalorder 1, %s13
    %p237 = scmp.lt.s32.totalorder %s13, 3
    %p238 = pnand %p236, %p237
    %p239 = pneg %p238
    // Predicated region
    $region45: #{block_forward.1} parent=5 // pred_check
      _
    $region46: #{block_forward.1} parent=5 // pred_check_branch
      %241 = sbr.rel (%p238) target = $region48
    $region47: #{block_forward.1} parent=5 // pred_region
      %s242 = ssub.s32 %s13, 1
      %p243 = scmp.lt.s32.totalorder %s18, 1
      %s244 = scalar_select %p243, %s18, 1
      %s245 = smul.addr %s244, 32
      %s246 = smul.addr %s245, 4
      %s247 = scalar_lea.vmem %s0, %s246
      %p248 = pneg %p39
      %p249 = pneg %p36
      %p250 = pneg %p60
      %p251 = pneg %p57
      %p252 = pneg %p81
      %p253 = pneg %p78
      %p254 = pneg %p102
      %p255 = pneg %p99
      %p256 = pneg %p123
      %p257 = pneg %p120
      %p258 = pneg %p144
      %p259 = pneg %p141
      %p260 = pneg %p165
      %p261 = pneg %p162
      %p262 = pneg %p191
      %p263 = pneg %p188
      %p264 = scmp.lt.s32.totalorder %s18, 1
      %s265 = scalar_select %p264, %s18, 1
      %s266 = smul.addr %s265, 8
      %s267 = smul.addr %s266, 8
      %s268 = scalar_lea.vmem %s7, %s267
      %p269 = scmp.lt.s32.totalorder %s18, 1
      %s270 = scalar_select %p269, %s18, 1
      %s271 = smul.addr %s270, 32
      %s272 = smul.addr %s271, 4
      %s273 = scalar_lea.vmem %s0, %s272
      %p274 = scmp.lt.s32.totalorder %s18, 1
      %s275 = scalar_select %p274, %s18, 1
      %s276 = smul.addr %s275, 8
      %s277 = smul.addr %s276, 8
      %s278 = scalar_lea.vmem %s7, %s277
      %280 = vst [vmem:[#allocation2] sm:$0xff] 0.0
      %281 = vst [vmem:[#allocation2 + $0x8] sm:$0xff] 0.0
      %s282 = scalar_lea.vmem [#allocation2], 272
      %283 = vst [vmem:[%s282] sm:$0xff] 0.0
      %284 = vst [vmem:[%s282 + $0x8] sm:$0xff] 0.0
      %v285 = vld [vmem:[%s5] sm:$0xf]
      %v286 = vld [vmem:[%s6] sm:$0xf]
      %v287 = vlaneseq
      %v288 = vshrl.u32 %v287, 7
      %v289 = vadd.s32 %v288, 8
      %vm290 = vcmp.ge.s32.totalorder %v288, 1
      %vm291 = vcmp.ge.s32.totalorder %v289, 1
      %vm292 = vcmp.le.s32.totalorder %v288, 14
      %vm293 = vcmp.le.s32.totalorder %v289, 14
      %v294 = vld [vmem:[%s273] sm:$0xf]
      %v295 = vld [vmem:[%s273 + $0x4] sm:$0xf]
      %v296 = vld [vmem:[%s273 + $0x8] sm:$0xf]
      %v297 = vld [vmem:[%s273 + $0xc] sm:$0xf]
      %v298 = vld [vmem:[%s273 + $0x10] sm:$0xf]
      %v299 = vld [vmem:[%s273 + $0x14] sm:$0xf]
      %v300 = vld [vmem:[%s273 + $0x18] sm:$0xf]
      %v301 = vld [vmem:[%s273 + $0x1c] sm:$0xf]
      %v302 = vld [vmem:[%s273 + $0x20] sm:$0xf]
      %v303 = vld [vmem:[%s273 + $0x24] sm:$0xf]
      %v304 = vld [vmem:[%s273 + $0x28] sm:$0xf]
      %v305 = vld [vmem:[%s273 + $0x2c] sm:$0xf]
      %v306 = vld [vmem:[%s273 + $0x30] sm:$0xf]
      %v307 = vld [vmem:[%s273 + $0x34] sm:$0xf]
      %v308 = vld [vmem:[%s273 + $0x38] sm:$0xf]
      %v309 = vld [vmem:[%s273 + $0x3c] sm:$0xf]
      %v310 = vld [vmem:[%s273 + $0x40] sm:$0xf]
      %v311 = vld [vmem:[%s273 + $0x44] sm:$0xf]
      %v312 = vld [vmem:[%s273 + $0x48] sm:$0xf]
      %v313 = vld [vmem:[%s273 + $0x4c] sm:$0xf]
      %v314 = vld [vmem:[%s273 + $0x50] sm:$0xf]
      %v315 = vld [vmem:[%s273 + $0x54] sm:$0xf]
      %v316 = vld [vmem:[%s273 + $0x58] sm:$0xf]
      %v317 = vld [vmem:[%s273 + $0x5c] sm:$0xf]
      %v318 = vld [vmem:[%s273 + $0x60] sm:$0xf]
      %v319 = vld [vmem:[%s273 + $0x64] sm:$0xf]
      %v320 = vld [vmem:[%s273 + $0x68] sm:$0xf]
      %v321 = vld [vmem:[%s273 + $0x6c] sm:$0xf]
      %v322 = vld [vmem:[%s273 + $0x70] sm:$0xf]
      %v323 = vld [vmem:[%s273 + $0x74] sm:$0xf]
      %v324 = vld [vmem:[%s273 + $0x78] sm:$0xf]
      %v325 = vld [vmem:[%s273 + $0x7c] sm:$0xf]
      %v326 = vunpack.c.l.bf16 %v294
      %v327 = vunpack.c.l.bf16 %v295
      %v328 = vunpack.c.l.bf16 %v296
      %v329 = vunpack.c.l.bf16 %v297
      %v330 = vunpack.c.l.bf16 %v298
      %v331 = vunpack.c.l.bf16 %v299
      %v332 = vunpack.c.l.bf16 %v300
      %v333 = vunpack.c.l.bf16 %v301
      %v334 = vunpack.c.l.bf16 %v302
      %v335 = vunpack.c.l.bf16 %v303
      %v336 = vunpack.c.l.bf16 %v304
      %v337 = vunpack.c.l.bf16 %v305
      %v338 = vunpack.c.l.bf16 %v306
      %v339 = vunpack.c.l.bf16 %v307
      %v340 = vunpack.c.l.bf16 %v308
      %v341 = vunpack.c.l.bf16 %v309
      %v342 = vunpack.c.l.bf16 %v310
      %v343 = vunpack.c.l.bf16 %v311
      %v344 = vunpack.c.l.bf16 %v312
      %v345 = vunpack.c.l.bf16 %v313
      %v346 = vunpack.c.l.bf16 %v314
      %v347 = vunpack.c.l.bf16 %v315
      %v348 = vunpack.c.l.bf16 %v316
      %v349 = vunpack.c.l.bf16 %v317
      %v350 = vunpack.c.l.bf16 %v318
      %v351 = vunpack.c.l.bf16 %v319
      %v352 = vunpack.c.l.bf16 %v320
      %v353 = vunpack.c.l.bf16 %v321
      %v354 = vunpack.c.l.bf16 %v322
      %v355 = vunpack.c.l.bf16 %v323
      %v356 = vunpack.c.l.bf16 %v324
      %v357 = vunpack.c.l.bf16 %v325
      %s358 = scalar_lea.vmem [#allocation2], 16
      %359 = vst [vmem:[%s358] sm:$0xff] %v326
      %360 = vst [vmem:[%s358 + $0x8] sm:$0xff] %v327
      %361 = vst [vmem:[%s358 + $0x10] sm:$0xff] %v328
      %362 = vst [vmem:[%s358 + $0x18] sm:$0xff] %v329
      %363 = vst [vmem:[%s358 + $0x20] sm:$0xff] %v330
      %364 = vst [vmem:[%s358 + $0x28] sm:$0xff] %v331
      %365 = vst [vmem:[%s358 + $0x30] sm:$0xff] %v332
      %366 = vst [vmem:[%s358 + $0x38] sm:$0xff] %v333
      %367 = vst [vmem:[%s358 + $0x40] sm:$0xff] %v334
      %368 = vst [vmem:[%s358 + $0x48] sm:$0xff] %v335
      %369 = vst [vmem:[%s358 + $0x50] sm:$0xff] %v336
      %370 = vst [vmem:[%s358 + $0x58] sm:$0xff] %v337
      %371 = vst [vmem:[%s358 + $0x60] sm:$0xff] %v338
      %372 = vst [vmem:[%s358 + $0x68] sm:$0xff] %v339
      %373 = vst [vmem:[%s358 + $0x70] sm:$0xff] %v340
      %374 = vst [vmem:[%s358 + $0x78] sm:$0xff] %v341
      %375 = vst [vmem:[%s358 + $0x80] sm:$0xff] %v342
      %376 = vst [vmem:[%s358 + $0x88] sm:$0xff] %v343
      %377 = vst [vmem:[%s358 + $0x90] sm:$0xff] %v344
      %378 = vst [vmem:[%s358 + $0x98] sm:$0xff] %v345
      %379 = vst [vmem:[%s358 + $0xa0] sm:$0xff] %v346
      %380 = vst [vmem:[%s358 + $0xa8] sm:$0xff] %v347
      %381 = vst [vmem:[%s358 + $0xb0] sm:$0xff] %v348
      %382 = vst [vmem:[%s358 + $0xb8] sm:$0xff] %v349
      %383 = vst [vmem:[%s358 + $0xc0] sm:$0xff] %v350
      %384 = vst [vmem:[%s358 + $0xc8] sm:$0xff] %v351
      %385 = vst [vmem:[%s358 + $0xd0] sm:$0xff] %v352
      %386 = vst [vmem:[%s358 + $0xd8] sm:$0xff] %v353
      %387 = vst [vmem:[%s358 + $0xe0] sm:$0xff] %v354
      %388 = vst [vmem:[%s358 + $0xe8] sm:$0xff] %v355
      %389 = vst [vmem:[%s358 + $0xf0] sm:$0xff] %v356
      %390 = vst [vmem:[%s358 + $0xf8] sm:$0xff] %v357
      %v391 = vld [vmem:[#allocation2] sm:$0xff]
      %v392 = vld [vmem:[#allocation2 + $0x8] sm:$0xff]
      %v393 = vld [vmem:[#allocation2 + $0x10] sm:$0xff]
      %v394 = vld [vmem:[#allocation2 + $0x18] sm:$0xff]
      %v395 = vld [vmem:[#allocation2 + $0x20] sm:$0xff]
      %v396 = vld [vmem:[#allocation2 + $0x28] sm:$0xff]
      %v397 = vld [vmem:[#allocation2 + $0x30] sm:$0xff]
      %v398 = vld [vmem:[#allocation2 + $0x38] sm:$0xff]
      %v399 = vld [vmem:[#allocation2 + $0x40] sm:$0xff]
      %v400 = vld [vmem:[#allocation2 + $0x48] sm:$0xff]
      %v401 = vld [vmem:[#allocation2 + $0x50] sm:$0xff]
      %v402 = vld [vmem:[#allocation2 + $0x58] sm:$0xff]
      %v403 = vld [vmem:[#allocation2 + $0x60] sm:$0xff]
      %v404 = vld [vmem:[#allocation2 + $0x68] sm:$0xff]
      %v405 = vld [vmem:[#allocation2 + $0x70] sm:$0xff]
      %v406 = vld [vmem:[#allocation2 + $0x78] sm:$0xff]
      %v407 = vld [vmem:[#allocation2 + $0x80] sm:$0xff]
      %v408 = vld [vmem:[#allocation2 + $0x88] sm:$0xff]
      %v409 = vld [vmem:[#allocation2 + $0x90] sm:$0xff]
      %v410 = vld [vmem:[#allocation2 + $0x98] sm:$0xff]
      %v411 = vld [vmem:[#allocation2 + $0xa0] sm:$0xff]
      %v412 = vld [vmem:[#allocation2 + $0xa8] sm:$0xff]
      %v413 = vld [vmem:[#allocation2 + $0xb0] sm:$0xff]
      %v414 = vld [vmem:[#allocation2 + $0xb8] sm:$0xff]
      %v415 = vld [vmem:[#allocation2 + $0xc0] sm:$0xff]
      %v416 = vld [vmem:[#allocation2 + $0xc8] sm:$0xff]
      %v417 = vld [vmem:[#allocation2 + $0xd0] sm:$0xff]
      %v418 = vld [vmem:[#allocation2 + $0xd8] sm:$0xff]
      %v419 = vld [vmem:[#allocation2 + $0xe0] sm:$0xff]
      %v420 = vld [vmem:[#allocation2 + $0xe8] sm:$0xff]
      %v421 = vld [vmem:[#allocation2 + $0xf0] sm:$0xff]
      %v422 = vld [vmem:[#allocation2 + $0xf8] sm:$0xff]
      %v423 = vld [vmem:[#allocation2 + $0x100] sm:$0xff]
      %v424 = vld [vmem:[#allocation2 + $0x108] sm:$0xff]
      %v425 = vld [vmem:[#allocation2 + $0x110] sm:$0xff]
      %v426 = vld [vmem:[#allocation2 + $0x118] sm:$0xff]
      %v427 = vrot.slane %v391, 7
      %v428 = vrot.slane %v392, 7
      %v429 = vrot.slane %v393, 7
      %v430 = vrot.slane %v394, 7
      %v431 = vrot.slane %v395, 7
      %v432 = vrot.slane %v396, 7
      %v433 = vrot.slane %v397, 7
      %v434 = vrot.slane %v398, 7
      %v435 = vrot.slane %v399, 7
      %v436 = vrot.slane %v400, 7
      %v437 = vrot.slane %v401, 7
      %v438 = vrot.slane %v402, 7
      %v439 = vrot.slane %v403, 7
      %v440 = vrot.slane %v404, 7
      %v441 = vrot.slane %v405, 7
      %v442 = vrot.slane %v406, 7
      %v443 = vrot.slane %v407, 7
      %v444 = vrot.slane %v408, 7
      %v445 = vrot.slane %v409, 7
      %v446 = vrot.slane %v410, 7
      %v447 = vrot.slane %v411, 7
      %v448 = vrot.slane %v412, 7
      %v449 = vrot.slane %v413, 7
      %v450 = vrot.slane %v414, 7
      %v451 = vrot.slane %v415, 7
      %v452 = vrot.slane %v416, 7
      %v453 = vrot.slane %v417, 7
      %v454 = vrot.slane %v418, 7
      %v455 = vrot.slane %v419, 7
      %v456 = vrot.slane %v420, 7
      %v457 = vrot.slane %v421, 7
      %v458 = vrot.slane %v422, 7
      %v459 = vrot.slane %v423, 7
      %v460 = vrot.slane %v424, 7
      %v461 = vrot.slane %v425, 7
      %v462 = vrot.slane %v426, 7
      %vm463 = vcmp.lt.s32.totalorder %v288, 1
      %v464 = vsel %vm463, %v461, %v462
      %v465 = vsel %vm463, %v460, %v461
      %v466 = vsel %vm463, %v459, %v460
      %v467 = vsel %vm463, %v458, %v459
      %v468 = vsel %vm463, %v457, %v458
      %v469 = vsel %vm463, %v456, %v457
      %v470 = vsel %vm463, %v455, %v456
      %v471 = vsel %vm463, %v454, %v455
      %v472 = vsel %vm463, %v453, %v454
      %v473 = vsel %vm463, %v452, %v453
      %v474 = vsel %vm463, %v451, %v452
      %v475 = vsel %vm463, %v450, %v451
      %v476 = vsel %vm463, %v449, %v450
      %v477 = vsel %vm463, %v448, %v449
      %v478 = vsel %vm463, %v447, %v448
      %v479 = vsel %vm463, %v446, %v447
      %v480 = vsel %vm463, %v445, %v446
      %v481 = vsel %vm463, %v444, %v445
      %v482 = vsel %vm463, %v443, %v444
      %v483 = vsel %vm463, %v442, %v443
      %v484 = vsel %vm463, %v441, %v442
      %v485 = vsel %vm463, %v440, %v441
      %v486 = vsel %vm463, %v439, %v440
      %v487 = vsel %vm463, %v438, %v439
      %v488 = vsel %vm463, %v437, %v438
      %v489 = vsel %vm463, %v436, %v437
      %v490 = vsel %vm463, %v435, %v436
      %v491 = vsel %vm463, %v434, %v435
      %v492 = vsel %vm463, %v433, %v434
      %v493 = vsel %vm463, %v432, %v433
      %v494 = vsel %vm463, %v431, %v432
      %v495 = vsel %vm463, %v430, %v431
      %v496 = vsel %vm463, %v429, %v430
      %v497 = vsel %vm463, %v428, %v429
      %v498 = vsel %vm463, %v427, %v428
      %v499 = vsel %vm463, %v462, %v427
      %v500 = vsel %vm290, 1, 0
      %v501 = vsel %vm291, 1, 0
      %vm502 = vcmp.eq.s32.totalorder %v500, 1
      %vm503 = vcmp.eq.s32.totalorder %v501, 1
      %v504 = vsel %vm502, %v499, 0.0
      %v505 = vsel %vm503, %v498, 0.0
      %v506 = vsel %vm502, %v497, 0.0
      %v507 = vsel %vm503, %v496, 0.0
      %v508 = vsel %vm502, %v495, 0.0
      %v509 = vsel %vm503, %v494, 0.0
      %v510 = vsel %vm502, %v493, 0.0
      %v511 = vsel %vm503, %v492, 0.0
      %v512 = vsel %vm502, %v491, 0.0
      %v513 = vsel %vm503, %v490, 0.0
      %v514 = vsel %vm502, %v489, 0.0
      %v515 = vsel %vm503, %v488, 0.0
      %v516 = vsel %vm502, %v487, 0.0
      %v517 = vsel %vm503, %v486, 0.0
      %v518 = vsel %vm502, %v485, 0.0
      %v519 = vsel %vm503, %v484, 0.0
      %v520 = vsel %vm502, %v483, 0.0
      %v521 = vsel %vm503, %v482, 0.0
      %v522 = vsel %vm502, %v481, 0.0
      %v523 = vsel %vm503, %v480, 0.0
      %v524 = vsel %vm502, %v479, 0.0
      %v525 = vsel %vm503, %v478, 0.0
      %v526 = vsel %vm502, %v477, 0.0
      %v527 = vsel %vm503, %v476, 0.0
      %v528 = vsel %vm502, %v475, 0.0
      %v529 = vsel %vm503, %v474, 0.0
      %v530 = vsel %vm502, %v473, 0.0
      %v531 = vsel %vm503, %v472, 0.0
      %v532 = vsel %vm502, %v471, 0.0
      %v533 = vsel %vm503, %v470, 0.0
      %v534 = vsel %vm502, %v469, 0.0
      %v535 = vsel %vm503, %v468, 0.0
      %v536 = vsel %vm502, %v467, 0.0
      %v537 = vsel %vm503, %v466, 0.0
      %v538 = vsel %vm502, %v465, 0.0
      %v539 = vsel %vm503, %v464, 0.0
      %v540 = vrot.slane %v391, 1
      %v541 = vrot.slane %v392, 1
      %v542 = vrot.slane %v393, 1
      %v543 = vrot.slane %v394, 1
      %v544 = vrot.slane %v395, 1
      %v545 = vrot.slane %v396, 1
      %v546 = vrot.slane %v397, 1
      %v547 = vrot.slane %v398, 1
      %v548 = vrot.slane %v399, 1
      %v549 = vrot.slane %v400, 1
      %v550 = vrot.slane %v401, 1
      %v551 = vrot.slane %v402, 1
      %v552 = vrot.slane %v403, 1
      %v553 = vrot.slane %v404, 1
      %v554 = vrot.slane %v405, 1
      %v555 = vrot.slane %v406, 1
      %v556 = vrot.slane %v407, 1
      %v557 = vrot.slane %v408, 1
      %v558 = vrot.slane %v409, 1
      %v559 = vrot.slane %v410, 1
      %v560 = vrot.slane %v411, 1
      %v561 = vrot.slane %v412, 1
      %v562 = vrot.slane %v413, 1
      %v563 = vrot.slane %v414, 1
      %v564 = vrot.slane %v415, 1
      %v565 = vrot.slane %v416, 1
      %v566 = vrot.slane %v417, 1
      %v567 = vrot.slane %v418, 1
      %v568 = vrot.slane %v419, 1
      %v569 = vrot.slane %v420, 1
      %v570 = vrot.slane %v421, 1
      %v571 = vrot.slane %v422, 1
      %v572 = vrot.slane %v423, 1
      %v573 = vrot.slane %v424, 1
      %v574 = vrot.slane %v425, 1
      %v575 = vrot.slane %v426, 1
      %vm576 = vcmp.lt.s32.totalorder %v288, 7
      %v577 = vsel %vm576, %v574, %v575
      %v578 = vsel %vm576, %v573, %v574
      %v579 = vsel %vm576, %v572, %v573
      %v580 = vsel %vm576, %v571, %v572
      %v581 = vsel %vm576, %v570, %v571
      %v582 = vsel %vm576, %v569, %v570
      %v583 = vsel %vm576, %v568, %v569
      %v584 = vsel %vm576, %v567, %v568
      %v585 = vsel %vm576, %v566, %v567
      %v586 = vsel %vm576, %v565, %v566
      %v587 = vsel %vm576, %v564, %v565
      %v588 = vsel %vm576, %v563, %v564
      %v589 = vsel %vm576, %v562, %v563
      %v590 = vsel %vm576, %v561, %v562
      %v591 = vsel %vm576, %v560, %v561
      %v592 = vsel %vm576, %v559, %v560
      %v593 = vsel %vm576, %v558, %v559
      %v594 = vsel %vm576, %v557, %v558
      %v595 = vsel %vm576, %v556, %v557
      %v596 = vsel %vm576, %v555, %v556
      %v597 = vsel %vm576, %v554, %v555
      %v598 = vsel %vm576, %v553, %v554
      %v599 = vsel %vm576, %v552, %v553
      %v600 = vsel %vm576, %v551, %v552
      %v601 = vsel %vm576, %v550, %v551
      %v602 = vsel %vm576, %v549, %v550
      %v603 = vsel %vm576, %v548, %v549
      %v604 = vsel %vm576, %v547, %v548
      %v605 = vsel %vm576, %v546, %v547
      %v606 = vsel %vm576, %v545, %v546
      %v607 = vsel %vm576, %v544, %v545
      %v608 = vsel %vm576, %v543, %v544
      %v609 = vsel %vm576, %v542, %v543
      %v610 = vsel %vm576, %v541, %v542
      %v611 = vsel %vm576, %v540, %v541
      %v612 = vsel %vm576, %v575, %v540
      %v613 = vsel %vm292, 1, 0
      %v614 = vsel %vm293, 1, 0
      %vm615 = vcmp.eq.s32.totalorder %v613, 1
      %vm616 = vcmp.eq.s32.totalorder %v614, 1
      %v617 = vsel %vm615, %v611, 0.0
      %v618 = vsel %vm616, %v610, 0.0
      %v619 = vsel %vm615, %v609, 0.0
      %v620 = vsel %vm616, %v608, 0.0
      %v621 = vsel %vm615, %v607, 0.0
      %v622 = vsel %vm616, %v606, 0.0
      %v623 = vsel %vm615, %v605, 0.0
      %v624 = vsel %vm616, %v604, 0.0
      %v625 = vsel %vm615, %v603, 0.0
      %v626 = vsel %vm616, %v602, 0.0
      %v627 = vsel %vm615, %v601, 0.0
      %v628 = vsel %vm616, %v600, 0.0
      %v629 = vsel %vm615, %v599, 0.0
      %v630 = vsel %vm616, %v598, 0.0
      %v631 = vsel %vm615, %v597, 0.0
      %v632 = vsel %vm616, %v596, 0.0
      %v633 = vsel %vm615, %v595, 0.0
      %v634 = vsel %vm616, %v594, 0.0
      %v635 = vsel %vm615, %v593, 0.0
      %v636 = vsel %vm616, %v592, 0.0
      %v637 = vsel %vm615, %v591, 0.0
      %v638 = vsel %vm616, %v590, 0.0
      %v639 = vsel %vm615, %v589, 0.0
      %v640 = vsel %vm616, %v588, 0.0
      %v641 = vsel %vm615, %v587, 0.0
      %v642 = vsel %vm616, %v586, 0.0
      %v643 = vsel %vm615, %v585, 0.0
      %v644 = vsel %vm616, %v584, 0.0
      %v645 = vsel %vm615, %v583, 0.0
      %v646 = vsel %vm616, %v582, 0.0
      %v647 = vsel %vm615, %v581, 0.0
      %v648 = vsel %vm616, %v580, 0.0
      %v649 = vsel %vm615, %v579, 0.0
      %v650 = vsel %vm616, %v578, 0.0
      %v651 = vsel %vm615, %v577, 0.0
      %v652 = vsel %vm616, %v612, 0.0
      %v653 = vpack.c.bf16 %v505, %v504
      %v654 = vpack.c.bf16 %v507, %v506
      %v655 = vpack.c.bf16 %v509, %v508
      %v656 = vpack.c.bf16 %v511, %v510
      %v657 = vpack.c.bf16 %v513, %v512
      %v658 = vpack.c.bf16 %v515, %v514
      %v659 = vpack.c.bf16 %v517, %v516
      %v660 = vpack.c.bf16 %v519, %v518
      %v661 = vpack.c.bf16 %v521, %v520
      %v662 = vpack.c.bf16 %v523, %v522
      %v663 = vpack.c.bf16 %v525, %v524
      %v664 = vpack.c.bf16 %v527, %v526
      %v665 = vpack.c.bf16 %v529, %v528
      %v666 = vpack.c.bf16 %v531, %v530
      %v667 = vpack.c.bf16 %v533, %v532
      %v668 = vpack.c.bf16 %v535, %v534
      %669 = vst [vmem:[#allocation3] sm:$0xff] %v653
      %670 = vst [vmem:[#allocation3 + $0x48] sm:$0xff] %v654
      %671 = vst [vmem:[#allocation3 + $0x90] sm:$0xff] %v655
      %672 = vst [vmem:[#allocation3 + $0xd8] sm:$0xff] %v656
      %673 = vst [vmem:[#allocation3 + $0x120] sm:$0xff] %v657
      %674 = vst [vmem:[#allocation3 + $0x168] sm:$0xff] %v658
      %675 = vst [vmem:[#allocation3 + $0x1b0] sm:$0xff] %v659
      %676 = vst [vmem:[#allocation3 + $0x1f8] sm:$0xff] %v660
      %677 = vst [vmem:[#allocation3 + $0x240] sm:$0xff] %v661
      %678 = vst [vmem:[#allocation3 + $0x288] sm:$0xff] %v662
      %679 = vst [vmem:[#allocation3 + $0x2d0] sm:$0xff] %v663
      %680 = vst [vmem:[#allocation3 + $0x318] sm:$0xff] %v664
      %681 = vst [vmem:[#allocation3 + $0x360] sm:$0xff] %v665
      %682 = vst [vmem:[#allocation3 + $0x3a8] sm:$0xff] %v666
      %683 = vst [vmem:[#allocation3 + $0x3f0] sm:$0xff] %v667
      %684 = vst [vmem:[#allocation3 + $0x438] sm:$0xff] %v668
      %v685 = vpack.c.bf16 %v392, %v391
      %v686 = vpack.c.bf16 %v394, %v393
      %v687 = vpack.c.bf16 %v396, %v395
      %v688 = vpack.c.bf16 %v398, %v397
      %v689 = vpack.c.bf16 %v400, %v399
      %v690 = vpack.c.bf16 %v402, %v401
      %v691 = vpack.c.bf16 %v404, %v403
      %v692 = vpack.c.bf16 %v406, %v405
      %v693 = vpack.c.bf16 %v408, %v407
      %v694 = vpack.c.bf16 %v410, %v409
      %v695 = vpack.c.bf16 %v412, %v411
      %v696 = vpack.c.bf16 %v414, %v413
      %v697 = vpack.c.bf16 %v416, %v415
      %v698 = vpack.c.bf16 %v418, %v417
      %v699 = vpack.c.bf16 %v420, %v419
      %v700 = vpack.c.bf16 %v422, %v421
      %701 = vst [vmem:[#allocation3 + $0x8] sm:$0xff] %v685
      %702 = vst [vmem:[#allocation3 + $0x50] sm:$0xff] %v686
      %703 = vst [vmem:[#allocation3 + $0x98] sm:$0xff] %v687
      %704 = vst [vmem:[#allocation3 + $0xe0] sm:$0xff] %v688
      %705 = vst [vmem:[#allocation3 + $0x128] sm:$0xff] %v689
      %706 = vst [vmem:[#allocation3 + $0x170] sm:$0xff] %v690
      %707 = vst [vmem:[#allocation3 + $0x1b8] sm:$0xff] %v691
      %708 = vst [vmem:[#allocation3 + $0x200] sm:$0xff] %v692
      %709 = vst [vmem:[#allocation3 + $0x248] sm:$0xff] %v693
      %710 = vst [vmem:[#allocation3 + $0x290] sm:$0xff] %v694
      %711 = vst [vmem:[#allocation3 + $0x2d8] sm:$0xff] %v695
      %712 = vst [vmem:[#allocation3 + $0x320] sm:$0xff] %v696
      %713 = vst [vmem:[#allocation3 + $0x368] sm:$0xff] %v697
      %714 = vst [vmem:[#allocation3 + $0x3b0] sm:$0xff] %v698
      %715 = vst [vmem:[#allocation3 + $0x3f8] sm:$0xff] %v699
      %716 = vst [vmem:[#allocation3 + $0x440] sm:$0xff] %v700
      %v717 = vpack.c.bf16 %v618, %v617
      %v718 = vpack.c.bf16 %v620, %v619
      %v719 = vpack.c.bf16 %v622, %v621
      %v720 = vpack.c.bf16 %v624, %v623
      %v721 = vpack.c.bf16 %v626, %v625
      %v722 = vpack.c.bf16 %v628, %v627
      %v723 = vpack.c.bf16 %v630, %v629
      %v724 = vpack.c.bf16 %v632, %v631
      %v725 = vpack.c.bf16 %v634, %v633
      %v726 = vpack.c.bf16 %v636, %v635
      %v727 = vpack.c.bf16 %v638, %v637
      %v728 = vpack.c.bf16 %v640, %v639
      %v729 = vpack.c.bf16 %v642, %v641
      %v730 = vpack.c.bf16 %v644, %v643
      %v731 = vpack.c.bf16 %v646, %v645
      %v732 = vpack.c.bf16 %v648, %v647
      %733 = vst [vmem:[#allocation3 + $0x10] sm:$0xff] %v717
      %734 = vst [vmem:[#allocation3 + $0x58] sm:$0xff] %v718
      %735 = vst [vmem:[#allocation3 + $0xa0] sm:$0xff] %v719
      %736 = vst [vmem:[#allocation3 + $0xe8] sm:$0xff] %v720
      %737 = vst [vmem:[#allocation3 + $0x130] sm:$0xff] %v721
      %738 = vst [vmem:[#allocation3 + $0x178] sm:$0xff] %v722
      %739 = vst [vmem:[#allocation3 + $0x1c0] sm:$0xff] %v723
      %740 = vst [vmem:[#allocation3 + $0x208] sm:$0xff] %v724
      %741 = vst [vmem:[#allocation3 + $0x250] sm:$0xff] %v725
      %742 = vst [vmem:[#allocation3 + $0x298] sm:$0xff] %v726
      %743 = vst [vmem:[#allocation3 + $0x2e0] sm:$0xff] %v727
      %744 = vst [vmem:[#allocation3 + $0x328] sm:$0xff] %v728
      %745 = vst [vmem:[#allocation3 + $0x370] sm:$0xff] %v729
      %746 = vst [vmem:[#allocation3 + $0x3b8] sm:$0xff] %v730
      %747 = vst [vmem:[#allocation3 + $0x400] sm:$0xff] %v731
      %748 = vst [vmem:[#allocation3 + $0x448] sm:$0xff] %v732
      %v749 = vpack.c.bf16 %v537, %v536
      %750 = vst [vmem:[#allocation3 + $0x18] sm:$0xff] %v654
      %751 = vst [vmem:[#allocation3 + $0x60] sm:$0xff] %v655
      %752 = vst [vmem:[#allocation3 + $0xa8] sm:$0xff] %v656
      %753 = vst [vmem:[#allocation3 + $0xf0] sm:$0xff] %v657
      %754 = vst [vmem:[#allocation3 + $0x138] sm:$0xff] %v658
      %755 = vst [vmem:[#allocation3 + $0x180] sm:$0xff] %v659
      %756 = vst [vmem:[#allocation3 + $0x1c8] sm:$0xff] %v660
      %757 = vst [vmem:[#allocation3 + $0x210] sm:$0xff] %v661
      %758 = vst [vmem:[#allocation3 + $0x258] sm:$0xff] %v662
      %759 = vst [vmem:[#allocation3 + $0x2a0] sm:$0xff] %v663
      %760 = vst [vmem:[#allocation3 + $0x2e8] sm:$0xff] %v664
      %761 = vst [vmem:[#allocation3 + $0x330] sm:$0xff] %v665
      %762 = vst [vmem:[#allocation3 + $0x378] sm:$0xff] %v666
      %763 = vst [vmem:[#allocation3 + $0x3c0] sm:$0xff] %v667
      %764 = vst [vmem:[#allocation3 + $0x408] sm:$0xff] %v668
      %765 = vst [vmem:[#allocation3 + $0x450] sm:$0xff] %v749
      %v766 = vpack.c.bf16 %v424, %v423
      %767 = vst [vmem:[#allocation3 + $0x20] sm:$0xff] %v686
      %768 = vst [vmem:[#allocation3 + $0x68] sm:$0xff] %v687
      %769 = vst [vmem:[#allocation3 + $0xb0] sm:$0xff] %v688
      %770 = vst [vmem:[#allocation3 + $0xf8] sm:$0xff] %v689
      %771 = vst [vmem:[#allocation3 + $0x140] sm:$0xff] %v690
      %772 = vst [vmem:[#allocation3 + $0x188] sm:$0xff] %v691
      %773 = vst [vmem:[#allocation3 + $0x1d0] sm:$0xff] %v692
      %774 = vst [vmem:[#allocation3 + $0x218] sm:$0xff] %v693
      %775 = vst [vmem:[#allocation3 + $0x260] sm:$0xff] %v694
      %776 = vst [vmem:[#allocation3 + $0x2a8] sm:$0xff] %v695
      %777 = vst [vmem:[#allocation3 + $0x2f0] sm:$0xff] %v696
      %778 = vst [vmem:[#allocation3 + $0x338] sm:$0xff] %v697
      %779 = vst [vmem:[#allocation3 + $0x380] sm:$0xff] %v698
      %780 = vst [vmem:[#allocation3 + $0x3c8] sm:$0xff] %v699
      %781 = vst [vmem:[#allocation3 + $0x410] sm:$0xff] %v700
      %782 = vst [vmem:[#allocation3 + $0x458] sm:$0xff] %v766
      %v783 = vpack.c.bf16 %v650, %v649
      %784 = vst [vmem:[#allocation3 + $0x28] sm:$0xff] %v718
      %785 = vst [vmem:[#allocation3 + $0x70] sm:$0xff] %v719
      %786 = vst [vmem:[#allocation3 + $0xb8] sm:$0xff] %v720
      %787 = vst [vmem:[#allocation3 + $0x100] sm:$0xff] %v721
      %788 = vst [vmem:[#allocation3 + $0x148] sm:$0xff] %v722
      %789 = vst [vmem:[#allocation3 + $0x190] sm:$0xff] %v723
      %790 = vst [vmem:[#allocation3 + $0x1d8] sm:$0xff] %v724
      %791 = vst [vmem:[#allocation3 + $0x220] sm:$0xff] %v725
      %792 = vst [vmem:[#allocation3 + $0x268] sm:$0xff] %v726
      %793 = vst [vmem:[#allocation3 + $0x2b0] sm:$0xff] %v727
      %794 = vst [vmem:[#allocation3 + $0x2f8] sm:$0xff] %v728
      %795 = vst [vmem:[#allocation3 + $0x340] sm:$0xff] %v729
      %796 = vst [vmem:[#allocation3 + $0x388] sm:$0xff] %v730
      %797 = vst [vmem:[#allocation3 + $0x3d0] sm:$0xff] %v731
      %798 = vst [vmem:[#allocation3 + $0x418] sm:$0xff] %v732
      %799 = vst [vmem:[#allocation3 + $0x460] sm:$0xff] %v783
      %v800 = vpack.c.bf16 %v539, %v538
      %801 = vst [vmem:[#allocation3 + $0x30] sm:$0xff] %v655
      %802 = vst [vmem:[#allocation3 + $0x78] sm:$0xff] %v656
      %803 = vst [vmem:[#allocation3 + $0xc0] sm:$0xff] %v657
      %804 = vst [vmem:[#allocation3 + $0x108] sm:$0xff] %v658
      %805 = vst [vmem:[#allocation3 + $0x150] sm:$0xff] %v659
      %806 = vst [vmem:[#allocation3 + $0x198] sm:$0xff] %v660
      %807 = vst [vmem:[#allocation3 + $0x1e0] sm:$0xff] %v661
      %808 = vst [vmem:[#allocation3 + $0x228] sm:$0xff] %v662
      %809 = vst [vmem:[#allocation3 + $0x270] sm:$0xff] %v663
      %810 = vst [vmem:[#allocation3 + $0x2b8] sm:$0xff] %v664
      %811 = vst [vmem:[#allocation3 + $0x300] sm:$0xff] %v665
      %812 = vst [vmem:[#allocation3 + $0x348] sm:$0xff] %v666
      %813 = vst [vmem:[#allocation3 + $0x390] sm:$0xff] %v667
      %814 = vst [vmem:[#allocation3 + $0x3d8] sm:$0xff] %v668
      %815 = vst [vmem:[#allocation3 + $0x420] sm:$0xff] %v749
      %816 = vst [vmem:[#allocation3 + $0x468] sm:$0xff] %v800
      %v817 = vpack.c.bf16 %v426, %v425
      %818 = vst [vmem:[#allocation3 + $0x38] sm:$0xff] %v687
      %819 = vst [vmem:[#allocation3 + $0x80] sm:$0xff] %v688
      %820 = vst [vmem:[#allocation3 + $0xc8] sm:$0xff] %v689
      %821 = vst [vmem:[#allocation3 + $0x110] sm:$0xff] %v690
      %822 = vst [vmem:[#allocation3 + $0x158] sm:$0xff] %v691
      %823 = vst [vmem:[#allocation3 + $0x1a0] sm:$0xff] %v692
      %824 = vst [vmem:[#allocation3 + $0x1e8] sm:$0xff] %v693
      %825 = vst [vmem:[#allocation3 + $0x230] sm:$0xff] %v694
      %826 = vst [vmem:[#allocation3 + $0x278] sm:$0xff] %v695
      %827 = vst [vmem:[#allocation3 + $0x2c0] sm:$0xff] %v696
      %828 = vst [vmem:[#allocation3 + $0x308] sm:$0xff] %v697
      %829 = vst [vmem:[#allocation3 + $0x350] sm:$0xff] %v698
      %830 = vst [vmem:[#allocation3 + $0x398] sm:$0xff] %v699
      %831 = vst [vmem:[#allocation3 + $0x3e0] sm:$0xff] %v700
      %832 = vst [vmem:[#allocation3 + $0x428] sm:$0xff] %v766
      %833 = vst [vmem:[#allocation3 + $0x470] sm:$0xff] %v817
      %v834 = vpack.c.bf16 %v652, %v651
      %835 = vst [vmem:[#allocation3 + $0x40] sm:$0xff] %v719
      %836 = vst [vmem:[#allocation3 + $0x88] sm:$0xff] %v720
      %837 = vst [vmem:[#allocation3 + $0xd0] sm:$0xff] %v721
      %838 = vst [vmem:[#allocation3 + $0x118] sm:$0xff] %v722
      %839 = vst [vmem:[#allocation3 + $0x160] sm:$0xff] %v723
      %840 = vst [vmem:[#allocation3 + $0x1a8] sm:$0xff] %v724
      %841 = vst [vmem:[#allocation3 + $0x1f0] sm:$0xff] %v725
      %842 = vst [vmem:[#allocation3 + $0x238] sm:$0xff] %v726
      %843 = vst [vmem:[#allocation3 + $0x280] sm:$0xff] %v727
      %844 = vst [vmem:[#allocation3 + $0x2c8] sm:$0xff] %v728
      %845 = vst [vmem:[#allocation3 + $0x310] sm:$0xff] %v729
      %846 = vst [vmem:[#allocation3 + $0x358] sm:$0xff] %v730
      %847 = vst [vmem:[#allocation3 + $0x3a0] sm:$0xff] %v731
      %848 = vst [vmem:[#allocation3 + $0x3e8] sm:$0xff] %v732
      %849 = vst [vmem:[#allocation3 + $0x430] sm:$0xff] %v783
      %850 = vst [vmem:[#allocation3 + $0x478] sm:$0xff] %v834
      %v851 = vld [vmem:[#allocation3] sm:$0xff]
      %v852 = vld [vmem:[#allocation3 + $0x8] sm:$0xff]
      %v853 = vld [vmem:[#allocation3 + $0x10] sm:$0xff]
      %v854 = vld [vmem:[#allocation3 + $0x18] sm:$0xff]
      %v855 = vld [vmem:[#allocation3 + $0x20] sm:$0xff]
      %v856 = vld [vmem:[#allocation3 + $0x28] sm:$0xff]
      %v857 = vld [vmem:[#allocation3 + $0x30] sm:$0xff]
      %v858 = vld [vmem:[#allocation3 + $0x38] sm:$0xff]
      %v859 = vld [vmem:[#allocation3 + $0x40] sm:$0xff]
      %v860 = vld [vmem:[#allocation3 + $0x48] sm:$0xff]
      %v861 = vld [vmem:[#allocation3 + $0x50] sm:$0xff]
      %v862 = vld [vmem:[#allocation3 + $0x58] sm:$0xff]
      %v863 = vld [vmem:[#allocation3 + $0x60] sm:$0xff]
      %v864 = vld [vmem:[#allocation3 + $0x68] sm:$0xff]
      %v865 = vld [vmem:[#allocation3 + $0x70] sm:$0xff]
      %v866 = vld [vmem:[#allocation3 + $0x78] sm:$0xff]
      %v867 = vld [vmem:[#allocation3 + $0x80] sm:$0xff]
      %v868 = vld [vmem:[#allocation3 + $0x88] sm:$0xff]
      %v869 = vld [vmem:[#allocation3 + $0x90] sm:$0xff]
      %v870 = vld [vmem:[#allocation3 + $0x98] sm:$0xff]
      %v871 = vld [vmem:[#allocation3 + $0xa0] sm:$0xff]
      %v872 = vld [vmem:[#allocation3 + $0xa8] sm:$0xff]
      %v873 = vld [vmem:[#allocation3 + $0xb0] sm:$0xff]
      %v874 = vld [vmem:[#allocation3 + $0xb8] sm:$0xff]
      %v875 = vld [vmem:[#allocation3 + $0xc0] sm:$0xff]
      %v876 = vld [vmem:[#allocation3 + $0xc8] sm:$0xff]
      %v877 = vld [vmem:[#allocation3 + $0xd0] sm:$0xff]
      %v878 = vld [vmem:[#allocation3 + $0xd8] sm:$0xff]
      %v879 = vld [vmem:[#allocation3 + $0xe0] sm:$0xff]
      %v880 = vld [vmem:[#allocation3 + $0xe8] sm:$0xff]
      %v881 = vld [vmem:[#allocation3 + $0xf0] sm:$0xff]
      %v882 = vld [vmem:[#allocation3 + $0xf8] sm:$0xff]
      %v883 = vld [vmem:[#allocation3 + $0x100] sm:$0xff]
      %v884 = vld [vmem:[#allocation3 + $0x108] sm:$0xff]
      %v885 = vld [vmem:[#allocation3 + $0x110] sm:$0xff]
      %v886 = vld [vmem:[#allocation3 + $0x118] sm:$0xff]
      %v887 = vld [vmem:[#allocation3 + $0x120] sm:$0xff]
      %v888 = vld [vmem:[#allocation3 + $0x128] sm:$0xff]
      %v889 = vld [vmem:[#allocation3 + $0x130] sm:$0xff]
      %v890 = vld [vmem:[#allocation3 + $0x138] sm:$0xff]
      %v891 = vld [vmem:[#allocation3 + $0x140] sm:$0xff]
      %v892 = vld [vmem:[#allocation3 + $0x148] sm:$0xff]
      %v893 = vld [vmem:[#allocation3 + $0x150] sm:$0xff]
      %v894 = vld [vmem:[#allocation3 + $0x158] sm:$0xff]
      %v895 = vld [vmem:[#allocation3 + $0x160] sm:$0xff]
      %v896 = vld [vmem:[#allocation3 + $0x168] sm:$0xff]
      %v897 = vld [vmem:[#allocation3 + $0x170] sm:$0xff]
      %v898 = vld [vmem:[#allocation3 + $0x178] sm:$0xff]
      %v899 = vld [vmem:[#allocation3 + $0x180] sm:$0xff]
      %v900 = vld [vmem:[#allocation3 + $0x188] sm:$0xff]
      %v901 = vld [vmem:[#allocation3 + $0x190] sm:$0xff]
      %v902 = vld [vmem:[#allocation3 + $0x198] sm:$0xff]
      %v903 = vld [vmem:[#allocation3 + $0x1a0] sm:$0xff]
      %v904 = vld [vmem:[#allocation3 + $0x1a8] sm:$0xff]
      %v905 = vld [vmem:[#allocation3 + $0x1b0] sm:$0xff]
      %v906 = vld [vmem:[#allocation3 + $0x1b8] sm:$0xff]
      %v907 = vld [vmem:[#allocation3 + $0x1c0] sm:$0xff]
      %v908 = vld [vmem:[#allocation3 + $0x1c8] sm:$0xff]
      %v909 = vld [vmem:[#allocation3 + $0x1d0] sm:$0xff]
      %v910 = vld [vmem:[#allocation3 + $0x1d8] sm:$0xff]
      %v911 = vld [vmem:[#allocation3 + $0x1e0] sm:$0xff]
      %v912 = vld [vmem:[#allocation3 + $0x1e8] sm:$0xff]
      %v913 = vld [vmem:[#allocation3 + $0x1f0] sm:$0xff]
      %v914 = vld [vmem:[#allocation3 + $0x1f8] sm:$0xff]
      %v915 = vld [vmem:[#allocation3 + $0x200] sm:$0xff]
      %v916 = vld [vmem:[#allocation3 + $0x208] sm:$0xff]
      %v917 = vld [vmem:[#allocation3 + $0x210] sm:$0xff]
      %v918 = vld [vmem:[#allocation3 + $0x218] sm:$0xff]
      %v919 = vld [vmem:[#allocation3 + $0x220] sm:$0xff]
      %v920 = vld [vmem:[#allocation3 + $0x228] sm:$0xff]
      %v921 = vld [vmem:[#allocation3 + $0x230] sm:$0xff]
      %v922 = vld [vmem:[#allocation3 + $0x238] sm:$0xff]
      %v923 = vld [vmem:[#allocation3 + $0x240] sm:$0xff]
      %v924 = vld [vmem:[#allocation3 + $0x248] sm:$0xff]
      %v925 = vld [vmem:[#allocation3 + $0x250] sm:$0xff]
      %v926 = vld [vmem:[#allocation3 + $0x258] sm:$0xff]
      %v927 = vld [vmem:[#allocation3 + $0x260] sm:$0xff]
      %v928 = vld [vmem:[#allocation3 + $0x268] sm:$0xff]
      %v929 = vld [vmem:[#allocation3 + $0x270] sm:$0xff]
      %v930 = vld [vmem:[#allocation3 + $0x278] sm:$0xff]
      %v931 = vld [vmem:[#allocation3 + $0x280] sm:$0xff]
      %v932 = vld [vmem:[#allocation3 + $0x288] sm:$0xff]
      %v933 = vld [vmem:[#allocation3 + $0x290] sm:$0xff]
      %v934 = vld [vmem:[#allocation3 + $0x298] sm:$0xff]
      %v935 = vld [vmem:[#allocation3 + $0x2a0] sm:$0xff]
      %v936 = vld [vmem:[#allocation3 + $0x2a8] sm:$0xff]
      %v937 = vld [vmem:[#allocation3 + $0x2b0] sm:$0xff]
      %v938 = vld [vmem:[#allocation3 + $0x2b8] sm:$0xff]
      %v939 = vld [vmem:[#allocation3 + $0x2c0] sm:$0xff]
      %v940 = vld [vmem:[#allocation3 + $0x2c8] sm:$0xff]
      %v941 = vld [vmem:[#allocation3 + $0x2d0] sm:$0xff]
      %v942 = vld [vmem:[#allocation3 + $0x2d8] sm:$0xff]
      %v943 = vld [vmem:[#allocation3 + $0x2e0] sm:$0xff]
      %v944 = vld [vmem:[#allocation3 + $0x2e8] sm:$0xff]
      %v945 = vld [vmem:[#allocation3 + $0x2f0] sm:$0xff]
      %v946 = vld [vmem:[#allocation3 + $0x2f8] sm:$0xff]
      %v947 = vld [vmem:[#allocation3 + $0x300] sm:$0xff]
      %v948 = vld [vmem:[#allocation3 + $0x308] sm:$0xff]
      %v949 = vld [vmem:[#allocation3 + $0x310] sm:$0xff]
      %v950 = vld [vmem:[#allocation3 + $0x318] sm:$0xff]
      %v951 = vld [vmem:[#allocation3 + $0x320] sm:$0xff]
      %v952 = vld [vmem:[#allocation3 + $0x328] sm:$0xff]
      %v953 = vld [vmem:[#allocation3 + $0x330] sm:$0xff]
      %v954 = vld [vmem:[#allocation3 + $0x338] sm:$0xff]
      %v955 = vld [vmem:[#allocation3 + $0x340] sm:$0xff]
      %v956 = vld [vmem:[#allocation3 + $0x348] sm:$0xff]
      %v957 = vld [vmem:[#allocation3 + $0x350] sm:$0xff]
      %v958 = vld [vmem:[#allocation3 + $0x358] sm:$0xff]
      %v959 = vld [vmem:[#allocation3 + $0x360] sm:$0xff]
      %v960 = vld [vmem:[#allocation3 + $0x368] sm:$0xff]
      %v961 = vld [vmem:[#allocation3 + $0x370] sm:$0xff]
      %v962 = vld [vmem:[#allocation3 + $0x378] sm:$0xff]
      %v963 = vld [vmem:[#allocation3 + $0x380] sm:$0xff]
      %v964 = vld [vmem:[#allocation3 + $0x388] sm:$0xff]
      %v965 = vld [vmem:[#allocation3 + $0x390] sm:$0xff]
      %v966 = vld [vmem:[#allocation3 + $0x398] sm:$0xff]
      %v967 = vld [vmem:[#allocation3 + $0x3a0] sm:$0xff]
      %v968 = vld [vmem:[#allocation3 + $0x3a8] sm:$0xff]
      %v969 = vld [vmem:[#allocation3 + $0x3b0] sm:$0xff]
      %v970 = vld [vmem:[#allocation3 + $0x3b8] sm:$0xff]
      %v971 = vld [vmem:[#allocation3 + $0x3c0] sm:$0xff]
      %v972 = vld [vmem:[#allocation3 + $0x3c8] sm:$0xff]
      %v973 = vld [vmem:[#allocation3 + $0x3d0] sm:$0xff]
      %v974 = vld [vmem:[#allocation3 + $0x3d8] sm:$0xff]
      %v975 = vld [vmem:[#allocation3 + $0x3e0] sm:$0xff]
      %v976 = vld [vmem:[#allocation3 + $0x3e8] sm:$0xff]
      %v977 = vld [vmem:[#allocation3 + $0x3f0] sm:$0xff]
      %v978 = vld [vmem:[#allocation3 + $0x3f8] sm:$0xff]
      %v979 = vld [vmem:[#allocation3 + $0x400] sm:$0xff]
      %v980 = vld [vmem:[#allocation3 + $0x408] sm:$0xff]
      %v981 = vld [vmem:[#allocation3 + $0x410] sm:$0xff]
      %v982 = vld [vmem:[#allocation3 + $0x418] sm:$0xff]
      %v983 = vld [vmem:[#allocation3 + $0x420] sm:$0xff]
      %v984 = vld [vmem:[#allocation3 + $0x428] sm:$0xff]
      %v985 = vld [vmem:[#allocation3 + $0x430] sm:$0xff]
      %v986 = vld [vmem:[#allocation3 + $0x438] sm:$0xff]
      %v987 = vld [vmem:[#allocation3 + $0x440] sm:$0xff]
      %v988 = vld [vmem:[#allocation3 + $0x448] sm:$0xff]
      %v989 = vld [vmem:[#allocation3 + $0x450] sm:$0xff]
      %v990 = vld [vmem:[#allocation3 + $0x458] sm:$0xff]
      %v991 = vld [vmem:[#allocation3 + $0x460] sm:$0xff]
      %v992 = vld [vmem:[#allocation3 + $0x468] sm:$0xff]
      %v993 = vld [vmem:[#allocation3 + $0x470] sm:$0xff]
      %v994 = vld [vmem:[#allocation3 + $0x478] sm:$0xff]
      %v995 = vld [vmem:[%s1] sm:$0xf]
      %v996 = vld [vmem:[%s1 + $0x4] sm:$0xf]
      %v997 = vld [vmem:[%s1 + $0x8] sm:$0xf]
      %v998 = vld [vmem:[%s1 + $0xc] sm:$0xf]
      %v999 = vld [vmem:[%s1 + $0x10] sm:$0xf]
      %v1000 = vld [vmem:[%s1 + $0x14] sm:$0xf]
      %v1001 = vld [vmem:[%s1 + $0x18] sm:$0xf]
      %v1002 = vld [vmem:[%s1 + $0x1c] sm:$0xf]
      %v1003 = vld [vmem:[%s1 + $0x20] sm:$0xf]
      %v1004 = vld [vmem:[%s1 + $0x24] sm:$0xf]
      %v1005 = vld [vmem:[%s1 + $0x28] sm:$0xf]
      %v1006 = vld [vmem:[%s1 + $0x2c] sm:$0xf]
      %v1007 = vld [vmem:[%s1 + $0x30] sm:$0xf]
      %v1008 = vld [vmem:[%s1 + $0x34] sm:$0xf]
      %v1009 = vld [vmem:[%s1 + $0x38] sm:$0xf]
      %v1010 = vld [vmem:[%s1 + $0x3c] sm:$0xf]
      %v1011 = vld [vmem:[%s1 + $0x40] sm:$0xf]
      %v1012 = vld [vmem:[%s1 + $0x44] sm:$0xf]
      %v1013 = vld [vmem:[%s1 + $0x48] sm:$0xf]
      %v1014 = vld [vmem:[%s1 + $0x4c] sm:$0xf]
      %v1015 = vld [vmem:[%s1 + $0x50] sm:$0xf]
      %v1016 = vld [vmem:[%s1 + $0x54] sm:$0xf]
      %v1017 = vld [vmem:[%s1 + $0x58] sm:$0xf]
      %v1018 = vld [vmem:[%s1 + $0x5c] sm:$0xf]
      %v1019 = vld [vmem:[%s1 + $0x60] sm:$0xf]
      %v1020 = vld [vmem:[%s1 + $0x64] sm:$0xf]
      %v1021 = vld [vmem:[%s1 + $0x68] sm:$0xf]
      %v1022 = vld [vmem:[%s1 + $0x6c] sm:$0xf]
      %v1023 = vld [vmem:[%s1 + $0x70] sm:$0xf]
      %v1024 = vld [vmem:[%s1 + $0x74] sm:$0xf]
      %v1025 = vld [vmem:[%s1 + $0x78] sm:$0xf]
      %v1026 = vld [vmem:[%s1 + $0x7c] sm:$0xf]
      %v1027 = vld [vmem:[%s1 + $0x80] sm:$0xf]
      %v1028 = vld [vmem:[%s1 + $0x84] sm:$0xf]
      %v1029 = vld [vmem:[%s1 + $0x88] sm:$0xf]
      %v1030 = vld [vmem:[%s1 + $0x8c] sm:$0xf]
      %v1031 = vld [vmem:[%s1 + $0x90] sm:$0xf]
      %v1032 = vld [vmem:[%s1 + $0x94] sm:$0xf]
      %v1033 = vld [vmem:[%s1 + $0x98] sm:$0xf]
      %v1034 = vld [vmem:[%s1 + $0x9c] sm:$0xf]
      %v1035 = vld [vmem:[%s1 + $0xa0] sm:$0xf]
      %v1036 = vld [vmem:[%s1 + $0xa4] sm:$0xf]
      %v1037 = vld [vmem:[%s1 + $0xa8] sm:$0xf]
      %v1038 = vld [vmem:[%s1 + $0xac] sm:$0xf]
      %v1039 = vld [vmem:[%s1 + $0xb0] sm:$0xf]
      %v1040 = vld [vmem:[%s1 + $0xb4] sm:$0xf]
      %v1041 = vld [vmem:[%s1 + $0xb8] sm:$0xf]
      %v1042 = vld [vmem:[%s1 + $0xbc] sm:$0xf]
      %v1043 = vld [vmem:[%s1 + $0xc0] sm:$0xf]
      %v1044 = vld [vmem:[%s1 + $0xc4] sm:$0xf]
      %v1045 = vld [vmem:[%s1 + $0xc8] sm:$0xf]
      %v1046 = vld [vmem:[%s1 + $0xcc] sm:$0xf]
      %v1047 = vld [vmem:[%s1 + $0xd0] sm:$0xf]
      %v1048 = vld [vmem:[%s1 + $0xd4] sm:$0xf]
      %v1049 = vld [vmem:[%s1 + $0xd8] sm:$0xf]
      %v1050 = vld [vmem:[%s1 + $0xdc] sm:$0xf]
      %v1051 = vld [vmem:[%s1 + $0xe0] sm:$0xf]
      %v1052 = vld [vmem:[%s1 + $0xe4] sm:$0xf]
      %v1053 = vld [vmem:[%s1 + $0xe8] sm:$0xf]
      %v1054 = vld [vmem:[%s1 + $0xec] sm:$0xf]
      %v1055 = vld [vmem:[%s1 + $0xf0] sm:$0xf]
      %v1056 = vld [vmem:[%s1 + $0xf4] sm:$0xf]
      %v1057 = vld [vmem:[%s1 + $0xf8] sm:$0xf]
      %v1058 = vld [vmem:[%s1 + $0xfc] sm:$0xf]
      %v1059 = vld [vmem:[%s1 + $0x100] sm:$0xf]
      %v1060 = vld [vmem:[%s1 + $0x104] sm:$0xf]
      %v1061 = vld [vmem:[%s1 + $0x108] sm:$0xf]
      %v1062 = vld [vmem:[%s1 + $0x10c] sm:$0xf]
      %v1063 = vld [vmem:[%s1 + $0x110] sm:$0xf]
      %v1064 = vld [vmem:[%s1 + $0x114] sm:$0xf]
      %v1065 = vld [vmem:[%s1 + $0x118] sm:$0xf]
      %v1066 = vld [vmem:[%s1 + $0x11c] sm:$0xf]
      %v1067 = vld [vmem:[%s1 + $0x120] sm:$0xf]
      %v1068 = vld [vmem:[%s1 + $0x124] sm:$0xf]
      %v1069 = vld [vmem:[%s1 + $0x128] sm:$0xf]
      %v1070 = vld [vmem:[%s1 + $0x12c] sm:$0xf]
      %v1071 = vld [vmem:[%s1 + $0x130] sm:$0xf]
      %v1072 = vld [vmem:[%s1 + $0x134] sm:$0xf]
      %v1073 = vld [vmem:[%s1 + $0x138] sm:$0xf]
      %v1074 = vld [vmem:[%s1 + $0x13c] sm:$0xf]
      %v1075 = vld [vmem:[%s1 + $0x140] sm:$0xf]
      %v1076 = vld [vmem:[%s1 + $0x144] sm:$0xf]
      %v1077 = vld [vmem:[%s1 + $0x148] sm:$0xf]
      %v1078 = vld [vmem:[%s1 + $0x14c] sm:$0xf]
      %v1079 = vld [vmem:[%s1 + $0x150] sm:$0xf]
      %v1080 = vld [vmem:[%s1 + $0x154] sm:$0xf]
      %v1081 = vld [vmem:[%s1 + $0x158] sm:$0xf]
      %v1082 = vld [vmem:[%s1 + $0x15c] sm:$0xf]
      %v1083 = vld [vmem:[%s1 + $0x160] sm:$0xf]
      %v1084 = vld [vmem:[%s1 + $0x164] sm:$0xf]
      %v1085 = vld [vmem:[%s1 + $0x168] sm:$0xf]
      %v1086 = vld [vmem:[%s1 + $0x16c] sm:$0xf]
      %v1087 = vld [vmem:[%s1 + $0x170] sm:$0xf]
      %v1088 = vld [vmem:[%s1 + $0x174] sm:$0xf]
      %v1089 = vld [vmem:[%s1 + $0x178] sm:$0xf]
      %v1090 = vld [vmem:[%s1 + $0x17c] sm:$0xf]
      %v1091 = vld [vmem:[%s1 + $0x180] sm:$0xf]
      %v1092 = vld [vmem:[%s1 + $0x184] sm:$0xf]
      %v1093 = vld [vmem:[%s1 + $0x188] sm:$0xf]
      %v1094 = vld [vmem:[%s1 + $0x18c] sm:$0xf]
      %v1095 = vld [vmem:[%s1 + $0x190] sm:$0xf]
      %v1096 = vld [vmem:[%s1 + $0x194] sm:$0xf]
      %v1097 = vld [vmem:[%s1 + $0x198] sm:$0xf]
      %v1098 = vld [vmem:[%s1 + $0x19c] sm:$0xf]
      %v1099 = vld [vmem:[%s1 + $0x1a0] sm:$0xf]
      %v1100 = vld [vmem:[%s1 + $0x1a4] sm:$0xf]
      %v1101 = vld [vmem:[%s1 + $0x1a8] sm:$0xf]
      %v1102 = vld [vmem:[%s1 + $0x1ac] sm:$0xf]
      %v1103 = vld [vmem:[%s1 + $0x1b0] sm:$0xf]
      %v1104 = vld [vmem:[%s1 + $0x1b4] sm:$0xf]
      %v1105 = vld [vmem:[%s1 + $0x1b8] sm:$0xf]
      %v1106 = vld [vmem:[%s1 + $0x1bc] sm:$0xf]
      %v1107 = vld [vmem:[%s1 + $0x1c0] sm:$0xf]
      %v1108 = vld [vmem:[%s1 + $0x1c4] sm:$0xf]
      %v1109 = vld [vmem:[%s1 + $0x1c8] sm:$0xf]
      %v1110 = vld [vmem:[%s1 + $0x1cc] sm:$0xf]
      %v1111 = vld [vmem:[%s1 + $0x1d0] sm:$0xf]
      %v1112 = vld [vmem:[%s1 + $0x1d4] sm:$0xf]
      %v1113 = vld [vmem:[%s1 + $0x1d8] sm:$0xf]
      %v1114 = vld [vmem:[%s1 + $0x1dc] sm:$0xf]
      %v1115 = vld [vmem:[%s1 + $0x1e0] sm:$0xf]
      %v1116 = vld [vmem:[%s1 + $0x1e4] sm:$0xf]
      %v1117 = vld [vmem:[%s1 + $0x1e8] sm:$0xf]
      %v1118 = vld [vmem:[%s1 + $0x1ec] sm:$0xf]
      %v1119 = vld [vmem:[%s1 + $0x1f0] sm:$0xf]
      %v1120 = vld [vmem:[%s1 + $0x1f4] sm:$0xf]
      %v1121 = vld [vmem:[%s1 + $0x1f8] sm:$0xf]
      %v1122 = vld [vmem:[%s1 + $0x1fc] sm:$0xf]
      %v1123 = vld [vmem:[%s1 + $0x200] sm:$0xf]
      %v1124 = vld [vmem:[%s1 + $0x204] sm:$0xf]
      %v1125 = vld [vmem:[%s1 + $0x208] sm:$0xf]
      %v1126 = vld [vmem:[%s1 + $0x20c] sm:$0xf]
      %v1127 = vld [vmem:[%s1 + $0x210] sm:$0xf]
      %v1128 = vld [vmem:[%s1 + $0x214] sm:$0xf]
      %v1129 = vld [vmem:[%s1 + $0x218] sm:$0xf]
      %v1130 = vld [vmem:[%s1 + $0x21c] sm:$0xf]
      %v1131 = vld [vmem:[%s1 + $0x220] sm:$0xf]
      %v1132 = vld [vmem:[%s1 + $0x224] sm:$0xf]
      %v1133 = vld [vmem:[%s1 + $0x228] sm:$0xf]
      %v1134 = vld [vmem:[%s1 + $0x22c] sm:$0xf]
      %v1135 = vld [vmem:[%s1 + $0x230] sm:$0xf]
      %v1136 = vld [vmem:[%s1 + $0x234] sm:$0xf]
      %v1137 = vld [vmem:[%s1 + $0x238] sm:$0xf]
      %v1138 = vld [vmem:[%s1 + $0x23c] sm:$0xf]
      %v1283 = vunpack.c.l.b16 %v995
      %v1284 = vunpack.c.l.b16 %v996
      %v1285 = vunpack.c.l.b16 %v997
      %v1286 = vunpack.c.l.b16 %v998
      %v1287 = vunpack.c.l.b16 %v999
      %v1288 = vunpack.c.l.b16 %v1000
      %v1289 = vunpack.c.l.b16 %v1001
      %v1290 = vunpack.c.l.b16 %v1002
      %v1291 = vunpack.c.l.b16 %v1003
      %v1292 = vunpack.c.l.b16 %v1004
      %v1293 = vunpack.c.l.b16 %v1005
      %v1294 = vunpack.c.l.b16 %v1006
      %v1295 = vunpack.c.l.b16 %v1007
      %v1296 = vunpack.c.l.b16 %v1008
      %v1297 = vunpack.c.l.b16 %v1009
      %v1298 = vunpack.c.l.b16 %v1010
      %v1299 = vunpack.c.l.b16 %v1011
      %v1300 = vunpack.c.l.b16 %v1012
      %v1301 = vunpack.c.l.b16 %v1013
      %v1302 = vunpack.c.l.b16 %v1014
      %v1303 = vunpack.c.l.b16 %v1015
      %v1304 = vunpack.c.l.b16 %v1016
      %v1305 = vunpack.c.l.b16 %v1017
      %v1306 = vunpack.c.l.b16 %v1018
      %v1307 = vunpack.c.l.b16 %v1019
      %v1308 = vunpack.c.l.b16 %v1020
      %v1309 = vunpack.c.l.b16 %v1021
      %v1310 = vunpack.c.l.b16 %v1022
      %v1311 = vunpack.c.l.b16 %v1023
      %v1312 = vunpack.c.l.b16 %v1024
      %v1313 = vunpack.c.l.b16 %v1025
      %v1314 = vunpack.c.l.b16 %v1026
      %v1315 = vunpack.c.l.b16 %v1027
      %v1316 = vunpack.c.l.b16 %v1028
      %v1317 = vunpack.c.l.b16 %v1029
      %v1318 = vunpack.c.l.b16 %v1030
      %v1319 = vunpack.c.l.b16 %v1031
      %v1320 = vunpack.c.l.b16 %v1032
      %v1321 = vunpack.c.l.b16 %v1033
      %v1322 = vunpack.c.l.b16 %v1034
      %v1323 = vunpack.c.l.b16 %v1035
      %v1324 = vunpack.c.l.b16 %v1036
      %v1325 = vunpack.c.l.b16 %v1037
      %v1326 = vunpack.c.l.b16 %v1038
      %v1327 = vunpack.c.l.b16 %v1039
      %v1328 = vunpack.c.l.b16 %v1040
      %v1329 = vunpack.c.l.b16 %v1041
      %v1330 = vunpack.c.l.b16 %v1042
      %v1331 = vunpack.c.l.b16 %v1043
      %v1332 = vunpack.c.l.b16 %v1044
      %v1333 = vunpack.c.l.b16 %v1045
      %v1334 = vunpack.c.l.b16 %v1046
      %v1335 = vunpack.c.l.b16 %v1047
      %v1336 = vunpack.c.l.b16 %v1048
      %v1337 = vunpack.c.l.b16 %v1049
      %v1338 = vunpack.c.l.b16 %v1050
      %v1339 = vunpack.c.l.b16 %v1051
      %v1340 = vunpack.c.l.b16 %v1052
      %v1341 = vunpack.c.l.b16 %v1053
      %v1342 = vunpack.c.l.b16 %v1054
      %v1343 = vunpack.c.l.b16 %v1055
      %v1344 = vunpack.c.l.b16 %v1056
      %v1345 = vunpack.c.l.b16 %v1057
      %v1346 = vunpack.c.l.b16 %v1058
      %v1347 = vunpack.c.l.b16 %v1059
      %v1348 = vunpack.c.l.b16 %v1060
      %v1349 = vunpack.c.l.b16 %v1061
      %v1350 = vunpack.c.l.b16 %v1062
      %v1351 = vunpack.c.l.b16 %v1063
      %v1352 = vunpack.c.l.b16 %v1064
      %v1353 = vunpack.c.l.b16 %v1065
      %v1354 = vunpack.c.l.b16 %v1066
      %v1355 = vunpack.c.l.b16 %v1067
      %v1356 = vunpack.c.l.b16 %v1068
      %v1357 = vunpack.c.l.b16 %v1069
      %v1358 = vunpack.c.l.b16 %v1070
      %v1359 = vunpack.c.l.b16 %v1071
      %v1360 = vunpack.c.l.b16 %v1072
      %v1361 = vunpack.c.l.b16 %v1073
      %v1362 = vunpack.c.l.b16 %v1074
      %v1363 = vunpack.c.l.b16 %v1075
      %v1364 = vunpack.c.l.b16 %v1076
      %v1365 = vunpack.c.l.b16 %v1077
      %v1366 = vunpack.c.l.b16 %v1078
      %v1367 = vunpack.c.l.b16 %v1079
      %v1368 = vunpack.c.l.b16 %v1080
      %v1369 = vunpack.c.l.b16 %v1081
      %v1370 = vunpack.c.l.b16 %v1082
      %v1371 = vunpack.c.l.b16 %v1083
      %v1372 = vunpack.c.l.b16 %v1084
      %v1373 = vunpack.c.l.b16 %v1085
      %v1374 = vunpack.c.l.b16 %v1086
      %v1375 = vunpack.c.l.b16 %v1087
      %v1376 = vunpack.c.l.b16 %v1088
      %v1377 = vunpack.c.l.b16 %v1089
      %v1378 = vunpack.c.l.b16 %v1090
      %v1379 = vunpack.c.l.b16 %v1091
      %v1380 = vunpack.c.l.b16 %v1092
      %v1381 = vunpack.c.l.b16 %v1093
      %v1382 = vunpack.c.l.b16 %v1094
      %v1383 = vunpack.c.l.b16 %v1095
      %v1384 = vunpack.c.l.b16 %v1096
      %v1385 = vunpack.c.l.b16 %v1097
      %v1386 = vunpack.c.l.b16 %v1098
      %v1387 = vunpack.c.l.b16 %v1099
      %v1388 = vunpack.c.l.b16 %v1100
      %v1389 = vunpack.c.l.b16 %v1101
      %v1390 = vunpack.c.l.b16 %v1102
      %v1391 = vunpack.c.l.b16 %v1103
      %v1392 = vunpack.c.l.b16 %v1104
      %v1393 = vunpack.c.l.b16 %v1105
      %v1394 = vunpack.c.l.b16 %v1106
      %v1395 = vunpack.c.l.b16 %v1107
      %v1396 = vunpack.c.l.b16 %v1108
      %v1397 = vunpack.c.l.b16 %v1109
      %v1398 = vunpack.c.l.b16 %v1110
      %v1399 = vunpack.c.l.b16 %v1111
      %v1400 = vunpack.c.l.b16 %v1112
      %v1401 = vunpack.c.l.b16 %v1113
      %v1402 = vunpack.c.l.b16 %v1114
      %v1403 = vunpack.c.l.b16 %v1115
      %v1404 = vunpack.c.l.b16 %v1116
      %v1405 = vunpack.c.l.b16 %v1117
      %v1406 = vunpack.c.l.b16 %v1118
      %v1407 = vunpack.c.l.b16 %v1119
      %v1408 = vunpack.c.l.b16 %v1120
      %v1409 = vunpack.c.l.b16 %v1121
      %v1410 = vunpack.c.l.b16 %v1122
      %v1411 = vunpack.c.l.b16 %v1123
      %v1412 = vunpack.c.l.b16 %v1124
      %v1413 = vunpack.c.l.b16 %v1125
      %v1414 = vunpack.c.l.b16 %v1126
      %v1415 = vunpack.c.l.b16 %v1127
      %v1416 = vunpack.c.l.b16 %v1128
      %v1417 = vunpack.c.l.b16 %v1129
      %v1418 = vunpack.c.l.b16 %v1130
      %v1419 = vunpack.c.l.b16 %v1131
      %v1420 = vunpack.c.l.b16 %v1132
      %v1421 = vunpack.c.l.b16 %v1133
      %v1422 = vunpack.c.l.b16 %v1134
      %v1423 = vunpack.c.l.b16 %v1135
      %v1424 = vunpack.c.l.b16 %v1136
      %v1425 = vunpack.c.l.b16 %v1137
      %v1426 = vunpack.c.l.b16 %v1138
      %v1427 = vpack.c.b16 %v1284, %v1283
      %v1428 = vpack.c.b16 %v1286, %v1285
      %v1429 = vpack.c.b16 %v1288, %v1287
      %v1430 = vpack.c.b16 %v1290, %v1289
      %v1431 = vpack.c.b16 %v1292, %v1291
      %v1432 = vpack.c.b16 %v1294, %v1293
      %v1433 = vpack.c.b16 %v1296, %v1295
      %v1434 = vpack.c.b16 %v1298, %v1297
      %v1435 = vpack.c.b16 %v1300, %v1299
      %v1436 = vpack.c.b16 %v1302, %v1301
      %v1437 = vpack.c.b16 %v1304, %v1303
      %v1438 = vpack.c.b16 %v1306, %v1305
      %v1439 = vpack.c.b16 %v1308, %v1307
      %v1440 = vpack.c.b16 %v1310, %v1309
      %v1441 = vpack.c.b16 %v1312, %v1311
      %v1442 = vpack.c.b16 %v1314, %v1313
      %v1443 = vpack.c.b16 %v1316, %v1315
      %v1444 = vpack.c.b16 %v1318, %v1317
      %v1445 = vpack.c.b16 %v1320, %v1319
      %v1446 = vpack.c.b16 %v1322, %v1321
      %v1447 = vpack.c.b16 %v1324, %v1323
      %v1448 = vpack.c.b16 %v1326, %v1325
      %v1449 = vpack.c.b16 %v1328, %v1327
      %v1450 = vpack.c.b16 %v1330, %v1329
      %v1451 = vpack.c.b16 %v1332, %v1331
      %v1452 = vpack.c.b16 %v1334, %v1333
      %v1453 = vpack.c.b16 %v1336, %v1335
      %v1454 = vpack.c.b16 %v1338, %v1337
      %v1455 = vpack.c.b16 %v1340, %v1339
      %v1456 = vpack.c.b16 %v1342, %v1341
      %v1457 = vpack.c.b16 %v1344, %v1343
      %v1458 = vpack.c.b16 %v1346, %v1345
      %v1459 = vpack.c.b16 %v1348, %v1347
      %v1460 = vpack.c.b16 %v1350, %v1349
      %v1461 = vpack.c.b16 %v1352, %v1351
      %v1462 = vpack.c.b16 %v1354, %v1353
      %v1463 = vpack.c.b16 %v1356, %v1355
      %v1464 = vpack.c.b16 %v1358, %v1357
      %v1465 = vpack.c.b16 %v1360, %v1359
      %v1466 = vpack.c.b16 %v1362, %v1361
      %v1467 = vpack.c.b16 %v1364, %v1363
      %v1468 = vpack.c.b16 %v1366, %v1365
      %v1469 = vpack.c.b16 %v1368, %v1367
      %v1470 = vpack.c.b16 %v1370, %v1369
      %v1471 = vpack.c.b16 %v1372, %v1371
      %v1472 = vpack.c.b16 %v1374, %v1373
      %v1473 = vpack.c.b16 %v1376, %v1375
      %v1474 = vpack.c.b16 %v1378, %v1377
      %v1475 = vpack.c.b16 %v1380, %v1379
      %v1476 = vpack.c.b16 %v1382, %v1381
      %v1477 = vpack.c.b16 %v1384, %v1383
      %v1478 = vpack.c.b16 %v1386, %v1385
      %v1479 = vpack.c.b16 %v1388, %v1387
      %v1480 = vpack.c.b16 %v1390, %v1389
      %v1481 = vpack.c.b16 %v1392, %v1391
      %v1482 = vpack.c.b16 %v1394, %v1393
      %v1483 = vpack.c.b16 %v1396, %v1395
      %v1484 = vpack.c.b16 %v1398, %v1397
      %v1485 = vpack.c.b16 %v1400, %v1399
      %v1486 = vpack.c.b16 %v1402, %v1401
      %v1487 = vpack.c.b16 %v1404, %v1403
      %v1488 = vpack.c.b16 %v1406, %v1405
      %v1489 = vpack.c.b16 %v1408, %v1407
      %v1490 = vpack.c.b16 %v1410, %v1409
      %v1491 = vpack.c.b16 %v1412, %v1411
      %v1492 = vpack.c.b16 %v1414, %v1413
      %v1493 = vpack.c.b16 %v1416, %v1415
      %v1494 = vpack.c.b16 %v1418, %v1417
      %v1495 = vpack.c.b16 %v1420, %v1419
      %v1496 = vpack.c.b16 %v1422, %v1421
      %v1497 = vpack.c.b16 %v1424, %v1423
      %v1498 = vpack.c.b16 %v1426, %v1425
      %1571 = vmatprep.subr.bf16.mxu0 0
      %1572 = vmatpush1.bf16.msra.mxu0 %v1427
      %1573 = vmatprep.subr.bf16.mxu0 0
      %1574 = vmatpush1.bf16.msra.mxu0 %v1428
      %1575 = vmatprep.subr.bf16.mxu0 0
      %1576 = vmatpush1.bf16.msra.mxu0 %v1429
      %1577 = vmatprep.subr.bf16.mxu0 0
      %1578 = vmatpush1.bf16.msra.mxu0 %v1430
      %1579 = vmatprep.subr.bf16.mxu0 0
      %1580 = vmatpush1.bf16.msra.mxu0 %v1431
      %1581 = vmatprep.subr.bf16.mxu0 0
      %1582 = vmatpush1.bf16.msra.mxu0 %v1432
      %1583 = vmatprep.subr.bf16.mxu0 0
      %1584 = vmatpush1.bf16.msra.mxu0 %v1433
      %1585 = vmatprep.subr.bf16.mxu0 0
      %1586 = vmatpush1.bf16.msra.mxu0 %v1434
      %1587 = vmatprep.subr.bf16.mxu0 0
      %1588 = vmatpush1.bf16.msra.mxu0 %v1435
      %1589 = vmatprep.subr.bf16.mxu0 0
      %1590 = vmatpush1.bf16.msra.mxu0 %v1436
      %1591 = vmatprep.subr.bf16.mxu0 0
      %1592 = vmatpush1.bf16.msra.mxu0 %v1437
      %1593 = vmatprep.subr.bf16.mxu0 0
      %1594 = vmatpush1.bf16.msra.mxu0 %v1438
      %1595 = vmatprep.subr.bf16.mxu0 0
      %1596 = vmatpush1.bf16.msra.mxu0 %v1439
      %1597 = vmatprep.subr.bf16.mxu0 0
      %1598 = vmatpush1.bf16.msra.mxu0 %v1440
      %1599 = vmatprep.subr.bf16.mxu0 0
      %1600 = vmatpush1.bf16.msra.mxu0 %v1441
      %1601 = vmatprep.subr.bf16.mxu0 0
      %1602 = vmatpush1.bf16.msra.mxu0 %v1442
      %1603 = vmatprep.mubr.bf16.mxu0 %v852
      %1604 = vmatmul.mubr.bf16.gmra.mrb[0].mxu0 %v851
      %v1605 = vpop.f32.mrb[0].mxu0
      %v1606 = vadd.f32 0.0, %v1605
      %v1607 = vpop.f32.mrb[0].mxu0
      %v1608 = vpop.f32.mrb[0].mxu0
      %v1609 = vadd.f32 0.0, %v1608
      %v1610 = vpop.f32.mrb[0].mxu0
      %1611 = vmatprep.mubr.bf16.mxu0 %v861
      %1612 = vmatmul.mubr.bf16.gmra.mrb[0].mxu0 %v860
      %v1613 = vpop.f32.mrb[0].mxu0
      %v1614 = vadd.f32 0.0, %v1613
      %v1615 = vpop.f32.mrb[0].mxu0
      %v1616 = vpop.f32.mrb[0].mxu0
      %v1617 = vadd.f32 0.0, %v1616
      %v1618 = vpop.f32.mrb[0].mxu0
      %1619 = vmatprep.mubr.bf16.mxu0 %v870
      %1620 = vmatmul.mubr.bf16.gmra.mrb[0].mxu0 %v869
      %v1621 = vpop.f32.mrb[0].mxu0
      %v1622 = vadd.f32 0.0, %v1621
      %v1623 = vpop.f32.mrb[0].mxu0
      %v1624 = vpop.f32.mrb[0].mxu0
      %v1625 = vadd.f32 0.0, %v1624
      %v1626 = vpop.f32.mrb[0].mxu0
      %1627 = vmatprep.mubr.bf16.mxu0 %v879
      %1628 = vmatmul.mubr.bf16.gmra.mrb[0].mxu0 %v878
      %v1629 = vpop.f32.mrb[0].mxu0
      %v1630 = vadd.f32 0.0, %v1629
      %v1631 = vpop.f32.mrb[0].mxu0
      %v1632 = vpop.f32.mrb[0].mxu0
      %v1633 = vadd.f32 0.0, %v1632
      %v1634 = vpop.f32.mrb[0].mxu0
      %1635 = vmatprep.mubr.bf16.mxu0 %v888
      %1636 = vmatmul.mubr.bf16.gmra.mrb[0].mxu0 %v887
      %v1637 = vpop.f32.mrb[0].mxu0
      %v1638 = vadd.f32 0.0, %v1637
      %v1639 = vpop.f32.mrb[0].mxu0
      %v1640 = vpop.f32.mrb[0].mxu0
      %v1641 = vadd.f32 0.0, %v1640
      %v1642 = vpop.f32.mrb[0].mxu0
      %1643 = vmatprep.mubr.bf16.mxu0 %v897
      %1644 = vmatmul.mubr.bf16.gmra.mrb[0].mxu0 %v896
      %v1645 = vpop.f32.mrb[0].mxu0
      %v1646 = vadd.f32 0.0, %v1645
      %v1647 = vpop.f32.mrb[0].mxu0
      %v1648 = vpop.f32.mrb[0].mxu0
      %v1649 = vadd.f32 0.0, %v1648
      %v1650 = vpop.f32.mrb[0].mxu0
      %1651 = vmatprep.mubr.bf16.mxu0 %v906
      %1652 = vmatmul.mubr.bf16.gmra.mrb[0].mxu0 %v905
      %v1653 = vpop.f32.mrb[0].mxu0
      %v1654 = vadd.f32 0.0, %v1653
      %v1655 = vpop.f32.mrb[0].mxu0
      %v1656 = vpop.f32.mrb[0].mxu0
      %v1657 = vadd.f32 0.0, %v1656
      %v1658 = vpop.f32.mrb[0].mxu0
      %1659 = vmatprep.mubr.bf16.mxu0 %v915
      %1660 = vmatmul.mubr.bf16.gmra.mrb[0].mxu0 %v914
      %v1661 = vpop.f32.mrb[0].mxu0
      %v1662 = vadd.f32 0.0, %v1661
      %v1663 = vpop.f32.mrb[0].mxu0
      %v1664 = vpop.f32.mrb[0].mxu0
      %v1665 = vadd.f32 0.0, %v1664
      %v1666 = vpop.f32.mrb[0].mxu0
      %1667 = vmatprep.mubr.bf16.mxu0 %v924
      %1668 = vmatmul.mubr.bf16.gmra.mrb[0].mxu0 %v923
      %v1669 = vpop.f32.mrb[0].mxu0
      %v1670 = vadd.f32 0.0, %v1669
      %v1671 = vpop.f32.mrb[0].mxu0
      %v1672 = vpop.f32.mrb[0].mxu0
      %v1673 = vadd.f32 0.0, %v1672
      %v1674 = vpop.f32.mrb[0].mxu0
      %1675 = vmatprep.mubr.bf16.mxu0 %v933
      %1676 = vmatmul.mubr.bf16.gmra.mrb[0].mxu0 %v932
      %v1677 = vpop.f32.mrb[0].mxu0
      %v1678 = vadd.f32 0.0, %v1677
      %v1679 = vpop.f32.mrb[0].mxu0
      %v1680 = vpop.f32.mrb[0].mxu0
      %v1681 = vadd.f32 0.0, %v1680
      %v1682 = vpop.f32.mrb[0].mxu0
      %1683 = vmatprep.mubr.bf16.mxu0 %v942
      %1684 = vmatmul.mubr.bf16.gmra.mrb[0].mxu0 %v941
      %v1685 = vpop.f32.mrb[0].mxu0
      %v1686 = vadd.f32 0.0, %v1685
      %v1687 = vpop.f32.mrb[0].mxu0
      %v1688 = vpop.f32.mrb[0].mxu0
      %v1689 = vadd.f32 0.0, %v1688
      %v1690 = vpop.f32.mrb[0].mxu0
      %1691 = vmatprep.mubr.bf16.mxu0 %v951
      %1692 = vmatmul.mubr.bf16.gmra.mrb[0].mxu0 %v950
      %v1693 = vpop.f32.mrb[0].mxu0
      %v1694 = vadd.f32 0.0, %v1693
      %v1695 = vpop.f32.mrb[0].mxu0
      %v1696 = vpop.f32.mrb[0].mxu0
      %v1697 = vadd.f32 0.0, %v1696
      %v1698 = vpop.f32.mrb[0].mxu0
      %1699 = vmatprep.mubr.bf16.mxu0 %v960
      %1700 = vmatmul.mubr.bf16.gmra.mrb[0].mxu0 %v959
      %v1701 = vpop.f32.mrb[0].mxu0
      %v1702 = vadd.f32 0.0, %v1701
      %v1703 = vpop.f32.mrb[0].mxu0
      %v1704 = vpop.f32.mrb[0].mxu0
      %v1705 = vadd.f32 0.0, %v1704
      %v1706 = vpop.f32.mrb[0].mxu0
      %1707 = vmatprep.mubr.bf16.mxu0 %v969
      %1708 = vmatmul.mubr.bf16.gmra.mrb[0].mxu0 %v968
      %v1709 = vpop.f32.mrb[0].mxu0
      %v1710 = vadd.f32 0.0, %v1709
      %v1711 = vpop.f32.mrb[0].mxu0
      %v1712 = vpop.f32.mrb[0].mxu0
      %v1713 = vadd.f32 0.0, %v1712
      %v1714 = vpop.f32.mrb[0].mxu0
      %1715 = vmatprep.mubr.bf16.mxu0 %v978
      %1716 = vmatmul.mubr.bf16.gmra.mrb[0].mxu0 %v977
      %v1717 = vpop.f32.mrb[0].mxu0
      %v1718 = vadd.f32 0.0, %v1717
      %v1719 = vpop.f32.mrb[0].mxu0
      %v1720 = vpop.f32.mrb[0].mxu0
      %v1721 = vadd.f32 0.0, %v1720
      %v1722 = vpop.f32.mrb[0].mxu0
      %1723 = vmatprep.mubr.bf16.mxu0 %v987
      %1724 = vmatmul.mubr.bf16.gmra.mrb[0].mxu0 %v986
      %v1725 = vpop.f32.mrb[0].mxu0
      %v1726 = vadd.f32 0.0, %v1725
      %v1727 = vpop.f32.mrb[0].mxu0
      %v1728 = vpop.f32.mrb[0].mxu0
      %v1729 = vadd.f32 0.0, %v1728
      %v1730 = vpop.f32.mrb[0].mxu0
      %1731 = vdwg.mxu0
      %1732 = vmatprep.subr.bf16.mxu0 0
      %1733 = vmatpush1.bf16.msra.mxu0 %v1443
      %1734 = vmatprep.subr.bf16.mxu0 0
      %1735 = vmatpush1.bf16.msra.mxu0 %v1444
      %1736 = vmatprep.subr.bf16.mxu0 0
      %1737 = vmatpush1.bf16.msra.mxu0 %v1445
      %1738 = vmatprep.subr.bf16.mxu0 0
      %1739 = vmatpush1.bf16.msra.mxu0 %v1446
      %1740 = vmatprep.subr.bf16.mxu0 0
      %1741 = vmatpush1.bf16.msra.mxu0 %v1447
      %1742 = vmatprep.subr.bf16.mxu0 0
      %1743 = vmatpush1.bf16.msra.mxu0 %v1448
      %1744 = vmatprep.subr.bf16.mxu0 0
      %1745 = vmatpush1.bf16.msra.mxu0 %v1449
      %1746 = vmatprep.subr.bf16.mxu0 0
      %1747 = vmatpush1.bf16.msra.mxu0 %v1450
      %1748 = vmatprep.subr.bf16.mxu0 0
      %1749 = vmatpush1.bf16.msra.mxu0 %v1451
      %1750 = vmatprep.subr.bf16.mxu0 0
      %1751 = vmatpush1.bf16.msra.mxu0 %v1452
      %1752 = vmatprep.subr.bf16.mxu0 0
      %1753 = vmatpush1.bf16.msra.mxu0 %v1453
      %1754 = vmatprep.subr.bf16.mxu0 0
      %1755 = vmatpush1.bf16.msra.mxu0 %v1454
      %1756 = vmatprep.subr.bf16.mxu0 0
      %1757 = vmatpush1.bf16.msra.mxu0 %v1455
      %1758 = vmatprep.subr.bf16.mxu0 0
      %1759 = vmatpush1.bf16.msra.mxu0 %v1456
      %1760 = vmatprep.subr.bf16.mxu0 0
      %1761 = vmatpush1.bf16.msra.mxu0 %v1457
      %1762 = vmatprep.subr.bf16.mxu0 0
      %1763 = vmatpush1.bf16.msra.mxu0 %v1458
      %1764 = vmatprep.mubr.bf16.mxu0 %v854
      %1765 = vmatmul.mubr.bf16.gmra.mrb[0].mxu0 %v853
      %v1766 = vpop.f32.mrb[0].mxu0
      %v1767 = vadd.f32 %v1606, %v1766
      %v1768 = vpop.f32.mrb[0].mxu0
      %v1769 = vpop.f32.mrb[0].mxu0
      %v1770 = vadd.f32 %v1609, %v1769
      %v1771 = vpop.f32.mrb[0].mxu0
      %1772 = vmatprep.mubr.bf16.mxu0 %v863
      %1773 = vmatmul.mubr.bf16.gmra.mrb[0].mxu0 %v862
      %v1774 = vpop.f32.mrb[0].mxu0
      %v1775 = vadd.f32 %v1614, %v1774
      %v1776 = vpop.f32.mrb[0].mxu0
      %v1777 = vpop.f32.mrb[0].mxu0
      %v1778 = vadd.f32 %v1617, %v1777
      %v1779 = vpop.f32.mrb[0].mxu0
      %1780 = vmatprep.mubr.bf16.mxu0 %v872
      %1781 = vmatmul.mubr.bf16.gmra.mrb[0].mxu0 %v871
      %v1782 = vpop.f32.mrb[0].mxu0
      %v1783 = vadd.f32 %v1622, %v1782
      %v1784 = vpop.f32.mrb[0].mxu0
      %v1785 = vpop.f32.mrb[0].mxu0
      %v1786 = vadd.f32 %v1625, %v1785
      %v1787 = vpop.f32.mrb[0].mxu0
      %1788 = vmatprep.mubr.bf16.mxu0 %v881
      %1789 = vmatmul.mubr.bf16.gmra.mrb[0].mxu0 %v880
      %v1790 = vpop.f32.mrb[0].mxu0
      %v1791 = vadd.f32 %v1630, %v1790
      %v1792 = vpop.f32.mrb[0].mxu0
      %v1793 = vpop.f32.mrb[0].mxu0
      %v1794 = vadd.f32 %v1633, %v1793
      %v1795 = vpop.f32.mrb[0].mxu0
      %1796 = vmatprep.mubr.bf16.mxu0 %v890
      %1797 = vmatmul.mubr.bf16.gmra.mrb[0].mxu0 %v889
      %v1798 = vpop.f32.mrb[0].mxu0
      %v1799 = vadd.f32 %v1638, %v1798
      %v1800 = vpop.f32.mrb[0].mxu0
      %v1801 = vpop.f32.mrb[0].mxu0
      %v1802 = vadd.f32 %v1641, %v1801
      %v1803 = vpop.f32.mrb[0].mxu0
      %1804 = vmatprep.mubr.bf16.mxu0 %v899
      %1805 = vmatmul.mubr.bf16.gmra.mrb[0].mxu0 %v898
      %v1806 = vpop.f32.mrb[0].mxu0
      %v1807 = vadd.f32 %v1646, %v1806
      %v1808 = vpop.f32.mrb[0].mxu0
      %v1809 = vpop.f32.mrb[0].mxu0
      %v1810 = vadd.f32 %v1649, %v1809
      %v1811 = vpop.f32.mrb[0].mxu0
      %1812 = vmatprep.mubr.bf16.mxu0 %v908
      %1813 = vmatmul.mubr.bf16.gmra.mrb[0].mxu0 %v907
      %v1814 = vpop.f32.mrb[0].mxu0
      %v1815 = vadd.f32 %v1654, %v1814
      %v1816 = vpop.f32.mrb[0].mxu0
      %v1817 = vpop.f32.mrb[0].mxu0
      %v1818 = vadd.f32 %v1657, %v1817
      %v1819 = vpop.f32.mrb[0].mxu0
      %1820 = vmatprep.mubr.bf16.mxu0 %v917
      %1821 = vmatmul.mubr.bf16.gmra.mrb[0].mxu0 %v916
      %v1822 = vpop.f32.mrb[0].mxu0
      %v1823 = vadd.f32 %v1662, %v1822
      %v1824 = vpop.f32.mrb[0].mxu0
      %v1825 = vpop.f32.mrb[0].mxu0
      %v1826 = vadd.f32 %v1665, %v1825
      %v1827 = vpop.f32.mrb[0].mxu0
      %1828 = vmatprep.mubr.bf16.mxu0 %v926
      %1829 = vmatmul.mubr.bf16.gmra.mrb[0].mxu0 %v925
      %v1830 = vpop.f32.mrb[0].mxu0
      %v1831 = vadd.f32 %v1670, %v1830
      %v1832 = vpop.f32.mrb[0].mxu0
      %v1833 = vpop.f32.mrb[0].mxu0
      %v1834 = vadd.f32 %v1673, %v1833
      %v1835 = vpop.f32.mrb[0].mxu0
      %1836 = vmatprep.mubr.bf16.mxu0 %v935
      %1837 = vmatmul.mubr.bf16.gmra.mrb[0].mxu0 %v934
      %v1838 = vpop.f32.mrb[0].mxu0
      %v1839 = vadd.f32 %v1678, %v1838
      %v1840 = vpop.f32.mrb[0].mxu0
      %v1841 = vpop.f32.mrb[0].mxu0
      %v1842 = vadd.f32 %v1681, %v1841
      %v1843 = vpop.f32.mrb[0].mxu0
      %1844 = vmatprep.mubr.bf16.mxu0 %v944
      %1845 = vmatmul.mubr.bf16.gmra.mrb[0].mxu0 %v943
      %v1846 = vpop.f32.mrb[0].mxu0
      %v1847 = vadd.f32 %v1686, %v1846
      %v1848 = vpop.f32.mrb[0].mxu0
      %v1849 = vpop.f32.mrb[0].mxu0
      %v1850 = vadd.f32 %v1689, %v1849
      %v1851 = vpop.f32.mrb[0].mxu0
      %1852 = vmatprep.mubr.bf16.mxu0 %v953
      %1853 = vmatmul.mubr.bf16.gmra.mrb[0].mxu0 %v952
      %v1854 = vpop.f32.mrb[0].mxu0
      %v1855 = vadd.f32 %v1694, %v1854
      %v1856 = vpop.f32.mrb[0].mxu0
      %v1857 = vpop.f32.mrb[0].mxu0
      %v1858 = vadd.f32 %v1697, %v1857
      %v1859 = vpop.f32.mrb[0].mxu0
      %1860 = vmatprep.mubr.bf16.mxu0 %v962
      %1861 = vmatmul.mubr.bf16.gmra.mrb[0].mxu0 %v961
      %v1862 = vpop.f32.mrb[0].mxu0
      %v1863 = vadd.f32 %v1702, %v1862
      %v1864 = vpop.f32.mrb[0].mxu0
      %v1865 = vpop.f32.mrb[0].mxu0
      %v1866 = vadd.f32 %v1705, %v1865
      %v1867 = vpop.f32.mrb[0].mxu0
      %1868 = vmatprep.mubr.bf16.mxu0 %v971
      %1869 = vmatmul.mubr.bf16.gmra.mrb[0].mxu0 %v970
      %v1870 = vpop.f32.mrb[0].mxu0
      %v1871 = vadd.f32 %v1710, %v1870
      %v1872 = vpop.f32.mrb[0].mxu0
      %v1873 = vpop.f32.mrb[0].mxu0
      %v1874 = vadd.f32 %v1713, %v1873
      %v1875 = vpop.f32.mrb[0].mxu0
      %1876 = vmatprep.mubr.bf16.mxu0 %v980
      %1877 = vmatmul.mubr.bf16.gmra.mrb[0].mxu0 %v979
      %v1878 = vpop.f32.mrb[0].mxu0
      %v1879 = vadd.f32 %v1718, %v1878
      %v1880 = vpop.f32.mrb[0].mxu0
      %v1881 = vpop.f32.mrb[0].mxu0
      %v1882 = vadd.f32 %v1721, %v1881
      %v1883 = vpop.f32.mrb[0].mxu0
      %1884 = vmatprep.mubr.bf16.mxu0 %v989
      %1885 = vmatmul.mubr.bf16.gmra.mrb[0].mxu0 %v988
      %v1886 = vpop.f32.mrb[0].mxu0
      %v1887 = vadd.f32 %v1726, %v1886
      %v1888 = vpop.f32.mrb[0].mxu0
      %v1889 = vpop.f32.mrb[0].mxu0
      %v1890 = vadd.f32 %v1729, %v1889
      %v1891 = vpop.f32.mrb[0].mxu0
      %1892 = vdwg.mxu0
      %1893 = vmatprep.subr.bf16.mxu0 0
      %1894 = vmatpush1.bf16.msra.mxu0 %v1459
      %1895 = vmatprep.subr.bf16.mxu0 0
      %1896 = vmatpush1.bf16.msra.mxu0 %v1460
      %1897 = vmatprep.subr.bf16.mxu0 0
      %1898 = vmatpush1.bf16.msra.mxu0 %v1461
      %1899 = vmatprep.subr.bf16.mxu0 0
      %1900 = vmatpush1.bf16.msra.mxu0 %v1462
      %1901 = vmatprep.subr.bf16.mxu0 0
      %1902 = vmatpush1.bf16.msra.mxu0 %v1463
      %1903 = vmatprep.subr.bf16.mxu0 0
      %1904 = vmatpush1.bf16.msra.mxu0 %v1464
      %1905 = vmatprep.subr.bf16.mxu0 0
      %1906 = vmatpush1.bf16.msra.mxu0 %v1465
      %1907 = vmatprep.subr.bf16.mxu0 0
      %1908 = vmatpush1.bf16.msra.mxu0 %v1466
      %1909 = vmatprep.subr.bf16.mxu0 0
      %1910 = vmatpush1.bf16.msra.mxu0 %v1467
      %1911 = vmatprep.subr.bf16.mxu0 0
      %1912 = vmatpush1.bf16.msra.mxu0 %v1468
      %1913 = vmatprep.subr.bf16.mxu0 0
      %1914 = vmatpush1.bf16.msra.mxu0 %v1469
      %1915 = vmatprep.subr.bf16.mxu0 0
      %1916 = vmatpush1.bf16.msra.mxu0 %v1470
      %1917 = vmatprep.subr.bf16.mxu0 0
      %1918 = vmatpush1.bf16.msra.mxu0 %v1471
      %1919 = vmatprep.subr.bf16.mxu0 0
      %1920 = vmatpush1.bf16.msra.mxu0 %v1472
      %1921 = vmatprep.subr.bf16.mxu0 0
      %1922 = vmatpush1.bf16.msra.mxu0 %v1473
      %1923 = vmatprep.subr.bf16.mxu0 0
      %1924 = vmatpush1.bf16.msra.mxu0 %v1474
      %1925 = vmatprep.mubr.bf16.mxu0 %v856
      %1926 = vmatmul.mubr.bf16.gmra.mrb[0].mxu0 %v855
      %v1927 = vpop.f32.mrb[0].mxu0
      %v1928 = vadd.f32 %v1767, %v1927
      %v1929 = vpop.f32.mrb[0].mxu0
      %v1930 = vpop.f32.mrb[0].mxu0
      %v1931 = vadd.f32 %v1770, %v1930
      %v1932 = vpop.f32.mrb[0].mxu0
      %1933 = vmatprep.mubr.bf16.mxu0 %v865
      %1934 = vmatmul.mubr.bf16.gmra.mrb[0].mxu0 %v864
      %v1935 = vpop.f32.mrb[0].mxu0
      %v1936 = vadd.f32 %v1775, %v1935
      %v1937 = vpop.f32.mrb[0].mxu0
      %v1938 = vpop.f32.mrb[0].mxu0
      %v1939 = vadd.f32 %v1778, %v1938
      %v1940 = vpop.f32.mrb[0].mxu0
      %1941 = vmatprep.mubr.bf16.mxu0 %v874
      %1942 = vmatmul.mubr.bf16.gmra.mrb[0].mxu0 %v873
      %v1943 = vpop.f32.mrb[0].mxu0
      %v1944 = vadd.f32 %v1783, %v1943
      %v1945 = vpop.f32.mrb[0].mxu0
      %v1946 = vpop.f32.mrb[0].mxu0
      %v1947 = vadd.f32 %v1786, %v1946
      %v1948 = vpop.f32.mrb[0].mxu0
      %1949 = vmatprep.mubr.bf16.mxu0 %v883
      %1950 = vmatmul.mubr.bf16.gmra.mrb[0].mxu0 %v882
      %v1951 = vpop.f32.mrb[0].mxu0
      %v1952 = vadd.f32 %v1791, %v1951
      %v1953 = vpop.f32.mrb[0].mxu0
      %v1954 = vpop.f32.mrb[0].mxu0
      %v1955 = vadd.f32 %v1794, %v1954
      %v1956 = vpop.f32.mrb[0].mxu0
      %1957 = vmatprep.mubr.bf16.mxu0 %v892
      %1958 = vmatmul.mubr.bf16.gmra.mrb[0].mxu0 %v891
      %v1959 = vpop.f32.mrb[0].mxu0
      %v1960 = vadd.f32 %v1799, %v1959
      %v1961 = vpop.f32.mrb[0].mxu0
      %v1962 = vpop.f32.mrb[0].mxu0
      %v1963 = vadd.f32 %v1802, %v1962
      %v1964 = vpop.f32.mrb[0].mxu0
      %1965 = vmatprep.mubr.bf16.mxu0 %v901
      %1966 = vmatmul.mubr.bf16.gmra.mrb[0].mxu0 %v900
      %v1967 = vpop.f32.mrb[0].mxu0
      %v1968 = vadd.f32 %v1807, %v1967
      %v1969 = vpop.f32.mrb[0].mxu0
      %v1970 = vpop.f32.mrb[0].mxu0
      %v1971 = vadd.f32 %v1810, %v1970
      %v1972 = vpop.f32.mrb[0].mxu0
      %1973 = vmatprep.mubr.bf16.mxu0 %v910
      %1974 = vmatmul.mubr.bf16.gmra.mrb[0].mxu0 %v909
      %v1975 = vpop.f32.mrb[0].mxu0
      %v1976 = vadd.f32 %v1815, %v1975
      %v1977 = vpop.f32.mrb[0].mxu0
      %v1978 = vpop.f32.mrb[0].mxu0
      %v1979 = vadd.f32 %v1818, %v1978
      %v1980 = vpop.f32.mrb[0].mxu0
      %1981 = vmatprep.mubr.bf16.mxu0 %v919
      %1982 = vmatmul.mubr.bf16.gmra.mrb[0].mxu0 %v918
      %v1983 = vpop.f32.mrb[0].mxu0
      %v1984 = vadd.f32 %v1823, %v1983
      %v1985 = vpop.f32.mrb[0].mxu0
      %v1986 = vpop.f32.mrb[0].mxu0
      %v1987 = vadd.f32 %v1826, %v1986
      %v1988 = vpop.f32.mrb[0].mxu0
      %1989 = vmatprep.mubr.bf16.mxu0 %v928
      %1990 = vmatmul.mubr.bf16.gmra.mrb[0].mxu0 %v927
      %v1991 = vpop.f32.mrb[0].mxu0
      %v1992 = vadd.f32 %v1831, %v1991
      %v1993 = vpop.f32.mrb[0].mxu0
      %v1994 = vpop.f32.mrb[0].mxu0
      %v1995 = vadd.f32 %v1834, %v1994
      %v1996 = vpop.f32.mrb[0].mxu0
      %1997 = vmatprep.mubr.bf16.mxu0 %v937
      %1998 = vmatmul.mubr.bf16.gmra.mrb[0].mxu0 %v936
      %v1999 = vpop.f32.mrb[0].mxu0
      %v2000 = vadd.f32 %v1839, %v1999
      %v2001 = vpop.f32.mrb[0].mxu0
      %v2002 = vpop.f32.mrb[0].mxu0
      %v2003 = vadd.f32 %v1842, %v2002
      %v2004 = vpop.f32.mrb[0].mxu0
      %2005 = vmatprep.mubr.bf16.mxu0 %v946
      %2006 = vmatmul.mubr.bf16.gmra.mrb[0].mxu0 %v945
      %v2007 = vpop.f32.mrb[0].mxu0
      %v2008 = vadd.f32 %v1847, %v2007
      %v2009 = vpop.f32.mrb[0].mxu0
      %v2010 = vpop.f32.mrb[0].mxu0
      %v2011 = vadd.f32 %v1850, %v2010
      %v2012 = vpop.f32.mrb[0].mxu0
      %2013 = vmatprep.mubr.bf16.mxu0 %v955
      %2014 = vmatmul.mubr.bf16.gmra.mrb[0].mxu0 %v954
      %v2015 = vpop.f32.mrb[0].mxu0
      %v2016 = vadd.f32 %v1855, %v2015
      %v2017 = vpop.f32.mrb[0].mxu0
      %v2018 = vpop.f32.mrb[0].mxu0
      %v2019 = vadd.f32 %v1858, %v2018
      %v2020 = vpop.f32.mrb[0].mxu0
      %2021 = vmatprep.mubr.bf16.mxu0 %v964
      %2022 = vmatmul.mubr.bf16.gmra.mrb[0].mxu0 %v963
      %v2023 = vpop.f32.mrb[0].mxu0
      %v2024 = vadd.f32 %v1863, %v2023
      %v2025 = vpop.f32.mrb[0].mxu0
      %v2026 = vpop.f32.mrb[0].mxu0
      %v2027 = vadd.f32 %v1866, %v2026
      %v2028 = vpop.f32.mrb[0].mxu0
      %2029 = vmatprep.mubr.bf16.mxu0 %v973
      %2030 = vmatmul.mubr.bf16.gmra.mrb[0].mxu0 %v972
      %v2031 = vpop.f32.mrb[0].mxu0
      %v2032 = vadd.f32 %v1871, %v2031
      %v2033 = vpop.f32.mrb[0].mxu0
      %v2034 = vpop.f32.mrb[0].mxu0
      %v2035 = vadd.f32 %v1874, %v2034
      %v2036 = vpop.f32.mrb[0].mxu0
      %2037 = vmatprep.mubr.bf16.mxu0 %v982
      %2038 = vmatmul.mubr.bf16.gmra.mrb[0].mxu0 %v981
      %v2039 = vpop.f32.mrb[0].mxu0
      %v2040 = vadd.f32 %v1879, %v2039
      %v2041 = vpop.f32.mrb[0].mxu0
      %v2042 = vpop.f32.mrb[0].mxu0
      %v2043 = vadd.f32 %v1882, %v2042
      %v2044 = vpop.f32.mrb[0].mxu0
      %2045 = vmatprep.mubr.bf16.mxu0 %v991
      %2046 = vmatmul.mubr.bf16.gmra.mrb[0].mxu0 %v990
      %v2047 = vpop.f32.mrb[0].mxu0
      %v2048 = vadd.f32 %v1887, %v2047
      %v2049 = vpop.f32.mrb[0].mxu0
      %v2050 = vpop.f32.mrb[0].mxu0
      %v2051 = vadd.f32 %v1890, %v2050
      %v2052 = vpop.f32.mrb[0].mxu0
      %2053 = vdwg.mxu0
      %2054 = vmatprep.subr.bf16.mxu0 0
      %2055 = vmatpush1.bf16.msra.mxu0 %v1475
      %2056 = vmatprep.subr.bf16.mxu0 0
      %2057 = vmatpush1.bf16.msra.mxu0 %v1476
      %2058 = vmatprep.subr.bf16.mxu0 0
      %2059 = vmatpush1.bf16.msra.mxu0 %v1477
      %2060 = vmatprep.subr.bf16.mxu0 0
      %2061 = vmatpush1.bf16.msra.mxu0 %v1478
      %2062 = vmatprep.subr.bf16.mxu0 0
      %2063 = vmatpush1.bf16.msra.mxu0 %v1479
      %2064 = vmatprep.subr.bf16.mxu0 0
      %2065 = vmatpush1.bf16.msra.mxu0 %v1480
      %2066 = vmatprep.subr.bf16.mxu0 0
      %2067 = vmatpush1.bf16.msra.mxu0 %v1481
      %2068 = vmatprep.subr.bf16.mxu0 0
      %2069 = vmatpush1.bf16.msra.mxu0 %v1482
      %2070 = vmatprep.subr.bf16.mxu0 0
      %2071 = vmatpush1.bf16.msra.mxu0 %v1483
      %2072 = vmatprep.subr.bf16.mxu0 0
      %2073 = vmatpush1.bf16.msra.mxu0 %v1484
      %2074 = vmatprep.subr.bf16.mxu0 0
      %2075 = vmatpush1.bf16.msra.mxu0 %v1485
      %2076 = vmatprep.subr.bf16.mxu0 0
      %2077 = vmatpush1.bf16.msra.mxu0 %v1486
      %2078 = vmatprep.subr.bf16.mxu0 0
      %2079 = vmatpush1.bf16.msra.mxu0 %v1487
      %2080 = vmatprep.subr.bf16.mxu0 0
      %2081 = vmatpush1.bf16.msra.mxu0 %v1488
      %2082 = vmatprep.subr.bf16.mxu0 0
      %2083 = vmatpush1.bf16.msra.mxu0 %v1489
      %2084 = vmatprep.subr.bf16.mxu0 0
      %2085 = vmatpush1.bf16.msra.mxu0 %v1490
      %2086 = vmatprep.mubr.bf16.mxu0 %v858
      %2087 = vmatmul.mubr.bf16.gmra.mrb[0].mxu0 %v857
      %v2088 = vpop.f32.mrb[0].mxu0
      %v2089 = vadd.f32 %v1928, %v2088
      %v2090 = vpop.f32.mrb[0].mxu0
      %v2091 = vpop.f32.mrb[0].mxu0
      %v2092 = vadd.f32 %v1931, %v2091
      %v2093 = vpop.f32.mrb[0].mxu0
      %2094 = vmatprep.mubr.bf16.mxu0 %v867
      %2095 = vmatmul.mubr.bf16.gmra.mrb[0].mxu0 %v866
      %v2096 = vpop.f32.mrb[0].mxu0
      %v2097 = vadd.f32 %v1936, %v2096
      %v2098 = vpop.f32.mrb[0].mxu0
      %v2099 = vpop.f32.mrb[0].mxu0
      %v2100 = vadd.f32 %v1939, %v2099
      %v2101 = vpop.f32.mrb[0].mxu0
      %2102 = vmatprep.mubr.bf16.mxu0 %v876
      %2103 = vmatmul.mubr.bf16.gmra.mrb[0].mxu0 %v875
      %v2104 = vpop.f32.mrb[0].mxu0
      %v2105 = vadd.f32 %v1944, %v2104
      %v2106 = vpop.f32.mrb[0].mxu0
      %v2107 = vpop.f32.mrb[0].mxu0
      %v2108 = vadd.f32 %v1947, %v2107
      %v2109 = vpop.f32.mrb[0].mxu0
      %2110 = vmatprep.mubr.bf16.mxu0 %v885
      %2111 = vmatmul.mubr.bf16.gmra.mrb[0].mxu0 %v884
      %v2112 = vpop.f32.mrb[0].mxu0
      %v2113 = vadd.f32 %v1952, %v2112
      %v2114 = vpop.f32.mrb[0].mxu0
      %v2115 = vpop.f32.mrb[0].mxu0
      %v2116 = vadd.f32 %v1955, %v2115
      %v2117 = vpop.f32.mrb[0].mxu0
      %2118 = vmatprep.mubr.bf16.mxu0 %v894
      %2119 = vmatmul.mubr.bf16.gmra.mrb[0].mxu0 %v893
      %v2120 = vpop.f32.mrb[0].mxu0
      %v2121 = vadd.f32 %v1960, %v2120
      %v2122 = vpop.f32.mrb[0].mxu0
      %v2123 = vpop.f32.mrb[0].mxu0
      %v2124 = vadd.f32 %v1963, %v2123
      %v2125 = vpop.f32.mrb[0].mxu0
      %2126 = vmatprep.mubr.bf16.mxu0 %v903
      %2127 = vmatmul.mubr.bf16.gmra.mrb[0].mxu0 %v902
      %v2128 = vpop.f32.mrb[0].mxu0
      %v2129 = vadd.f32 %v1968, %v2128
      %v2130 = vpop.f32.mrb[0].mxu0
      %v2131 = vpop.f32.mrb[0].mxu0
      %v2132 = vadd.f32 %v1971, %v2131
      %v2133 = vpop.f32.mrb[0].mxu0
      %2134 = vmatprep.mubr.bf16.mxu0 %v912
      %2135 = vmatmul.mubr.bf16.gmra.mrb[0].mxu0 %v911
      %v2136 = vpop.f32.mrb[0].mxu0
      %v2137 = vadd.f32 %v1976, %v2136
      %v2138 = vpop.f32.mrb[0].mxu0
      %v2139 = vpop.f32.mrb[0].mxu0
      %v2140 = vadd.f32 %v1979, %v2139
      %v2141 = vpop.f32.mrb[0].mxu0
      %2142 = vmatprep.mubr.bf16.mxu0 %v921
      %2143 = vmatmul.mubr.bf16.gmra.mrb[0].mxu0 %v920
      %v2144 = vpop.f32.mrb[0].mxu0
      %v2145 = vadd.f32 %v1984, %v2144
      %v2146 = vpop.f32.mrb[0].mxu0
      %v2147 = vpop.f32.mrb[0].mxu0
      %v2148 = vadd.f32 %v1987, %v2147
      %v2149 = vpop.f32.mrb[0].mxu0
      %2150 = vmatprep.mubr.bf16.mxu0 %v930
      %2151 = vmatmul.mubr.bf16.gmra.mrb[0].mxu0 %v929
      %v2152 = vpop.f32.mrb[0].mxu0
      %v2153 = vadd.f32 %v1992, %v2152
      %v2154 = vpop.f32.mrb[0].mxu0
      %v2155 = vpop.f32.mrb[0].mxu0
      %v2156 = vadd.f32 %v1995, %v2155
      %v2157 = vpop.f32.mrb[0].mxu0
      %2158 = vmatprep.mubr.bf16.mxu0 %v939
      %2159 = vmatmul.mubr.bf16.gmra.mrb[0].mxu0 %v938
      %v2160 = vpop.f32.mrb[0].mxu0
      %v2161 = vadd.f32 %v2000, %v2160
      %v2162 = vpop.f32.mrb[0].mxu0
      %v2163 = vpop.f32.mrb[0].mxu0
      %v2164 = vadd.f32 %v2003, %v2163
      %v2165 = vpop.f32.mrb[0].mxu0
      %2166 = vmatprep.mubr.bf16.mxu0 %v948
      %2167 = vmatmul.mubr.bf16.gmra.mrb[0].mxu0 %v947
      %v2168 = vpop.f32.mrb[0].mxu0
      %v2169 = vadd.f32 %v2008, %v2168
      %v2170 = vpop.f32.mrb[0].mxu0
      %v2171 = vpop.f32.mrb[0].mxu0
      %v2172 = vadd.f32 %v2011, %v2171
      %v2173 = vpop.f32.mrb[0].mxu0
      %2174 = vmatprep.mubr.bf16.mxu0 %v957
      %2175 = vmatmul.mubr.bf16.gmra.mrb[0].mxu0 %v956
      %v2176 = vpop.f32.mrb[0].mxu0
      %v2177 = vadd.f32 %v2016, %v2176
      %v2178 = vpop.f32.mrb[0].mxu0
      %v2179 = vpop.f32.mrb[0].mxu0
      %v2180 = vadd.f32 %v2019, %v2179
      %v2181 = vpop.f32.mrb[0].mxu0
      %2182 = vmatprep.mubr.bf16.mxu0 %v966
      %2183 = vmatmul.mubr.bf16.gmra.mrb[0].mxu0 %v965
      %v2184 = vpop.f32.mrb[0].mxu0
      %v2185 = vadd.f32 %v2024, %v2184
      %v2186 = vpop.f32.mrb[0].mxu0
      %v2187 = vpop.f32.mrb[0].mxu0
      %v2188 = vadd.f32 %v2027, %v2187
      %v2189 = vpop.f32.mrb[0].mxu0
      %2190 = vmatprep.mubr.bf16.mxu0 %v975
      %2191 = vmatmul.mubr.bf16.gmra.mrb[0].mxu0 %v974
      %v2192 = vpop.f32.mrb[0].mxu0
      %v2193 = vadd.f32 %v2032, %v2192
      %v2194 = vpop.f32.mrb[0].mxu0
      %v2195 = vpop.f32.mrb[0].mxu0
      %v2196 = vadd.f32 %v2035, %v2195
      %v2197 = vpop.f32.mrb[0].mxu0
      %2198 = vmatprep.mubr.bf16.mxu0 %v984
      %2199 = vmatmul.mubr.bf16.gmra.mrb[0].mxu0 %v983
      %v2200 = vpop.f32.mrb[0].mxu0
      %v2201 = vadd.f32 %v2040, %v2200
      %v2202 = vpop.f32.mrb[0].mxu0
      %v2203 = vpop.f32.mrb[0].mxu0
      %v2204 = vadd.f32 %v2043, %v2203
      %v2205 = vpop.f32.mrb[0].mxu0
      %2206 = vmatprep.mubr.bf16.mxu0 %v993
      %2207 = vmatmul.mubr.bf16.gmra.mrb[0].mxu0 %v992
      %v2208 = vpop.f32.mrb[0].mxu0
      %v2209 = vadd.f32 %v2048, %v2208
      %v2210 = vpop.f32.mrb[0].mxu0
      %v2211 = vpop.f32.mrb[0].mxu0
      %v2212 = vadd.f32 %v2051, %v2211
      %v2213 = vpop.f32.mrb[0].mxu0
      %2214 = vdwg.mxu0
      %2215 = vmatprep.subr.bf16.mxu0 0
      %2216 = vmatpush1.bf16.msra.mxu0 %v1491
      %2217 = vmatprep.subr.bf16.mxu0 0
      %2218 = vmatpush1.bf16.msra.mxu0 %v1492
      %2219 = vmatprep.subr.bf16.mxu0 0
      %2220 = vmatpush1.bf16.msra.mxu0 %v1493
      %2221 = vmatprep.subr.bf16.mxu0 0
      %2222 = vmatpush1.bf16.msra.mxu0 %v1494
      %2223 = vmatprep.subr.bf16.mxu0 0
      %2224 = vmatpush1.bf16.msra.mxu0 %v1495
      %2225 = vmatprep.subr.bf16.mxu0 0
      %2226 = vmatpush1.bf16.msra.mxu0 %v1496
      %2227 = vmatprep.subr.bf16.mxu0 0
      %2228 = vmatpush1.bf16.msra.mxu0 %v1497
      %2229 = vmatprep.subr.bf16.mxu0 0
      %2230 = vmatpush1.bf16.msra.mxu0 %v1498
      %2231 = vmatprep.subr.bf16.mxu0 0
      %2232 = vmatpush1.bf16.msra.mxu0 0
      %2233 = vmatprep.subr.bf16.mxu0 0
      %2234 = vmatpush1.bf16.msra.mxu0 0
      %2235 = vmatprep.subr.bf16.mxu0 0
      %2236 = vmatpush1.bf16.msra.mxu0 0
      %2237 = vmatprep.subr.bf16.mxu0 0
      %2238 = vmatpush1.bf16.msra.mxu0 0
      %2239 = vmatprep.subr.bf16.mxu0 0
      %2240 = vmatpush1.bf16.msra.mxu0 0
      %2241 = vmatprep.subr.bf16.mxu0 0
      %2242 = vmatpush1.bf16.msra.mxu0 0
      %2243 = vmatprep.subr.bf16.mxu0 0
      %2244 = vmatpush1.bf16.msra.mxu0 0
      %2245 = vmatprep.subr.bf16.mxu0 0
      %2246 = vmatpush1.bf16.msra.mxu0 0
      %2247 = vmatprep.mubr.bf16.mxu0 0
      %2248 = vmatmul.mubr.bf16.gmra.mrb[0].mxu0 %v859
      %v2249 = vpop.f32.mrb[0].mxu0
      %v2250 = vadd.f32 %v2089, %v2249
      %v2251 = vpop.f32.mrb[0].mxu0
      %v2252 = vpop.f32.mrb[0].mxu0
      %v2253 = vadd.f32 %v2092, %v2252
      %v2254 = vpop.f32.mrb[0].mxu0
      %2255 = vmatprep.mubr.bf16.mxu0 0
      %2256 = vmatmul.mubr.bf16.gmra.mrb[0].mxu0 %v868
      %v2257 = vpop.f32.mrb[0].mxu0
      %v2258 = vadd.f32 %v2097, %v2257
      %v2259 = vpop.f32.mrb[0].mxu0
      %v2260 = vpop.f32.mrb[0].mxu0
      %v2261 = vadd.f32 %v2100, %v2260
      %v2262 = vpop.f32.mrb[0].mxu0
      %2263 = vmatprep.mubr.bf16.mxu0 0
      %2264 = vmatmul.mubr.bf16.gmra.mrb[0].mxu0 %v877
      %v2265 = vpop.f32.mrb[0].mxu0
      %v2266 = vadd.f32 %v2105, %v2265
      %v2267 = vpop.f32.mrb[0].mxu0
      %v2268 = vpop.f32.mrb[0].mxu0
      %v2269 = vadd.f32 %v2108, %v2268
      %v2270 = vpop.f32.mrb[0].mxu0
      %2271 = vmatprep.mubr.bf16.mxu0 0
      %2272 = vmatmul.mubr.bf16.gmra.mrb[0].mxu0 %v886
      %v2273 = vpop.f32.mrb[0].mxu0
      %v2274 = vadd.f32 %v2113, %v2273
      %v2275 = vpop.f32.mrb[0].mxu0
      %v2276 = vpop.f32.mrb[0].mxu0
      %v2277 = vadd.f32 %v2116, %v2276
      %v2278 = vpop.f32.mrb[0].mxu0
      %2279 = vmatprep.mubr.bf16.mxu0 0
      %2280 = vmatmul.mubr.bf16.gmra.mrb[0].mxu0 %v895
      %v2281 = vpop.f32.mrb[0].mxu0
      %v2282 = vadd.f32 %v2121, %v2281
      %v2283 = vpop.f32.mrb[0].mxu0
      %v2284 = vpop.f32.mrb[0].mxu0
      %v2285 = vadd.f32 %v2124, %v2284
      %v2286 = vpop.f32.mrb[0].mxu0
      %2287 = vmatprep.mubr.bf16.mxu0 0
      %2288 = vmatmul.mubr.bf16.gmra.mrb[0].mxu0 %v904
      %v2289 = vpop.f32.mrb[0].mxu0
      %v2290 = vadd.f32 %v2129, %v2289
      %v2291 = vpop.f32.mrb[0].mxu0
      %v2292 = vpop.f32.mrb[0].mxu0
      %v2293 = vadd.f32 %v2132, %v2292
      %v2294 = vpop.f32.mrb[0].mxu0
      %2295 = vmatprep.mubr.bf16.mxu0 0
      %2296 = vmatmul.mubr.bf16.gmra.mrb[0].mxu0 %v913
      %v2297 = vpop.f32.mrb[0].mxu0
      %v2298 = vadd.f32 %v2137, %v2297
      %v2299 = vpop.f32.mrb[0].mxu0
      %v2300 = vpop.f32.mrb[0].mxu0
      %v2301 = vadd.f32 %v2140, %v2300
      %v2302 = vpop.f32.mrb[0].mxu0
      %2303 = vmatprep.mubr.bf16.mxu0 0
      %2304 = vmatmul.mubr.bf16.gmra.mrb[0].mxu0 %v922
      %v2305 = vpop.f32.mrb[0].mxu0
      %v2306 = vadd.f32 %v2145, %v2305
      %v2307 = vpop.f32.mrb[0].mxu0
      %v2308 = vpop.f32.mrb[0].mxu0
      %v2309 = vadd.f32 %v2148, %v2308
      %v2310 = vpop.f32.mrb[0].mxu0
      %2311 = vmatprep.mubr.bf16.mxu0 0
      %2312 = vmatmul.mubr.bf16.gmra.mrb[0].mxu0 %v931
      %v2313 = vpop.f32.mrb[0].mxu0
      %v2314 = vadd.f32 %v2153, %v2313
      %v2315 = vpop.f32.mrb[0].mxu0
      %v2316 = vpop.f32.mrb[0].mxu0
      %v2317 = vadd.f32 %v2156, %v2316
      %v2318 = vpop.f32.mrb[0].mxu0
      %2319 = vmatprep.mubr.bf16.mxu0 0
      %2320 = vmatmul.mubr.bf16.gmra.mrb[0].mxu0 %v940
      %v2321 = vpop.f32.mrb[0].mxu0
      %v2322 = vadd.f32 %v2161, %v2321
      %v2323 = vpop.f32.mrb[0].mxu0
      %v2324 = vpop.f32.mrb[0].mxu0
      %v2325 = vadd.f32 %v2164, %v2324
      %v2326 = vpop.f32.mrb[0].mxu0
      %2327 = vmatprep.mubr.bf16.mxu0 0
      %2328 = vmatmul.mubr.bf16.gmra.mrb[0].mxu0 %v949
      %v2329 = vpop.f32.mrb[0].mxu0
      %v2330 = vadd.f32 %v2169, %v2329
      %v2331 = vpop.f32.mrb[0].mxu0
      %v2332 = vpop.f32.mrb[0].mxu0
      %v2333 = vadd.f32 %v2172, %v2332
      %v2334 = vpop.f32.mrb[0].mxu0
      %2335 = vmatprep.mubr.bf16.mxu0 0
      %2336 = vmatmul.mubr.bf16.gmra.mrb[0].mxu0 %v958
      %v2337 = vpop.f32.mrb[0].mxu0
      %v2338 = vadd.f32 %v2177, %v2337
      %v2339 = vpop.f32.mrb[0].mxu0
      %v2340 = vpop.f32.mrb[0].mxu0
      %v2341 = vadd.f32 %v2180, %v2340
      %v2342 = vpop.f32.mrb[0].mxu0
      %2343 = vmatprep.mubr.bf16.mxu0 0
      %2344 = vmatmul.mubr.bf16.gmra.mrb[0].mxu0 %v967
      %v2345 = vpop.f32.mrb[0].mxu0
      %v2346 = vadd.f32 %v2185, %v2345
      %v2347 = vpop.f32.mrb[0].mxu0
      %v2348 = vpop.f32.mrb[0].mxu0
      %v2349 = vadd.f32 %v2188, %v2348
      %v2350 = vpop.f32.mrb[0].mxu0
      %2351 = vmatprep.mubr.bf16.mxu0 0
      %2352 = vmatmul.mubr.bf16.gmra.mrb[0].mxu0 %v976
      %v2353 = vpop.f32.mrb[0].mxu0
      %v2354 = vadd.f32 %v2193, %v2353
      %v2355 = vpop.f32.mrb[0].mxu0
      %v2356 = vpop.f32.mrb[0].mxu0
      %v2357 = vadd.f32 %v2196, %v2356
      %v2358 = vpop.f32.mrb[0].mxu0
      %2359 = vmatprep.mubr.bf16.mxu0 0
      %2360 = vmatmul.mubr.bf16.gmra.mrb[0].mxu0 %v985
      %v2361 = vpop.f32.mrb[0].mxu0
      %v2362 = vadd.f32 %v2201, %v2361
      %v2363 = vpop.f32.mrb[0].mxu0
      %v2364 = vpop.f32.mrb[0].mxu0
      %v2365 = vadd.f32 %v2204, %v2364
      %v2366 = vpop.f32.mrb[0].mxu0
      %2367 = vmatprep.mubr.bf16.mxu0 0
      %2368 = vmatmul.mubr.bf16.gmra.mrb[0].mxu0 %v994
      %v2369 = vpop.f32.mrb[0].mxu0
      %v2370 = vadd.f32 %v2209, %v2369
      %v2371 = vpop.f32.mrb[0].mxu0
      %v2372 = vpop.f32.mrb[0].mxu0
      %v2373 = vadd.f32 %v2212, %v2372
      %v2374 = vpop.f32.mrb[0].mxu0
      %2375 = vdwg.mxu0
      %v2376 = vlaneseq
      %v2377 = vshrl.u32 %v2376, 7
      %v2378 = vsub.s32 0, %v2377
      %v2379 = vrot.slane %v285, %v2378
      %v2380 = vmul.f32 %v2250, %v2379
      %v2381 = vmul.f32 %v2253, %v2379
      %v2382 = vmul.f32 %v2258, %v2379
      %v2383 = vmul.f32 %v2261, %v2379
      %v2384 = vmul.f32 %v2266, %v2379
      %v2385 = vmul.f32 %v2269, %v2379
      %v2386 = vmul.f32 %v2274, %v2379
      %v2387 = vmul.f32 %v2277, %v2379
      %v2388 = vmul.f32 %v2282, %v2379
      %v2389 = vmul.f32 %v2285, %v2379
      %v2390 = vmul.f32 %v2290, %v2379
      %v2391 = vmul.f32 %v2293, %v2379
      %v2392 = vmul.f32 %v2298, %v2379
      %v2393 = vmul.f32 %v2301, %v2379
      %v2394 = vmul.f32 %v2306, %v2379
      %v2395 = vmul.f32 %v2309, %v2379
      %v2396 = vmul.f32 %v2314, %v2379
      %v2397 = vmul.f32 %v2317, %v2379
      %v2398 = vmul.f32 %v2322, %v2379
      %v2399 = vmul.f32 %v2325, %v2379
      %v2400 = vmul.f32 %v2330, %v2379
      %v2401 = vmul.f32 %v2333, %v2379
      %v2402 = vmul.f32 %v2338, %v2379
      %v2403 = vmul.f32 %v2341, %v2379
      %v2404 = vmul.f32 %v2346, %v2379
      %v2405 = vmul.f32 %v2349, %v2379
      %v2406 = vmul.f32 %v2354, %v2379
      %v2407 = vmul.f32 %v2357, %v2379
      %v2408 = vmul.f32 %v2362, %v2379
      %v2409 = vmul.f32 %v2365, %v2379
      %v2410 = vmul.f32 %v2370, %v2379
      %v2411 = vmul.f32 %v2373, %v2379
      %v2412 = vlaneseq
      %v2413 = vshrl.u32 %v2412, 7
      %v2414 = vsub.s32 0, %v2413
      %v2415 = vrot.slane %v286, %v2414
      %v2416 = vadd.f32 %v2380, %v2415
      %v2417 = vadd.f32 %v2381, %v2415
      %v2418 = vadd.f32 %v2382, %v2415
      %v2419 = vadd.f32 %v2383, %v2415
      %v2420 = vadd.f32 %v2384, %v2415
      %v2421 = vadd.f32 %v2385, %v2415
      %v2422 = vadd.f32 %v2386, %v2415
      %v2423 = vadd.f32 %v2387, %v2415
      %v2424 = vadd.f32 %v2388, %v2415
      %v2425 = vadd.f32 %v2389, %v2415
      %v2426 = vadd.f32 %v2390, %v2415
      %v2427 = vadd.f32 %v2391, %v2415
      %v2428 = vadd.f32 %v2392, %v2415
      %v2429 = vadd.f32 %v2393, %v2415
      %v2430 = vadd.f32 %v2394, %v2415
      %v2431 = vadd.f32 %v2395, %v2415
      %v2432 = vadd.f32 %v2396, %v2415
      %v2433 = vadd.f32 %v2397, %v2415
      %v2434 = vadd.f32 %v2398, %v2415
      %v2435 = vadd.f32 %v2399, %v2415
      %v2436 = vadd.f32 %v2400, %v2415
      %v2437 = vadd.f32 %v2401, %v2415
      %v2438 = vadd.f32 %v2402, %v2415
      %v2439 = vadd.f32 %v2403, %v2415
      %v2440 = vadd.f32 %v2404, %v2415
      %v2441 = vadd.f32 %v2405, %v2415
      %v2442 = vadd.f32 %v2406, %v2415
      %v2443 = vadd.f32 %v2407, %v2415
      %v2444 = vadd.f32 %v2408, %v2415
      %v2445 = vadd.f32 %v2409, %v2415
      %v2446 = vadd.f32 %v2410, %v2415
      %v2447 = vadd.f32 %v2411, %v2415
      %vm2448 = vcmp.ge.f32.partialorder %v2416, 0.0
      %vm2449 = vcmp.ge.f32.partialorder %v2417, 0.0
      %vm2450 = vcmp.ge.f32.partialorder %v2418, 0.0
      %vm2451 = vcmp.ge.f32.partialorder %v2419, 0.0
      %vm2452 = vcmp.ge.f32.partialorder %v2420, 0.0
      %vm2453 = vcmp.ge.f32.partialorder %v2421, 0.0
      %vm2454 = vcmp.ge.f32.partialorder %v2422, 0.0
      %vm2455 = vcmp.ge.f32.partialorder %v2423, 0.0
      %vm2456 = vcmp.ge.f32.partialorder %v2424, 0.0
      %vm2457 = vcmp.ge.f32.partialorder %v2425, 0.0
      %vm2458 = vcmp.ge.f32.partialorder %v2426, 0.0
      %vm2459 = vcmp.ge.f32.partialorder %v2427, 0.0
      %vm2460 = vcmp.ge.f32.partialorder %v2428, 0.0
      %vm2461 = vcmp.ge.f32.partialorder %v2429, 0.0
      %vm2462 = vcmp.ge.f32.partialorder %v2430, 0.0
      %vm2463 = vcmp.ge.f32.partialorder %v2431, 0.0
      %vm2464 = vcmp.ge.f32.partialorder %v2432, 0.0
      %vm2465 = vcmp.ge.f32.partialorder %v2433, 0.0
      %vm2466 = vcmp.ge.f32.partialorder %v2434, 0.0
      %vm2467 = vcmp.ge.f32.partialorder %v2435, 0.0
      %vm2468 = vcmp.ge.f32.partialorder %v2436, 0.0
      %vm2469 = vcmp.ge.f32.partialorder %v2437, 0.0
      %vm2470 = vcmp.ge.f32.partialorder %v2438, 0.0
      %vm2471 = vcmp.ge.f32.partialorder %v2439, 0.0
      %vm2472 = vcmp.ge.f32.partialorder %v2440, 0.0
      %vm2473 = vcmp.ge.f32.partialorder %v2441, 0.0
      %vm2474 = vcmp.ge.f32.partialorder %v2442, 0.0
      %vm2475 = vcmp.ge.f32.partialorder %v2443, 0.0
      %vm2476 = vcmp.ge.f32.partialorder %v2444, 0.0
      %vm2477 = vcmp.ge.f32.partialorder %v2445, 0.0
      %vm2478 = vcmp.ge.f32.partialorder %v2446, 0.0
      %vm2479 = vcmp.ge.f32.partialorder %v2447, 0.0
      %v2480 = vmul.f32 %v2416, 0.1
      %v2481 = vmul.f32 %v2417, 0.1
      %v2482 = vmul.f32 %v2418, 0.1
      %v2483 = vmul.f32 %v2419, 0.1
      %v2484 = vmul.f32 %v2420, 0.1
      %v2485 = vmul.f32 %v2421, 0.1
      %v2486 = vmul.f32 %v2422, 0.1
      %v2487 = vmul.f32 %v2423, 0.1
      %v2488 = vmul.f32 %v2424, 0.1
      %v2489 = vmul.f32 %v2425, 0.1
      %v2490 = vmul.f32 %v2426, 0.1
      %v2491 = vmul.f32 %v2427, 0.1
      %v2492 = vmul.f32 %v2428, 0.1
      %v2493 = vmul.f32 %v2429, 0.1
      %v2494 = vmul.f32 %v2430, 0.1
      %v2495 = vmul.f32 %v2431, 0.1
      %v2496 = vmul.f32 %v2432, 0.1
      %v2497 = vmul.f32 %v2433, 0.1
      %v2498 = vmul.f32 %v2434, 0.1
      %v2499 = vmul.f32 %v2435, 0.1
      %v2500 = vmul.f32 %v2436, 0.1
      %v2501 = vmul.f32 %v2437, 0.1
      %v2502 = vmul.f32 %v2438, 0.1
      %v2503 = vmul.f32 %v2439, 0.1
      %v2504 = vmul.f32 %v2440, 0.1
      %v2505 = vmul.f32 %v2441, 0.1
      %v2506 = vmul.f32 %v2442, 0.1
      %v2507 = vmul.f32 %v2443, 0.1
      %v2508 = vmul.f32 %v2444, 0.1
      %v2509 = vmul.f32 %v2445, 0.1
      %v2510 = vmul.f32 %v2446, 0.1
      %v2511 = vmul.f32 %v2447, 0.1
      %v2512 = vsel %vm2448, %v2416, %v2480
      %v2513 = vsel %vm2449, %v2417, %v2481
      %v2514 = vsel %vm2450, %v2418, %v2482
      %v2515 = vsel %vm2451, %v2419, %v2483
      %v2516 = vsel %vm2452, %v2420, %v2484
      %v2517 = vsel %vm2453, %v2421, %v2485
      %v2518 = vsel %vm2454, %v2422, %v2486
      %v2519 = vsel %vm2455, %v2423, %v2487
      %v2520 = vsel %vm2456, %v2424, %v2488
      %v2521 = vsel %vm2457, %v2425, %v2489
      %v2522 = vsel %vm2458, %v2426, %v2490
      %v2523 = vsel %vm2459, %v2427, %v2491
      %v2524 = vsel %vm2460, %v2428, %v2492
      %v2525 = vsel %vm2461, %v2429, %v2493
      %v2526 = vsel %vm2462, %v2430, %v2494
      %v2527 = vsel %vm2463, %v2431, %v2495
      %v2528 = vsel %vm2464, %v2432, %v2496
      %v2529 = vsel %vm2465, %v2433, %v2497
      %v2530 = vsel %vm2466, %v2434, %v2498
      %v2531 = vsel %vm2467, %v2435, %v2499
      %v2532 = vsel %vm2468, %v2436, %v2500
      %v2533 = vsel %vm2469, %v2437, %v2501
      %v2534 = vsel %vm2470, %v2438, %v2502
      %v2535 = vsel %vm2471, %v2439, %v2503
      %v2536 = vsel %vm2472, %v2440, %v2504
      %v2537 = vsel %vm2473, %v2441, %v2505
      %v2538 = vsel %vm2474, %v2442, %v2506
      %v2539 = vsel %vm2475, %v2443, %v2507
      %v2540 = vsel %vm2476, %v2444, %v2508
      %v2541 = vsel %vm2477, %v2445, %v2509
      %v2542 = vsel %vm2478, %v2446, %v2510
      %v2543 = vsel %vm2479, %v2447, %v2511
      %2544 = vst [vmem:[%s358] sm:$0xff] %v2512
      %2545 = vst [vmem:[%s358 + $0x8] sm:$0xff] %v2513
      %2546 = vst [vmem:[%s358 + $0x10] sm:$0xff] %v2514
      %2547 = vst [vmem:[%s358 + $0x18] sm:$0xff] %v2515
      %2548 = vst [vmem:[%s358 + $0x20] sm:$0xff] %v2516
      %2549 = vst [vmem:[%s358 + $0x28] sm:$0xff] %v2517
      %2550 = vst [vmem:[%s358 + $0x30] sm:$0xff] %v2518
      %2551 = vst [vmem:[%s358 + $0x38] sm:$0xff] %v2519
      %2552 = vst [vmem:[%s358 + $0x40] sm:$0xff] %v2520
      %2553 = vst [vmem:[%s358 + $0x48] sm:$0xff] %v2521
      %2554 = vst [vmem:[%s358 + $0x50] sm:$0xff] %v2522
      %2555 = vst [vmem:[%s358 + $0x58] sm:$0xff] %v2523
      %2556 = vst [vmem:[%s358 + $0x60] sm:$0xff] %v2524
      %2557 = vst [vmem:[%s358 + $0x68] sm:$0xff] %v2525
      %2558 = vst [vmem:[%s358 + $0x70] sm:$0xff] %v2526
      %2559 = vst [vmem:[%s358 + $0x78] sm:$0xff] %v2527
      %2560 = vst [vmem:[%s358 + $0x80] sm:$0xff] %v2528
      %2561 = vst [vmem:[%s358 + $0x88] sm:$0xff] %v2529
      %2562 = vst [vmem:[%s358 + $0x90] sm:$0xff] %v2530
      %2563 = vst [vmem:[%s358 + $0x98] sm:$0xff] %v2531
      %2564 = vst [vmem:[%s358 + $0xa0] sm:$0xff] %v2532
      %2565 = vst [vmem:[%s358 + $0xa8] sm:$0xff] %v2533
      %2566 = vst [vmem:[%s358 + $0xb0] sm:$0xff] %v2534
      %2567 = vst [vmem:[%s358 + $0xb8] sm:$0xff] %v2535
      %2568 = vst [vmem:[%s358 + $0xc0] sm:$0xff] %v2536
      %2569 = vst [vmem:[%s358 + $0xc8] sm:$0xff] %v2537
      %2570 = vst [vmem:[%s358 + $0xd0] sm:$0xff] %v2538
      %2571 = vst [vmem:[%s358 + $0xd8] sm:$0xff] %v2539
      %2572 = vst [vmem:[%s358 + $0xe0] sm:$0xff] %v2540
      %2573 = vst [vmem:[%s358 + $0xe8] sm:$0xff] %v2541
      %2574 = vst [vmem:[%s358 + $0xf0] sm:$0xff] %v2542
      %2575 = vst [vmem:[%s358 + $0xf8] sm:$0xff] %v2543
      %v2576 = vld [vmem:[#allocation2] sm:$0xff]
      %v2577 = vld [vmem:[#allocation2 + $0x8] sm:$0xff]
      %v2578 = vld [vmem:[#allocation2 + $0x10] sm:$0xff]
      %v2579 = vld [vmem:[#allocation2 + $0x18] sm:$0xff]
      %v2580 = vld [vmem:[#allocation2 + $0x20] sm:$0xff]
      %v2581 = vld [vmem:[#allocation2 + $0x28] sm:$0xff]
      %v2582 = vld [vmem:[#allocation2 + $0x30] sm:$0xff]
      %v2583 = vld [vmem:[#allocation2 + $0x38] sm:$0xff]
      %v2584 = vld [vmem:[#allocation2 + $0x40] sm:$0xff]
      %v2585 = vld [vmem:[#allocation2 + $0x48] sm:$0xff]
      %v2586 = vld [vmem:[#allocation2 + $0x50] sm:$0xff]
      %v2587 = vld [vmem:[#allocation2 + $0x58] sm:$0xff]
      %v2588 = vld [vmem:[#allocation2 + $0x60] sm:$0xff]
      %v2589 = vld [vmem:[#allocation2 + $0x68] sm:$0xff]
      %v2590 = vld [vmem:[#allocation2 + $0x70] sm:$0xff]
      %v2591 = vld [vmem:[#allocation2 + $0x78] sm:$0xff]
      %v2592 = vld [vmem:[#allocation2 + $0x80] sm:$0xff]
      %v2593 = vld [vmem:[#allocation2 + $0x88] sm:$0xff]
      %v2594 = vld [vmem:[#allocation2 + $0x90] sm:$0xff]
      %v2595 = vld [vmem:[#allocation2 + $0x98] sm:$0xff]
      %v2596 = vld [vmem:[#allocation2 + $0xa0] sm:$0xff]
      %v2597 = vld [vmem:[#allocation2 + $0xa8] sm:$0xff]
      %v2598 = vld [vmem:[#allocation2 + $0xb0] sm:$0xff]
      %v2599 = vld [vmem:[#allocation2 + $0xb8] sm:$0xff]
      %v2600 = vld [vmem:[#allocation2 + $0xc0] sm:$0xff]
      %v2601 = vld [vmem:[#allocation2 + $0xc8] sm:$0xff]
      %v2602 = vld [vmem:[#allocation2 + $0xd0] sm:$0xff]
      %v2603 = vld [vmem:[#allocation2 + $0xd8] sm:$0xff]
      %v2604 = vld [vmem:[#allocation2 + $0xe0] sm:$0xff]
      %v2605 = vld [vmem:[#allocation2 + $0xe8] sm:$0xff]
      %v2606 = vld [vmem:[#allocation2 + $0xf0] sm:$0xff]
      %v2607 = vld [vmem:[#allocation2 + $0xf8] sm:$0xff]
      %v2608 = vld [vmem:[#allocation2 + $0x100] sm:$0xff]
      %v2609 = vld [vmem:[#allocation2 + $0x108] sm:$0xff]
      %v2610 = vld [vmem:[#allocation2 + $0x110] sm:$0xff]
      %v2611 = vld [vmem:[#allocation2 + $0x118] sm:$0xff]
      %v2612 = vrot.slane %v2576, 7
      %v2613 = vrot.slane %v2577, 7
      %v2614 = vrot.slane %v2578, 7
      %v2615 = vrot.slane %v2579, 7
      %v2616 = vrot.slane %v2580, 7
      %v2617 = vrot.slane %v2581, 7
      %v2618 = vrot.slane %v2582, 7
      %v2619 = vrot.slane %v2583, 7
      %v2620 = vrot.slane %v2584, 7
      %v2621 = vrot.slane %v2585, 7
      %v2622 = vrot.slane %v2586, 7
      %v2623 = vrot.slane %v2587, 7
      %v2624 = vrot.slane %v2588, 7
      %v2625 = vrot.slane %v2589, 7
      %v2626 = vrot.slane %v2590, 7
      %v2627 = vrot.slane %v2591, 7
      %v2628 = vrot.slane %v2592, 7
      %v2629 = vrot.slane %v2593, 7
      %v2630 = vrot.slane %v2594, 7
      %v2631 = vrot.slane %v2595, 7
      %v2632 = vrot.slane %v2596, 7
      %v2633 = vrot.slane %v2597, 7
      %v2634 = vrot.slane %v2598, 7
      %v2635 = vrot.slane %v2599, 7
      %v2636 = vrot.slane %v2600, 7
      %v2637 = vrot.slane %v2601, 7
      %v2638 = vrot.slane %v2602, 7
      %v2639 = vrot.slane %v2603, 7
      %v2640 = vrot.slane %v2604, 7
      %v2641 = vrot.slane %v2605, 7
      %v2642 = vrot.slane %v2606, 7
      %v2643 = vrot.slane %v2607, 7
      %v2644 = vrot.slane %v2608, 7
      %v2645 = vrot.slane %v2609, 7
      %v2646 = vrot.slane %v2610, 7
      %v2647 = vrot.slane %v2611, 7
      %v2648 = vsel %vm463, %v2646, %v2647
      %v2649 = vsel %vm463, %v2645, %v2646
      %v2650 = vsel %vm463, %v2644, %v2645
      %v2651 = vsel %vm463, %v2643, %v2644
      %v2652 = vsel %vm463, %v2642, %v2643
      %v2653 = vsel %vm463, %v2641, %v2642
      %v2654 = vsel %vm463, %v2640, %v2641
      %v2655 = vsel %vm463, %v2639, %v2640
      %v2656 = vsel %vm463, %v2638, %v2639
      %v2657 = vsel %vm463, %v2637, %v2638
      %v2658 = vsel %vm463, %v2636, %v2637
      %v2659 = vsel %vm463, %v2635, %v2636
      %v2660 = vsel %vm463, %v2634, %v2635
      %v2661 = vsel %vm463, %v2633, %v2634
      %v2662 = vsel %vm463, %v2632, %v2633
      %v2663 = vsel %vm463, %v2631, %v2632
      %v2664 = vsel %vm463, %v2630, %v2631
      %v2665 = vsel %vm463, %v2629, %v2630
      %v2666 = vsel %vm463, %v2628, %v2629
      %v2667 = vsel %vm463, %v2627, %v2628
      %v2668 = vsel %vm463, %v2626, %v2627
      %v2669 = vsel %vm463, %v2625, %v2626
      %v2670 = vsel %vm463, %v2624, %v2625
      %v2671 = vsel %vm463, %v2623, %v2624
      %v2672 = vsel %vm463, %v2622, %v2623
      %v2673 = vsel %vm463, %v2621, %v2622
      %v2674 = vsel %vm463, %v2620, %v2621
      %v2675 = vsel %vm463, %v2619, %v2620
      %v2676 = vsel %vm463, %v2618, %v2619
      %v2677 = vsel %vm463, %v2617, %v2618
      %v2678 = vsel %vm463, %v2616, %v2617
      %v2679 = vsel %vm463, %v2615, %v2616
      %v2680 = vsel %vm463, %v2614, %v2615
      %v2681 = vsel %vm463, %v2613, %v2614
      %v2682 = vsel %vm463, %v2612, %v2613
      %v2683 = vsel %vm463, %v2647, %v2612
      %v2684 = vsel %vm502, %v2683, 0.0
      %v2685 = vsel %vm503, %v2682, 0.0
      %v2686 = vsel %vm502, %v2681, 0.0
      %v2687 = vsel %vm503, %v2680, 0.0
      %v2688 = vsel %vm502, %v2679, 0.0
      %v2689 = vsel %vm503, %v2678, 0.0
      %v2690 = vsel %vm502, %v2677, 0.0
      %v2691 = vsel %vm503, %v2676, 0.0
      %v2692 = vsel %vm502, %v2675, 0.0
      %v2693 = vsel %vm503, %v2674, 0.0
      %v2694 = vsel %vm502, %v2673, 0.0
      %v2695 = vsel %vm503, %v2672, 0.0
      %v2696 = vsel %vm502, %v2671, 0.0
      %v2697 = vsel %vm503, %v2670, 0.0
      %v2698 = vsel %vm502, %v2669, 0.0
      %v2699 = vsel %vm503, %v2668, 0.0
      %v2700 = vsel %vm502, %v2667, 0.0
      %v2701 = vsel %vm503, %v2666, 0.0
      %v2702 = vsel %vm502, %v2665, 0.0
      %v2703 = vsel %vm503, %v2664, 0.0
      %v2704 = vsel %vm502, %v2663, 0.0
      %v2705 = vsel %vm503, %v2662, 0.0
      %v2706 = vsel %vm502, %v2661, 0.0
      %v2707 = vsel %vm503, %v2660, 0.0
      %v2708 = vsel %vm502, %v2659, 0.0
      %v2709 = vsel %vm503, %v2658, 0.0
      %v2710 = vsel %vm502, %v2657, 0.0
      %v2711 = vsel %vm503, %v2656, 0.0
      %v2712 = vsel %vm502, %v2655, 0.0
      %v2713 = vsel %vm503, %v2654, 0.0
      %v2714 = vsel %vm502, %v2653, 0.0
      %v2715 = vsel %vm503, %v2652, 0.0
      %v2716 = vsel %vm502, %v2651, 0.0
      %v2717 = vsel %vm503, %v2650, 0.0
      %v2718 = vsel %vm502, %v2649, 0.0
      %v2719 = vsel %vm503, %v2648, 0.0
      %v2720 = vrot.slane %v2576, 1
      %v2721 = vrot.slane %v2577, 1
      %v2722 = vrot.slane %v2578, 1
      %v2723 = vrot.slane %v2579, 1
      %v2724 = vrot.slane %v2580, 1
      %v2725 = vrot.slane %v2581, 1
      %v2726 = vrot.slane %v2582, 1
      %v2727 = vrot.slane %v2583, 1
      %v2728 = vrot.slane %v2584, 1
      %v2729 = vrot.slane %v2585, 1
      %v2730 = vrot.slane %v2586, 1
      %v2731 = vrot.slane %v2587, 1
      %v2732 = vrot.slane %v2588, 1
      %v2733 = vrot.slane %v2589, 1
      %v2734 = vrot.slane %v2590, 1
      %v2735 = vrot.slane %v2591, 1
      %v2736 = vrot.slane %v2592, 1
      %v2737 = vrot.slane %v2593, 1
      %v2738 = vrot.slane %v2594, 1
      %v2739 = vrot.slane %v2595, 1
      %v2740 = vrot.slane %v2596, 1
      %v2741 = vrot.slane %v2597, 1
      %v2742 = vrot.slane %v2598, 1
      %v2743 = vrot.slane %v2599, 1
      %v2744 = vrot.slane %v2600, 1
      %v2745 = vrot.slane %v2601, 1
      %v2746 = vrot.slane %v2602, 1
      %v2747 = vrot.slane %v2603, 1
      %v2748 = vrot.slane %v2604, 1
      %v2749 = vrot.slane %v2605, 1
      %v2750 = vrot.slane %v2606, 1
      %v2751 = vrot.slane %v2607, 1
      %v2752 = vrot.slane %v2608, 1
      %v2753 = vrot.slane %v2609, 1
      %v2754 = vrot.slane %v2610, 1
      %v2755 = vrot.slane %v2611, 1
      %v2756 = vsel %vm576, %v2754, %v2755
      %v2757 = vsel %vm576, %v2753, %v2754
      %v2758 = vsel %vm576, %v2752, %v2753
      %v2759 = vsel %vm576, %v2751, %v2752
      %v2760 = vsel %vm576, %v2750, %v2751
      %v2761 = vsel %vm576, %v2749, %v2750
      %v2762 = vsel %vm576, %v2748, %v2749
      %v2763 = vsel %vm576, %v2747, %v2748
      %v2764 = vsel %vm576, %v2746, %v2747
      %v2765 = vsel %vm576, %v2745, %v2746
      %v2766 = vsel %vm576, %v2744, %v2745
      %v2767 = vsel %vm576, %v2743, %v2744
      %v2768 = vsel %vm576, %v2742, %v2743
      %v2769 = vsel %vm576, %v2741, %v2742
      %v2770 = vsel %vm576, %v2740, %v2741
      %v2771 = vsel %vm576, %v2739, %v2740
      %v2772 = vsel %vm576, %v2738, %v2739
      %v2773 = vsel %vm576, %v2737, %v2738
      %v2774 = vsel %vm576, %v2736, %v2737
      %v2775 = vsel %vm576, %v2735, %v2736
      %v2776 = vsel %vm576, %v2734, %v2735
      %v2777 = vsel %vm576, %v2733, %v2734
      %v2778 = vsel %vm576, %v2732, %v2733
      %v2779 = vsel %vm576, %v2731, %v2732
      %v2780 = vsel %vm576, %v2730, %v2731
      %v2781 = vsel %vm576, %v2729, %v2730
      %v2782 = vsel %vm576, %v2728, %v2729
      %v2783 = vsel %vm576, %v2727, %v2728
      %v2784 = vsel %vm576, %v2726, %v2727
      %v2785 = vsel %vm576, %v2725, %v2726
      %v2786 = vsel %vm576, %v2724, %v2725
      %v2787 = vsel %vm576, %v2723, %v2724
      %v2788 = vsel %vm576, %v2722, %v2723
      %v2789 = vsel %vm576, %v2721, %v2722
      %v2790 = vsel %vm576, %v2720, %v2721
      %v2791 = vsel %vm576, %v2755, %v2720
      %v2792 = vsel %vm615, %v2790, 0.0
      %v2793 = vsel %vm616, %v2789, 0.0
      %v2794 = vsel %vm615, %v2788, 0.0
      %v2795 = vsel %vm616, %v2787, 0.0
      %v2796 = vsel %vm615, %v2786, 0.0
      %v2797 = vsel %vm616, %v2785, 0.0
      %v2798 = vsel %vm615, %v2784, 0.0
      %v2799 = vsel %vm616, %v2783, 0.0
      %v2800 = vsel %vm615, %v2782, 0.0
      %v2801 = vsel %vm616, %v2781, 0.0
      %v2802 = vsel %vm615, %v2780, 0.0
      %v2803 = vsel %vm616, %v2779, 0.0
      %v2804 = vsel %vm615, %v2778, 0.0
      %v2805 = vsel %vm616, %v2777, 0.0
      %v2806 = vsel %vm615, %v2776, 0.0
      %v2807 = vsel %vm616, %v2775, 0.0
      %v2808 = vsel %vm615, %v2774, 0.0
      %v2809 = vsel %vm616, %v2773, 0.0
      %v2810 = vsel %vm615, %v2772, 0.0
      %v2811 = vsel %vm616, %v2771, 0.0
      %v2812 = vsel %vm615, %v2770, 0.0
      %v2813 = vsel %vm616, %v2769, 0.0
      %v2814 = vsel %vm615, %v2768, 0.0
      %v2815 = vsel %vm616, %v2767, 0.0
      %v2816 = vsel %vm615, %v2766, 0.0
      %v2817 = vsel %vm616, %v2765, 0.0
      %v2818 = vsel %vm615, %v2764, 0.0
      %v2819 = vsel %vm616, %v2763, 0.0
      %v2820 = vsel %vm615, %v2762, 0.0
      %v2821 = vsel %vm616, %v2761, 0.0
      %v2822 = vsel %vm615, %v2760, 0.0
      %v2823 = vsel %vm616, %v2759, 0.0
      %v2824 = vsel %vm615, %v2758, 0.0
      %v2825 = vsel %vm616, %v2757, 0.0
      %v2826 = vsel %vm615, %v2756, 0.0
      %v2827 = vsel %vm616, %v2791, 0.0
      %v2828 = vpack.c.bf16 %v2685, %v2684
      %v2829 = vpack.c.bf16 %v2687, %v2686
      %v2830 = vpack.c.bf16 %v2689, %v2688
      %v2831 = vpack.c.bf16 %v2691, %v2690
      %v2832 = vpack.c.bf16 %v2693, %v2692
      %v2833 = vpack.c.bf16 %v2695, %v2694
      %v2834 = vpack.c.bf16 %v2697, %v2696
      %v2835 = vpack.c.bf16 %v2699, %v2698
      %v2836 = vpack.c.bf16 %v2701, %v2700
      %v2837 = vpack.c.bf16 %v2703, %v2702
      %v2838 = vpack.c.bf16 %v2705, %v2704
      %v2839 = vpack.c.bf16 %v2707, %v2706
      %v2840 = vpack.c.bf16 %v2709, %v2708
      %v2841 = vpack.c.bf16 %v2711, %v2710
      %v2842 = vpack.c.bf16 %v2713, %v2712
      %v2843 = vpack.c.bf16 %v2715, %v2714
      %2844 = vst [vmem:[#allocation3] sm:$0xff] %v2828
      %2845 = vst [vmem:[#allocation3 + $0x48] sm:$0xff] %v2829
      %2846 = vst [vmem:[#allocation3 + $0x90] sm:$0xff] %v2830
      %2847 = vst [vmem:[#allocation3 + $0xd8] sm:$0xff] %v2831
      %2848 = vst [vmem:[#allocation3 + $0x120] sm:$0xff] %v2832
      %2849 = vst [vmem:[#allocation3 + $0x168] sm:$0xff] %v2833
      %2850 = vst [vmem:[#allocation3 + $0x1b0] sm:$0xff] %v2834
      %2851 = vst [vmem:[#allocation3 + $0x1f8] sm:$0xff] %v2835
      %2852 = vst [vmem:[#allocation3 + $0x240] sm:$0xff] %v2836
      %2853 = vst [vmem:[#allocation3 + $0x288] sm:$0xff] %v2837
      %2854 = vst [vmem:[#allocation3 + $0x2d0] sm:$0xff] %v2838
      %2855 = vst [vmem:[#allocation3 + $0x318] sm:$0xff] %v2839
      %2856 = vst [vmem:[#allocation3 + $0x360] sm:$0xff] %v2840
      %2857 = vst [vmem:[#allocation3 + $0x3a8] sm:$0xff] %v2841
      %2858 = vst [vmem:[#allocation3 + $0x3f0] sm:$0xff] %v2842
      %2859 = vst [vmem:[#allocation3 + $0x438] sm:$0xff] %v2843
      %v2860 = vpack.c.bf16 %v2577, %v2576
      %v2861 = vpack.c.bf16 %v2579, %v2578
      %v2862 = vpack.c.bf16 %v2581, %v2580
      %v2863 = vpack.c.bf16 %v2583, %v2582
      %v2864 = vpack.c.bf16 %v2585, %v2584
      %v2865 = vpack.c.bf16 %v2587, %v2586
      %v2866 = vpack.c.bf16 %v2589, %v2588
      %v2867 = vpack.c.bf16 %v2591, %v2590
      %v2868 = vpack.c.bf16 %v2593, %v2592
      %v2869 = vpack.c.bf16 %v2595, %v2594
      %v2870 = vpack.c.bf16 %v2597, %v2596
      %v2871 = vpack.c.bf16 %v2599, %v2598
      %v2872 = vpack.c.bf16 %v2601, %v2600
      %v2873 = vpack.c.bf16 %v2603, %v2602
      %v2874 = vpack.c.bf16 %v2605, %v2604
      %v2875 = vpack.c.bf16 %v2607, %v2606
      %2876 = vst [vmem:[#allocation3 + $0x8] sm:$0xff] %v2860
      %2877 = vst [vmem:[#allocation3 + $0x50] sm:$0xff] %v2861
      %2878 = vst [vmem:[#allocation3 + $0x98] sm:$0xff] %v2862
      %2879 = vst [vmem:[#allocation3 + $0xe0] sm:$0xff] %v2863
      %2880 = vst [vmem:[#allocation3 + $0x128] sm:$0xff] %v2864
      %2881 = vst [vmem:[#allocation3 + $0x170] sm:$0xff] %v2865
      %2882 = vst [vmem:[#allocation3 + $0x1b8] sm:$0xff] %v2866
      %2883 = vst [vmem:[#allocation3 + $0x200] sm:$0xff] %v2867
      %2884 = vst [vmem:[#allocation3 + $0x248] sm:$0xff] %v2868
      %2885 = vst [vmem:[#allocation3 + $0x290] sm:$0xff] %v2869
      %2886 = vst [vmem:[#allocation3 + $0x2d8] sm:$0xff] %v2870
      %2887 = vst [vmem:[#allocation3 + $0x320] sm:$0xff] %v2871
      %2888 = vst [vmem:[#allocation3 + $0x368] sm:$0xff] %v2872
      %2889 = vst [vmem:[#allocation3 + $0x3b0] sm:$0xff] %v2873
      %2890 = vst [vmem:[#allocation3 + $0x3f8] sm:$0xff] %v2874
      %2891 = vst [vmem:[#allocation3 + $0x440] sm:$0xff] %v2875
      %v2892 = vpack.c.bf16 %v2793, %v2792
      %v2893 = vpack.c.bf16 %v2795, %v2794
      %v2894 = vpack.c.bf16 %v2797, %v2796
      %v2895 = vpack.c.bf16 %v2799, %v2798
      %v2896 = vpack.c.bf16 %v2801, %v2800
      %v2897 = vpack.c.bf16 %v2803, %v2802
      %v2898 = vpack.c.bf16 %v2805, %v2804
      %v2899 = vpack.c.bf16 %v2807, %v2806
      %v2900 = vpack.c.bf16 %v2809, %v2808
      %v2901 = vpack.c.bf16 %v2811, %v2810
      %v2902 = vpack.c.bf16 %v2813, %v2812
      %v2903 = vpack.c.bf16 %v2815, %v2814
      %v2904 = vpack.c.bf16 %v2817, %v2816
      %v2905 = vpack.c.bf16 %v2819, %v2818
      %v2906 = vpack.c.bf16 %v2821, %v2820
      %v2907 = vpack.c.bf16 %v2823, %v2822
      %2908 = vst [vmem:[#allocation3 + $0x10] sm:$0xff] %v2892
      %2909 = vst [vmem:[#allocation3 + $0x58] sm:$0xff] %v2893
      %2910 = vst [vmem:[#allocation3 + $0xa0] sm:$0xff] %v2894
      %2911 = vst [vmem:[#allocation3 + $0xe8] sm:$0xff] %v2895
      %2912 = vst [vmem:[#allocation3 + $0x130] sm:$0xff] %v2896
      %2913 = vst [vmem:[#allocation3 + $0x178] sm:$0xff] %v2897
      %2914 = vst [vmem:[#allocation3 + $0x1c0] sm:$0xff] %v2898
      %2915 = vst [vmem:[#allocation3 + $0x208] sm:$0xff] %v2899
      %2916 = vst [vmem:[#allocation3 + $0x250] sm:$0xff] %v2900
      %2917 = vst [vmem:[#allocation3 + $0x298] sm:$0xff] %v2901
      %2918 = vst [vmem:[#allocation3 + $0x2e0] sm:$0xff] %v2902
      %2919 = vst [vmem:[#allocation3 + $0x328] sm:$0xff] %v2903
      %2920 = vst [vmem:[#allocation3 + $0x370] sm:$0xff] %v2904
      %2921 = vst [vmem:[#allocation3 + $0x3b8] sm:$0xff] %v2905
      %2922 = vst [vmem:[#allocation3 + $0x400] sm:$0xff] %v2906
      %2923 = vst [vmem:[#allocation3 + $0x448] sm:$0xff] %v2907
      %v2924 = vpack.c.bf16 %v2717, %v2716
      %2925 = vst [vmem:[#allocation3 + $0x18] sm:$0xff] %v2829
      %2926 = vst [vmem:[#allocation3 + $0x60] sm:$0xff] %v2830
      %2927 = vst [vmem:[#allocation3 + $0xa8] sm:$0xff] %v2831
      %2928 = vst [vmem:[#allocation3 + $0xf0] sm:$0xff] %v2832
      %2929 = vst [vmem:[#allocation3 + $0x138] sm:$0xff] %v2833
      %2930 = vst [vmem:[#allocation3 + $0x180] sm:$0xff] %v2834
      %2931 = vst [vmem:[#allocation3 + $0x1c8] sm:$0xff] %v2835
      %2932 = vst [vmem:[#allocation3 + $0x210] sm:$0xff] %v2836
      %2933 = vst [vmem:[#allocation3 + $0x258] sm:$0xff] %v2837
      %2934 = vst [vmem:[#allocation3 + $0x2a0] sm:$0xff] %v2838
      %2935 = vst [vmem:[#allocation3 + $0x2e8] sm:$0xff] %v2839
      %2936 = vst [vmem:[#allocation3 + $0x330] sm:$0xff] %v2840
      %2937 = vst [vmem:[#allocation3 + $0x378] sm:$0xff] %v2841
      %2938 = vst [vmem:[#allocation3 + $0x3c0] sm:$0xff] %v2842
      %2939 = vst [vmem:[#allocation3 + $0x408] sm:$0xff] %v2843
      %2940 = vst [vmem:[#allocation3 + $0x450] sm:$0xff] %v2924
      %v2941 = vpack.c.bf16 %v2609, %v2608
      %2942 = vst [vmem:[#allocation3 + $0x20] sm:$0xff] %v2861
      %2943 = vst [vmem:[#allocation3 + $0x68] sm:$0xff] %v2862
      %2944 = vst [vmem:[#allocation3 + $0xb0] sm:$0xff] %v2863
      %2945 = vst [vmem:[#allocation3 + $0xf8] sm:$0xff] %v2864
      %2946 = vst [vmem:[#allocation3 + $0x140] sm:$0xff] %v2865
      %2947 = vst [vmem:[#allocation3 + $0x188] sm:$0xff] %v2866
      %2948 = vst [vmem:[#allocation3 + $0x1d0] sm:$0xff] %v2867
      %2949 = vst [vmem:[#allocation3 + $0x218] sm:$0xff] %v2868
      %2950 = vst [vmem:[#allocation3 + $0x260] sm:$0xff] %v2869
      %2951 = vst [vmem:[#allocation3 + $0x2a8] sm:$0xff] %v2870
      %2952 = vst [vmem:[#allocation3 + $0x2f0] sm:$0xff] %v2871
      %2953 = vst [vmem:[#allocation3 + $0x338] sm:$0xff] %v2872
      %2954 = vst [vmem:[#allocation3 + $0x380] sm:$0xff] %v2873
      %2955 = vst [vmem:[#allocation3 + $0x3c8] sm:$0xff] %v2874
      %2956 = vst [vmem:[#allocation3 + $0x410] sm:$0xff] %v2875
      %2957 = vst [vmem:[#allocation3 + $0x458] sm:$0xff] %v2941
      %v2958 = vpack.c.bf16 %v2825, %v2824
      %2959 = vst [vmem:[#allocation3 + $0x28] sm:$0xff] %v2893
      %2960 = vst [vmem:[#allocation3 + $0x70] sm:$0xff] %v2894
      %2961 = vst [vmem:[#allocation3 + $0xb8] sm:$0xff] %v2895
      %2962 = vst [vmem:[#allocation3 + $0x100] sm:$0xff] %v2896
      %2963 = vst [vmem:[#allocation3 + $0x148] sm:$0xff] %v2897
      %2964 = vst [vmem:[#allocation3 + $0x190] sm:$0xff] %v2898
      %2965 = vst [vmem:[#allocation3 + $0x1d8] sm:$0xff] %v2899
      %2966 = vst [vmem:[#allocation3 + $0x220] sm:$0xff] %v2900
      %2967 = vst [vmem:[#allocation3 + $0x268] sm:$0xff] %v2901
      %2968 = vst [vmem:[#allocation3 + $0x2b0] sm:$0xff] %v2902
      %2969 = vst [vmem:[#allocation3 + $0x2f8] sm:$0xff] %v2903
      %2970 = vst [vmem:[#allocation3 + $0x340] sm:$0xff] %v2904
      %2971 = vst [vmem:[#allocation3 + $0x388] sm:$0xff] %v2905
      %2972 = vst [vmem:[#allocation3 + $0x3d0] sm:$0xff] %v2906
      %2973 = vst [vmem:[#allocation3 + $0x418] sm:$0xff] %v2907
      %2974 = vst [vmem:[#allocation3 + $0x460] sm:$0xff] %v2958
      %v2975 = vpack.c.bf16 %v2719, %v2718
      %2976 = vst [vmem:[#allocation3 + $0x30] sm:$0xff] %v2830
      %2977 = vst [vmem:[#allocation3 + $0x78] sm:$0xff] %v2831
      %2978 = vst [vmem:[#allocation3 + $0xc0] sm:$0xff] %v2832
      %2979 = vst [vmem:[#allocation3 + $0x108] sm:$0xff] %v2833
      %2980 = vst [vmem:[#allocation3 + $0x150] sm:$0xff] %v2834
      %2981 = vst [vmem:[#allocation3 + $0x198] sm:$0xff] %v2835
      %2982 = vst [vmem:[#allocation3 + $0x1e0] sm:$0xff] %v2836
      %2983 = vst [vmem:[#allocation3 + $0x228] sm:$0xff] %v2837
      %2984 = vst [vmem:[#allocation3 + $0x270] sm:$0xff] %v2838
      %2985 = vst [vmem:[#allocation3 + $0x2b8] sm:$0xff] %v2839
      %2986 = vst [vmem:[#allocation3 + $0x300] sm:$0xff] %v2840
      %2987 = vst [vmem:[#allocation3 + $0x348] sm:$0xff] %v2841
      %2988 = vst [vmem:[#allocation3 + $0x390] sm:$0xff] %v2842
      %2989 = vst [vmem:[#allocation3 + $0x3d8] sm:$0xff] %v2843
      %2990 = vst [vmem:[#allocation3 + $0x420] sm:$0xff] %v2924
      %2991 = vst [vmem:[#allocation3 + $0x468] sm:$0xff] %v2975
      %v2992 = vpack.c.bf16 %v2611, %v2610
      %2993 = vst [vmem:[#allocation3 + $0x38] sm:$0xff] %v2862
      %2994 = vst [vmem:[#allocation3 + $0x80] sm:$0xff] %v2863
      %2995 = vst [vmem:[#allocation3 + $0xc8] sm:$0xff] %v2864
      %2996 = vst [vmem:[#allocation3 + $0x110] sm:$0xff] %v2865
      %2997 = vst [vmem:[#allocation3 + $0x158] sm:$0xff] %v2866
      %2998 = vst [vmem:[#allocation3 + $0x1a0] sm:$0xff] %v2867
      %2999 = vst [vmem:[#allocation3 + $0x1e8] sm:$0xff] %v2868
      %3000 = vst [vmem:[#allocation3 + $0x230] sm:$0xff] %v2869
      %3001 = vst [vmem:[#allocation3 + $0x278] sm:$0xff] %v2870
      %3002 = vst [vmem:[#allocation3 + $0x2c0] sm:$0xff] %v2871
      %3003 = vst [vmem:[#allocation3 + $0x308] sm:$0xff] %v2872
      %3004 = vst [vmem:[#allocation3 + $0x350] sm:$0xff] %v2873
      %3005 = vst [vmem:[#allocation3 + $0x398] sm:$0xff] %v2874
      %3006 = vst [vmem:[#allocation3 + $0x3e0] sm:$0xff] %v2875
      %3007 = vst [vmem:[#allocation3 + $0x428] sm:$0xff] %v2941
      %3008 = vst [vmem:[#allocation3 + $0x470] sm:$0xff] %v2992
      %v3009 = vpack.c.bf16 %v2827, %v2826
      %3010 = vst [vmem:[#allocation3 + $0x40] sm:$0xff] %v2894
      %3011 = vst [vmem:[#allocation3 + $0x88] sm:$0xff] %v2895
      %3012 = vst [vmem:[#allocation3 + $0xd0] sm:$0xff] %v2896
      %3013 = vst [vmem:[#allocation3 + $0x118] sm:$0xff] %v2897
      %3014 = vst [vmem:[#allocation3 + $0x160] sm:$0xff] %v2898
      %3015 = vst [vmem:[#allocation3 + $0x1a8] sm:$0xff] %v2899
      %3016 = vst [vmem:[#allocation3 + $0x1f0] sm:$0xff] %v2900
      %3017 = vst [vmem:[#allocation3 + $0x238] sm:$0xff] %v2901
      %3018 = vst [vmem:[#allocation3 + $0x280] sm:$0xff] %v2902
      %3019 = vst [vmem:[#allocation3 + $0x2c8] sm:$0xff] %v2903
      %3020 = vst [vmem:[#allocation3 + $0x310] sm:$0xff] %v2904
      %3021 = vst [vmem:[#allocation3 + $0x358] sm:$0xff] %v2905
      %3022 = vst [vmem:[#allocation3 + $0x3a0] sm:$0xff] %v2906
      %3023 = vst [vmem:[#allocation3 + $0x3e8] sm:$0xff] %v2907
      %3024 = vst [vmem:[#allocation3 + $0x430] sm:$0xff] %v2958
      %3025 = vst [vmem:[#allocation3 + $0x478] sm:$0xff] %v3009
      %v3026 = vld [vmem:[#allocation3] sm:$0xff]
      %v3027 = vld [vmem:[#allocation3 + $0x8] sm:$0xff]
      %v3028 = vld [vmem:[#allocation3 + $0x10] sm:$0xff]
      %v3029 = vld [vmem:[#allocation3 + $0x18] sm:$0xff]
      %v3030 = vld [vmem:[#allocation3 + $0x20] sm:$0xff]
      %v3031 = vld [vmem:[#allocation3 + $0x28] sm:$0xff]
      %v3032 = vld [vmem:[#allocation3 + $0x30] sm:$0xff]
      %v3033 = vld [vmem:[#allocation3 + $0x38] sm:$0xff]
      %v3034 = vld [vmem:[#allocation3 + $0x40] sm:$0xff]
      %v3035 = vld [vmem:[#allocation3 + $0x48] sm:$0xff]
      %v3036 = vld [vmem:[#allocation3 + $0x50] sm:$0xff]
      %v3037 = vld [vmem:[#allocation3 + $0x58] sm:$0xff]
      %v3038 = vld [vmem:[#allocation3 + $0x60] sm:$0xff]
      %v3039 = vld [vmem:[#allocation3 + $0x68] sm:$0xff]
      %v3040 = vld [vmem:[#allocation3 + $0x70] sm:$0xff]
      %v3041 = vld [vmem:[#allocation3 + $0x78] sm:$0xff]
      %v3042 = vld [vmem:[#allocation3 + $0x80] sm:$0xff]
      %v3043 = vld [vmem:[#allocation3 + $0x88] sm:$0xff]
      %v3044 = vld [vmem:[#allocation3 + $0x90] sm:$0xff]
      %v3045 = vld [vmem:[#allocation3 + $0x98] sm:$0xff]
      %v3046 = vld [vmem:[#allocation3 + $0xa0] sm:$0xff]
      %v3047 = vld [vmem:[#allocation3 + $0xa8] sm:$0xff]
      %v3048 = vld [vmem:[#allocation3 + $0xb0] sm:$0xff]
      %v3049 = vld [vmem:[#allocation3 + $0xb8] sm:$0xff]
      %v3050 = vld [vmem:[#allocation3 + $0xc0] sm:$0xff]
      %v3051 = vld [vmem:[#allocation3 + $0xc8] sm:$0xff]
      %v3052 = vld [vmem:[#allocation3 + $0xd0] sm:$0xff]
      %v3053 = vld [vmem:[#allocation3 + $0xd8] sm:$0xff]
      %v3054 = vld [vmem:[#allocation3 + $0xe0] sm:$0xff]
      %v3055 = vld [vmem:[#allocation3 + $0xe8] sm:$0xff]
      %v3056 = vld [vmem:[#allocation3 + $0xf0] sm:$0xff]
      %v3057 = vld [vmem:[#allocation3 + $0xf8] sm:$0xff]
      %v3058 = vld [vmem:[#allocation3 + $0x100] sm:$0xff]
      %v3059 = vld [vmem:[#allocation3 + $0x108] sm:$0xff]
      %v3060 = vld [vmem:[#allocation3 + $0x110] sm:$0xff]
      %v3061 = vld [vmem:[#allocation3 + $0x118] sm:$0xff]
      %v3062 = vld [vmem:[#allocation3 + $0x120] sm:$0xff]
      %v3063 = vld [vmem:[#allocation3 + $0x128] sm:$0xff]
      %v3064 = vld [vmem:[#allocation3 + $0x130] sm:$0xff]
      %v3065 = vld [vmem:[#allocation3 + $0x138] sm:$0xff]
      %v3066 = vld [vmem:[#allocation3 + $0x140] sm:$0xff]
      %v3067 = vld [vmem:[#allocation3 + $0x148] sm:$0xff]
      %v3068 = vld [vmem:[#allocation3 + $0x150] sm:$0xff]
      %v3069 = vld [vmem:[#allocation3 + $0x158] sm:$0xff]
      %v3070 = vld [vmem:[#allocation3 + $0x160] sm:$0xff]
      %v3071 = vld [vmem:[#allocation3 + $0x168] sm:$0xff]
      %v3072 = vld [vmem:[#allocation3 + $0x170] sm:$0xff]
      %v3073 = vld [vmem:[#allocation3 + $0x178] sm:$0xff]
      %v3074 = vld [vmem:[#allocation3 + $0x180] sm:$0xff]
      %v3075 = vld [vmem:[#allocation3 + $0x188] sm:$0xff]
      %v3076 = vld [vmem:[#allocation3 + $0x190] sm:$0xff]
      %v3077 = vld [vmem:[#allocation3 + $0x198] sm:$0xff]
      %v3078 = vld [vmem:[#allocation3 + $0x1a0] sm:$0xff]
      %v3079 = vld [vmem:[#allocation3 + $0x1a8] sm:$0xff]
      %v3080 = vld [vmem:[#allocation3 + $0x1b0] sm:$0xff]
      %v3081 = vld [vmem:[#allocation3 + $0x1b8] sm:$0xff]
      %v3082 = vld [vmem:[#allocation3 + $0x1c0] sm:$0xff]
      %v3083 = vld [vmem:[#allocation3 + $0x1c8] sm:$0xff]
      %v3084 = vld [vmem:[#allocation3 + $0x1d0] sm:$0xff]
      %v3085 = vld [vmem:[#allocation3 + $0x1d8] sm:$0xff]
      %v3086 = vld [vmem:[#allocation3 + $0x1e0] sm:$0xff]
      %v3087 = vld [vmem:[#allocation3 + $0x1e8] sm:$0xff]
      %v3088 = vld [vmem:[#allocation3 + $0x1f0] sm:$0xff]
      %v3089 = vld [vmem:[#allocation3 + $0x1f8] sm:$0xff]
      %v3090 = vld [vmem:[#allocation3 + $0x200] sm:$0xff]
      %v3091 = vld [vmem:[#allocation3 + $0x208] sm:$0xff]
      %v3092 = vld [vmem:[#allocation3 + $0x210] sm:$0xff]
      %v3093 = vld [vmem:[#allocation3 + $0x218] sm:$0xff]
      %v3094 = vld [vmem:[#allocation3 + $0x220] sm:$0xff]
      %v3095 = vld [vmem:[#allocation3 + $0x228] sm:$0xff]
      %v3096 = vld [vmem:[#allocation3 + $0x230] sm:$0xff]
      %v3097 = vld [vmem:[#allocation3 + $0x238] sm:$0xff]
      %v3098 = vld [vmem:[#allocation3 + $0x240] sm:$0xff]
      %v3099 = vld [vmem:[#allocation3 + $0x248] sm:$0xff]
      %v3100 = vld [vmem:[#allocation3 + $0x250] sm:$0xff]
      %v3101 = vld [vmem:[#allocation3 + $0x258] sm:$0xff]
      %v3102 = vld [vmem:[#allocation3 + $0x260] sm:$0xff]
      %v3103 = vld [vmem:[#allocation3 + $0x268] sm:$0xff]
      %v3104 = vld [vmem:[#allocation3 + $0x270] sm:$0xff]
      %v3105 = vld [vmem:[#allocation3 + $0x278] sm:$0xff]
      %v3106 = vld [vmem:[#allocation3 + $0x280] sm:$0xff]
      %v3107 = vld [vmem:[#allocation3 + $0x288] sm:$0xff]
      %v3108 = vld [vmem:[#allocation3 + $0x290] sm:$0xff]
      %v3109 = vld [vmem:[#allocation3 + $0x298] sm:$0xff]
      %v3110 = vld [vmem:[#allocation3 + $0x2a0] sm:$0xff]
      %v3111 = vld [vmem:[#allocation3 + $0x2a8] sm:$0xff]
      %v3112 = vld [vmem:[#allocation3 + $0x2b0] sm:$0xff]
      %v3113 = vld [vmem:[#allocation3 + $0x2b8] sm:$0xff]
      %v3114 = vld [vmem:[#allocation3 + $0x2c0] sm:$0xff]
      %v3115 = vld [vmem:[#allocation3 + $0x2c8] sm:$0xff]
      %v3116 = vld [vmem:[#allocation3 + $0x2d0] sm:$0xff]
      %v3117 = vld [vmem:[#allocation3 + $0x2d8] sm:$0xff]
      %v3118 = vld [vmem:[#allocation3 + $0x2e0] sm:$0xff]
      %v3119 = vld [vmem:[#allocation3 + $0x2e8] sm:$0xff]
      %v3120 = vld [vmem:[#allocation3 + $0x2f0] sm:$0xff]
      %v3121 = vld [vmem:[#allocation3 + $0x2f8] sm:$0xff]
      %v3122 = vld [vmem:[#allocation3 + $0x300] sm:$0xff]
      %v3123 = vld [vmem:[#allocation3 + $0x308] sm:$0xff]
      %v3124 = vld [vmem:[#allocation3 + $0x310] sm:$0xff]
      %v3125 = vld [vmem:[#allocation3 + $0x318] sm:$0xff]
      %v3126 = vld [vmem:[#allocation3 + $0x320] sm:$0xff]
      %v3127 = vld [vmem:[#allocation3 + $0x328] sm:$0xff]
      %v3128 = vld [vmem:[#allocation3 + $0x330] sm:$0xff]
      %v3129 = vld [vmem:[#allocation3 + $0x338] sm:$0xff]
      %v3130 = vld [vmem:[#allocation3 + $0x340] sm:$0xff]
      %v3131 = vld [vmem:[#allocation3 + $0x348] sm:$0xff]
      %v3132 = vld [vmem:[#allocation3 + $0x350] sm:$0xff]
      %v3133 = vld [vmem:[#allocation3 + $0x358] sm:$0xff]
      %v3134 = vld [vmem:[#allocation3 + $0x360] sm:$0xff]
      %v3135 = vld [vmem:[#allocation3 + $0x368] sm:$0xff]
      %v3136 = vld [vmem:[#allocation3 + $0x370] sm:$0xff]
      %v3137 = vld [vmem:[#allocation3 + $0x378] sm:$0xff]
      %v3138 = vld [vmem:[#allocation3 + $0x380] sm:$0xff]
      %v3139 = vld [vmem:[#allocation3 + $0x388] sm:$0xff]
      %v3140 = vld [vmem:[#allocation3 + $0x390] sm:$0xff]
      %v3141 = vld [vmem:[#allocation3 + $0x398] sm:$0xff]
      %v3142 = vld [vmem:[#allocation3 + $0x3a0] sm:$0xff]
      %v3143 = vld [vmem:[#allocation3 + $0x3a8] sm:$0xff]
      %v3144 = vld [vmem:[#allocation3 + $0x3b0] sm:$0xff]
      %v3145 = vld [vmem:[#allocation3 + $0x3b8] sm:$0xff]
      %v3146 = vld [vmem:[#allocation3 + $0x3c0] sm:$0xff]
      %v3147 = vld [vmem:[#allocation3 + $0x3c8] sm:$0xff]
      %v3148 = vld [vmem:[#allocation3 + $0x3d0] sm:$0xff]
      %v3149 = vld [vmem:[#allocation3 + $0x3d8] sm:$0xff]
      %v3150 = vld [vmem:[#allocation3 + $0x3e0] sm:$0xff]
      %v3151 = vld [vmem:[#allocation3 + $0x3e8] sm:$0xff]
      %v3152 = vld [vmem:[#allocation3 + $0x3f0] sm:$0xff]
      %v3153 = vld [vmem:[#allocation3 + $0x3f8] sm:$0xff]
      %v3154 = vld [vmem:[#allocation3 + $0x400] sm:$0xff]
      %v3155 = vld [vmem:[#allocation3 + $0x408] sm:$0xff]
      %v3156 = vld [vmem:[#allocation3 + $0x410] sm:$0xff]
      %v3157 = vld [vmem:[#allocation3 + $0x418] sm:$0xff]
      %v3158 = vld [vmem:[#allocation3 + $0x420] sm:$0xff]
      %v3159 = vld [vmem:[#allocation3 + $0x428] sm:$0xff]
      %v3160 = vld [vmem:[#allocation3 + $0x430] sm:$0xff]
      %v3161 = vld [vmem:[#allocation3 + $0x438] sm:$0xff]
      %v3162 = vld [vmem:[#allocation3 + $0x440] sm:$0xff]
      %v3163 = vld [vmem:[#allocation3 + $0x448] sm:$0xff]
      %v3164 = vld [vmem:[#allocation3 + $0x450] sm:$0xff]
      %v3165 = vld [vmem:[#allocation3 + $0x458] sm:$0xff]
      %v3166 = vld [vmem:[#allocation3 + $0x460] sm:$0xff]
      %v3167 = vld [vmem:[#allocation3 + $0x468] sm:$0xff]
      %v3168 = vld [vmem:[#allocation3 + $0x470] sm:$0xff]
      %v3169 = vld [vmem:[#allocation3 + $0x478] sm:$0xff]
      %v3170 = vld [vmem:[%s2] sm:$0xf]
      %v3171 = vld [vmem:[%s2 + $0x4] sm:$0xf]
      %v3172 = vld [vmem:[%s2 + $0x8] sm:$0xf]
      %v3173 = vld [vmem:[%s2 + $0xc] sm:$0xf]
      %v3174 = vld [vmem:[%s2 + $0x10] sm:$0xf]
      %v3175 = vld [vmem:[%s2 + $0x14] sm:$0xf]
      %v3176 = vld [vmem:[%s2 + $0x18] sm:$0xf]
      %v3177 = vld [vmem:[%s2 + $0x1c] sm:$0xf]
      %v3178 = vld [vmem:[%s2 + $0x20] sm:$0xf]
      %v3179 = vld [vmem:[%s2 + $0x24] sm:$0xf]
      %v3180 = vld [vmem:[%s2 + $0x28] sm:$0xf]
      %v3181 = vld [vmem:[%s2 + $0x2c] sm:$0xf]
      %v3182 = vld [vmem:[%s2 + $0x30] sm:$0xf]
      %v3183 = vld [vmem:[%s2 + $0x34] sm:$0xf]
      %v3184 = vld [vmem:[%s2 + $0x38] sm:$0xf]
      %v3185 = vld [vmem:[%s2 + $0x3c] sm:$0xf]
      %v3186 = vld [vmem:[%s2 + $0x40] sm:$0xf]
      %v3187 = vld [vmem:[%s2 + $0x44] sm:$0xf]
      %v3188 = vld [vmem:[%s2 + $0x48] sm:$0xf]
      %v3189 = vld [vmem:[%s2 + $0x4c] sm:$0xf]
      %v3190 = vld [vmem:[%s2 + $0x50] sm:$0xf]
      %v3191 = vld [vmem:[%s2 + $0x54] sm:$0xf]
      %v3192 = vld [vmem:[%s2 + $0x58] sm:$0xf]
      %v3193 = vld [vmem:[%s2 + $0x5c] sm:$0xf]
      %v3194 = vld [vmem:[%s2 + $0x60] sm:$0xf]
      %v3195 = vld [vmem:[%s2 + $0x64] sm:$0xf]
      %v3196 = vld [vmem:[%s2 + $0x68] sm:$0xf]
      %v3197 = vld [vmem:[%s2 + $0x6c] sm:$0xf]
      %v3198 = vld [vmem:[%s2 + $0x70] sm:$0xf]
      %v3199 = vld [vmem:[%s2 + $0x74] sm:$0xf]
      %v3200 = vld [vmem:[%s2 + $0x78] sm:$0xf]
      %v3201 = vld [vmem:[%s2 + $0x7c] sm:$0xf]
      %v3202 = vld [vmem:[%s2 + $0x80] sm:$0xf]
      %v3203 = vld [vmem:[%s2 + $0x84] sm:$0xf]
      %v3204 = vld [vmem:[%s2 + $0x88] sm:$0xf]
      %v3205 = vld [vmem:[%s2 + $0x8c] sm:$0xf]
      %v3206 = vld [vmem:[%s2 + $0x90] sm:$0xf]
      %v3207 = vld [vmem:[%s2 + $0x94] sm:$0xf]
      %v3208 = vld [vmem:[%s2 + $0x98] sm:$0xf]
      %v3209 = vld [vmem:[%s2 + $0x9c] sm:$0xf]
      %v3210 = vld [vmem:[%s2 + $0xa0] sm:$0xf]
      %v3211 = vld [vmem:[%s2 + $0xa4] sm:$0xf]
      %v3212 = vld [vmem:[%s2 + $0xa8] sm:$0xf]
      %v3213 = vld [vmem:[%s2 + $0xac] sm:$0xf]
      %v3214 = vld [vmem:[%s2 + $0xb0] sm:$0xf]
      %v3215 = vld [vmem:[%s2 + $0xb4] sm:$0xf]
      %v3216 = vld [vmem:[%s2 + $0xb8] sm:$0xf]
      %v3217 = vld [vmem:[%s2 + $0xbc] sm:$0xf]
      %v3218 = vld [vmem:[%s2 + $0xc0] sm:$0xf]
      %v3219 = vld [vmem:[%s2 + $0xc4] sm:$0xf]
      %v3220 = vld [vmem:[%s2 + $0xc8] sm:$0xf]
      %v3221 = vld [vmem:[%s2 + $0xcc] sm:$0xf]
      %v3222 = vld [vmem:[%s2 + $0xd0] sm:$0xf]
      %v3223 = vld [vmem:[%s2 + $0xd4] sm:$0xf]
      %v3224 = vld [vmem:[%s2 + $0xd8] sm:$0xf]
      %v3225 = vld [vmem:[%s2 + $0xdc] sm:$0xf]
      %v3226 = vld [vmem:[%s2 + $0xe0] sm:$0xf]
      %v3227 = vld [vmem:[%s2 + $0xe4] sm:$0xf]
      %v3228 = vld [vmem:[%s2 + $0xe8] sm:$0xf]
      %v3229 = vld [vmem:[%s2 + $0xec] sm:$0xf]
      %v3230 = vld [vmem:[%s2 + $0xf0] sm:$0xf]
      %v3231 = vld [vmem:[%s2 + $0xf4] sm:$0xf]
      %v3232 = vld [vmem:[%s2 + $0xf8] sm:$0xf]
      %v3233 = vld [vmem:[%s2 + $0xfc] sm:$0xf]
      %v3234 = vld [vmem:[%s2 + $0x100] sm:$0xf]
      %v3235 = vld [vmem:[%s2 + $0x104] sm:$0xf]
      %v3236 = vld [vmem:[%s2 + $0x108] sm:$0xf]
      %v3237 = vld [vmem:[%s2 + $0x10c] sm:$0xf]
      %v3238 = vld [vmem:[%s2 + $0x110] sm:$0xf]
      %v3239 = vld [vmem:[%s2 + $0x114] sm:$0xf]
      %v3240 = vld [vmem:[%s2 + $0x118] sm:$0xf]
      %v3241 = vld [vmem:[%s2 + $0x11c] sm:$0xf]
      %v3242 = vld [vmem:[%s2 + $0x120] sm:$0xf]
      %v3243 = vld [vmem:[%s2 + $0x124] sm:$0xf]
      %v3244 = vld [vmem:[%s2 + $0x128] sm:$0xf]
      %v3245 = vld [vmem:[%s2 + $0x12c] sm:$0xf]
      %v3246 = vld [vmem:[%s2 + $0x130] sm:$0xf]
      %v3247 = vld [vmem:[%s2 + $0x134] sm:$0xf]
      %v3248 = vld [vmem:[%s2 + $0x138] sm:$0xf]
      %v3249 = vld [vmem:[%s2 + $0x13c] sm:$0xf]
      %v3250 = vld [vmem:[%s2 + $0x140] sm:$0xf]
      %v3251 = vld [vmem:[%s2 + $0x144] sm:$0xf]
      %v3252 = vld [vmem:[%s2 + $0x148] sm:$0xf]
      %v3253 = vld [vmem:[%s2 + $0x14c] sm:$0xf]
      %v3254 = vld [vmem:[%s2 + $0x150] sm:$0xf]
      %v3255 = vld [vmem:[%s2 + $0x154] sm:$0xf]
      %v3256 = vld [vmem:[%s2 + $0x158] sm:$0xf]
      %v3257 = vld [vmem:[%s2 + $0x15c] sm:$0xf]
      %v3258 = vld [vmem:[%s2 + $0x160] sm:$0xf]
      %v3259 = vld [vmem:[%s2 + $0x164] sm:$0xf]
      %v3260 = vld [vmem:[%s2 + $0x168] sm:$0xf]
      %v3261 = vld [vmem:[%s2 + $0x16c] sm:$0xf]
      %v3262 = vld [vmem:[%s2 + $0x170] sm:$0xf]
      %v3263 = vld [vmem:[%s2 + $0x174] sm:$0xf]
      %v3264 = vld [vmem:[%s2 + $0x178] sm:$0xf]
      %v3265 = vld [vmem:[%s2 + $0x17c] sm:$0xf]
      %v3266 = vld [vmem:[%s2 + $0x180] sm:$0xf]
      %v3267 = vld [vmem:[%s2 + $0x184] sm:$0xf]
      %v3268 = vld [vmem:[%s2 + $0x188] sm:$0xf]
      %v3269 = vld [vmem:[%s2 + $0x18c] sm:$0xf]
      %v3270 = vld [vmem:[%s2 + $0x190] sm:$0xf]
      %v3271 = vld [vmem:[%s2 + $0x194] sm:$0xf]
      %v3272 = vld [vmem:[%s2 + $0x198] sm:$0xf]
      %v3273 = vld [vmem:[%s2 + $0x19c] sm:$0xf]
      %v3274 = vld [vmem:[%s2 + $0x1a0] sm:$0xf]
      %v3275 = vld [vmem:[%s2 + $0x1a4] sm:$0xf]
      %v3276 = vld [vmem:[%s2 + $0x1a8] sm:$0xf]
      %v3277 = vld [vmem:[%s2 + $0x1ac] sm:$0xf]
      %v3278 = vld [vmem:[%s2 + $0x1b0] sm:$0xf]
      %v3279 = vld [vmem:[%s2 + $0x1b4] sm:$0xf]
      %v3280 = vld [vmem:[%s2 + $0x1b8] sm:$0xf]
      %v3281 = vld [vmem:[%s2 + $0x1bc] sm:$0xf]
      %v3282 = vld [vmem:[%s2 + $0x1c0] sm:$0xf]
      %v3283 = vld [vmem:[%s2 + $0x1c4] sm:$0xf]
      %v3284 = vld [vmem:[%s2 + $0x1c8] sm:$0xf]
      %v3285 = vld [vmem:[%s2 + $0x1cc] sm:$0xf]
      %v3286 = vld [vmem:[%s2 + $0x1d0] sm:$0xf]
      %v3287 = vld [vmem:[%s2 + $0x1d4] sm:$0xf]
      %v3288 = vld [vmem:[%s2 + $0x1d8] sm:$0xf]
      %v3289 = vld [vmem:[%s2 + $0x1dc] sm:$0xf]
      %v3290 = vld [vmem:[%s2 + $0x1e0] sm:$0xf]
      %v3291 = vld [vmem:[%s2 + $0x1e4] sm:$0xf]
      %v3292 = vld [vmem:[%s2 + $0x1e8] sm:$0xf]
      %v3293 = vld [vmem:[%s2 + $0x1ec] sm:$0xf]
      %v3294 = vld [vmem:[%s2 + $0x1f0] sm:$0xf]
      %v3295 = vld [vmem:[%s2 + $0x1f4] sm:$0xf]
      %v3296 = vld [vmem:[%s2 + $0x1f8] sm:$0xf]
      %v3297 = vld [vmem:[%s2 + $0x1fc] sm:$0xf]
      %v3298 = vld [vmem:[%s2 + $0x200] sm:$0xf]
      %v3299 = vld [vmem:[%s2 + $0x204] sm:$0xf]
      %v3300 = vld [vmem:[%s2 + $0x208] sm:$0xf]
      %v3301 = vld [vmem:[%s2 + $0x20c] sm:$0xf]
      %v3302 = vld [vmem:[%s2 + $0x210] sm:$0xf]
      %v3303 = vld [vmem:[%s2 + $0x214] sm:$0xf]
      %v3304 = vld [vmem:[%s2 + $0x218] sm:$0xf]
      %v3305 = vld [vmem:[%s2 + $0x21c] sm:$0xf]
      %v3306 = vld [vmem:[%s2 + $0x220] sm:$0xf]
      %v3307 = vld [vmem:[%s2 + $0x224] sm:$0xf]
      %v3308 = vld [vmem:[%s2 + $0x228] sm:$0xf]
      %v3309 = vld [vmem:[%s2 + $0x22c] sm:$0xf]
      %v3310 = vld [vmem:[%s2 + $0x230] sm:$0xf]
      %v3311 = vld [vmem:[%s2 + $0x234] sm:$0xf]
      %v3312 = vld [vmem:[%s2 + $0x238] sm:$0xf]
      %v3313 = vld [vmem:[%s2 + $0x23c] sm:$0xf]
      %v3458 = vunpack.c.l.b16 %v3170
      %v3459 = vunpack.c.l.b16 %v3171
      %v3460 = vunpack.c.l.b16 %v3172
      %v3461 = vunpack.c.l.b16 %v3173
      %v3462 = vunpack.c.l.b16 %v3174
      %v3463 = vunpack.c.l.b16 %v3175
      %v3464 = vunpack.c.l.b16 %v3176
      %v3465 = vunpack.c.l.b16 %v3177
      %v3466 = vunpack.c.l.b16 %v3178
      %v3467 = vunpack.c.l.b16 %v3179
      %v3468 = vunpack.c.l.b16 %v3180
      %v3469 = vunpack.c.l.b16 %v3181
      %v3470 = vunpack.c.l.b16 %v3182
      %v3471 = vunpack.c.l.b16 %v3183
      %v3472 = vunpack.c.l.b16 %v3184
      %v3473 = vunpack.c.l.b16 %v3185
      %v3474 = vunpack.c.l.b16 %v3186
      %v3475 = vunpack.c.l.b16 %v3187
      %v3476 = vunpack.c.l.b16 %v3188
      %v3477 = vunpack.c.l.b16 %v3189
      %v3478 = vunpack.c.l.b16 %v3190
      %v3479 = vunpack.c.l.b16 %v3191
      %v3480 = vunpack.c.l.b16 %v3192
      %v3481 = vunpack.c.l.b16 %v3193
      %v3482 = vunpack.c.l.b16 %v3194
      %v3483 = vunpack.c.l.b16 %v3195
      %v3484 = vunpack.c.l.b16 %v3196
      %v3485 = vunpack.c.l.b16 %v3197
      %v3486 = vunpack.c.l.b16 %v3198
      %v3487 = vunpack.c.l.b16 %v3199
      %v3488 = vunpack.c.l.b16 %v3200
      %v3489 = vunpack.c.l.b16 %v3201
      %v3490 = vunpack.c.l.b16 %v3202
      %v3491 = vunpack.c.l.b16 %v3203
      %v3492 = vunpack.c.l.b16 %v3204
      %v3493 = vunpack.c.l.b16 %v3205
      %v3494 = vunpack.c.l.b16 %v3206
      %v3495 = vunpack.c.l.b16 %v3207
      %v3496 = vunpack.c.l.b16 %v3208
      %v3497 = vunpack.c.l.b16 %v3209
      %v3498 = vunpack.c.l.b16 %v3210
      %v3499 = vunpack.c.l.b16 %v3211
      %v3500 = vunpack.c.l.b16 %v3212
      %v3501 = vunpack.c.l.b16 %v3213
      %v3502 = vunpack.c.l.b16 %v3214
      %v3503 = vunpack.c.l.b16 %v3215
      %v3504 = vunpack.c.l.b16 %v3216
      %v3505 = vunpack.c.l.b16 %v3217
      %v3506 = vunpack.c.l.b16 %v3218
      %v3507 = vunpack.c.l.b16 %v3219
      %v3508 = vunpack.c.l.b16 %v3220
      %v3509 = vunpack.c.l.b16 %v3221
      %v3510 = vunpack.c.l.b16 %v3222
      %v3511 = vunpack.c.l.b16 %v3223
      %v3512 = vunpack.c.l.b16 %v3224
      %v3513 = vunpack.c.l.b16 %v3225
      %v3514 = vunpack.c.l.b16 %v3226
      %v3515 = vunpack.c.l.b16 %v3227
      %v3516 = vunpack.c.l.b16 %v3228
      %v3517 = vunpack.c.l.b16 %v3229
      %v3518 = vunpack.c.l.b16 %v3230
      %v3519 = vunpack.c.l.b16 %v3231
      %v3520 = vunpack.c.l.b16 %v3232
      %v3521 = vunpack.c.l.b16 %v3233
      %v3522 = vunpack.c.l.b16 %v3234
      %v3523 = vunpack.c.l.b16 %v3235
      %v3524 = vunpack.c.l.b16 %v3236
      %v3525 = vunpack.c.l.b16 %v3237
      %v3526 = vunpack.c.l.b16 %v3238
      %v3527 = vunpack.c.l.b16 %v3239
      %v3528 = vunpack.c.l.b16 %v3240
      %v3529 = vunpack.c.l.b16 %v3241
      %v3530 = vunpack.c.l.b16 %v3242
      %v3531 = vunpack.c.l.b16 %v3243
      %v3532 = vunpack.c.l.b16 %v3244
      %v3533 = vunpack.c.l.b16 %v3245
      %v3534 = vunpack.c.l.b16 %v3246
      %v3535 = vunpack.c.l.b16 %v3247
      %v3536 = vunpack.c.l.b16 %v3248
      %v3537 = vunpack.c.l.b16 %v3249
      %v3538 = vunpack.c.l.b16 %v3250
      %v3539 = vunpack.c.l.b16 %v3251
      %v3540 = vunpack.c.l.b16 %v3252
      %v3541 = vunpack.c.l.b16 %v3253
      %v3542 = vunpack.c.l.b16 %v3254
      %v3543 = vunpack.c.l.b16 %v3255
      %v3544 = vunpack.c.l.b16 %v3256
      %v3545 = vunpack.c.l.b16 %v3257
      %v3546 = vunpack.c.l.b16 %v3258
      %v3547 = vunpack.c.l.b16 %v3259
      %v3548 = vunpack.c.l.b16 %v3260
      %v3549 = vunpack.c.l.b16 %v3261
      %v3550 = vunpack.c.l.b16 %v3262
      %v3551 = vunpack.c.l.b16 %v3263
      %v3552 = vunpack.c.l.b16 %v3264
      %v3553 = vunpack.c.l.b16 %v3265
      %v3554 = vunpack.c.l.b16 %v3266
      %v3555 = vunpack.c.l.b16 %v3267
      %v3556 = vunpack.c.l.b16 %v3268
      %v3557 = vunpack.c.l.b16 %v3269
      %v3558 = vunpack.c.l.b16 %v3270
      %v3559 = vunpack.c.l.b16 %v3271
      %v3560 = vunpack.c.l.b16 %v3272
      %v3561 = vunpack.c.l.b16 %v3273
      %v3562 = vunpack.c.l.b16 %v3274
      %v3563 = vunpack.c.l.b16 %v3275
      %v3564 = vunpack.c.l.b16 %v3276
      %v3565 = vunpack.c.l.b16 %v3277
      %v3566 = vunpack.c.l.b16 %v3278
      %v3567 = vunpack.c.l.b16 %v3279
      %v3568 = vunpack.c.l.b16 %v3280
      %v3569 = vunpack.c.l.b16 %v3281
      %v3570 = vunpack.c.l.b16 %v3282
      %v3571 = vunpack.c.l.b16 %v3283
      %v3572 = vunpack.c.l.b16 %v3284
      %v3573 = vunpack.c.l.b16 %v3285
      %v3574 = vunpack.c.l.b16 %v3286
      %v3575 = vunpack.c.l.b16 %v3287
      %v3576 = vunpack.c.l.b16 %v3288
      %v3577 = vunpack.c.l.b16 %v3289
      %v3578 = vunpack.c.l.b16 %v3290
      %v3579 = vunpack.c.l.b16 %v3291
      %v3580 = vunpack.c.l.b16 %v3292
      %v3581 = vunpack.c.l.b16 %v3293
      %v3582 = vunpack.c.l.b16 %v3294
      %v3583 = vunpack.c.l.b16 %v3295
      %v3584 = vunpack.c.l.b16 %v3296
      %v3585 = vunpack.c.l.b16 %v3297
      %v3586 = vunpack.c.l.b16 %v3298
      %v3587 = vunpack.c.l.b16 %v3299
      %v3588 = vunpack.c.l.b16 %v3300
      %v3589 = vunpack.c.l.b16 %v3301
      %v3590 = vunpack.c.l.b16 %v3302
      %v3591 = vunpack.c.l.b16 %v3303
      %v3592 = vunpack.c.l.b16 %v3304
      %v3593 = vunpack.c.l.b16 %v3305
      %v3594 = vunpack.c.l.b16 %v3306
      %v3595 = vunpack.c.l.b16 %v3307
      %v3596 = vunpack.c.l.b16 %v3308
      %v3597 = vunpack.c.l.b16 %v3309
      %v3598 = vunpack.c.l.b16 %v3310
      %v3599 = vunpack.c.l.b16 %v3311
      %v3600 = vunpack.c.l.b16 %v3312
      %v3601 = vunpack.c.l.b16 %v3313
      %v3602 = vpack.c.b16 %v3459, %v3458
      %v3603 = vpack.c.b16 %v3461, %v3460
      %v3604 = vpack.c.b16 %v3463, %v3462
      %v3605 = vpack.c.b16 %v3465, %v3464
      %v3606 = vpack.c.b16 %v3467, %v3466
      %v3607 = vpack.c.b16 %v3469, %v3468
      %v3608 = vpack.c.b16 %v3471, %v3470
      %v3609 = vpack.c.b16 %v3473, %v3472
      %v3610 = vpack.c.b16 %v3475, %v3474
      %v3611 = vpack.c.b16 %v3477, %v3476
      %v3612 = vpack.c.b16 %v3479, %v3478
      %v3613 = vpack.c.b16 %v3481, %v3480
      %v3614 = vpack.c.b16 %v3483, %v3482
      %v3615 = vpack.c.b16 %v3485, %v3484
      %v3616 = vpack.c.b16 %v3487, %v3486
      %v3617 = vpack.c.b16 %v3489, %v3488
      %v3618 = vpack.c.b16 %v3491, %v3490
      %v3619 = vpack.c.b16 %v3493, %v3492
      %v3620 = vpack.c.b16 %v3495, %v3494
      %v3621 = vpack.c.b16 %v3497, %v3496
      %v3622 = vpack.c.b16 %v3499, %v3498
      %v3623 = vpack.c.b16 %v3501, %v3500
      %v3624 = vpack.c.b16 %v3503, %v3502
      %v3625 = vpack.c.b16 %v3505, %v3504
      %v3626 = vpack.c.b16 %v3507, %v3506
      %v3627 = vpack.c.b16 %v3509, %v3508
      %v3628 = vpack.c.b16 %v3511, %v3510
      %v3629 = vpack.c.b16 %v3513, %v3512
      %v3630 = vpack.c.b16 %v3515, %v3514
      %v3631 = vpack.c.b16 %v3517, %v3516
      %v3632 = vpack.c.b16 %v3519, %v3518
      %v3633 = vpack.c.b16 %v3521, %v3520
      %v3634 = vpack.c.b16 %v3523, %v3522
      %v3635 = vpack.c.b16 %v3525, %v3524
      %v3636 = vpack.c.b16 %v3527, %v3526
      %v3637 = vpack.c.b16 %v3529, %v3528
      %v3638 = vpack.c.b16 %v3531, %v3530
      %v3639 = vpack.c.b16 %v3533, %v3532
      %v3640 = vpack.c.b16 %v3535, %v3534
      %v3641 = vpack.c.b16 %v3537, %v3536
      %v3642 = vpack.c.b16 %v3539, %v3538
      %v3643 = vpack.c.b16 %v3541, %v3540
      %v3644 = vpack.c.b16 %v3543, %v3542
      %v3645 = vpack.c.b16 %v3545, %v3544
      %v3646 = vpack.c.b16 %v3547, %v3546
      %v3647 = vpack.c.b16 %v3549, %v3548
      %v3648 = vpack.c.b16 %v3551, %v3550
      %v3649 = vpack.c.b16 %v3553, %v3552
      %v3650 = vpack.c.b16 %v3555, %v3554
      %v3651 = vpack.c.b16 %v3557, %v3556
      %v3652 = vpack.c.b16 %v3559, %v3558
      %v3653 = vpack.c.b16 %v3561, %v3560
      %v3654 = vpack.c.b16 %v3563, %v3562
      %v3655 = vpack.c.b16 %v3565, %v3564
      %v3656 = vpack.c.b16 %v3567, %v3566
      %v3657 = vpack.c.b16 %v3569, %v3568
      %v3658 = vpack.c.b16 %v3571, %v3570
      %v3659 = vpack.c.b16 %v3573, %v3572
      %v3660 = vpack.c.b16 %v3575, %v3574
      %v3661 = vpack.c.b16 %v3577, %v3576
      %v3662 = vpack.c.b16 %v3579, %v3578
      %v3663 = vpack.c.b16 %v3581, %v3580
      %v3664 = vpack.c.b16 %v3583, %v3582
      %v3665 = vpack.c.b16 %v3585, %v3584
      %v3666 = vpack.c.b16 %v3587, %v3586
      %v3667 = vpack.c.b16 %v3589, %v3588
      %v3668 = vpack.c.b16 %v3591, %v3590
      %v3669 = vpack.c.b16 %v3593, %v3592
      %v3670 = vpack.c.b16 %v3595, %v3594
      %v3671 = vpack.c.b16 %v3597, %v3596
      %v3672 = vpack.c.b16 %v3599, %v3598
      %v3673 = vpack.c.b16 %v3601, %v3600
      %3746 = vmatprep.subr.bf16.mxu0 0
      %3747 = vmatpush1.bf16.msra.mxu0 %v3602
      %3748 = vmatprep.subr.bf16.mxu0 0
      %3749 = vmatpush1.bf16.msra.mxu0 %v3603
      %3750 = vmatprep.subr.bf16.mxu0 0
      %3751 = vmatpush1.bf16.msra.mxu0 %v3604
      %3752 = vmatprep.subr.bf16.mxu0 0
      %3753 = vmatpush1.bf16.msra.mxu0 %v3605
      %3754 = vmatprep.subr.bf16.mxu0 0
      %3755 = vmatpush1.bf16.msra.mxu0 %v3606
      %3756 = vmatprep.subr.bf16.mxu0 0
      %3757 = vmatpush1.bf16.msra.mxu0 %v3607
      %3758 = vmatprep.subr.bf16.mxu0 0
      %3759 = vmatpush1.bf16.msra.mxu0 %v3608
      %3760 = vmatprep.subr.bf16.mxu0 0
      %3761 = vmatpush1.bf16.msra.mxu0 %v3609
      %3762 = vmatprep.subr.bf16.mxu0 0
      %3763 = vmatpush1.bf16.msra.mxu0 %v3610
      %3764 = vmatprep.subr.bf16.mxu0 0
      %3765 = vmatpush1.bf16.msra.mxu0 %v3611
      %3766 = vmatprep.subr.bf16.mxu0 0
      %3767 = vmatpush1.bf16.msra.mxu0 %v3612
      %3768 = vmatprep.subr.bf16.mxu0 0
      %3769 = vmatpush1.bf16.msra.mxu0 %v3613
      %3770 = vmatprep.subr.bf16.mxu0 0
      %3771 = vmatpush1.bf16.msra.mxu0 %v3614
      %3772 = vmatprep.subr.bf16.mxu0 0
      %3773 = vmatpush1.bf16.msra.mxu0 %v3615
      %3774 = vmatprep.subr.bf16.mxu0 0
      %3775 = vmatpush1.bf16.msra.mxu0 %v3616
      %3776 = vmatprep.subr.bf16.mxu0 0
      %3777 = vmatpush1.bf16.msra.mxu0 %v3617
      %3778 = vmatprep.mubr.bf16.mxu0 %v3027
      %3779 = vmatmul.mubr.bf16.gmra.mrb[0].mxu0 %v3026
      %v3780 = vpop.f32.mrb[0].mxu0
      %v3781 = vadd.f32 0.0, %v3780
      %v3782 = vpop.f32.mrb[0].mxu0
      %v3783 = vpop.f32.mrb[0].mxu0
      %v3784 = vadd.f32 0.0, %v3783
      %v3785 = vpop.f32.mrb[0].mxu0
      %3786 = vmatprep.mubr.bf16.mxu0 %v3036
      %3787 = vmatmul.mubr.bf16.gmra.mrb[0].mxu0 %v3035
      %v3788 = vpop.f32.mrb[0].mxu0
      %v3789 = vadd.f32 0.0, %v3788
      %v3790 = vpop.f32.mrb[0].mxu0
      %v3791 = vpop.f32.mrb[0].mxu0
      %v3792 = vadd.f32 0.0, %v3791
      %v3793 = vpop.f32.mrb[0].mxu0
      %3794 = vmatprep.mubr.bf16.mxu0 %v3045
      %3795 = vmatmul.mubr.bf16.gmra.mrb[0].mxu0 %v3044
      %v3796 = vpop.f32.mrb[0].mxu0
      %v3797 = vadd.f32 0.0, %v3796
      %v3798 = vpop.f32.mrb[0].mxu0
      %v3799 = vpop.f32.mrb[0].mxu0
      %v3800 = vadd.f32 0.0, %v3799
      %v3801 = vpop.f32.mrb[0].mxu0
      %3802 = vmatprep.mubr.bf16.mxu0 %v3054
      %3803 = vmatmul.mubr.bf16.gmra.mrb[0].mxu0 %v3053
      %v3804 = vpop.f32.mrb[0].mxu0
      %v3805 = vadd.f32 0.0, %v3804
      %v3806 = vpop.f32.mrb[0].mxu0
      %v3807 = vpop.f32.mrb[0].mxu0
      %v3808 = vadd.f32 0.0, %v3807
      %v3809 = vpop.f32.mrb[0].mxu0
      %3810 = vmatprep.mubr.bf16.mxu0 %v3063
      %3811 = vmatmul.mubr.bf16.gmra.mrb[0].mxu0 %v3062
      %v3812 = vpop.f32.mrb[0].mxu0
      %v3813 = vadd.f32 0.0, %v3812
      %v3814 = vpop.f32.mrb[0].mxu0
      %v3815 = vpop.f32.mrb[0].mxu0
      %v3816 = vadd.f32 0.0, %v3815
      %v3817 = vpop.f32.mrb[0].mxu0
      %3818 = vmatprep.mubr.bf16.mxu0 %v3072
      %3819 = vmatmul.mubr.bf16.gmra.mrb[0].mxu0 %v3071
      %v3820 = vpop.f32.mrb[0].mxu0
      %v3821 = vadd.f32 0.0, %v3820
      %v3822 = vpop.f32.mrb[0].mxu0
      %v3823 = vpop.f32.mrb[0].mxu0
      %v3824 = vadd.f32 0.0, %v3823
      %v3825 = vpop.f32.mrb[0].mxu0
      %3826 = vmatprep.mubr.bf16.mxu0 %v3081
      %3827 = vmatmul.mubr.bf16.gmra.mrb[0].mxu0 %v3080
      %v3828 = vpop.f32.mrb[0].mxu0
      %v3829 = vadd.f32 0.0, %v3828
      %v3830 = vpop.f32.mrb[0].mxu0
      %v3831 = vpop.f32.mrb[0].mxu0
      %v3832 = vadd.f32 0.0, %v3831
      %v3833 = vpop.f32.mrb[0].mxu0
      %3834 = vmatprep.mubr.bf16.mxu0 %v3090
      %3835 = vmatmul.mubr.bf16.gmra.mrb[0].mxu0 %v3089
      %v3836 = vpop.f32.mrb[0].mxu0
      %v3837 = vadd.f32 0.0, %v3836
      %v3838 = vpop.f32.mrb[0].mxu0
      %v3839 = vpop.f32.mrb[0].mxu0
      %v3840 = vadd.f32 0.0, %v3839
      %v3841 = vpop.f32.mrb[0].mxu0
      %3842 = vmatprep.mubr.bf16.mxu0 %v3099
      %3843 = vmatmul.mubr.bf16.gmra.mrb[0].mxu0 %v3098
      %v3844 = vpop.f32.mrb[0].mxu0
      %v3845 = vadd.f32 0.0, %v3844
      %v3846 = vpop.f32.mrb[0].mxu0
      %v3847 = vpop.f32.mrb[0].mxu0
      %v3848 = vadd.f32 0.0, %v3847
      %v3849 = vpop.f32.mrb[0].mxu0
      %3850 = vmatprep.mubr.bf16.mxu0 %v3108
      %3851 = vmatmul.mubr.bf16.gmra.mrb[0].mxu0 %v3107
      %v3852 = vpop.f32.mrb[0].mxu0
      %v3853 = vadd.f32 0.0, %v3852
      %v3854 = vpop.f32.mrb[0].mxu0
      %v3855 = vpop.f32.mrb[0].mxu0
      %v3856 = vadd.f32 0.0, %v3855
      %v3857 = vpop.f32.mrb[0].mxu0
      %3858 = vmatprep.mubr.bf16.mxu0 %v3117
      %3859 = vmatmul.mubr.bf16.gmra.mrb[0].mxu0 %v3116
      %v3860 = vpop.f32.mrb[0].mxu0
      %v3861 = vadd.f32 0.0, %v3860
      %v3862 = vpop.f32.mrb[0].mxu0
      %v3863 = vpop.f32.mrb[0].mxu0
      %v3864 = vadd.f32 0.0, %v3863
      %v3865 = vpop.f32.mrb[0].mxu0
      %3866 = vmatprep.mubr.bf16.mxu0 %v3126
      %3867 = vmatmul.mubr.bf16.gmra.mrb[0].mxu0 %v3125
      %v3868 = vpop.f32.mrb[0].mxu0
      %v3869 = vadd.f32 0.0, %v3868
      %v3870 = vpop.f32.mrb[0].mxu0
      %v3871 = vpop.f32.mrb[0].mxu0
      %v3872 = vadd.f32 0.0, %v3871
      %v3873 = vpop.f32.mrb[0].mxu0
      %3874 = vmatprep.mubr.bf16.mxu0 %v3135
      %3875 = vmatmul.mubr.bf16.gmra.mrb[0].mxu0 %v3134
      %v3876 = vpop.f32.mrb[0].mxu0
      %v3877 = vadd.f32 0.0, %v3876
      %v3878 = vpop.f32.mrb[0].mxu0
      %v3879 = vpop.f32.mrb[0].mxu0
      %v3880 = vadd.f32 0.0, %v3879
      %v3881 = vpop.f32.mrb[0].mxu0
      %3882 = vmatprep.mubr.bf16.mxu0 %v3144
      %3883 = vmatmul.mubr.bf16.gmra.mrb[0].mxu0 %v3143
      %v3884 = vpop.f32.mrb[0].mxu0
      %v3885 = vadd.f32 0.0, %v3884
      %v3886 = vpop.f32.mrb[0].mxu0
      %v3887 = vpop.f32.mrb[0].mxu0
      %v3888 = vadd.f32 0.0, %v3887
      %v3889 = vpop.f32.mrb[0].mxu0
      %3890 = vmatprep.mubr.bf16.mxu0 %v3153
      %3891 = vmatmul.mubr.bf16.gmra.mrb[0].mxu0 %v3152
      %v3892 = vpop.f32.mrb[0].mxu0
      %v3893 = vadd.f32 0.0, %v3892
      %v3894 = vpop.f32.mrb[0].mxu0
      %v3895 = vpop.f32.mrb[0].mxu0
      %v3896 = vadd.f32 0.0, %v3895
      %v3897 = vpop.f32.mrb[0].mxu0
      %3898 = vmatprep.mubr.bf16.mxu0 %v3162
      %3899 = vmatmul.mubr.bf16.gmra.mrb[0].mxu0 %v3161
      %v3900 = vpop.f32.mrb[0].mxu0
      %v3901 = vadd.f32 0.0, %v3900
      %v3902 = vpop.f32.mrb[0].mxu0
      %v3903 = vpop.f32.mrb[0].mxu0
      %v3904 = vadd.f32 0.0, %v3903
      %v3905 = vpop.f32.mrb[0].mxu0
      %3906 = vdwg.mxu0
      %3907 = vmatprep.subr.bf16.mxu0 0
      %3908 = vmatpush1.bf16.msra.mxu0 %v3618
      %3909 = vmatprep.subr.bf16.mxu0 0
      %3910 = vmatpush1.bf16.msra.mxu0 %v3619
      %3911 = vmatprep.subr.bf16.mxu0 0
      %3912 = vmatpush1.bf16.msra.mxu0 %v3620
      %3913 = vmatprep.subr.bf16.mxu0 0
      %3914 = vmatpush1.bf16.msra.mxu0 %v3621
      %3915 = vmatprep.subr.bf16.mxu0 0
      %3916 = vmatpush1.bf16.msra.mxu0 %v3622
      %3917 = vmatprep.subr.bf16.mxu0 0
      %3918 = vmatpush1.bf16.msra.mxu0 %v3623
      %3919 = vmatprep.subr.bf16.mxu0 0
      %3920 = vmatpush1.bf16.msra.mxu0 %v3624
      %3921 = vmatprep.subr.bf16.mxu0 0
      %3922 = vmatpush1.bf16.msra.mxu0 %v3625
      %3923 = vmatprep.subr.bf16.mxu0 0
      %3924 = vmatpush1.bf16.msra.mxu0 %v3626
      %3925 = vmatprep.subr.bf16.mxu0 0
      %3926 = vmatpush1.bf16.msra.mxu0 %v3627
      %3927 = vmatprep.subr.bf16.mxu0 0
      %3928 = vmatpush1.bf16.msra.mxu0 %v3628
      %3929 = vmatprep.subr.bf16.mxu0 0
      %3930 = vmatpush1.bf16.msra.mxu0 %v3629
      %3931 = vmatprep.subr.bf16.mxu0 0
      %3932 = vmatpush1.bf16.msra.mxu0 %v3630
      %3933 = vmatprep.subr.bf16.mxu0 0
      %3934 = vmatpush1.bf16.msra.mxu0 %v3631
      %3935 = vmatprep.subr.bf16.mxu0 0
      %3936 = vmatpush1.bf16.msra.mxu0 %v3632
      %3937 = vmatprep.subr.bf16.mxu0 0
      %3938 = vmatpush1.bf16.msra.mxu0 %v3633
      %3939 = vmatprep.mubr.bf16.mxu0 %v3029
      %3940 = vmatmul.mubr.bf16.gmra.mrb[0].mxu0 %v3028
      %v3941 = vpop.f32.mrb[0].mxu0
      %v3942 = vadd.f32 %v3781, %v3941
      %v3943 = vpop.f32.mrb[0].mxu0
      %v3944 = vpop.f32.mrb[0].mxu0
      %v3945 = vadd.f32 %v3784, %v3944
      %v3946 = vpop.f32.mrb[0].mxu0
      %3947 = vmatprep.mubr.bf16.mxu0 %v3038
      %3948 = vmatmul.mubr.bf16.gmra.mrb[0].mxu0 %v3037
      %v3949 = vpop.f32.mrb[0].mxu0
      %v3950 = vadd.f32 %v3789, %v3949
      %v3951 = vpop.f32.mrb[0].mxu0
      %v3952 = vpop.f32.mrb[0].mxu0
      %v3953 = vadd.f32 %v3792, %v3952
      %v3954 = vpop.f32.mrb[0].mxu0
      %3955 = vmatprep.mubr.bf16.mxu0 %v3047
      %3956 = vmatmul.mubr.bf16.gmra.mrb[0].mxu0 %v3046
      %v3957 = vpop.f32.mrb[0].mxu0
      %v3958 = vadd.f32 %v3797, %v3957
      %v3959 = vpop.f32.mrb[0].mxu0
      %v3960 = vpop.f32.mrb[0].mxu0
      %v3961 = vadd.f32 %v3800, %v3960
      %v3962 = vpop.f32.mrb[0].mxu0
      %3963 = vmatprep.mubr.bf16.mxu0 %v3056
      %3964 = vmatmul.mubr.bf16.gmra.mrb[0].mxu0 %v3055
      %v3965 = vpop.f32.mrb[0].mxu0
      %v3966 = vadd.f32 %v3805, %v3965
      %v3967 = vpop.f32.mrb[0].mxu0
      %v3968 = vpop.f32.mrb[0].mxu0
      %v3969 = vadd.f32 %v3808, %v3968
      %v3970 = vpop.f32.mrb[0].mxu0
      %3971 = vmatprep.mubr.bf16.mxu0 %v3065
      %3972 = vmatmul.mubr.bf16.gmra.mrb[0].mxu0 %v3064
      %v3973 = vpop.f32.mrb[0].mxu0
      %v3974 = vadd.f32 %v3813, %v3973
      %v3975 = vpop.f32.mrb[0].mxu0
      %v3976 = vpop.f32.mrb[0].mxu0
      %v3977 = vadd.f32 %v3816, %v3976
      %v3978 = vpop.f32.mrb[0].mxu0
      %3979 = vmatprep.mubr.bf16.mxu0 %v3074
      %3980 = vmatmul.mubr.bf16.gmra.mrb[0].mxu0 %v3073
      %v3981 = vpop.f32.mrb[0].mxu0
      %v3982 = vadd.f32 %v3821, %v3981
      %v3983 = vpop.f32.mrb[0].mxu0
      %v3984 = vpop.f32.mrb[0].mxu0
      %v3985 = vadd.f32 %v3824, %v3984
      %v3986 = vpop.f32.mrb[0].mxu0
      %3987 = vmatprep.mubr.bf16.mxu0 %v3083
      %3988 = vmatmul.mubr.bf16.gmra.mrb[0].mxu0 %v3082
      %v3989 = vpop.f32.mrb[0].mxu0
      %v3990 = vadd.f32 %v3829, %v3989
      %v3991 = vpop.f32.mrb[0].mxu0
      %v3992 = vpop.f32.mrb[0].mxu0
      %v3993 = vadd.f32 %v3832, %v3992
      %v3994 = vpop.f32.mrb[0].mxu0
      %3995 = vmatprep.mubr.bf16.mxu0 %v3092
      %3996 = vmatmul.mubr.bf16.gmra.mrb[0].mxu0 %v3091
      %v3997 = vpop.f32.mrb[0].mxu0
      %v3998 = vadd.f32 %v3837, %v3997
      %v3999 = vpop.f32.mrb[0].mxu0
      %v4000 = vpop.f32.mrb[0].mxu0
      %v4001 = vadd.f32 %v3840, %v4000
      %v4002 = vpop.f32.mrb[0].mxu0
      %4003 = vmatprep.mubr.bf16.mxu0 %v3101
      %4004 = vmatmul.mubr.bf16.gmra.mrb[0].mxu0 %v3100
      %v4005 = vpop.f32.mrb[0].mxu0
      %v4006 = vadd.f32 %v3845, %v4005
      %v4007 = vpop.f32.mrb[0].mxu0
      %v4008 = vpop.f32.mrb[0].mxu0
      %v4009 = vadd.f32 %v3848, %v4008
      %v4010 = vpop.f32.mrb[0].mxu0
      %4011 = vmatprep.mubr.bf16.mxu0 %v3110
      %4012 = vmatmul.mubr.bf16.gmra.mrb[0].mxu0 %v3109
      %v4013 = vpop.f32.mrb[0].mxu0
      %v4014 = vadd.f32 %v3853, %v4013
      %v4015 = vpop.f32.mrb[0].mxu0
      %v4016 = vpop.f32.mrb[0].mxu0
      %v4017 = vadd.f32 %v3856, %v4016
      %v4018 = vpop.f32.mrb[0].mxu0
      %4019 = vmatprep.mubr.bf16.mxu0 %v3119
      %4020 = vmatmul.mubr.bf16.gmra.mrb[0].mxu0 %v3118
      %v4021 = vpop.f32.mrb[0].mxu0
      %v4022 = vadd.f32 %v3861, %v4021
      %v4023 = vpop.f32.mrb[0].mxu0
      %v4024 = vpop.f32.mrb[0].mxu0
      %v4025 = vadd.f32 %v3864, %v4024
      %v4026 = vpop.f32.mrb[0].mxu0
      %4027 = vmatprep.mubr.bf16.mxu0 %v3128
      %4028 = vmatmul.mubr.bf16.gmra.mrb[0].mxu0 %v3127
      %v4029 = vpop.f32.mrb[0].mxu0
      %v4030 = vadd.f32 %v3869, %v4029
      %v4031 = vpop.f32.mrb[0].mxu0
      %v4032 = vpop.f32.mrb[0].mxu0
      %v4033 = vadd.f32 %v3872, %v4032
      %v4034 = vpop.f32.mrb[0].mxu0
      %4035 = vmatprep.mubr.bf16.mxu0 %v3137
      %4036 = vmatmul.mubr.bf16.gmra.mrb[0].mxu0 %v3136
      %v4037 = vpop.f32.mrb[0].mxu0
      %v4038 = vadd.f32 %v3877, %v4037
      %v4039 = vpop.f32.mrb[0].mxu0
      %v4040 = vpop.f32.mrb[0].mxu0
      %v4041 = vadd.f32 %v3880, %v4040
      %v4042 = vpop.f32.mrb[0].mxu0
      %4043 = vmatprep.mubr.bf16.mxu0 %v3146
      %4044 = vmatmul.mubr.bf16.gmra.mrb[0].mxu0 %v3145
      %v4045 = vpop.f32.mrb[0].mxu0
      %v4046 = vadd.f32 %v3885, %v4045
      %v4047 = vpop.f32.mrb[0].mxu0
      %v4048 = vpop.f32.mrb[0].mxu0
      %v4049 = vadd.f32 %v3888, %v4048
      %v4050 = vpop.f32.mrb[0].mxu0
      %4051 = vmatprep.mubr.bf16.mxu0 %v3155
      %4052 = vmatmul.mubr.bf16.gmra.mrb[0].mxu0 %v3154
      %v4053 = vpop.f32.mrb[0].mxu0
      %v4054 = vadd.f32 %v3893, %v4053
      %v4055 = vpop.f32.mrb[0].mxu0
      %v4056 = vpop.f32.mrb[0].mxu0
      %v4057 = vadd.f32 %v3896, %v4056
      %v4058 = vpop.f32.mrb[0].mxu0
      %4059 = vmatprep.mubr.bf16.mxu0 %v3164
      %4060 = vmatmul.mubr.bf16.gmra.mrb[0].mxu0 %v3163
      %v4061 = vpop.f32.mrb[0].mxu0
      %v4062 = vadd.f32 %v3901, %v4061
      %v4063 = vpop.f32.mrb[0].mxu0
      %v4064 = vpop.f32.mrb[0].mxu0
      %v4065 = vadd.f32 %v3904, %v4064
      %v4066 = vpop.f32.mrb[0].mxu0
      %4067 = vdwg.mxu0
      %4068 = vmatprep.subr.bf16.mxu0 0
      %4069 = vmatpush1.bf16.msra.mxu0 %v3634
      %4070 = vmatprep.subr.bf16.mxu0 0
      %4071 = vmatpush1.bf16.msra.mxu0 %v3635
      %4072 = vmatprep.subr.bf16.mxu0 0
      %4073 = vmatpush1.bf16.msra.mxu0 %v3636
      %4074 = vmatprep.subr.bf16.mxu0 0
      %4075 = vmatpush1.bf16.msra.mxu0 %v3637
      %4076 = vmatprep.subr.bf16.mxu0 0
      %4077 = vmatpush1.bf16.msra.mxu0 %v3638
      %4078 = vmatprep.subr.bf16.mxu0 0
      %4079 = vmatpush1.bf16.msra.mxu0 %v3639
      %4080 = vmatprep.subr.bf16.mxu0 0
      %4081 = vmatpush1.bf16.msra.mxu0 %v3640
      %4082 = vmatprep.subr.bf16.mxu0 0
      %4083 = vmatpush1.bf16.msra.mxu0 %v3641
      %4084 = vmatprep.subr.bf16.mxu0 0
      %4085 = vmatpush1.bf16.msra.mxu0 %v3642
      %4086 = vmatprep.subr.bf16.mxu0 0
      %4087 = vmatpush1.bf16.msra.mxu0 %v3643
      %4088 = vmatprep.subr.bf16.mxu0 0
      %4089 = vmatpush1.bf16.msra.mxu0 %v3644
      %4090 = vmatprep.subr.bf16.mxu0 0
      %4091 = vmatpush1.bf16.msra.mxu0 %v3645
      %4092 = vmatprep.subr.bf16.mxu0 0
      %4093 = vmatpush1.bf16.msra.mxu0 %v3646
      %4094 = vmatprep.subr.bf16.mxu0 0
      %4095 = vmatpush1.bf16.msra.mxu0 %v3647
      %4096 = vmatprep.subr.bf16.mxu0 0
      %4097 = vmatpush1.bf16.msra.mxu0 %v3648
      %4098 = vmatprep.subr.bf16.mxu0 0
      %4099 = vmatpush1.bf16.msra.mxu0 %v3649
      %4100 = vmatprep.mubr.bf16.mxu0 %v3031
      %4101 = vmatmul.mubr.bf16.gmra.mrb[0].mxu0 %v3030
      %v4102 = vpop.f32.mrb[0].mxu0
      %v4103 = vadd.f32 %v3942, %v4102
      %v4104 = vpop.f32.mrb[0].mxu0
      %v4105 = vpop.f32.mrb[0].mxu0
      %v4106 = vadd.f32 %v3945, %v4105
      %v4107 = vpop.f32.mrb[0].mxu0
      %4108 = vmatprep.mubr.bf16.mxu0 %v3040
      %4109 = vmatmul.mubr.bf16.gmra.mrb[0].mxu0 %v3039
      %v4110 = vpop.f32.mrb[0].mxu0
      %v4111 = vadd.f32 %v3950, %v4110
      %v4112 = vpop.f32.mrb[0].mxu0
      %v4113 = vpop.f32.mrb[0].mxu0
      %v4114 = vadd.f32 %v3953, %v4113
      %v4115 = vpop.f32.mrb[0].mxu0
      %4116 = vmatprep.mubr.bf16.mxu0 %v3049
      %4117 = vmatmul.mubr.bf16.gmra.mrb[0].mxu0 %v3048
      %v4118 = vpop.f32.mrb[0].mxu0
      %v4119 = vadd.f32 %v3958, %v4118
      %v4120 = vpop.f32.mrb[0].mxu0
      %v4121 = vpop.f32.mrb[0].mxu0
      %v4122 = vadd.f32 %v3961, %v4121
      %v4123 = vpop.f32.mrb[0].mxu0
      %4124 = vmatprep.mubr.bf16.mxu0 %v3058
      %4125 = vmatmul.mubr.bf16.gmra.mrb[0].mxu0 %v3057
      %v4126 = vpop.f32.mrb[0].mxu0
      %v4127 = vadd.f32 %v3966, %v4126
      %v4128 = vpop.f32.mrb[0].mxu0
      %v4129 = vpop.f32.mrb[0].mxu0
      %v4130 = vadd.f32 %v3969, %v4129
      %v4131 = vpop.f32.mrb[0].mxu0
      %4132 = vmatprep.mubr.bf16.mxu0 %v3067
      %4133 = vmatmul.mubr.bf16.gmra.mrb[0].mxu0 %v3066
      %v4134 = vpop.f32.mrb[0].mxu0
      %v4135 = vadd.f32 %v3974, %v4134
      %v4136 = vpop.f32.mrb[0].mxu0
      %v4137 = vpop.f32.mrb[0].mxu0
      %v4138 = vadd.f32 %v3977, %v4137
      %v4139 = vpop.f32.mrb[0].mxu0
      %4140 = vmatprep.mubr.bf16.mxu0 %v3076
      %4141 = vmatmul.mubr.bf16.gmra.mrb[0].mxu0 %v3075
      %v4142 = vpop.f32.mrb[0].mxu0
      %v4143 = vadd.f32 %v3982, %v4142
      %v4144 = vpop.f32.mrb[0].mxu0
      %v4145 = vpop.f32.mrb[0].mxu0
      %v4146 = vadd.f32 %v3985, %v4145
      %v4147 = vpop.f32.mrb[0].mxu0
      %4148 = vmatprep.mubr.bf16.mxu0 %v3085
      %4149 = vmatmul.mubr.bf16.gmra.mrb[0].mxu0 %v3084
      %v4150 = vpop.f32.mrb[0].mxu0
      %v4151 = vadd.f32 %v3990, %v4150
      %v4152 = vpop.f32.mrb[0].mxu0
      %v4153 = vpop.f32.mrb[0].mxu0
      %v4154 = vadd.f32 %v3993, %v4153
      %v4155 = vpop.f32.mrb[0].mxu0
      %4156 = vmatprep.mubr.bf16.mxu0 %v3094
      %4157 = vmatmul.mubr.bf16.gmra.mrb[0].mxu0 %v3093
      %v4158 = vpop.f32.mrb[0].mxu0
      %v4159 = vadd.f32 %v3998, %v4158
      %v4160 = vpop.f32.mrb[0].mxu0
      %v4161 = vpop.f32.mrb[0].mxu0
      %v4162 = vadd.f32 %v4001, %v4161
      %v4163 = vpop.f32.mrb[0].mxu0
      %4164 = vmatprep.mubr.bf16.mxu0 %v3103
      %4165 = vmatmul.mubr.bf16.gmra.mrb[0].mxu0 %v3102
      %v4166 = vpop.f32.mrb[0].mxu0
      %v4167 = vadd.f32 %v4006, %v4166
      %v4168 = vpop.f32.mrb[0].mxu0
      %v4169 = vpop.f32.mrb[0].mxu0
      %v4170 = vadd.f32 %v4009, %v4169
      %v4171 = vpop.f32.mrb[0].mxu0
      %4172 = vmatprep.mubr.bf16.mxu0 %v3112
      %4173 = vmatmul.mubr.bf16.gmra.mrb[0].mxu0 %v3111
      %v4174 = vpop.f32.mrb[0].mxu0
      %v4175 = vadd.f32 %v4014, %v4174
      %v4176 = vpop.f32.mrb[0].mxu0
      %v4177 = vpop.f32.mrb[0].mxu0
      %v4178 = vadd.f32 %v4017, %v4177
      %v4179 = vpop.f32.mrb[0].mxu0
      %4180 = vmatprep.mubr.bf16.mxu0 %v3121
      %4181 = vmatmul.mubr.bf16.gmra.mrb[0].mxu0 %v3120
      %v4182 = vpop.f32.mrb[0].mxu0
      %v4183 = vadd.f32 %v4022, %v4182
      %v4184 = vpop.f32.mrb[0].mxu0
      %v4185 = vpop.f32.mrb[0].mxu0
      %v4186 = vadd.f32 %v4025, %v4185
      %v4187 = vpop.f32.mrb[0].mxu0
      %4188 = vmatprep.mubr.bf16.mxu0 %v3130
      %4189 = vmatmul.mubr.bf16.gmra.mrb[0].mxu0 %v3129
      %v4190 = vpop.f32.mrb[0].mxu0
      %v4191 = vadd.f32 %v4030, %v4190
      %v4192 = vpop.f32.mrb[0].mxu0
      %v4193 = vpop.f32.mrb[0].mxu0
      %v4194 = vadd.f32 %v4033, %v4193
      %v4195 = vpop.f32.mrb[0].mxu0
      %4196 = vmatprep.mubr.bf16.mxu0 %v3139
      %4197 = vmatmul.mubr.bf16.gmra.mrb[0].mxu0 %v3138
      %v4198 = vpop.f32.mrb[0].mxu0
      %v4199 = vadd.f32 %v4038, %v4198
      %v4200 = vpop.f32.mrb[0].mxu0
      %v4201 = vpop.f32.mrb[0].mxu0
      %v4202 = vadd.f32 %v4041, %v4201
      %v4203 = vpop.f32.mrb[0].mxu0
      %4204 = vmatprep.mubr.bf16.mxu0 %v3148
      %4205 = vmatmul.mubr.bf16.gmra.mrb[0].mxu0 %v3147
      %v4206 = vpop.f32.mrb[0].mxu0
      %v4207 = vadd.f32 %v4046, %v4206
      %v4208 = vpop.f32.mrb[0].mxu0
      %v4209 = vpop.f32.mrb[0].mxu0
      %v4210 = vadd.f32 %v4049, %v4209
      %v4211 = vpop.f32.mrb[0].mxu0
      %4212 = vmatprep.mubr.bf16.mxu0 %v3157
      %4213 = vmatmul.mubr.bf16.gmra.mrb[0].mxu0 %v3156
      %v4214 = vpop.f32.mrb[0].mxu0
      %v4215 = vadd.f32 %v4054, %v4214
      %v4216 = vpop.f32.mrb[0].mxu0
      %v4217 = vpop.f32.mrb[0].mxu0
      %v4218 = vadd.f32 %v4057, %v4217
      %v4219 = vpop.f32.mrb[0].mxu0
      %4220 = vmatprep.mubr.bf16.mxu0 %v3166
      %4221 = vmatmul.mubr.bf16.gmra.mrb[0].mxu0 %v3165
      %v4222 = vpop.f32.mrb[0].mxu0
      %v4223 = vadd.f32 %v4062, %v4222
      %v4224 = vpop.f32.mrb[0].mxu0
      %v4225 = vpop.f32.mrb[0].mxu0
      %v4226 = vadd.f32 %v4065, %v4225
      %v4227 = vpop.f32.mrb[0].mxu0
      %4228 = vdwg.mxu0
      %4229 = vmatprep.subr.bf16.mxu0 0
      %4230 = vmatpush1.bf16.msra.mxu0 %v3650
      %4231 = vmatprep.subr.bf16.mxu0 0
      %4232 = vmatpush1.bf16.msra.mxu0 %v3651
      %4233 = vmatprep.subr.bf16.mxu0 0
      %4234 = vmatpush1.bf16.msra.mxu0 %v3652
      %4235 = vmatprep.subr.bf16.mxu0 0
      %4236 = vmatpush1.bf16.msra.mxu0 %v3653
      %4237 = vmatprep.subr.bf16.mxu0 0
      %4238 = vmatpush1.bf16.msra.mxu0 %v3654
      %4239 = vmatprep.subr.bf16.mxu0 0
      %4240 = vmatpush1.bf16.msra.mxu0 %v3655
      %4241 = vmatprep.subr.bf16.mxu0 0
      %4242 = vmatpush1.bf16.msra.mxu0 %v3656
      %4243 = vmatprep.subr.bf16.mxu0 0
      %4244 = vmatpush1.bf16.msra.mxu0 %v3657
      %4245 = vmatprep.subr.bf16.mxu0 0
      %4246 = vmatpush1.bf16.msra.mxu0 %v3658
      %4247 = vmatprep.subr.bf16.mxu0 0
      %4248 = vmatpush1.bf16.msra.mxu0 %v3659
      %4249 = vmatprep.subr.bf16.mxu0 0
      %4250 = vmatpush1.bf16.msra.mxu0 %v3660
      %4251 = vmatprep.subr.bf16.mxu0 0
      %4252 = vmatpush1.bf16.msra.mxu0 %v3661
      %4253 = vmatprep.subr.bf16.mxu0 0
      %4254 = vmatpush1.bf16.msra.mxu0 %v3662
      %4255 = vmatprep.subr.bf16.mxu0 0
      %4256 = vmatpush1.bf16.msra.mxu0 %v3663
      %4257 = vmatprep.subr.bf16.mxu0 0
      %4258 = vmatpush1.bf16.msra.mxu0 %v3664
      %4259 = vmatprep.subr.bf16.mxu0 0
      %4260 = vmatpush1.bf16.msra.mxu0 %v3665
      %4261 = vmatprep.mubr.bf16.mxu0 %v3033
      %4262 = vmatmul.mubr.bf16.gmra.mrb[0].mxu0 %v3032
      %v4263 = vpop.f32.mrb[0].mxu0
      %v4264 = vadd.f32 %v4103, %v4263
      %v4265 = vpop.f32.mrb[0].mxu0
      %v4266 = vpop.f32.mrb[0].mxu0
      %v4267 = vadd.f32 %v4106, %v4266
      %v4268 = vpop.f32.mrb[0].mxu0
      %4269 = vmatprep.mubr.bf16.mxu0 %v3042
      %4270 = vmatmul.mubr.bf16.gmra.mrb[0].mxu0 %v3041
      %v4271 = vpop.f32.mrb[0].mxu0
      %v4272 = vadd.f32 %v4111, %v4271
      %v4273 = vpop.f32.mrb[0].mxu0
      %v4274 = vpop.f32.mrb[0].mxu0
      %v4275 = vadd.f32 %v4114, %v4274
      %v4276 = vpop.f32.mrb[0].mxu0
      %4277 = vmatprep.mubr.bf16.mxu0 %v3051
      %4278 = vmatmul.mubr.bf16.gmra.mrb[0].mxu0 %v3050
      %v4279 = vpop.f32.mrb[0].mxu0
      %v4280 = vadd.f32 %v4119, %v4279
      %v4281 = vpop.f32.mrb[0].mxu0
      %v4282 = vpop.f32.mrb[0].mxu0
      %v4283 = vadd.f32 %v4122, %v4282
      %v4284 = vpop.f32.mrb[0].mxu0
      %4285 = vmatprep.mubr.bf16.mxu0 %v3060
      %4286 = vmatmul.mubr.bf16.gmra.mrb[0].mxu0 %v3059
      %v4287 = vpop.f32.mrb[0].mxu0
      %v4288 = vadd.f32 %v4127, %v4287
      %v4289 = vpop.f32.mrb[0].mxu0
      %v4290 = vpop.f32.mrb[0].mxu0
      %v4291 = vadd.f32 %v4130, %v4290
      %v4292 = vpop.f32.mrb[0].mxu0
      %4293 = vmatprep.mubr.bf16.mxu0 %v3069
      %4294 = vmatmul.mubr.bf16.gmra.mrb[0].mxu0 %v3068
      %v4295 = vpop.f32.mrb[0].mxu0
      %v4296 = vadd.f32 %v4135, %v4295
      %v4297 = vpop.f32.mrb[0].mxu0
      %v4298 = vpop.f32.mrb[0].mxu0
      %v4299 = vadd.f32 %v4138, %v4298
      %v4300 = vpop.f32.mrb[0].mxu0
      %4301 = vmatprep.mubr.bf16.mxu0 %v3078
      %4302 = vmatmul.mubr.bf16.gmra.mrb[0].mxu0 %v3077
      %v4303 = vpop.f32.mrb[0].mxu0
      %v4304 = vadd.f32 %v4143, %v4303
      %v4305 = vpop.f32.mrb[0].mxu0
      %v4306 = vpop.f32.mrb[0].mxu0
      %v4307 = vadd.f32 %v4146, %v4306
      %v4308 = vpop.f32.mrb[0].mxu0
      %4309 = vmatprep.mubr.bf16.mxu0 %v3087
      %4310 = vmatmul.mubr.bf16.gmra.mrb[0].mxu0 %v3086
      %v4311 = vpop.f32.mrb[0].mxu0
      %v4312 = vadd.f32 %v4151, %v4311
      %v4313 = vpop.f32.mrb[0].mxu0
      %v4314 = vpop.f32.mrb[0].mxu0
      %v4315 = vadd.f32 %v4154, %v4314
      %v4316 = vpop.f32.mrb[0].mxu0
      %4317 = vmatprep.mubr.bf16.mxu0 %v3096
      %4318 = vmatmul.mubr.bf16.gmra.mrb[0].mxu0 %v3095
      %v4319 = vpop.f32.mrb[0].mxu0
      %v4320 = vadd.f32 %v4159, %v4319
      %v4321 = vpop.f32.mrb[0].mxu0
      %v4322 = vpop.f32.mrb[0].mxu0
      %v4323 = vadd.f32 %v4162, %v4322
      %v4324 = vpop.f32.mrb[0].mxu0
      %4325 = vmatprep.mubr.bf16.mxu0 %v3105
      %4326 = vmatmul.mubr.bf16.gmra.mrb[0].mxu0 %v3104
      %v4327 = vpop.f32.mrb[0].mxu0
      %v4328 = vadd.f32 %v4167, %v4327
      %v4329 = vpop.f32.mrb[0].mxu0
      %v4330 = vpop.f32.mrb[0].mxu0
      %v4331 = vadd.f32 %v4170, %v4330
      %v4332 = vpop.f32.mrb[0].mxu0
      %4333 = vmatprep.mubr.bf16.mxu0 %v3114
      %4334 = vmatmul.mubr.bf16.gmra.mrb[0].mxu0 %v3113
      %v4335 = vpop.f32.mrb[0].mxu0
      %v4336 = vadd.f32 %v4175, %v4335
      %v4337 = vpop.f32.mrb[0].mxu0
      %v4338 = vpop.f32.mrb[0].mxu0
      %v4339 = vadd.f32 %v4178, %v4338
      %v4340 = vpop.f32.mrb[0].mxu0
      %4341 = vmatprep.mubr.bf16.mxu0 %v3123
      %4342 = vmatmul.mubr.bf16.gmra.mrb[0].mxu0 %v3122
      %v4343 = vpop.f32.mrb[0].mxu0
      %v4344 = vadd.f32 %v4183, %v4343
      %v4345 = vpop.f32.mrb[0].mxu0
      %v4346 = vpop.f32.mrb[0].mxu0
      %v4347 = vadd.f32 %v4186, %v4346
      %v4348 = vpop.f32.mrb[0].mxu0
      %4349 = vmatprep.mubr.bf16.mxu0 %v3132
      %4350 = vmatmul.mubr.bf16.gmra.mrb[0].mxu0 %v3131
      %v4351 = vpop.f32.mrb[0].mxu0
      %v4352 = vadd.f32 %v4191, %v4351
      %v4353 = vpop.f32.mrb[0].mxu0
      %v4354 = vpop.f32.mrb[0].mxu0
      %v4355 = vadd.f32 %v4194, %v4354
      %v4356 = vpop.f32.mrb[0].mxu0
      %4357 = vmatprep.mubr.bf16.mxu0 %v3141
      %4358 = vmatmul.mubr.bf16.gmra.mrb[0].mxu0 %v3140
      %v4359 = vpop.f32.mrb[0].mxu0
      %v4360 = vadd.f32 %v4199, %v4359
      %v4361 = vpop.f32.mrb[0].mxu0
      %v4362 = vpop.f32.mrb[0].mxu0
      %v4363 = vadd.f32 %v4202, %v4362
      %v4364 = vpop.f32.mrb[0].mxu0
      %4365 = vmatprep.mubr.bf16.mxu0 %v3150
      %4366 = vmatmul.mubr.bf16.gmra.mrb[0].mxu0 %v3149
      %v4367 = vpop.f32.mrb[0].mxu0
      %v4368 = vadd.f32 %v4207, %v4367
      %v4369 = vpop.f32.mrb[0].mxu0
      %v4370 = vpop.f32.mrb[0].mxu0
      %v4371 = vadd.f32 %v4210, %v4370
      %v4372 = vpop.f32.mrb[0].mxu0
      %4373 = vmatprep.mubr.bf16.mxu0 %v3159
      %4374 = vmatmul.mubr.bf16.gmra.mrb[0].mxu0 %v3158
      %v4375 = vpop.f32.mrb[0].mxu0
      %v4376 = vadd.f32 %v4215, %v4375
      %v4377 = vpop.f32.mrb[0].mxu0
      %v4378 = vpop.f32.mrb[0].mxu0
      %v4379 = vadd.f32 %v4218, %v4378
      %v4380 = vpop.f32.mrb[0].mxu0
      %4381 = vmatprep.mubr.bf16.mxu0 %v3168
      %4382 = vmatmul.mubr.bf16.gmra.mrb[0].mxu0 %v3167
      %v4383 = vpop.f32.mrb[0].mxu0
      %v4384 = vadd.f32 %v4223, %v4383
      %v4385 = vpop.f32.mrb[0].mxu0
      %v4386 = vpop.f32.mrb[0].mxu0
      %v4387 = vadd.f32 %v4226, %v4386
      %v4388 = vpop.f32.mrb[0].mxu0
      %4389 = vdwg.mxu0
      %4390 = vmatprep.subr.bf16.mxu0 0
      %4391 = vmatpush1.bf16.msra.mxu0 %v3666
      %4392 = vmatprep.subr.bf16.mxu0 0
      %4393 = vmatpush1.bf16.msra.mxu0 %v3667
      %4394 = vmatprep.subr.bf16.mxu0 0
      %4395 = vmatpush1.bf16.msra.mxu0 %v3668
      %4396 = vmatprep.subr.bf16.mxu0 0
      %4397 = vmatpush1.bf16.msra.mxu0 %v3669
      %4398 = vmatprep.subr.bf16.mxu0 0
      %4399 = vmatpush1.bf16.msra.mxu0 %v3670
      %4400 = vmatprep.subr.bf16.mxu0 0
      %4401 = vmatpush1.bf16.msra.mxu0 %v3671
      %4402 = vmatprep.subr.bf16.mxu0 0
      %4403 = vmatpush1.bf16.msra.mxu0 %v3672
      %4404 = vmatprep.subr.bf16.mxu0 0
      %4405 = vmatpush1.bf16.msra.mxu0 %v3673
      %4406 = vmatprep.subr.bf16.mxu0 0
      %4407 = vmatpush1.bf16.msra.mxu0 0
      %4408 = vmatprep.subr.bf16.mxu0 0
      %4409 = vmatpush1.bf16.msra.mxu0 0
      %4410 = vmatprep.subr.bf16.mxu0 0
      %4411 = vmatpush1.bf16.msra.mxu0 0
      %4412 = vmatprep.subr.bf16.mxu0 0
      %4413 = vmatpush1.bf16.msra.mxu0 0
      %4414 = vmatprep.subr.bf16.mxu0 0
      %4415 = vmatpush1.bf16.msra.mxu0 0
      %4416 = vmatprep.subr.bf16.mxu0 0
      %4417 = vmatpush1.bf16.msra.mxu0 0
      %4418 = vmatprep.subr.bf16.mxu0 0
      %4419 = vmatpush1.bf16.msra.mxu0 0
      %4420 = vmatprep.subr.bf16.mxu0 0
      %4421 = vmatpush1.bf16.msra.mxu0 0
      %4422 = vmatprep.mubr.bf16.mxu0 0
      %4423 = vmatmul.mubr.bf16.gmra.mrb[0].mxu0 %v3034
      %v4424 = vpop.f32.mrb[0].mxu0
      %v4425 = vadd.f32 %v4264, %v4424
      %v4426 = vpop.f32.mrb[0].mxu0
      %v4427 = vpop.f32.mrb[0].mxu0
      %v4428 = vadd.f32 %v4267, %v4427
      %v4429 = vpop.f32.mrb[0].mxu0
      %4430 = vmatprep.mubr.bf16.mxu0 0
      %4431 = vmatmul.mubr.bf16.gmra.mrb[0].mxu0 %v3043
      %v4432 = vpop.f32.mrb[0].mxu0
      %v4433 = vadd.f32 %v4272, %v4432
      %v4434 = vpop.f32.mrb[0].mxu0
      %v4435 = vpop.f32.mrb[0].mxu0
      %v4436 = vadd.f32 %v4275, %v4435
      %v4437 = vpop.f32.mrb[0].mxu0
      %4438 = vmatprep.mubr.bf16.mxu0 0
      %4439 = vmatmul.mubr.bf16.gmra.mrb[0].mxu0 %v3052
      %v4440 = vpop.f32.mrb[0].mxu0
      %v4441 = vadd.f32 %v4280, %v4440
      %v4442 = vpop.f32.mrb[0].mxu0
      %v4443 = vpop.f32.mrb[0].mxu0
      %v4444 = vadd.f32 %v4283, %v4443
      %v4445 = vpop.f32.mrb[0].mxu0
      %4446 = vmatprep.mubr.bf16.mxu0 0
      %4447 = vmatmul.mubr.bf16.gmra.mrb[0].mxu0 %v3061
      %v4448 = vpop.f32.mrb[0].mxu0
      %v4449 = vadd.f32 %v4288, %v4448
      %v4450 = vpop.f32.mrb[0].mxu0
      %v4451 = vpop.f32.mrb[0].mxu0
      %v4452 = vadd.f32 %v4291, %v4451
      %v4453 = vpop.f32.mrb[0].mxu0
      %4454 = vmatprep.mubr.bf16.mxu0 0
      %4455 = vmatmul.mubr.bf16.gmra.mrb[0].mxu0 %v3070
      %v4456 = vpop.f32.mrb[0].mxu0
      %v4457 = vadd.f32 %v4296, %v4456
      %v4458 = vpop.f32.mrb[0].mxu0
      %v4459 = vpop.f32.mrb[0].mxu0
      %v4460 = vadd.f32 %v4299, %v4459
      %v4461 = vpop.f32.mrb[0].mxu0
      %4462 = vmatprep.mubr.bf16.mxu0 0
      %4463 = vmatmul.mubr.bf16.gmra.mrb[0].mxu0 %v3079
      %v4464 = vpop.f32.mrb[0].mxu0
      %v4465 = vadd.f32 %v4304, %v4464
      %v4466 = vpop.f32.mrb[0].mxu0
      %v4467 = vpop.f32.mrb[0].mxu0
      %v4468 = vadd.f32 %v4307, %v4467
      %v4469 = vpop.f32.mrb[0].mxu0
      %4470 = vmatprep.mubr.bf16.mxu0 0
      %4471 = vmatmul.mubr.bf16.gmra.mrb[0].mxu0 %v3088
      %v4472 = vpop.f32.mrb[0].mxu0
      %v4473 = vadd.f32 %v4312, %v4472
      %v4474 = vpop.f32.mrb[0].mxu0
      %v4475 = vpop.f32.mrb[0].mxu0
      %v4476 = vadd.f32 %v4315, %v4475
      %v4477 = vpop.f32.mrb[0].mxu0
      %4478 = vmatprep.mubr.bf16.mxu0 0
      %4479 = vmatmul.mubr.bf16.gmra.mrb[0].mxu0 %v3097
      %v4480 = vpop.f32.mrb[0].mxu0
      %v4481 = vadd.f32 %v4320, %v4480
      %v4482 = vpop.f32.mrb[0].mxu0
      %v4483 = vpop.f32.mrb[0].mxu0
      %v4484 = vadd.f32 %v4323, %v4483
      %v4485 = vpop.f32.mrb[0].mxu0
      %4486 = vmatprep.mubr.bf16.mxu0 0
      %4487 = vmatmul.mubr.bf16.gmra.mrb[0].mxu0 %v3106
      %v4488 = vpop.f32.mrb[0].mxu0
      %v4489 = vadd.f32 %v4328, %v4488
      %v4490 = vpop.f32.mrb[0].mxu0
      %v4491 = vpop.f32.mrb[0].mxu0
      %v4492 = vadd.f32 %v4331, %v4491
      %v4493 = vpop.f32.mrb[0].mxu0
      %4494 = vmatprep.mubr.bf16.mxu0 0
      %4495 = vmatmul.mubr.bf16.gmra.mrb[0].mxu0 %v3115
      %v4496 = vpop.f32.mrb[0].mxu0
      %v4497 = vadd.f32 %v4336, %v4496
      %v4498 = vpop.f32.mrb[0].mxu0
      %v4499 = vpop.f32.mrb[0].mxu0
      %v4500 = vadd.f32 %v4339, %v4499
      %v4501 = vpop.f32.mrb[0].mxu0
      %4502 = vmatprep.mubr.bf16.mxu0 0
      %4503 = vmatmul.mubr.bf16.gmra.mrb[0].mxu0 %v3124
      %v4504 = vpop.f32.mrb[0].mxu0
      %v4505 = vadd.f32 %v4344, %v4504
      %v4506 = vpop.f32.mrb[0].mxu0
      %v4507 = vpop.f32.mrb[0].mxu0
      %v4508 = vadd.f32 %v4347, %v4507
      %v4509 = vpop.f32.mrb[0].mxu0
      %4510 = vmatprep.mubr.bf16.mxu0 0
      %4511 = vmatmul.mubr.bf16.gmra.mrb[0].mxu0 %v3133
      %v4512 = vpop.f32.mrb[0].mxu0
      %v4513 = vadd.f32 %v4352, %v4512
      %v4514 = vpop.f32.mrb[0].mxu0
      %v4515 = vpop.f32.mrb[0].mxu0
      %v4516 = vadd.f32 %v4355, %v4515
      %v4517 = vpop.f32.mrb[0].mxu0
      %4518 = vmatprep.mubr.bf16.mxu0 0
      %4519 = vmatmul.mubr.bf16.gmra.mrb[0].mxu0 %v3142
      %v4520 = vpop.f32.mrb[0].mxu0
      %v4521 = vadd.f32 %v4360, %v4520
      %v4522 = vpop.f32.mrb[0].mxu0
      %v4523 = vpop.f32.mrb[0].mxu0
      %v4524 = vadd.f32 %v4363, %v4523
      %v4525 = vpop.f32.mrb[0].mxu0
      %4526 = vmatprep.mubr.bf16.mxu0 0
      %4527 = vmatmul.mubr.bf16.gmra.mrb[0].mxu0 %v3151
      %v4528 = vpop.f32.mrb[0].mxu0
      %v4529 = vadd.f32 %v4368, %v4528
      %v4530 = vpop.f32.mrb[0].mxu0
      %v4531 = vpop.f32.mrb[0].mxu0
      %v4532 = vadd.f32 %v4371, %v4531
      %v4533 = vpop.f32.mrb[0].mxu0
      %4534 = vmatprep.mubr.bf16.mxu0 0
      %4535 = vmatmul.mubr.bf16.gmra.mrb[0].mxu0 %v3160
      %v4536 = vpop.f32.mrb[0].mxu0
      %v4537 = vadd.f32 %v4376, %v4536
      %v4538 = vpop.f32.mrb[0].mxu0
      %v4539 = vpop.f32.mrb[0].mxu0
      %v4540 = vadd.f32 %v4379, %v4539
      %v4541 = vpop.f32.mrb[0].mxu0
      %4542 = vmatprep.mubr.bf16.mxu0 0
      %4543 = vmatmul.mubr.bf16.gmra.mrb[0].mxu0 %v3169
      %v4544 = vpop.f32.mrb[0].mxu0
      %v4545 = vadd.f32 %v4384, %v4544
      %v4546 = vpop.f32.mrb[0].mxu0
      %v4547 = vpop.f32.mrb[0].mxu0
      %v4548 = vadd.f32 %v4387, %v4547
      %v4549 = vpop.f32.mrb[0].mxu0
      %4550 = vdwg.mxu0
      %v4551 = vlaneseq
      %v4552 = vshrl.u32 %v4551, 7
      %v4553 = vsub.s32 1, %v4552
      %v4554 = vrot.slane %v285, %v4553
      %v4555 = vmul.f32 %v4425, %v4554
      %v4556 = vmul.f32 %v4428, %v4554
      %v4557 = vmul.f32 %v4433, %v4554
      %v4558 = vmul.f32 %v4436, %v4554
      %v4559 = vmul.f32 %v4441, %v4554
      %v4560 = vmul.f32 %v4444, %v4554
      %v4561 = vmul.f32 %v4449, %v4554
      %v4562 = vmul.f32 %v4452, %v4554
      %v4563 = vmul.f32 %v4457, %v4554
      %v4564 = vmul.f32 %v4460, %v4554
      %v4565 = vmul.f32 %v4465, %v4554
      %v4566 = vmul.f32 %v4468, %v4554
      %v4567 = vmul.f32 %v4473, %v4554
      %v4568 = vmul.f32 %v4476, %v4554
      %v4569 = vmul.f32 %v4481, %v4554
      %v4570 = vmul.f32 %v4484, %v4554
      %v4571 = vmul.f32 %v4489, %v4554
      %v4572 = vmul.f32 %v4492, %v4554
      %v4573 = vmul.f32 %v4497, %v4554
      %v4574 = vmul.f32 %v4500, %v4554
      %v4575 = vmul.f32 %v4505, %v4554
      %v4576 = vmul.f32 %v4508, %v4554
      %v4577 = vmul.f32 %v4513, %v4554
      %v4578 = vmul.f32 %v4516, %v4554
      %v4579 = vmul.f32 %v4521, %v4554
      %v4580 = vmul.f32 %v4524, %v4554
      %v4581 = vmul.f32 %v4529, %v4554
      %v4582 = vmul.f32 %v4532, %v4554
      %v4583 = vmul.f32 %v4537, %v4554
      %v4584 = vmul.f32 %v4540, %v4554
      %v4585 = vmul.f32 %v4545, %v4554
      %v4586 = vmul.f32 %v4548, %v4554
      %v4587 = vlaneseq
      %v4588 = vshrl.u32 %v4587, 7
      %v4589 = vsub.s32 1, %v4588
      %v4590 = vrot.slane %v286, %v4589
      %v4591 = vadd.f32 %v4555, %v4590
      %v4592 = vadd.f32 %v4556, %v4590
      %v4593 = vadd.f32 %v4557, %v4590
      %v4594 = vadd.f32 %v4558, %v4590
      %v4595 = vadd.f32 %v4559, %v4590
      %v4596 = vadd.f32 %v4560, %v4590
      %v4597 = vadd.f32 %v4561, %v4590
      %v4598 = vadd.f32 %v4562, %v4590
      %v4599 = vadd.f32 %v4563, %v4590
      %v4600 = vadd.f32 %v4564, %v4590
      %v4601 = vadd.f32 %v4565, %v4590
      %v4602 = vadd.f32 %v4566, %v4590
      %v4603 = vadd.f32 %v4567, %v4590
      %v4604 = vadd.f32 %v4568, %v4590
      %v4605 = vadd.f32 %v4569, %v4590
      %v4606 = vadd.f32 %v4570, %v4590
      %v4607 = vadd.f32 %v4571, %v4590
      %v4608 = vadd.f32 %v4572, %v4590
      %v4609 = vadd.f32 %v4573, %v4590
      %v4610 = vadd.f32 %v4574, %v4590
      %v4611 = vadd.f32 %v4575, %v4590
      %v4612 = vadd.f32 %v4576, %v4590
      %v4613 = vadd.f32 %v4577, %v4590
      %v4614 = vadd.f32 %v4578, %v4590
      %v4615 = vadd.f32 %v4579, %v4590
      %v4616 = vadd.f32 %v4580, %v4590
      %v4617 = vadd.f32 %v4581, %v4590
      %v4618 = vadd.f32 %v4582, %v4590
      %v4619 = vadd.f32 %v4583, %v4590
      %v4620 = vadd.f32 %v4584, %v4590
      %v4621 = vadd.f32 %v4585, %v4590
      %v4622 = vadd.f32 %v4586, %v4590
      %vm4623 = vcmp.ge.f32.partialorder %v4591, 0.0
      %vm4624 = vcmp.ge.f32.partialorder %v4592, 0.0
      %vm4625 = vcmp.ge.f32.partialorder %v4593, 0.0
      %vm4626 = vcmp.ge.f32.partialorder %v4594, 0.0
      %vm4627 = vcmp.ge.f32.partialorder %v4595, 0.0
      %vm4628 = vcmp.ge.f32.partialorder %v4596, 0.0
      %vm4629 = vcmp.ge.f32.partialorder %v4597, 0.0
      %vm4630 = vcmp.ge.f32.partialorder %v4598, 0.0
      %vm4631 = vcmp.ge.f32.partialorder %v4599, 0.0
      %vm4632 = vcmp.ge.f32.partialorder %v4600, 0.0
      %vm4633 = vcmp.ge.f32.partialorder %v4601, 0.0
      %vm4634 = vcmp.ge.f32.partialorder %v4602, 0.0
      %vm4635 = vcmp.ge.f32.partialorder %v4603, 0.0
      %vm4636 = vcmp.ge.f32.partialorder %v4604, 0.0
      %vm4637 = vcmp.ge.f32.partialorder %v4605, 0.0
      %vm4638 = vcmp.ge.f32.partialorder %v4606, 0.0
      %vm4639 = vcmp.ge.f32.partialorder %v4607, 0.0
      %vm4640 = vcmp.ge.f32.partialorder %v4608, 0.0
      %vm4641 = vcmp.ge.f32.partialorder %v4609, 0.0
      %vm4642 = vcmp.ge.f32.partialorder %v4610, 0.0
      %vm4643 = vcmp.ge.f32.partialorder %v4611, 0.0
      %vm4644 = vcmp.ge.f32.partialorder %v4612, 0.0
      %vm4645 = vcmp.ge.f32.partialorder %v4613, 0.0
      %vm4646 = vcmp.ge.f32.partialorder %v4614, 0.0
      %vm4647 = vcmp.ge.f32.partialorder %v4615, 0.0
      %vm4648 = vcmp.ge.f32.partialorder %v4616, 0.0
      %vm4649 = vcmp.ge.f32.partialorder %v4617, 0.0
      %vm4650 = vcmp.ge.f32.partialorder %v4618, 0.0
      %vm4651 = vcmp.ge.f32.partialorder %v4619, 0.0
      %vm4652 = vcmp.ge.f32.partialorder %v4620, 0.0
      %vm4653 = vcmp.ge.f32.partialorder %v4621, 0.0
      %vm4654 = vcmp.ge.f32.partialorder %v4622, 0.0
      %v4655 = vmul.f32 %v4591, 0.1
      %v4656 = vmul.f32 %v4592, 0.1
      %v4657 = vmul.f32 %v4593, 0.1
      %v4658 = vmul.f32 %v4594, 0.1
      %v4659 = vmul.f32 %v4595, 0.1
      %v4660 = vmul.f32 %v4596, 0.1
      %v4661 = vmul.f32 %v4597, 0.1
      %v4662 = vmul.f32 %v4598, 0.1
      %v4663 = vmul.f32 %v4599, 0.1
      %v4664 = vmul.f32 %v4600, 0.1
      %v4665 = vmul.f32 %v4601, 0.1
      %v4666 = vmul.f32 %v4602, 0.1
      %v4667 = vmul.f32 %v4603, 0.1
      %v4668 = vmul.f32 %v4604, 0.1
      %v4669 = vmul.f32 %v4605, 0.1
      %v4670 = vmul.f32 %v4606, 0.1
      %v4671 = vmul.f32 %v4607, 0.1
      %v4672 = vmul.f32 %v4608, 0.1
      %v4673 = vmul.f32 %v4609, 0.1
      %v4674 = vmul.f32 %v4610, 0.1
      %v4675 = vmul.f32 %v4611, 0.1
      %v4676 = vmul.f32 %v4612, 0.1
      %v4677 = vmul.f32 %v4613, 0.1
      %v4678 = vmul.f32 %v4614, 0.1
      %v4679 = vmul.f32 %v4615, 0.1
      %v4680 = vmul.f32 %v4616, 0.1
      %v4681 = vmul.f32 %v4617, 0.1
      %v4682 = vmul.f32 %v4618, 0.1
      %v4683 = vmul.f32 %v4619, 0.1
      %v4684 = vmul.f32 %v4620, 0.1
      %v4685 = vmul.f32 %v4621, 0.1
      %v4686 = vmul.f32 %v4622, 0.1
      %v4687 = vsel %vm4623, %v4591, %v4655
      %v4688 = vsel %vm4624, %v4592, %v4656
      %v4689 = vsel %vm4625, %v4593, %v4657
      %v4690 = vsel %vm4626, %v4594, %v4658
      %v4691 = vsel %vm4627, %v4595, %v4659
      %v4692 = vsel %vm4628, %v4596, %v4660
      %v4693 = vsel %vm4629, %v4597, %v4661
      %v4694 = vsel %vm4630, %v4598, %v4662
      %v4695 = vsel %vm4631, %v4599, %v4663
      %v4696 = vsel %vm4632, %v4600, %v4664
      %v4697 = vsel %vm4633, %v4601, %v4665
      %v4698 = vsel %vm4634, %v4602, %v4666
      %v4699 = vsel %vm4635, %v4603, %v4667
      %v4700 = vsel %vm4636, %v4604, %v4668
      %v4701 = vsel %vm4637, %v4605, %v4669
      %v4702 = vsel %vm4638, %v4606, %v4670
      %v4703 = vsel %vm4639, %v4607, %v4671
      %v4704 = vsel %vm4640, %v4608, %v4672
      %v4705 = vsel %vm4641, %v4609, %v4673
      %v4706 = vsel %vm4642, %v4610, %v4674
      %v4707 = vsel %vm4643, %v4611, %v4675
      %v4708 = vsel %vm4644, %v4612, %v4676
      %v4709 = vsel %vm4645, %v4613, %v4677
      %v4710 = vsel %vm4646, %v4614, %v4678
      %v4711 = vsel %vm4647, %v4615, %v4679
      %v4712 = vsel %vm4648, %v4616, %v4680
      %v4713 = vsel %vm4649, %v4617, %v4681
      %v4714 = vsel %vm4650, %v4618, %v4682
      %v4715 = vsel %vm4651, %v4619, %v4683
      %v4716 = vsel %vm4652, %v4620, %v4684
      %v4717 = vsel %vm4653, %v4621, %v4685
      %v4718 = vsel %vm4654, %v4622, %v4686
      %4719 = vst [vmem:[%s358] sm:$0xff] %v4687
      %4720 = vst [vmem:[%s358 + $0x8] sm:$0xff] %v4688
      %4721 = vst [vmem:[%s358 + $0x10] sm:$0xff] %v4689
      %4722 = vst [vmem:[%s358 + $0x18] sm:$0xff] %v4690
      %4723 = vst [vmem:[%s358 + $0x20] sm:$0xff] %v4691
      %4724 = vst [vmem:[%s358 + $0x28] sm:$0xff] %v4692
      %4725 = vst [vmem:[%s358 + $0x30] sm:$0xff] %v4693
      %4726 = vst [vmem:[%s358 + $0x38] sm:$0xff] %v4694
      %4727 = vst [vmem:[%s358 + $0x40] sm:$0xff] %v4695
      %4728 = vst [vmem:[%s358 + $0x48] sm:$0xff] %v4696
      %4729 = vst [vmem:[%s358 + $0x50] sm:$0xff] %v4697
      %4730 = vst [vmem:[%s358 + $0x58] sm:$0xff] %v4698
      %4731 = vst [vmem:[%s358 + $0x60] sm:$0xff] %v4699
      %4732 = vst [vmem:[%s358 + $0x68] sm:$0xff] %v4700
      %4733 = vst [vmem:[%s358 + $0x70] sm:$0xff] %v4701
      %4734 = vst [vmem:[%s358 + $0x78] sm:$0xff] %v4702
      %4735 = vst [vmem:[%s358 + $0x80] sm:$0xff] %v4703
      %4736 = vst [vmem:[%s358 + $0x88] sm:$0xff] %v4704
      %4737 = vst [vmem:[%s358 + $0x90] sm:$0xff] %v4705
      %4738 = vst [vmem:[%s358 + $0x98] sm:$0xff] %v4706
      %4739 = vst [vmem:[%s358 + $0xa0] sm:$0xff] %v4707
      %4740 = vst [vmem:[%s358 + $0xa8] sm:$0xff] %v4708
      %4741 = vst [vmem:[%s358 + $0xb0] sm:$0xff] %v4709
      %4742 = vst [vmem:[%s358 + $0xb8] sm:$0xff] %v4710
      %4743 = vst [vmem:[%s358 + $0xc0] sm:$0xff] %v4711
      %4744 = vst [vmem:[%s358 + $0xc8] sm:$0xff] %v4712
      %4745 = vst [vmem:[%s358 + $0xd0] sm:$0xff] %v4713
      %4746 = vst [vmem:[%s358 + $0xd8] sm:$0xff] %v4714
      %4747 = vst [vmem:[%s358 + $0xe0] sm:$0xff] %v4715
      %4748 = vst [vmem:[%s358 + $0xe8] sm:$0xff] %v4716
      %4749 = vst [vmem:[%s358 + $0xf0] sm:$0xff] %v4717
      %4750 = vst [vmem:[%s358 + $0xf8] sm:$0xff] %v4718
      %v4751 = vld [vmem:[#allocation2] sm:$0xff]
      %v4752 = vld [vmem:[#allocation2 + $0x8] sm:$0xff]
      %v4753 = vld [vmem:[#allocation2 + $0x10] sm:$0xff]
      %v4754 = vld [vmem:[#allocation2 + $0x18] sm:$0xff]
      %v4755 = vld [vmem:[#allocation2 + $0x20] sm:$0xff]
      %v4756 = vld [vmem:[#allocation2 + $0x28] sm:$0xff]
      %v4757 = vld [vmem:[#allocation2 + $0x30] sm:$0xff]
      %v4758 = vld [vmem:[#allocation2 + $0x38] sm:$0xff]
      %v4759 = vld [vmem:[#allocation2 + $0x40] sm:$0xff]
      %v4760 = vld [vmem:[#allocation2 + $0x48] sm:$0xff]
      %v4761 = vld [vmem:[#allocation2 + $0x50] sm:$0xff]
      %v4762 = vld [vmem:[#allocation2 + $0x58] sm:$0xff]
      %v4763 = vld [vmem:[#allocation2 + $0x60] sm:$0xff]
      %v4764 = vld [vmem:[#allocation2 + $0x68] sm:$0xff]
      %v4765 = vld [vmem:[#allocation2 + $0x70] sm:$0xff]
      %v4766 = vld [vmem:[#allocation2 + $0x78] sm:$0xff]
      %v4767 = vld [vmem:[#allocation2 + $0x80] sm:$0xff]
      %v4768 = vld [vmem:[#allocation2 + $0x88] sm:$0xff]
      %v4769 = vld [vmem:[#allocation2 + $0x90] sm:$0xff]
      %v4770 = vld [vmem:[#allocation2 + $0x98] sm:$0xff]
      %v4771 = vld [vmem:[#allocation2 + $0xa0] sm:$0xff]
      %v4772 = vld [vmem:[#allocation2 + $0xa8] sm:$0xff]
      %v4773 = vld [vmem:[#allocation2 + $0xb0] sm:$0xff]
      %v4774 = vld [vmem:[#allocation2 + $0xb8] sm:$0xff]
      %v4775 = vld [vmem:[#allocation2 + $0xc0] sm:$0xff]
      %v4776 = vld [vmem:[#allocation2 + $0xc8] sm:$0xff]
      %v4777 = vld [vmem:[#allocation2 + $0xd0] sm:$0xff]
      %v4778 = vld [vmem:[#allocation2 + $0xd8] sm:$0xff]
      %v4779 = vld [vmem:[#allocation2 + $0xe0] sm:$0xff]
      %v4780 = vld [vmem:[#allocation2 + $0xe8] sm:$0xff]
      %v4781 = vld [vmem:[#allocation2 + $0xf0] sm:$0xff]
      %v4782 = vld [vmem:[#allocation2 + $0xf8] sm:$0xff]
      %v4783 = vld [vmem:[#allocation2 + $0x100] sm:$0xff]
      %v4784 = vld [vmem:[#allocation2 + $0x108] sm:$0xff]
      %v4785 = vld [vmem:[#allocation2 + $0x110] sm:$0xff]
      %v4786 = vld [vmem:[#allocation2 + $0x118] sm:$0xff]
      %v4787 = vrot.slane %v4751, 7
      %v4788 = vrot.slane %v4752, 7
      %v4789 = vrot.slane %v4753, 7
      %v4790 = vrot.slane %v4754, 7
      %v4791 = vrot.slane %v4755, 7
      %v4792 = vrot.slane %v4756, 7
      %v4793 = vrot.slane %v4757, 7
      %v4794 = vrot.slane %v4758, 7
      %v4795 = vrot.slane %v4759, 7
      %v4796 = vrot.slane %v4760, 7
      %v4797 = vrot.slane %v4761, 7
      %v4798 = vrot.slane %v4762, 7
      %v4799 = vrot.slane %v4763, 7
      %v4800 = vrot.slane %v4764, 7
      %v4801 = vrot.slane %v4765, 7
      %v4802 = vrot.slane %v4766, 7
      %v4803 = vrot.slane %v4767, 7
      %v4804 = vrot.slane %v4768, 7
      %v4805 = vrot.slane %v4769, 7
      %v4806 = vrot.slane %v4770, 7
      %v4807 = vrot.slane %v4771, 7
      %v4808 = vrot.slane %v4772, 7
      %v4809 = vrot.slane %v4773, 7
      %v4810 = vrot.slane %v4774, 7
      %v4811 = vrot.slane %v4775, 7
      %v4812 = vrot.slane %v4776, 7
      %v4813 = vrot.slane %v4777, 7
      %v4814 = vrot.slane %v4778, 7
      %v4815 = vrot.slane %v4779, 7
      %v4816 = vrot.slane %v4780, 7
      %v4817 = vrot.slane %v4781, 7
      %v4818 = vrot.slane %v4782, 7
      %v4819 = vrot.slane %v4783, 7
      %v4820 = vrot.slane %v4784, 7
      %v4821 = vrot.slane %v4785, 7
      %v4822 = vrot.slane %v4786, 7
      %v4823 = vsel %vm463, %v4821, %v4822
      %v4824 = vsel %vm463, %v4820, %v4821
      %v4825 = vsel %vm463, %v4819, %v4820
      %v4826 = vsel %vm463, %v4818, %v4819
      %v4827 = vsel %vm463, %v4817, %v4818
      %v4828 = vsel %vm463, %v4816, %v4817
      %v4829 = vsel %vm463, %v4815, %v4816
      %v4830 = vsel %vm463, %v4814, %v4815
      %v4831 = vsel %vm463, %v4813, %v4814
      %v4832 = vsel %vm463, %v4812, %v4813
      %v4833 = vsel %vm463, %v4811, %v4812
      %v4834 = vsel %vm463, %v4810, %v4811
      %v4835 = vsel %vm463, %v4809, %v4810
      %v4836 = vsel %vm463, %v4808, %v4809
      %v4837 = vsel %vm463, %v4807, %v4808
      %v4838 = vsel %vm463, %v4806, %v4807
      %v4839 = vsel %vm463, %v4805, %v4806
      %v4840 = vsel %vm463, %v4804, %v4805
      %v4841 = vsel %vm463, %v4803, %v4804
      %v4842 = vsel %vm463, %v4802, %v4803
      %v4843 = vsel %vm463, %v4801, %v4802
      %v4844 = vsel %vm463, %v4800, %v4801
      %v4845 = vsel %vm463, %v4799, %v4800
      %v4846 = vsel %vm463, %v4798, %v4799
      %v4847 = vsel %vm463, %v4797, %v4798
      %v4848 = vsel %vm463, %v4796, %v4797
      %v4849 = vsel %vm463, %v4795, %v4796
      %v4850 = vsel %vm463, %v4794, %v4795
      %v4851 = vsel %vm463, %v4793, %v4794
      %v4852 = vsel %vm463, %v4792, %v4793
      %v4853 = vsel %vm463, %v4791, %v4792
      %v4854 = vsel %vm463, %v4790, %v4791
      %v4855 = vsel %vm463, %v4789, %v4790
      %v4856 = vsel %vm463, %v4788, %v4789
      %v4857 = vsel %vm463, %v4787, %v4788
      %v4858 = vsel %vm463, %v4822, %v4787
      %v4859 = vsel %vm502, %v4858, 0.0
      %v4860 = vsel %vm503, %v4857, 0.0
      %v4861 = vsel %vm502, %v4856, 0.0
      %v4862 = vsel %vm503, %v4855, 0.0
      %v4863 = vsel %vm502, %v4854, 0.0
      %v4864 = vsel %vm503, %v4853, 0.0
      %v4865 = vsel %vm502, %v4852, 0.0
      %v4866 = vsel %vm503, %v4851, 0.0
      %v4867 = vsel %vm502, %v4850, 0.0
      %v4868 = vsel %vm503, %v4849, 0.0
      %v4869 = vsel %vm502, %v4848, 0.0
      %v4870 = vsel %vm503, %v4847, 0.0
      %v4871 = vsel %vm502, %v4846, 0.0
      %v4872 = vsel %vm503, %v4845, 0.0
      %v4873 = vsel %vm502, %v4844, 0.0
      %v4874 = vsel %vm503, %v4843, 0.0
      %v4875 = vsel %vm502, %v4842, 0.0
      %v4876 = vsel %vm503, %v4841, 0.0
      %v4877 = vsel %vm502, %v4840, 0.0
      %v4878 = vsel %vm503, %v4839, 0.0
      %v4879 = vsel %vm502, %v4838, 0.0
      %v4880 = vsel %vm503, %v4837, 0.0
      %v4881 = vsel %vm502, %v4836, 0.0
      %v4882 = vsel %vm503, %v4835, 0.0
      %v4883 = vsel %vm502, %v4834, 0.0
      %v4884 = vsel %vm503, %v4833, 0.0
      %v4885 = vsel %vm502, %v4832, 0.0
      %v4886 = vsel %vm503, %v4831, 0.0
      %v4887 = vsel %vm502, %v4830, 0.0
      %v4888 = vsel %vm503, %v4829, 0.0
      %v4889 = vsel %vm502, %v4828, 0.0
      %v4890 = vsel %vm503, %v4827, 0.0
      %v4891 = vsel %vm502, %v4826, 0.0
      %v4892 = vsel %vm503, %v4825, 0.0
      %v4893 = vsel %vm502, %v4824, 0.0
      %v4894 = vsel %vm503, %v4823, 0.0
      %v4895 = vrot.slane %v4751, 1
      %v4896 = vrot.slane %v4752, 1
      %v4897 = vrot.slane %v4753, 1
      %v4898 = vrot.slane %v4754, 1
      %v4899 = vrot.slane %v4755, 1
      %v4900 = vrot.slane %v4756, 1
      %v4901 = vrot.slane %v4757, 1
      %v4902 = vrot.slane %v4758, 1
      %v4903 = vrot.slane %v4759, 1
      %v4904 = vrot.slane %v4760, 1
      %v4905 = vrot.slane %v4761, 1
      %v4906 = vrot.slane %v4762, 1
      %v4907 = vrot.slane %v4763, 1
      %v4908 = vrot.slane %v4764, 1
      %v4909 = vrot.slane %v4765, 1
      %v4910 = vrot.slane %v4766, 1
      %v4911 = vrot.slane %v4767, 1
      %v4912 = vrot.slane %v4768, 1
      %v4913 = vrot.slane %v4769, 1
      %v4914 = vrot.slane %v4770, 1
      %v4915 = vrot.slane %v4771, 1
      %v4916 = vrot.slane %v4772, 1
      %v4917 = vrot.slane %v4773, 1
      %v4918 = vrot.slane %v4774, 1
      %v4919 = vrot.slane %v4775, 1
      %v4920 = vrot.slane %v4776, 1
      %v4921 = vrot.slane %v4777, 1
      %v4922 = vrot.slane %v4778, 1
      %v4923 = vrot.slane %v4779, 1
      %v4924 = vrot.slane %v4780, 1
      %v4925 = vrot.slane %v4781, 1
      %v4926 = vrot.slane %v4782, 1
      %v4927 = vrot.slane %v4783, 1
      %v4928 = vrot.slane %v4784, 1
      %v4929 = vrot.slane %v4785, 1
      %v4930 = vrot.slane %v4786, 1
      %v4931 = vsel %vm576, %v4929, %v4930
      %v4932 = vsel %vm576, %v4928, %v4929
      %v4933 = vsel %vm576, %v4927, %v4928
      %v4934 = vsel %vm576, %v4926, %v4927
      %v4935 = vsel %vm576, %v4925, %v4926
      %v4936 = vsel %vm576, %v4924, %v4925
      %v4937 = vsel %vm576, %v4923, %v4924
      %v4938 = vsel %vm576, %v4922, %v4923
      %v4939 = vsel %vm576, %v4921, %v4922
      %v4940 = vsel %vm576, %v4920, %v4921
      %v4941 = vsel %vm576, %v4919, %v4920
      %v4942 = vsel %vm576, %v4918, %v4919
      %v4943 = vsel %vm576, %v4917, %v4918
      %v4944 = vsel %vm576, %v4916, %v4917
      %v4945 = vsel %vm576, %v4915, %v4916
      %v4946 = vsel %vm576, %v4914, %v4915
      %v4947 = vsel %vm576, %v4913, %v4914
      %v4948 = vsel %vm576, %v4912, %v4913
      %v4949 = vsel %vm576, %v4911, %v4912
      %v4950 = vsel %vm576, %v4910, %v4911
      %v4951 = vsel %vm576, %v4909, %v4910
      %v4952 = vsel %vm576, %v4908, %v4909
      %v4953 = vsel %vm576, %v4907, %v4908
      %v4954 = vsel %vm576, %v4906, %v4907
      %v4955 = vsel %vm576, %v4905, %v4906
      %v4956 = vsel %vm576, %v4904, %v4905
      %v4957 = vsel %vm576, %v4903, %v4904
      %v4958 = vsel %vm576, %v4902, %v4903
      %v4959 = vsel %vm576, %v4901, %v4902
      %v4960 = vsel %vm576, %v4900, %v4901
      %v4961 = vsel %vm576, %v4899, %v4900
      %v4962 = vsel %vm576, %v4898, %v4899
      %v4963 = vsel %vm576, %v4897, %v4898
      %v4964 = vsel %vm576, %v4896, %v4897
      %v4965 = vsel %vm576, %v4895, %v4896
      %v4966 = vsel %vm576, %v4930, %v4895
      %v4967 = vsel %vm615, %v4965, 0.0
      %v4968 = vsel %vm616, %v4964, 0.0
      %v4969 = vsel %vm615, %v4963, 0.0
      %v4970 = vsel %vm616, %v4962, 0.0
      %v4971 = vsel %vm615, %v4961, 0.0
      %v4972 = vsel %vm616, %v4960, 0.0
      %v4973 = vsel %vm615, %v4959, 0.0
      %v4974 = vsel %vm616, %v4958, 0.0
      %v4975 = vsel %vm615, %v4957, 0.0
      %v4976 = vsel %vm616, %v4956, 0.0
      %v4977 = vsel %vm615, %v4955, 0.0
      %v4978 = vsel %vm616, %v4954, 0.0
      %v4979 = vsel %vm615, %v4953, 0.0
      %v4980 = vsel %vm616, %v4952, 0.0
      %v4981 = vsel %vm615, %v4951, 0.0
      %v4982 = vsel %vm616, %v4950, 0.0
      %v4983 = vsel %vm615, %v4949, 0.0
      %v4984 = vsel %vm616, %v4948, 0.0
      %v4985 = vsel %vm615, %v4947, 0.0
      %v4986 = vsel %vm616, %v4946, 0.0
      %v4987 = vsel %vm615, %v4945, 0.0
      %v4988 = vsel %vm616, %v4944, 0.0
      %v4989 = vsel %vm615, %v4943, 0.0
      %v4990 = vsel %vm616, %v4942, 0.0
      %v4991 = vsel %vm615, %v4941, 0.0
      %v4992 = vsel %vm616, %v4940, 0.0
      %v4993 = vsel %vm615, %v4939, 0.0
      %v4994 = vsel %vm616, %v4938, 0.0
      %v4995 = vsel %vm615, %v4937, 0.0
      %v4996 = vsel %vm616, %v4936, 0.0
      %v4997 = vsel %vm615, %v4935, 0.0
      %v4998 = vsel %vm616, %v4934, 0.0
      %v4999 = vsel %vm615, %v4933, 0.0
      %v5000 = vsel %vm616, %v4932, 0.0
      %v5001 = vsel %vm615, %v4931, 0.0
      %v5002 = vsel %vm616, %v4966, 0.0
      %v5003 = vpack.c.bf16 %v4860, %v4859
      %v5004 = vpack.c.bf16 %v4862, %v4861
      %v5005 = vpack.c.bf16 %v4864, %v4863
      %v5006 = vpack.c.bf16 %v4866, %v4865
      %v5007 = vpack.c.bf16 %v4868, %v4867
      %v5008 = vpack.c.bf16 %v4870, %v4869
      %v5009 = vpack.c.bf16 %v4872, %v4871
      %v5010 = vpack.c.bf16 %v4874, %v4873
      %v5011 = vpack.c.bf16 %v4876, %v4875
      %v5012 = vpack.c.bf16 %v4878, %v4877
      %v5013 = vpack.c.bf16 %v4880, %v4879
      %v5014 = vpack.c.bf16 %v4882, %v4881
      %v5015 = vpack.c.bf16 %v4884, %v4883
      %v5016 = vpack.c.bf16 %v4886, %v4885
      %v5017 = vpack.c.bf16 %v4888, %v4887
      %v5018 = vpack.c.bf16 %v4890, %v4889
      %5019 = vst [vmem:[#allocation3] sm:$0xff] %v5003
      %5020 = vst [vmem:[#allocation3 + $0x48] sm:$0xff] %v5004
      %5021 = vst [vmem:[#allocation3 + $0x90] sm:$0xff] %v5005
      %5022 = vst [vmem:[#allocation3 + $0xd8] sm:$0xff] %v5006
      %5023 = vst [vmem:[#allocation3 + $0x120] sm:$0xff] %v5007
      %5024 = vst [vmem:[#allocation3 + $0x168] sm:$0xff] %v5008
      %5025 = vst [vmem:[#allocation3 + $0x1b0] sm:$0xff] %v5009
      %5026 = vst [vmem:[#allocation3 + $0x1f8] sm:$0xff] %v5010
      %5027 = vst [vmem:[#allocation3 + $0x240] sm:$0xff] %v5011
      %5028 = vst [vmem:[#allocation3 + $0x288] sm:$0xff] %v5012
      %5029 = vst [vmem:[#allocation3 + $0x2d0] sm:$0xff] %v5013
      %5030 = vst [vmem:[#allocation3 + $0x318] sm:$0xff] %v5014
      %5031 = vst [vmem:[#allocation3 + $0x360] sm:$0xff] %v5015
      %5032 = vst [vmem:[#allocation3 + $0x3a8] sm:$0xff] %v5016
      %5033 = vst [vmem:[#allocation3 + $0x3f0] sm:$0xff] %v5017
      %5034 = vst [vmem:[#allocation3 + $0x438] sm:$0xff] %v5018
      %v5035 = vpack.c.bf16 %v4752, %v4751
      %v5036 = vpack.c.bf16 %v4754, %v4753
      %v5037 = vpack.c.bf16 %v4756, %v4755
      %v5038 = vpack.c.bf16 %v4758, %v4757
      %v5039 = vpack.c.bf16 %v4760, %v4759
      %v5040 = vpack.c.bf16 %v4762, %v4761
      %v5041 = vpack.c.bf16 %v4764, %v4763
      %v5042 = vpack.c.bf16 %v4766, %v4765
      %v5043 = vpack.c.bf16 %v4768, %v4767
      %v5044 = vpack.c.bf16 %v4770, %v4769
      %v5045 = vpack.c.bf16 %v4772, %v4771
      %v5046 = vpack.c.bf16 %v4774, %v4773
      %v5047 = vpack.c.bf16 %v4776, %v4775
      %v5048 = vpack.c.bf16 %v4778, %v4777
      %v5049 = vpack.c.bf16 %v4780, %v4779
      %v5050 = vpack.c.bf16 %v4782, %v4781
      %5051 = vst [vmem:[#allocation3 + $0x8] sm:$0xff] %v5035
      %5052 = vst [vmem:[#allocation3 + $0x50] sm:$0xff] %v5036
      %5053 = vst [vmem:[#allocation3 + $0x98] sm:$0xff] %v5037
      %5054 = vst [vmem:[#allocation3 + $0xe0] sm:$0xff] %v5038
      %5055 = vst [vmem:[#allocation3 + $0x128] sm:$0xff] %v5039
      %5056 = vst [vmem:[#allocation3 + $0x170] sm:$0xff] %v5040
      %5057 = vst [vmem:[#allocation3 + $0x1b8] sm:$0xff] %v5041
      %5058 = vst [vmem:[#allocation3 + $0x200] sm:$0xff] %v5042
      %5059 = vst [vmem:[#allocation3 + $0x248] sm:$0xff] %v5043
      %5060 = vst [vmem:[#allocation3 + $0x290] sm:$0xff] %v5044
      %5061 = vst [vmem:[#allocation3 + $0x2d8] sm:$0xff] %v5045
      %5062 = vst [vmem:[#allocation3 + $0x320] sm:$0xff] %v5046
      %5063 = vst [vmem:[#allocation3 + $0x368] sm:$0xff] %v5047
      %5064 = vst [vmem:[#allocation3 + $0x3b0] sm:$0xff] %v5048
      %5065 = vst [vmem:[#allocation3 + $0x3f8] sm:$0xff] %v5049
      %5066 = vst [vmem:[#allocation3 + $0x440] sm:$0xff] %v5050
      %v5067 = vpack.c.bf16 %v4968, %v4967
      %v5068 = vpack.c.bf16 %v4970, %v4969
      %v5069 = vpack.c.bf16 %v4972, %v4971
      %v5070 = vpack.c.bf16 %v4974, %v4973
      %v5071 = vpack.c.bf16 %v4976, %v4975
      %v5072 = vpack.c.bf16 %v4978, %v4977
      %v5073 = vpack.c.bf16 %v4980, %v4979
      %v5074 = vpack.c.bf16 %v4982, %v4981
      %v5075 = vpack.c.bf16 %v4984, %v4983
      %v5076 = vpack.c.bf16 %v4986, %v4985
      %v5077 = vpack.c.bf16 %v4988, %v4987
      %v5078 = vpack.c.bf16 %v4990, %v4989
      %v5079 = vpack.c.bf16 %v4992, %v4991
      %v5080 = vpack.c.bf16 %v4994, %v4993
      %v5081 = vpack.c.bf16 %v4996, %v4995
      %v5082 = vpack.c.bf16 %v4998, %v4997
      %5083 = vst [vmem:[#allocation3 + $0x10] sm:$0xff] %v5067
      %5084 = vst [vmem:[#allocation3 + $0x58] sm:$0xff] %v5068
      %5085 = vst [vmem:[#allocation3 + $0xa0] sm:$0xff] %v5069
      %5086 = vst [vmem:[#allocation3 + $0xe8] sm:$0xff] %v5070
      %5087 = vst [vmem:[#allocation3 + $0x130] sm:$0xff] %v5071
      %5088 = vst [vmem:[#allocation3 + $0x178] sm:$0xff] %v5072
      %5089 = vst [vmem:[#allocation3 + $0x1c0] sm:$0xff] %v5073
      %5090 = vst [vmem:[#allocation3 + $0x208] sm:$0xff] %v5074
      %5091 = vst [vmem:[#allocation3 + $0x250] sm:$0xff] %v5075
      %5092 = vst [vmem:[#allocation3 + $0x298] sm:$0xff] %v5076
      %5093 = vst [vmem:[#allocation3 + $0x2e0] sm:$0xff] %v5077
      %5094 = vst [vmem:[#allocation3 + $0x328] sm:$0xff] %v5078
      %5095 = vst [vmem:[#allocation3 + $0x370] sm:$0xff] %v5079
      %5096 = vst [vmem:[#allocation3 + $0x3b8] sm:$0xff] %v5080
      %5097 = vst [vmem:[#allocation3 + $0x400] sm:$0xff] %v5081
      %5098 = vst [vmem:[#allocation3 + $0x448] sm:$0xff] %v5082
      %v5099 = vpack.c.bf16 %v4892, %v4891
      %5100 = vst [vmem:[#allocation3 + $0x18] sm:$0xff] %v5004
      %5101 = vst [vmem:[#allocation3 + $0x60] sm:$0xff] %v5005
      %5102 = vst [vmem:[#allocation3 + $0xa8] sm:$0xff] %v5006
      %5103 = vst [vmem:[#allocation3 + $0xf0] sm:$0xff] %v5007
      %5104 = vst [vmem:[#allocation3 + $0x138] sm:$0xff] %v5008
      %5105 = vst [vmem:[#allocation3 + $0x180] sm:$0xff] %v5009
      %5106 = vst [vmem:[#allocation3 + $0x1c8] sm:$0xff] %v5010
      %5107 = vst [vmem:[#allocation3 + $0x210] sm:$0xff] %v5011
      %5108 = vst [vmem:[#allocation3 + $0x258] sm:$0xff] %v5012
      %5109 = vst [vmem:[#allocation3 + $0x2a0] sm:$0xff] %v5013
      %5110 = vst [vmem:[#allocation3 + $0x2e8] sm:$0xff] %v5014
      %5111 = vst [vmem:[#allocation3 + $0x330] sm:$0xff] %v5015
      %5112 = vst [vmem:[#allocation3 + $0x378] sm:$0xff] %v5016
      %5113 = vst [vmem:[#allocation3 + $0x3c0] sm:$0xff] %v5017
      %5114 = vst [vmem:[#allocation3 + $0x408] sm:$0xff] %v5018
      %5115 = vst [vmem:[#allocation3 + $0x450] sm:$0xff] %v5099
      %v5116 = vpack.c.bf16 %v4784, %v4783
      %5117 = vst [vmem:[#allocation3 + $0x20] sm:$0xff] %v5036
      %5118 = vst [vmem:[#allocation3 + $0x68] sm:$0xff] %v5037
      %5119 = vst [vmem:[#allocation3 + $0xb0] sm:$0xff] %v5038
      %5120 = vst [vmem:[#allocation3 + $0xf8] sm:$0xff] %v5039
      %5121 = vst [vmem:[#allocation3 + $0x140] sm:$0xff] %v5040
      %5122 = vst [vmem:[#allocation3 + $0x188] sm:$0xff] %v5041
      %5123 = vst [vmem:[#allocation3 + $0x1d0] sm:$0xff] %v5042
      %5124 = vst [vmem:[#allocation3 + $0x218] sm:$0xff] %v5043
      %5125 = vst [vmem:[#allocation3 + $0x260] sm:$0xff] %v5044
      %5126 = vst [vmem:[#allocation3 + $0x2a8] sm:$0xff] %v5045
      %5127 = vst [vmem:[#allocation3 + $0x2f0] sm:$0xff] %v5046
      %5128 = vst [vmem:[#allocation3 + $0x338] sm:$0xff] %v5047
      %5129 = vst [vmem:[#allocation3 + $0x380] sm:$0xff] %v5048
      %5130 = vst [vmem:[#allocation3 + $0x3c8] sm:$0xff] %v5049
      %5131 = vst [vmem:[#allocation3 + $0x410] sm:$0xff] %v5050
      %5132 = vst [vmem:[#allocation3 + $0x458] sm:$0xff] %v5116
      %v5133 = vpack.c.bf16 %v5000, %v4999
      %5134 = vst [vmem:[#allocation3 + $0x28] sm:$0xff] %v5068
      %5135 = vst [vmem:[#allocation3 + $0x70] sm:$0xff] %v5069
      %5136 = vst [vmem:[#allocation3 + $0xb8] sm:$0xff] %v5070
      %5137 = vst [vmem:[#allocation3 + $0x100] sm:$0xff] %v5071
      %5138 = vst [vmem:[#allocation3 + $0x148] sm:$0xff] %v5072
      %5139 = vst [vmem:[#allocation3 + $0x190] sm:$0xff] %v5073
      %5140 = vst [vmem:[#allocation3 + $0x1d8] sm:$0xff] %v5074
      %5141 = vst [vmem:[#allocation3 + $0x220] sm:$0xff] %v5075
      %5142 = vst [vmem:[#allocation3 + $0x268] sm:$0xff] %v5076
      %5143 = vst [vmem:[#allocation3 + $0x2b0] sm:$0xff] %v5077
      %5144 = vst [vmem:[#allocation3 + $0x2f8] sm:$0xff] %v5078
      %5145 = vst [vmem:[#allocation3 + $0x340] sm:$0xff] %v5079
      %5146 = vst [vmem:[#allocation3 + $0x388] sm:$0xff] %v5080
      %5147 = vst [vmem:[#allocation3 + $0x3d0] sm:$0xff] %v5081
      %5148 = vst [vmem:[#allocation3 + $0x418] sm:$0xff] %v5082
      %5149 = vst [vmem:[#allocation3 + $0x460] sm:$0xff] %v5133
      %v5150 = vpack.c.bf16 %v4894, %v4893
      %5151 = vst [vmem:[#allocation3 + $0x30] sm:$0xff] %v5005
      %5152 = vst [vmem:[#allocation3 + $0x78] sm:$0xff] %v5006
      %5153 = vst [vmem:[#allocation3 + $0xc0] sm:$0xff] %v5007
      %5154 = vst [vmem:[#allocation3 + $0x108] sm:$0xff] %v5008
      %5155 = vst [vmem:[#allocation3 + $0x150] sm:$0xff] %v5009
      %5156 = vst [vmem:[#allocation3 + $0x198] sm:$0xff] %v5010
      %5157 = vst [vmem:[#allocation3 + $0x1e0] sm:$0xff] %v5011
      %5158 = vst [vmem:[#allocation3 + $0x228] sm:$0xff] %v5012
      %5159 = vst [vmem:[#allocation3 + $0x270] sm:$0xff] %v5013
      %5160 = vst [vmem:[#allocation3 + $0x2b8] sm:$0xff] %v5014
      %5161 = vst [vmem:[#allocation3 + $0x300] sm:$0xff] %v5015
      %5162 = vst [vmem:[#allocation3 + $0x348] sm:$0xff] %v5016
      %5163 = vst [vmem:[#allocation3 + $0x390] sm:$0xff] %v5017
      %5164 = vst [vmem:[#allocation3 + $0x3d8] sm:$0xff] %v5018
      %5165 = vst [vmem:[#allocation3 + $0x420] sm:$0xff] %v5099
      %5166 = vst [vmem:[#allocation3 + $0x468] sm:$0xff] %v5150
      %v5167 = vpack.c.bf16 %v4786, %v4785
      %5168 = vst [vmem:[#allocation3 + $0x38] sm:$0xff] %v5037
      %5169 = vst [vmem:[#allocation3 + $0x80] sm:$0xff] %v5038
      %5170 = vst [vmem:[#allocation3 + $0xc8] sm:$0xff] %v5039
      %5171 = vst [vmem:[#allocation3 + $0x110] sm:$0xff] %v5040
      %5172 = vst [vmem:[#allocation3 + $0x158] sm:$0xff] %v5041
      %5173 = vst [vmem:[#allocation3 + $0x1a0] sm:$0xff] %v5042
      %5174 = vst [vmem:[#allocation3 + $0x1e8] sm:$0xff] %v5043
      %5175 = vst [vmem:[#allocation3 + $0x230] sm:$0xff] %v5044
      %5176 = vst [vmem:[#allocation3 + $0x278] sm:$0xff] %v5045
      %5177 = vst [vmem:[#allocation3 + $0x2c0] sm:$0xff] %v5046
      %5178 = vst [vmem:[#allocation3 + $0x308] sm:$0xff] %v5047
      %5179 = vst [vmem:[#allocation3 + $0x350] sm:$0xff] %v5048
      %5180 = vst [vmem:[#allocation3 + $0x398] sm:$0xff] %v5049
      %5181 = vst [vmem:[#allocation3 + $0x3e0] sm:$0xff] %v5050
      %5182 = vst [vmem:[#allocation3 + $0x428] sm:$0xff] %v5116
      %5183 = vst [vmem:[#allocation3 + $0x470] sm:$0xff] %v5167
      %v5184 = vpack.c.bf16 %v5002, %v5001
      %5185 = vst [vmem:[#allocation3 + $0x40] sm:$0xff] %v5069
      %5186 = vst [vmem:[#allocation3 + $0x88] sm:$0xff] %v5070
      %5187 = vst [vmem:[#allocation3 + $0xd0] sm:$0xff] %v5071
      %5188 = vst [vmem:[#allocation3 + $0x118] sm:$0xff] %v5072
      %5189 = vst [vmem:[#allocation3 + $0x160] sm:$0xff] %v5073
      %5190 = vst [vmem:[#allocation3 + $0x1a8] sm:$0xff] %v5074
      %5191 = vst [vmem:[#allocation3 + $0x1f0] sm:$0xff] %v5075
      %5192 = vst [vmem:[#allocation3 + $0x238] sm:$0xff] %v5076
      %5193 = vst [vmem:[#allocation3 + $0x280] sm:$0xff] %v5077
      %5194 = vst [vmem:[#allocation3 + $0x2c8] sm:$0xff] %v5078
      %5195 = vst [vmem:[#allocation3 + $0x310] sm:$0xff] %v5079
      %5196 = vst [vmem:[#allocation3 + $0x358] sm:$0xff] %v5080
      %5197 = vst [vmem:[#allocation3 + $0x3a0] sm:$0xff] %v5081
      %5198 = vst [vmem:[#allocation3 + $0x3e8] sm:$0xff] %v5082
      %5199 = vst [vmem:[#allocation3 + $0x430] sm:$0xff] %v5133
      %5200 = vst [vmem:[#allocation3 + $0x478] sm:$0xff] %v5184
      %v5201 = vld [vmem:[#allocation3] sm:$0xff]
      %v5202 = vld [vmem:[#allocation3 + $0x8] sm:$0xff]
      %v5203 = vld [vmem:[#allocation3 + $0x10] sm:$0xff]
      %v5204 = vld [vmem:[#allocation3 + $0x18] sm:$0xff]
      %v5205 = vld [vmem:[#allocation3 + $0x20] sm:$0xff]
      %v5206 = vld [vmem:[#allocation3 + $0x28] sm:$0xff]
      %v5207 = vld [vmem:[#allocation3 + $0x30] sm:$0xff]
      %v5208 = vld [vmem:[#allocation3 + $0x38] sm:$0xff]
      %v5209 = vld [vmem:[#allocation3 + $0x40] sm:$0xff]
      %v5210 = vld [vmem:[#allocation3 + $0x48] sm:$0xff]
      %v5211 = vld [vmem:[#allocation3 + $0x50] sm:$0xff]
      %v5212 = vld [vmem:[#allocation3 + $0x58] sm:$0xff]
      %v5213 = vld [vmem:[#allocation3 + $0x60] sm:$0xff]
      %v5214 = vld [vmem:[#allocation3 + $0x68] sm:$0xff]
      %v5215 = vld [vmem:[#allocation3 + $0x70] sm:$0xff]
      %v5216 = vld [vmem:[#allocation3 + $0x78] sm:$0xff]
      %v5217 = vld [vmem:[#allocation3 + $0x80] sm:$0xff]
      %v5218 = vld [vmem:[#allocation3 + $0x88] sm:$0xff]
      %v5219 = vld [vmem:[#allocation3 + $0x90] sm:$0xff]
      %v5220 = vld [vmem:[#allocation3 + $0x98] sm:$0xff]
      %v5221 = vld [vmem:[#allocation3 + $0xa0] sm:$0xff]
      %v5222 = vld [vmem:[#allocation3 + $0xa8] sm:$0xff]
      %v5223 = vld [vmem:[#allocation3 + $0xb0] sm:$0xff]
      %v5224 = vld [vmem:[#allocation3 + $0xb8] sm:$0xff]
      %v5225 = vld [vmem:[#allocation3 + $0xc0] sm:$0xff]
      %v5226 = vld [vmem:[#allocation3 + $0xc8] sm:$0xff]
      %v5227 = vld [vmem:[#allocation3 + $0xd0] sm:$0xff]
      %v5228 = vld [vmem:[#allocation3 + $0xd8] sm:$0xff]
      %v5229 = vld [vmem:[#allocation3 + $0xe0] sm:$0xff]
      %v5230 = vld [vmem:[#allocation3 + $0xe8] sm:$0xff]
      %v5231 = vld [vmem:[#allocation3 + $0xf0] sm:$0xff]
      %v5232 = vld [vmem:[#allocation3 + $0xf8] sm:$0xff]
      %v5233 = vld [vmem:[#allocation3 + $0x100] sm:$0xff]
      %v5234 = vld [vmem:[#allocation3 + $0x108] sm:$0xff]
      %v5235 = vld [vmem:[#allocation3 + $0x110] sm:$0xff]
      %v5236 = vld [vmem:[#allocation3 + $0x118] sm:$0xff]
      %v5237 = vld [vmem:[#allocation3 + $0x120] sm:$0xff]
      %v5238 = vld [vmem:[#allocation3 + $0x128] sm:$0xff]
      %v5239 = vld [vmem:[#allocation3 + $0x130] sm:$0xff]
      %v5240 = vld [vmem:[#allocation3 + $0x138] sm:$0xff]
      %v5241 = vld [vmem:[#allocation3 + $0x140] sm:$0xff]
      %v5242 = vld [vmem:[#allocation3 + $0x148] sm:$0xff]
      %v5243 = vld [vmem:[#allocation3 + $0x150] sm:$0xff]
      %v5244 = vld [vmem:[#allocation3 + $0x158] sm:$0xff]
      %v5245 = vld [vmem:[#allocation3 + $0x160] sm:$0xff]
      %v5246 = vld [vmem:[#allocation3 + $0x168] sm:$0xff]
      %v5247 = vld [vmem:[#allocation3 + $0x170] sm:$0xff]
      %v5248 = vld [vmem:[#allocation3 + $0x178] sm:$0xff]
      %v5249 = vld [vmem:[#allocation3 + $0x180] sm:$0xff]
      %v5250 = vld [vmem:[#allocation3 + $0x188] sm:$0xff]
      %v5251 = vld [vmem:[#allocation3 + $0x190] sm:$0xff]
      %v5252 = vld [vmem:[#allocation3 + $0x198] sm:$0xff]
      %v5253 = vld [vmem:[#allocation3 + $0x1a0] sm:$0xff]
      %v5254 = vld [vmem:[#allocation3 + $0x1a8] sm:$0xff]
      %v5255 = vld [vmem:[#allocation3 + $0x1b0] sm:$0xff]
      %v5256 = vld [vmem:[#allocation3 + $0x1b8] sm:$0xff]
      %v5257 = vld [vmem:[#allocation3 + $0x1c0] sm:$0xff]
      %v5258 = vld [vmem:[#allocation3 + $0x1c8] sm:$0xff]
      %v5259 = vld [vmem:[#allocation3 + $0x1d0] sm:$0xff]
      %v5260 = vld [vmem:[#allocation3 + $0x1d8] sm:$0xff]
      %v5261 = vld [vmem:[#allocation3 + $0x1e0] sm:$0xff]
      %v5262 = vld [vmem:[#allocation3 + $0x1e8] sm:$0xff]
      %v5263 = vld [vmem:[#allocation3 + $0x1f0] sm:$0xff]
      %v5264 = vld [vmem:[#allocation3 + $0x1f8] sm:$0xff]
      %v5265 = vld [vmem:[#allocation3 + $0x200] sm:$0xff]
      %v5266 = vld [vmem:[#allocation3 + $0x208] sm:$0xff]
      %v5267 = vld [vmem:[#allocation3 + $0x210] sm:$0xff]
      %v5268 = vld [vmem:[#allocation3 + $0x218] sm:$0xff]
      %v5269 = vld [vmem:[#allocation3 + $0x220] sm:$0xff]
      %v5270 = vld [vmem:[#allocation3 + $0x228] sm:$0xff]
      %v5271 = vld [vmem:[#allocation3 + $0x230] sm:$0xff]
      %v5272 = vld [vmem:[#allocation3 + $0x238] sm:$0xff]
      %v5273 = vld [vmem:[#allocation3 + $0x240] sm:$0xff]
      %v5274 = vld [vmem:[#allocation3 + $0x248] sm:$0xff]
      %v5275 = vld [vmem:[#allocation3 + $0x250] sm:$0xff]
      %v5276 = vld [vmem:[#allocation3 + $0x258] sm:$0xff]
      %v5277 = vld [vmem:[#allocation3 + $0x260] sm:$0xff]
      %v5278 = vld [vmem:[#allocation3 + $0x268] sm:$0xff]
      %v5279 = vld [vmem:[#allocation3 + $0x270] sm:$0xff]
      %v5280 = vld [vmem:[#allocation3 + $0x278] sm:$0xff]
      %v5281 = vld [vmem:[#allocation3 + $0x280] sm:$0xff]
      %v5282 = vld [vmem:[#allocation3 + $0x288] sm:$0xff]
      %v5283 = vld [vmem:[#allocation3 + $0x290] sm:$0xff]
      %v5284 = vld [vmem:[#allocation3 + $0x298] sm:$0xff]
      %v5285 = vld [vmem:[#allocation3 + $0x2a0] sm:$0xff]
      %v5286 = vld [vmem:[#allocation3 + $0x2a8] sm:$0xff]
      %v5287 = vld [vmem:[#allocation3 + $0x2b0] sm:$0xff]
      %v5288 = vld [vmem:[#allocation3 + $0x2b8] sm:$0xff]
      %v5289 = vld [vmem:[#allocation3 + $0x2c0] sm:$0xff]
      %v5290 = vld [vmem:[#allocation3 + $0x2c8] sm:$0xff]
      %v5291 = vld [vmem:[#allocation3 + $0x2d0] sm:$0xff]
      %v5292 = vld [vmem:[#allocation3 + $0x2d8] sm:$0xff]
      %v5293 = vld [vmem:[#allocation3 + $0x2e0] sm:$0xff]
      %v5294 = vld [vmem:[#allocation3 + $0x2e8] sm:$0xff]
      %v5295 = vld [vmem:[#allocation3 + $0x2f0] sm:$0xff]
      %v5296 = vld [vmem:[#allocation3 + $0x2f8] sm:$0xff]
      %v5297 = vld [vmem:[#allocation3 + $0x300] sm:$0xff]
      %v5298 = vld [vmem:[#allocation3 + $0x308] sm:$0xff]
      %v5299 = vld [vmem:[#allocation3 + $0x310] sm:$0xff]
      %v5300 = vld [vmem:[#allocation3 + $0x318] sm:$0xff]
      %v5301 = vld [vmem:[#allocation3 + $0x320] sm:$0xff]
      %v5302 = vld [vmem:[#allocation3 + $0x328] sm:$0xff]
      %v5303 = vld [vmem:[#allocation3 + $0x330] sm:$0xff]
      %v5304 = vld [vmem:[#allocation3 + $0x338] sm:$0xff]
      %v5305 = vld [vmem:[#allocation3 + $0x340] sm:$0xff]
      %v5306 = vld [vmem:[#allocation3 + $0x348] sm:$0xff]
      %v5307 = vld [vmem:[#allocation3 + $0x350] sm:$0xff]
      %v5308 = vld [vmem:[#allocation3 + $0x358] sm:$0xff]
      %v5309 = vld [vmem:[#allocation3 + $0x360] sm:$0xff]
      %v5310 = vld [vmem:[#allocation3 + $0x368] sm:$0xff]
      %v5311 = vld [vmem:[#allocation3 + $0x370] sm:$0xff]
      %v5312 = vld [vmem:[#allocation3 + $0x378] sm:$0xff]
      %v5313 = vld [vmem:[#allocation3 + $0x380] sm:$0xff]
      %v5314 = vld [vmem:[#allocation3 + $0x388] sm:$0xff]
      %v5315 = vld [vmem:[#allocation3 + $0x390] sm:$0xff]
      %v5316 = vld [vmem:[#allocation3 + $0x398] sm:$0xff]
      %v5317 = vld [vmem:[#allocation3 + $0x3a0] sm:$0xff]
      %v5318 = vld [vmem:[#allocation3 + $0x3a8] sm:$0xff]
      %v5319 = vld [vmem:[#allocation3 + $0x3b0] sm:$0xff]
      %v5320 = vld [vmem:[#allocation3 + $0x3b8] sm:$0xff]
      %v5321 = vld [vmem:[#allocation3 + $0x3c0] sm:$0xff]
      %v5322 = vld [vmem:[#allocation3 + $0x3c8] sm:$0xff]
      %v5323 = vld [vmem:[#allocation3 + $0x3d0] sm:$0xff]
      %v5324 = vld [vmem:[#allocation3 + $0x3d8] sm:$0xff]
      %v5325 = vld [vmem:[#allocation3 + $0x3e0] sm:$0xff]
      %v5326 = vld [vmem:[#allocation3 + $0x3e8] sm:$0xff]
      %v5327 = vld [vmem:[#allocation3 + $0x3f0] sm:$0xff]
      %v5328 = vld [vmem:[#allocation3 + $0x3f8] sm:$0xff]
      %v5329 = vld [vmem:[#allocation3 + $0x400] sm:$0xff]
      %v5330 = vld [vmem:[#allocation3 + $0x408] sm:$0xff]
      %v5331 = vld [vmem:[#allocation3 + $0x410] sm:$0xff]
      %v5332 = vld [vmem:[#allocation3 + $0x418] sm:$0xff]
      %v5333 = vld [vmem:[#allocation3 + $0x420] sm:$0xff]
      %v5334 = vld [vmem:[#allocation3 + $0x428] sm:$0xff]
      %v5335 = vld [vmem:[#allocation3 + $0x430] sm:$0xff]
      %v5336 = vld [vmem:[#allocation3 + $0x438] sm:$0xff]
      %v5337 = vld [vmem:[#allocation3 + $0x440] sm:$0xff]
      %v5338 = vld [vmem:[#allocation3 + $0x448] sm:$0xff]
      %v5339 = vld [vmem:[#allocation3 + $0x450] sm:$0xff]
      %v5340 = vld [vmem:[#allocation3 + $0x458] sm:$0xff]
      %v5341 = vld [vmem:[#allocation3 + $0x460] sm:$0xff]
      %v5342 = vld [vmem:[#allocation3 + $0x468] sm:$0xff]
      %v5343 = vld [vmem:[#allocation3 + $0x470] sm:$0xff]
      %v5344 = vld [vmem:[#allocation3 + $0x478] sm:$0xff]
      %v5345 = vld [vmem:[%s3] sm:$0xf]
      %v5346 = vld [vmem:[%s3 + $0x4] sm:$0xf]
      %v5347 = vld [vmem:[%s3 + $0x8] sm:$0xf]
      %v5348 = vld [vmem:[%s3 + $0xc] sm:$0xf]
      %v5349 = vld [vmem:[%s3 + $0x10] sm:$0xf]
      %v5350 = vld [vmem:[%s3 + $0x14] sm:$0xf]
      %v5351 = vld [vmem:[%s3 + $0x18] sm:$0xf]
      %v5352 = vld [vmem:[%s3 + $0x1c] sm:$0xf]
      %v5353 = vld [vmem:[%s3 + $0x20] sm:$0xf]
      %v5354 = vld [vmem:[%s3 + $0x24] sm:$0xf]
      %v5355 = vld [vmem:[%s3 + $0x28] sm:$0xf]
      %v5356 = vld [vmem:[%s3 + $0x2c] sm:$0xf]
      %v5357 = vld [vmem:[%s3 + $0x30] sm:$0xf]
      %v5358 = vld [vmem:[%s3 + $0x34] sm:$0xf]
      %v5359 = vld [vmem:[%s3 + $0x38] sm:$0xf]
      %v5360 = vld [vmem:[%s3 + $0x3c] sm:$0xf]
      %v5361 = vld [vmem:[%s3 + $0x40] sm:$0xf]
      %v5362 = vld [vmem:[%s3 + $0x44] sm:$0xf]
      %v5363 = vld [vmem:[%s3 + $0x48] sm:$0xf]
      %v5364 = vld [vmem:[%s3 + $0x4c] sm:$0xf]
      %v5365 = vld [vmem:[%s3 + $0x50] sm:$0xf]
      %v5366 = vld [vmem:[%s3 + $0x54] sm:$0xf]
      %v5367 = vld [vmem:[%s3 + $0x58] sm:$0xf]
      %v5368 = vld [vmem:[%s3 + $0x5c] sm:$0xf]
      %v5369 = vld [vmem:[%s3 + $0x60] sm:$0xf]
      %v5370 = vld [vmem:[%s3 + $0x64] sm:$0xf]
      %v5371 = vld [vmem:[%s3 + $0x68] sm:$0xf]
      %v5372 = vld [vmem:[%s3 + $0x6c] sm:$0xf]
      %v5373 = vld [vmem:[%s3 + $0x70] sm:$0xf]
      %v5374 = vld [vmem:[%s3 + $0x74] sm:$0xf]
      %v5375 = vld [vmem:[%s3 + $0x78] sm:$0xf]
      %v5376 = vld [vmem:[%s3 + $0x7c] sm:$0xf]
      %v5377 = vld [vmem:[%s3 + $0x80] sm:$0xf]
      %v5378 = vld [vmem:[%s3 + $0x84] sm:$0xf]
      %v5379 = vld [vmem:[%s3 + $0x88] sm:$0xf]
      %v5380 = vld [vmem:[%s3 + $0x8c] sm:$0xf]
      %v5381 = vld [vmem:[%s3 + $0x90] sm:$0xf]
      %v5382 = vld [vmem:[%s3 + $0x94] sm:$0xf]
      %v5383 = vld [vmem:[%s3 + $0x98] sm:$0xf]
      %v5384 = vld [vmem:[%s3 + $0x9c] sm:$0xf]
      %v5385 = vld [vmem:[%s3 + $0xa0] sm:$0xf]
      %v5386 = vld [vmem:[%s3 + $0xa4] sm:$0xf]
      %v5387 = vld [vmem:[%s3 + $0xa8] sm:$0xf]
      %v5388 = vld [vmem:[%s3 + $0xac] sm:$0xf]
      %v5389 = vld [vmem:[%s3 + $0xb0] sm:$0xf]
      %v5390 = vld [vmem:[%s3 + $0xb4] sm:$0xf]
      %v5391 = vld [vmem:[%s3 + $0xb8] sm:$0xf]
      %v5392 = vld [vmem:[%s3 + $0xbc] sm:$0xf]
      %v5393 = vld [vmem:[%s3 + $0xc0] sm:$0xf]
      %v5394 = vld [vmem:[%s3 + $0xc4] sm:$0xf]
      %v5395 = vld [vmem:[%s3 + $0xc8] sm:$0xf]
      %v5396 = vld [vmem:[%s3 + $0xcc] sm:$0xf]
      %v5397 = vld [vmem:[%s3 + $0xd0] sm:$0xf]
      %v5398 = vld [vmem:[%s3 + $0xd4] sm:$0xf]
      %v5399 = vld [vmem:[%s3 + $0xd8] sm:$0xf]
      %v5400 = vld [vmem:[%s3 + $0xdc] sm:$0xf]
      %v5401 = vld [vmem:[%s3 + $0xe0] sm:$0xf]
      %v5402 = vld [vmem:[%s3 + $0xe4] sm:$0xf]
      %v5403 = vld [vmem:[%s3 + $0xe8] sm:$0xf]
      %v5404 = vld [vmem:[%s3 + $0xec] sm:$0xf]
      %v5405 = vld [vmem:[%s3 + $0xf0] sm:$0xf]
      %v5406 = vld [vmem:[%s3 + $0xf4] sm:$0xf]
      %v5407 = vld [vmem:[%s3 + $0xf8] sm:$0xf]
      %v5408 = vld [vmem:[%s3 + $0xfc] sm:$0xf]
      %v5409 = vld [vmem:[%s3 + $0x100] sm:$0xf]
      %v5410 = vld [vmem:[%s3 + $0x104] sm:$0xf]
      %v5411 = vld [vmem:[%s3 + $0x108] sm:$0xf]
      %v5412 = vld [vmem:[%s3 + $0x10c] sm:$0xf]
      %v5413 = vld [vmem:[%s3 + $0x110] sm:$0xf]
      %v5414 = vld [vmem:[%s3 + $0x114] sm:$0xf]
      %v5415 = vld [vmem:[%s3 + $0x118] sm:$0xf]
      %v5416 = vld [vmem:[%s3 + $0x11c] sm:$0xf]
      %v5417 = vld [vmem:[%s3 + $0x120] sm:$0xf]
      %v5418 = vld [vmem:[%s3 + $0x124] sm:$0xf]
      %v5419 = vld [vmem:[%s3 + $0x128] sm:$0xf]
      %v5420 = vld [vmem:[%s3 + $0x12c] sm:$0xf]
      %v5421 = vld [vmem:[%s3 + $0x130] sm:$0xf]
      %v5422 = vld [vmem:[%s3 + $0x134] sm:$0xf]
      %v5423 = vld [vmem:[%s3 + $0x138] sm:$0xf]
      %v5424 = vld [vmem:[%s3 + $0x13c] sm:$0xf]
      %v5425 = vld [vmem:[%s3 + $0x140] sm:$0xf]
      %v5426 = vld [vmem:[%s3 + $0x144] sm:$0xf]
      %v5427 = vld [vmem:[%s3 + $0x148] sm:$0xf]
      %v5428 = vld [vmem:[%s3 + $0x14c] sm:$0xf]
      %v5429 = vld [vmem:[%s3 + $0x150] sm:$0xf]
      %v5430 = vld [vmem:[%s3 + $0x154] sm:$0xf]
      %v5431 = vld [vmem:[%s3 + $0x158] sm:$0xf]
      %v5432 = vld [vmem:[%s3 + $0x15c] sm:$0xf]
      %v5433 = vld [vmem:[%s3 + $0x160] sm:$0xf]
      %v5434 = vld [vmem:[%s3 + $0x164] sm:$0xf]
      %v5435 = vld [vmem:[%s3 + $0x168] sm:$0xf]
      %v5436 = vld [vmem:[%s3 + $0x16c] sm:$0xf]
      %v5437 = vld [vmem:[%s3 + $0x170] sm:$0xf]
      %v5438 = vld [vmem:[%s3 + $0x174] sm:$0xf]
      %v5439 = vld [vmem:[%s3 + $0x178] sm:$0xf]
      %v5440 = vld [vmem:[%s3 + $0x17c] sm:$0xf]
      %v5441 = vld [vmem:[%s3 + $0x180] sm:$0xf]
      %v5442 = vld [vmem:[%s3 + $0x184] sm:$0xf]
      %v5443 = vld [vmem:[%s3 + $0x188] sm:$0xf]
      %v5444 = vld [vmem:[%s3 + $0x18c] sm:$0xf]
      %v5445 = vld [vmem:[%s3 + $0x190] sm:$0xf]
      %v5446 = vld [vmem:[%s3 + $0x194] sm:$0xf]
      %v5447 = vld [vmem:[%s3 + $0x198] sm:$0xf]
      %v5448 = vld [vmem:[%s3 + $0x19c] sm:$0xf]
      %v5449 = vld [vmem:[%s3 + $0x1a0] sm:$0xf]
      %v5450 = vld [vmem:[%s3 + $0x1a4] sm:$0xf]
      %v5451 = vld [vmem:[%s3 + $0x1a8] sm:$0xf]
      %v5452 = vld [vmem:[%s3 + $0x1ac] sm:$0xf]
      %v5453 = vld [vmem:[%s3 + $0x1b0] sm:$0xf]
      %v5454 = vld [vmem:[%s3 + $0x1b4] sm:$0xf]
      %v5455 = vld [vmem:[%s3 + $0x1b8] sm:$0xf]
      %v5456 = vld [vmem:[%s3 + $0x1bc] sm:$0xf]
      %v5457 = vld [vmem:[%s3 + $0x1c0] sm:$0xf]
      %v5458 = vld [vmem:[%s3 + $0x1c4] sm:$0xf]
      %v5459 = vld [vmem:[%s3 + $0x1c8] sm:$0xf]
      %v5460 = vld [vmem:[%s3 + $0x1cc] sm:$0xf]
      %v5461 = vld [vmem:[%s3 + $0x1d0] sm:$0xf]
      %v5462 = vld [vmem:[%s3 + $0x1d4] sm:$0xf]
      %v5463 = vld [vmem:[%s3 + $0x1d8] sm:$0xf]
      %v5464 = vld [vmem:[%s3 + $0x1dc] sm:$0xf]
      %v5465 = vld [vmem:[%s3 + $0x1e0] sm:$0xf]
      %v5466 = vld [vmem:[%s3 + $0x1e4] sm:$0xf]
      %v5467 = vld [vmem:[%s3 + $0x1e8] sm:$0xf]
      %v5468 = vld [vmem:[%s3 + $0x1ec] sm:$0xf]
      %v5469 = vld [vmem:[%s3 + $0x1f0] sm:$0xf]
      %v5470 = vld [vmem:[%s3 + $0x1f4] sm:$0xf]
      %v5471 = vld [vmem:[%s3 + $0x1f8] sm:$0xf]
      %v5472 = vld [vmem:[%s3 + $0x1fc] sm:$0xf]
      %v5473 = vld [vmem:[%s3 + $0x200] sm:$0xf]
      %v5474 = vld [vmem:[%s3 + $0x204] sm:$0xf]
      %v5475 = vld [vmem:[%s3 + $0x208] sm:$0xf]
      %v5476 = vld [vmem:[%s3 + $0x20c] sm:$0xf]
      %v5477 = vld [vmem:[%s3 + $0x210] sm:$0xf]
      %v5478 = vld [vmem:[%s3 + $0x214] sm:$0xf]
      %v5479 = vld [vmem:[%s3 + $0x218] sm:$0xf]
      %v5480 = vld [vmem:[%s3 + $0x21c] sm:$0xf]
      %v5481 = vld [vmem:[%s3 + $0x220] sm:$0xf]
      %v5482 = vld [vmem:[%s3 + $0x224] sm:$0xf]
      %v5483 = vld [vmem:[%s3 + $0x228] sm:$0xf]
      %v5484 = vld [vmem:[%s3 + $0x22c] sm:$0xf]
      %v5485 = vld [vmem:[%s3 + $0x230] sm:$0xf]
      %v5486 = vld [vmem:[%s3 + $0x234] sm:$0xf]
      %v5487 = vld [vmem:[%s3 + $0x238] sm:$0xf]
      %v5488 = vld [vmem:[%s3 + $0x23c] sm:$0xf]
      %v5633 = vunpack.c.l.b16 %v5345
      %v5634 = vunpack.c.l.b16 %v5346
      %v5635 = vunpack.c.l.b16 %v5347
      %v5636 = vunpack.c.l.b16 %v5348
      %v5637 = vunpack.c.l.b16 %v5349
      %v5638 = vunpack.c.l.b16 %v5350
      %v5639 = vunpack.c.l.b16 %v5351
      %v5640 = vunpack.c.l.b16 %v5352
      %v5641 = vunpack.c.l.b16 %v5353
      %v5642 = vunpack.c.l.b16 %v5354
      %v5643 = vunpack.c.l.b16 %v5355
      %v5644 = vunpack.c.l.b16 %v5356
      %v5645 = vunpack.c.l.b16 %v5357
      %v5646 = vunpack.c.l.b16 %v5358
      %v5647 = vunpack.c.l.b16 %v5359
      %v5648 = vunpack.c.l.b16 %v5360
      %v5649 = vunpack.c.l.b16 %v5361
      %v5650 = vunpack.c.l.b16 %v5362
      %v5651 = vunpack.c.l.b16 %v5363
      %v5652 = vunpack.c.l.b16 %v5364
      %v5653 = vunpack.c.l.b16 %v5365
      %v5654 = vunpack.c.l.b16 %v5366
      %v5655 = vunpack.c.l.b16 %v5367
      %v5656 = vunpack.c.l.b16 %v5368
      %v5657 = vunpack.c.l.b16 %v5369
      %v5658 = vunpack.c.l.b16 %v5370
      %v5659 = vunpack.c.l.b16 %v5371
      %v5660 = vunpack.c.l.b16 %v5372
      %v5661 = vunpack.c.l.b16 %v5373
      %v5662 = vunpack.c.l.b16 %v5374
      %v5663 = vunpack.c.l.b16 %v5375
      %v5664 = vunpack.c.l.b16 %v5376
      %v5665 = vunpack.c.l.b16 %v5377
      %v5666 = vunpack.c.l.b16 %v5378
      %v5667 = vunpack.c.l.b16 %v5379
      %v5668 = vunpack.c.l.b16 %v5380
      %v5669 = vunpack.c.l.b16 %v5381
      %v5670 = vunpack.c.l.b16 %v5382
      %v5671 = vunpack.c.l.b16 %v5383
      %v5672 = vunpack.c.l.b16 %v5384
      %v5673 = vunpack.c.l.b16 %v5385
      %v5674 = vunpack.c.l.b16 %v5386
      %v5675 = vunpack.c.l.b16 %v5387
      %v5676 = vunpack.c.l.b16 %v5388
      %v5677 = vunpack.c.l.b16 %v5389
      %v5678 = vunpack.c.l.b16 %v5390
      %v5679 = vunpack.c.l.b16 %v5391
      %v5680 = vunpack.c.l.b16 %v5392
      %v5681 = vunpack.c.l.b16 %v5393
      %v5682 = vunpack.c.l.b16 %v5394
      %v5683 = vunpack.c.l.b16 %v5395
      %v5684 = vunpack.c.l.b16 %v5396
      %v5685 = vunpack.c.l.b16 %v5397
      %v5686 = vunpack.c.l.b16 %v5398
      %v5687 = vunpack.c.l.b16 %v5399
      %v5688 = vunpack.c.l.b16 %v5400
      %v5689 = vunpack.c.l.b16 %v5401
      %v5690 = vunpack.c.l.b16 %v5402
      %v5691 = vunpack.c.l.b16 %v5403
      %v5692 = vunpack.c.l.b16 %v5404
      %v5693 = vunpack.c.l.b16 %v5405
      %v5694 = vunpack.c.l.b16 %v5406
      %v5695 = vunpack.c.l.b16 %v5407
      %v5696 = vunpack.c.l.b16 %v5408
      %v5697 = vunpack.c.l.b16 %v5409
      %v5698 = vunpack.c.l.b16 %v5410
      %v5699 = vunpack.c.l.b16 %v5411
      %v5700 = vunpack.c.l.b16 %v5412
      %v5701 = vunpack.c.l.b16 %v5413
      %v5702 = vunpack.c.l.b16 %v5414
      %v5703 = vunpack.c.l.b16 %v5415
      %v5704 = vunpack.c.l.b16 %v5416
      %v5705 = vunpack.c.l.b16 %v5417
      %v5706 = vunpack.c.l.b16 %v5418
      %v5707 = vunpack.c.l.b16 %v5419
      %v5708 = vunpack.c.l.b16 %v5420
      %v5709 = vunpack.c.l.b16 %v5421
      %v5710 = vunpack.c.l.b16 %v5422
      %v5711 = vunpack.c.l.b16 %v5423
      %v5712 = vunpack.c.l.b16 %v5424
      %v5713 = vunpack.c.l.b16 %v5425
      %v5714 = vunpack.c.l.b16 %v5426
      %v5715 = vunpack.c.l.b16 %v5427
      %v5716 = vunpack.c.l.b16 %v5428
      %v5717 = vunpack.c.l.b16 %v5429
      %v5718 = vunpack.c.l.b16 %v5430
      %v5719 = vunpack.c.l.b16 %v5431
      %v5720 = vunpack.c.l.b16 %v5432
      %v5721 = vunpack.c.l.b16 %v5433
      %v5722 = vunpack.c.l.b16 %v5434
      %v5723 = vunpack.c.l.b16 %v5435
      %v5724 = vunpack.c.l.b16 %v5436
      %v5725 = vunpack.c.l.b16 %v5437
      %v5726 = vunpack.c.l.b16 %v5438
      %v5727 = vunpack.c.l.b16 %v5439
      %v5728 = vunpack.c.l.b16 %v5440
      %v5729 = vunpack.c.l.b16 %v5441
      %v5730 = vunpack.c.l.b16 %v5442
      %v5731 = vunpack.c.l.b16 %v5443
      %v5732 = vunpack.c.l.b16 %v5444
      %v5733 = vunpack.c.l.b16 %v5445
      %v5734 = vunpack.c.l.b16 %v5446
      %v5735 = vunpack.c.l.b16 %v5447
      %v5736 = vunpack.c.l.b16 %v5448
      %v5737 = vunpack.c.l.b16 %v5449
      %v5738 = vunpack.c.l.b16 %v5450
      %v5739 = vunpack.c.l.b16 %v5451
      %v5740 = vunpack.c.l.b16 %v5452
      %v5741 = vunpack.c.l.b16 %v5453
      %v5742 = vunpack.c.l.b16 %v5454
      %v5743 = vunpack.c.l.b16 %v5455
      %v5744 = vunpack.c.l.b16 %v5456
      %v5745 = vunpack.c.l.b16 %v5457
      %v5746 = vunpack.c.l.b16 %v5458
      %v5747 = vunpack.c.l.b16 %v5459
      %v5748 = vunpack.c.l.b16 %v5460
      %v5749 = vunpack.c.l.b16 %v5461
      %v5750 = vunpack.c.l.b16 %v5462
      %v5751 = vunpack.c.l.b16 %v5463
      %v5752 = vunpack.c.l.b16 %v5464
      %v5753 = vunpack.c.l.b16 %v5465
      %v5754 = vunpack.c.l.b16 %v5466
      %v5755 = vunpack.c.l.b16 %v5467
      %v5756 = vunpack.c.l.b16 %v5468
      %v5757 = vunpack.c.l.b16 %v5469
      %v5758 = vunpack.c.l.b16 %v5470
      %v5759 = vunpack.c.l.b16 %v5471
      %v5760 = vunpack.c.l.b16 %v5472
      %v5761 = vunpack.c.l.b16 %v5473
      %v5762 = vunpack.c.l.b16 %v5474
      %v5763 = vunpack.c.l.b16 %v5475
      %v5764 = vunpack.c.l.b16 %v5476
      %v5765 = vunpack.c.l.b16 %v5477
      %v5766 = vunpack.c.l.b16 %v5478
      %v5767 = vunpack.c.l.b16 %v5479
      %v5768 = vunpack.c.l.b16 %v5480
      %v5769 = vunpack.c.l.b16 %v5481
      %v5770 = vunpack.c.l.b16 %v5482
      %v5771 = vunpack.c.l.b16 %v5483
      %v5772 = vunpack.c.l.b16 %v5484
      %v5773 = vunpack.c.l.b16 %v5485
      %v5774 = vunpack.c.l.b16 %v5486
      %v5775 = vunpack.c.l.b16 %v5487
      %v5776 = vunpack.c.l.b16 %v5488
      %v5777 = vpack.c.b16 %v5634, %v5633
      %v5778 = vpack.c.b16 %v5636, %v5635
      %v5779 = vpack.c.b16 %v5638, %v5637
      %v5780 = vpack.c.b16 %v5640, %v5639
      %v5781 = vpack.c.b16 %v5642, %v5641
      %v5782 = vpack.c.b16 %v5644, %v5643
      %v5783 = vpack.c.b16 %v5646, %v5645
      %v5784 = vpack.c.b16 %v5648, %v5647
      %v5785 = vpack.c.b16 %v5650, %v5649
      %v5786 = vpack.c.b16 %v5652, %v5651
      %v5787 = vpack.c.b16 %v5654, %v5653
      %v5788 = vpack.c.b16 %v5656, %v5655
      %v5789 = vpack.c.b16 %v5658, %v5657
      %v5790 = vpack.c.b16 %v5660, %v5659
      %v5791 = vpack.c.b16 %v5662, %v5661
      %v5792 = vpack.c.b16 %v5664, %v5663
      %v5793 = vpack.c.b16 %v5666, %v5665
      %v5794 = vpack.c.b16 %v5668, %v5667
      %v5795 = vpack.c.b16 %v5670, %v5669
      %v5796 = vpack.c.b16 %v5672, %v5671
      %v5797 = vpack.c.b16 %v5674, %v5673
      %v5798 = vpack.c.b16 %v5676, %v5675
      %v5799 = vpack.c.b16 %v5678, %v5677
      %v5800 = vpack.c.b16 %v5680, %v5679
      %v5801 = vpack.c.b16 %v5682, %v5681
      %v5802 = vpack.c.b16 %v5684, %v5683
      %v5803 = vpack.c.b16 %v5686, %v5685
      %v5804 = vpack.c.b16 %v5688, %v5687
      %v5805 = vpack.c.b16 %v5690, %v5689
      %v5806 = vpack.c.b16 %v5692, %v5691
      %v5807 = vpack.c.b16 %v5694, %v5693
      %v5808 = vpack.c.b16 %v5696, %v5695
      %v5809 = vpack.c.b16 %v5698, %v5697
      %v5810 = vpack.c.b16 %v5700, %v5699
      %v5811 = vpack.c.b16 %v5702, %v5701
      %v5812 = vpack.c.b16 %v5704, %v5703
      %v5813 = vpack.c.b16 %v5706, %v5705
      %v5814 = vpack.c.b16 %v5708, %v5707
      %v5815 = vpack.c.b16 %v5710, %v5709
      %v5816 = vpack.c.b16 %v5712, %v5711
      %v5817 = vpack.c.b16 %v5714, %v5713
      %v5818 = vpack.c.b16 %v5716, %v5715
      %v5819 = vpack.c.b16 %v5718, %v5717
      %v5820 = vpack.c.b16 %v5720, %v5719
      %v5821 = vpack.c.b16 %v5722, %v5721
      %v5822 = vpack.c.b16 %v5724, %v5723
      %v5823 = vpack.c.b16 %v5726, %v5725
      %v5824 = vpack.c.b16 %v5728, %v5727
      %v5825 = vpack.c.b16 %v5730, %v5729
      %v5826 = vpack.c.b16 %v5732, %v5731
      %v5827 = vpack.c.b16 %v5734, %v5733
      %v5828 = vpack.c.b16 %v5736, %v5735
      %v5829 = vpack.c.b16 %v5738, %v5737
      %v5830 = vpack.c.b16 %v5740, %v5739
      %v5831 = vpack.c.b16 %v5742, %v5741
      %v5832 = vpack.c.b16 %v5744, %v5743
      %v5833 = vpack.c.b16 %v5746, %v5745
      %v5834 = vpack.c.b16 %v5748, %v5747
      %v5835 = vpack.c.b16 %v5750, %v5749
      %v5836 = vpack.c.b16 %v5752, %v5751
      %v5837 = vpack.c.b16 %v5754, %v5753
      %v5838 = vpack.c.b16 %v5756, %v5755
      %v5839 = vpack.c.b16 %v5758, %v5757
      %v5840 = vpack.c.b16 %v5760, %v5759
      %v5841 = vpack.c.b16 %v5762, %v5761
      %v5842 = vpack.c.b16 %v5764, %v5763
      %v5843 = vpack.c.b16 %v5766, %v5765
      %v5844 = vpack.c.b16 %v5768, %v5767
      %v5845 = vpack.c.b16 %v5770, %v5769
      %v5846 = vpack.c.b16 %v5772, %v5771
      %v5847 = vpack.c.b16 %v5774, %v5773
      %v5848 = vpack.c.b16 %v5776, %v5775
      %5921 = vmatprep.subr.bf16.mxu0 0
      %5922 = vmatpush1.bf16.msra.mxu0 %v5777
      %5923 = vmatprep.subr.bf16.mxu0 0
      %5924 = vmatpush1.bf16.msra.mxu0 %v5778
      %5925 = vmatprep.subr.bf16.mxu0 0
      %5926 = vmatpush1.bf16.msra.mxu0 %v5779
      %5927 = vmatprep.subr.bf16.mxu0 0
      %5928 = vmatpush1.bf16.msra.mxu0 %v5780
      %5929 = vmatprep.subr.bf16.mxu0 0
      %5930 = vmatpush1.bf16.msra.mxu0 %v5781
      %5931 = vmatprep.subr.bf16.mxu0 0
      %5932 = vmatpush1.bf16.msra.mxu0 %v5782
      %5933 = vmatprep.subr.bf16.mxu0 0
      %5934 = vmatpush1.bf16.msra.mxu0 %v5783
      %5935 = vmatprep.subr.bf16.mxu0 0
      %5936 = vmatpush1.bf16.msra.mxu0 %v5784
      %5937 = vmatprep.subr.bf16.mxu0 0
      %5938 = vmatpush1.bf16.msra.mxu0 %v5785
      %5939 = vmatprep.subr.bf16.mxu0 0
      %5940 = vmatpush1.bf16.msra.mxu0 %v5786
      %5941 = vmatprep.subr.bf16.mxu0 0
      %5942 = vmatpush1.bf16.msra.mxu0 %v5787
      %5943 = vmatprep.subr.bf16.mxu0 0
      %5944 = vmatpush1.bf16.msra.mxu0 %v5788
      %5945 = vmatprep.subr.bf16.mxu0 0
      %5946 = vmatpush1.bf16.msra.mxu0 %v5789
      %5947 = vmatprep.subr.bf16.mxu0 0
      %5948 = vmatpush1.bf16.msra.mxu0 %v5790
      %5949 = vmatprep.subr.bf16.mxu0 0
      %5950 = vmatpush1.bf16.msra.mxu0 %v5791
      %5951 = vmatprep.subr.bf16.mxu0 0
      %5952 = vmatpush1.bf16.msra.mxu0 %v5792
      %5953 = vmatprep.mubr.bf16.mxu0 %v5202
      %5954 = vmatmul.mubr.bf16.gmra.mrb[0].mxu0 %v5201
      %v5955 = vpop.f32.mrb[0].mxu0
      %v5956 = vadd.f32 0.0, %v5955
      %v5957 = vpop.f32.mrb[0].mxu0
      %v5958 = vpop.f32.mrb[0].mxu0
      %v5959 = vadd.f32 0.0, %v5958
      %v5960 = vpop.f32.mrb[0].mxu0
      %5961 = vmatprep.mubr.bf16.mxu0 %v5211
      %5962 = vmatmul.mubr.bf16.gmra.mrb[0].mxu0 %v5210
      %v5963 = vpop.f32.mrb[0].mxu0
      %v5964 = vadd.f32 0.0, %v5963
      %v5965 = vpop.f32.mrb[0].mxu0
      %v5966 = vpop.f32.mrb[0].mxu0
      %v5967 = vadd.f32 0.0, %v5966
      %v5968 = vpop.f32.mrb[0].mxu0
      %5969 = vmatprep.mubr.bf16.mxu0 %v5220
      %5970 = vmatmul.mubr.bf16.gmra.mrb[0].mxu0 %v5219
      %v5971 = vpop.f32.mrb[0].mxu0
      %v5972 = vadd.f32 0.0, %v5971
      %v5973 = vpop.f32.mrb[0].mxu0
      %v5974 = vpop.f32.mrb[0].mxu0
      %v5975 = vadd.f32 0.0, %v5974
      %v5976 = vpop.f32.mrb[0].mxu0
      %5977 = vmatprep.mubr.bf16.mxu0 %v5229
      %5978 = vmatmul.mubr.bf16.gmra.mrb[0].mxu0 %v5228
      %v5979 = vpop.f32.mrb[0].mxu0
      %v5980 = vadd.f32 0.0, %v5979
      %v5981 = vpop.f32.mrb[0].mxu0
      %v5982 = vpop.f32.mrb[0].mxu0
      %v5983 = vadd.f32 0.0, %v5982
      %v5984 = vpop.f32.mrb[0].mxu0
      %5985 = vmatprep.mubr.bf16.mxu0 %v5238
      %5986 = vmatmul.mubr.bf16.gmra.mrb[0].mxu0 %v5237
      %v5987 = vpop.f32.mrb[0].mxu0
      %v5988 = vadd.f32 0.0, %v5987
      %v5989 = vpop.f32.mrb[0].mxu0
      %v5990 = vpop.f32.mrb[0].mxu0
      %v5991 = vadd.f32 0.0, %v5990
      %v5992 = vpop.f32.mrb[0].mxu0
      %5993 = vmatprep.mubr.bf16.mxu0 %v5247
      %5994 = vmatmul.mubr.bf16.gmra.mrb[0].mxu0 %v5246
      %v5995 = vpop.f32.mrb[0].mxu0
      %v5996 = vadd.f32 0.0, %v5995
      %v5997 = vpop.f32.mrb[0].mxu0
      %v5998 = vpop.f32.mrb[0].mxu0
      %v5999 = vadd.f32 0.0, %v5998
      %v6000 = vpop.f32.mrb[0].mxu0
      %6001 = vmatprep.mubr.bf16.mxu0 %v5256
      %6002 = vmatmul.mubr.bf16.gmra.mrb[0].mxu0 %v5255
      %v6003 = vpop.f32.mrb[0].mxu0
      %v6004 = vadd.f32 0.0, %v6003
      %v6005 = vpop.f32.mrb[0].mxu0
      %v6006 = vpop.f32.mrb[0].mxu0
      %v6007 = vadd.f32 0.0, %v6006
      %v6008 = vpop.f32.mrb[0].mxu0
      %6009 = vmatprep.mubr.bf16.mxu0 %v5265
      %6010 = vmatmul.mubr.bf16.gmra.mrb[0].mxu0 %v5264
      %v6011 = vpop.f32.mrb[0].mxu0
      %v6012 = vadd.f32 0.0, %v6011
      %v6013 = vpop.f32.mrb[0].mxu0
      %v6014 = vpop.f32.mrb[0].mxu0
      %v6015 = vadd.f32 0.0, %v6014
      %v6016 = vpop.f32.mrb[0].mxu0
      %6017 = vmatprep.mubr.bf16.mxu0 %v5274
      %6018 = vmatmul.mubr.bf16.gmra.mrb[0].mxu0 %v5273
      %v6019 = vpop.f32.mrb[0].mxu0
      %v6020 = vadd.f32 0.0, %v6019
      %v6021 = vpop.f32.mrb[0].mxu0
      %v6022 = vpop.f32.mrb[0].mxu0
      %v6023 = vadd.f32 0.0, %v6022
      %v6024 = vpop.f32.mrb[0].mxu0
      %6025 = vmatprep.mubr.bf16.mxu0 %v5283
      %6026 = vmatmul.mubr.bf16.gmra.mrb[0].mxu0 %v5282
      %v6027 = vpop.f32.mrb[0].mxu0
      %v6028 = vadd.f32 0.0, %v6027
      %v6029 = vpop.f32.mrb[0].mxu0
      %v6030 = vpop.f32.mrb[0].mxu0
      %v6031 = vadd.f32 0.0, %v6030
      %v6032 = vpop.f32.mrb[0].mxu0
      %6033 = vmatprep.mubr.bf16.mxu0 %v5292
      %6034 = vmatmul.mubr.bf16.gmra.mrb[0].mxu0 %v5291
      %v6035 = vpop.f32.mrb[0].mxu0
      %v6036 = vadd.f32 0.0, %v6035
      %v6037 = vpop.f32.mrb[0].mxu0
      %v6038 = vpop.f32.mrb[0].mxu0
      %v6039 = vadd.f32 0.0, %v6038
      %v6040 = vpop.f32.mrb[0].mxu0
      %6041 = vmatprep.mubr.bf16.mxu0 %v5301
      %6042 = vmatmul.mubr.bf16.gmra.mrb[0].mxu0 %v5300
      %v6043 = vpop.f32.mrb[0].mxu0
      %v6044 = vadd.f32 0.0, %v6043
      %v6045 = vpop.f32.mrb[0].mxu0
      %v6046 = vpop.f32.mrb[0].mxu0
      %v6047 = vadd.f32 0.0, %v6046
      %v6048 = vpop.f32.mrb[0].mxu0
      %6049 = vmatprep.mubr.bf16.mxu0 %v5310
      %6050 = vmatmul.mubr.bf16.gmra.mrb[0].mxu0 %v5309
      %v6051 = vpop.f32.mrb[0].mxu0
      %v6052 = vadd.f32 0.0, %v6051
      %v6053 = vpop.f32.mrb[0].mxu0
      %v6054 = vpop.f32.mrb[0].mxu0
      %v6055 = vadd.f32 0.0, %v6054
      %v6056 = vpop.f32.mrb[0].mxu0
      %6057 = vmatprep.mubr.bf16.mxu0 %v5319
      %6058 = vmatmul.mubr.bf16.gmra.mrb[0].mxu0 %v5318
      %v6059 = vpop.f32.mrb[0].mxu0
      %v6060 = vadd.f32 0.0, %v6059
      %v6061 = vpop.f32.mrb[0].mxu0
      %v6062 = vpop.f32.mrb[0].mxu0
      %v6063 = vadd.f32 0.0, %v6062
      %v6064 = vpop.f32.mrb[0].mxu0
      %6065 = vmatprep.mubr.bf16.mxu0 %v5328
      %6066 = vmatmul.mubr.bf16.gmra.mrb[0].mxu0 %v5327
      %v6067 = vpop.f32.mrb[0].mxu0
      %v6068 = vadd.f32 0.0, %v6067
      %v6069 = vpop.f32.mrb[0].mxu0
      %v6070 = vpop.f32.mrb[0].mxu0
      %v6071 = vadd.f32 0.0, %v6070
      %v6072 = vpop.f32.mrb[0].mxu0
      %6073 = vmatprep.mubr.bf16.mxu0 %v5337
      %6074 = vmatmul.mubr.bf16.gmra.mrb[0].mxu0 %v5336
      %v6075 = vpop.f32.mrb[0].mxu0
      %v6076 = vadd.f32 0.0, %v6075
      %v6077 = vpop.f32.mrb[0].mxu0
      %v6078 = vpop.f32.mrb[0].mxu0
      %v6079 = vadd.f32 0.0, %v6078
      %v6080 = vpop.f32.mrb[0].mxu0
      %6081 = vdwg.mxu0
      %6082 = vmatprep.subr.bf16.mxu0 0
      %6083 = vmatpush1.bf16.msra.mxu0 %v5793
      %6084 = vmatprep.subr.bf16.mxu0 0
      %6085 = vmatpush1.bf16.msra.mxu0 %v5794
      %6086 = vmatprep.subr.bf16.mxu0 0
      %6087 = vmatpush1.bf16.msra.mxu0 %v5795
      %6088 = vmatprep.subr.bf16.mxu0 0
      %6089 = vmatpush1.bf16.msra.mxu0 %v5796
      %6090 = vmatprep.subr.bf16.mxu0 0
      %6091 = vmatpush1.bf16.msra.mxu0 %v5797
      %6092 = vmatprep.subr.bf16.mxu0 0
      %6093 = vmatpush1.bf16.msra.mxu0 %v5798
      %6094 = vmatprep.subr.bf16.mxu0 0
      %6095 = vmatpush1.bf16.msra.mxu0 %v5799
      %6096 = vmatprep.subr.bf16.mxu0 0
      %6097 = vmatpush1.bf16.msra.mxu0 %v5800
      %6098 = vmatprep.subr.bf16.mxu0 0
      %6099 = vmatpush1.bf16.msra.mxu0 %v5801
      %6100 = vmatprep.subr.bf16.mxu0 0
      %6101 = vmatpush1.bf16.msra.mxu0 %v5802
      %6102 = vmatprep.subr.bf16.mxu0 0
      %6103 = vmatpush1.bf16.msra.mxu0 %v5803
      %6104 = vmatprep.subr.bf16.mxu0 0
      %6105 = vmatpush1.bf16.msra.mxu0 %v5804
      %6106 = vmatprep.subr.bf16.mxu0 0
      %6107 = vmatpush1.bf16.msra.mxu0 %v5805
      %6108 = vmatprep.subr.bf16.mxu0 0
      %6109 = vmatpush1.bf16.msra.mxu0 %v5806
      %6110 = vmatprep.subr.bf16.mxu0 0
      %6111 = vmatpush1.bf16.msra.mxu0 %v5807
      %6112 = vmatprep.subr.bf16.mxu0 0
      %6113 = vmatpush1.bf16.msra.mxu0 %v5808
      %6114 = vmatprep.mubr.bf16.mxu0 %v5204
      %6115 = vmatmul.mubr.bf16.gmra.mrb[0].mxu0 %v5203
      %v6116 = vpop.f32.mrb[0].mxu0
      %v6117 = vadd.f32 %v5956, %v6116
      %v6118 = vpop.f32.mrb[0].mxu0
      %v6119 = vpop.f32.mrb[0].mxu0
      %v6120 = vadd.f32 %v5959, %v6119
      %v6121 = vpop.f32.mrb[0].mxu0
      %6122 = vmatprep.mubr.bf16.mxu0 %v5213
      %6123 = vmatmul.mubr.bf16.gmra.mrb[0].mxu0 %v5212
      %v6124 = vpop.f32.mrb[0].mxu0
      %v6125 = vadd.f32 %v5964, %v6124
      %v6126 = vpop.f32.mrb[0].mxu0
      %v6127 = vpop.f32.mrb[0].mxu0
      %v6128 = vadd.f32 %v5967, %v6127
      %v6129 = vpop.f32.mrb[0].mxu0
      %6130 = vmatprep.mubr.bf16.mxu0 %v5222
      %6131 = vmatmul.mubr.bf16.gmra.mrb[0].mxu0 %v5221
      %v6132 = vpop.f32.mrb[0].mxu0
      %v6133 = vadd.f32 %v5972, %v6132
      %v6134 = vpop.f32.mrb[0].mxu0
      %v6135 = vpop.f32.mrb[0].mxu0
      %v6136 = vadd.f32 %v5975, %v6135
      %v6137 = vpop.f32.mrb[0].mxu0
      %6138 = vmatprep.mubr.bf16.mxu0 %v5231
      %6139 = vmatmul.mubr.bf16.gmra.mrb[0].mxu0 %v5230
      %v6140 = vpop.f32.mrb[0].mxu0
      %v6141 = vadd.f32 %v5980, %v6140
      %v6142 = vpop.f32.mrb[0].mxu0
      %v6143 = vpop.f32.mrb[0].mxu0
      %v6144 = vadd.f32 %v5983, %v6143
      %v6145 = vpop.f32.mrb[0].mxu0
      %6146 = vmatprep.mubr.bf16.mxu0 %v5240
      %6147 = vmatmul.mubr.bf16.gmra.mrb[0].mxu0 %v5239
      %v6148 = vpop.f32.mrb[0].mxu0
      %v6149 = vadd.f32 %v5988, %v6148
      %v6150 = vpop.f32.mrb[0].mxu0
      %v6151 = vpop.f32.mrb[0].mxu0
      %v6152 = vadd.f32 %v5991, %v6151
      %v6153 = vpop.f32.mrb[0].mxu0
      %6154 = vmatprep.mubr.bf16.mxu0 %v5249
      %6155 = vmatmul.mubr.bf16.gmra.mrb[0].mxu0 %v5248
      %v6156 = vpop.f32.mrb[0].mxu0
      %v6157 = vadd.f32 %v5996, %v6156
      %v6158 = vpop.f32.mrb[0].mxu0
      %v6159 = vpop.f32.mrb[0].mxu0
      %v6160 = vadd.f32 %v5999, %v6159
      %v6161 = vpop.f32.mrb[0].mxu0
      %6162 = vmatprep.mubr.bf16.mxu0 %v5258
      %6163 = vmatmul.mubr.bf16.gmra.mrb[0].mxu0 %v5257
      %v6164 = vpop.f32.mrb[0].mxu0
      %v6165 = vadd.f32 %v6004, %v6164
      %v6166 = vpop.f32.mrb[0].mxu0
      %v6167 = vpop.f32.mrb[0].mxu0
      %v6168 = vadd.f32 %v6007, %v6167
      %v6169 = vpop.f32.mrb[0].mxu0
      %6170 = vmatprep.mubr.bf16.mxu0 %v5267
      %6171 = vmatmul.mubr.bf16.gmra.mrb[0].mxu0 %v5266
      %v6172 = vpop.f32.mrb[0].mxu0
      %v6173 = vadd.f32 %v6012, %v6172
      %v6174 = vpop.f32.mrb[0].mxu0
      %v6175 = vpop.f32.mrb[0].mxu0
      %v6176 = vadd.f32 %v6015, %v6175
      %v6177 = vpop.f32.mrb[0].mxu0
      %6178 = vmatprep.mubr.bf16.mxu0 %v5276
      %6179 = vmatmul.mubr.bf16.gmra.mrb[0].mxu0 %v5275
      %v6180 = vpop.f32.mrb[0].mxu0
      %v6181 = vadd.f32 %v6020, %v6180
      %v6182 = vpop.f32.mrb[0].mxu0
      %v6183 = vpop.f32.mrb[0].mxu0
      %v6184 = vadd.f32 %v6023, %v6183
      %v6185 = vpop.f32.mrb[0].mxu0
      %6186 = vmatprep.mubr.bf16.mxu0 %v5285
      %6187 = vmatmul.mubr.bf16.gmra.mrb[0].mxu0 %v5284
      %v6188 = vpop.f32.mrb[0].mxu0
      %v6189 = vadd.f32 %v6028, %v6188
      %v6190 = vpop.f32.mrb[0].mxu0
      %v6191 = vpop.f32.mrb[0].mxu0
      %v6192 = vadd.f32 %v6031, %v6191
      %v6193 = vpop.f32.mrb[0].mxu0
      %6194 = vmatprep.mubr.bf16.mxu0 %v5294
      %6195 = vmatmul.mubr.bf16.gmra.mrb[0].mxu0 %v5293
      %v6196 = vpop.f32.mrb[0].mxu0
      %v6197 = vadd.f32 %v6036, %v6196
      %v6198 = vpop.f32.mrb[0].mxu0
      %v6199 = vpop.f32.mrb[0].mxu0
      %v6200 = vadd.f32 %v6039, %v6199
      %v6201 = vpop.f32.mrb[0].mxu0
      %6202 = vmatprep.mubr.bf16.mxu0 %v5303
      %6203 = vmatmul.mubr.bf16.gmra.mrb[0].mxu0 %v5302
      %v6204 = vpop.f32.mrb[0].mxu0
      %v6205 = vadd.f32 %v6044, %v6204
      %v6206 = vpop.f32.mrb[0].mxu0
      %v6207 = vpop.f32.mrb[0].mxu0
      %v6208 = vadd.f32 %v6047, %v6207
      %v6209 = vpop.f32.mrb[0].mxu0
      %6210 = vmatprep.mubr.bf16.mxu0 %v5312
      %6211 = vmatmul.mubr.bf16.gmra.mrb[0].mxu0 %v5311
      %v6212 = vpop.f32.mrb[0].mxu0
      %v6213 = vadd.f32 %v6052, %v6212
      %v6214 = vpop.f32.mrb[0].mxu0
      %v6215 = vpop.f32.mrb[0].mxu0
      %v6216 = vadd.f32 %v6055, %v6215
      %v6217 = vpop.f32.mrb[0].mxu0
      %6218 = vmatprep.mubr.bf16.mxu0 %v5321
      %6219 = vmatmul.mubr.bf16.gmra.mrb[0].mxu0 %v5320
      %v6220 = vpop.f32.mrb[0].mxu0
      %v6221 = vadd.f32 %v6060, %v6220
      %v6222 = vpop.f32.mrb[0].mxu0
      %v6223 = vpop.f32.mrb[0].mxu0
      %v6224 = vadd.f32 %v6063, %v6223
      %v6225 = vpop.f32.mrb[0].mxu0
      %6226 = vmatprep.mubr.bf16.mxu0 %v5330
      %6227 = vmatmul.mubr.bf16.gmra.mrb[0].mxu0 %v5329
      %v6228 = vpop.f32.mrb[0].mxu0
      %v6229 = vadd.f32 %v6068, %v6228
      %v6230 = vpop.f32.mrb[0].mxu0
      %v6231 = vpop.f32.mrb[0].mxu0
      %v6232 = vadd.f32 %v6071, %v6231
      %v6233 = vpop.f32.mrb[0].mxu0
      %6234 = vmatprep.mubr.bf16.mxu0 %v5339
      %6235 = vmatmul.mubr.bf16.gmra.mrb[0].mxu0 %v5338
      %v6236 = vpop.f32.mrb[0].mxu0
      %v6237 = vadd.f32 %v6076, %v6236
      %v6238 = vpop.f32.mrb[0].mxu0
      %v6239 = vpop.f32.mrb[0].mxu0
      %v6240 = vadd.f32 %v6079, %v6239
      %v6241 = vpop.f32.mrb[0].mxu0
      %6242 = vdwg.mxu0
      %6243 = vmatprep.subr.bf16.mxu0 0
      %6244 = vmatpush1.bf16.msra.mxu0 %v5809
      %6245 = vmatprep.subr.bf16.mxu0 0
      %6246 = vmatpush1.bf16.msra.mxu0 %v5810
      %6247 = vmatprep.subr.bf16.mxu0 0
      %6248 = vmatpush1.bf16.msra.mxu0 %v5811
      %6249 = vmatprep.subr.bf16.mxu0 0
      %6250 = vmatpush1.bf16.msra.mxu0 %v5812
      %6251 = vmatprep.subr.bf16.mxu0 0
      %6252 = vmatpush1.bf16.msra.mxu0 %v5813
      %6253 = vmatprep.subr.bf16.mxu0 0
      %6254 = vmatpush1.bf16.msra.mxu0 %v5814
      %6255 = vmatprep.subr.bf16.mxu0 0
      %6256 = vmatpush1.bf16.msra.mxu0 %v5815
      %6257 = vmatprep.subr.bf16.mxu0 0
      %6258 = vmatpush1.bf16.msra.mxu0 %v5816
      %6259 = vmatprep.subr.bf16.mxu0 0
      %6260 = vmatpush1.bf16.msra.mxu0 %v5817
      %6261 = vmatprep.subr.bf16.mxu0 0
      %6262 = vmatpush1.bf16.msra.mxu0 %v5818
      %6263 = vmatprep.subr.bf16.mxu0 0
      %6264 = vmatpush1.bf16.msra.mxu0 %v5819
      %6265 = vmatprep.subr.bf16.mxu0 0
      %6266 = vmatpush1.bf16.msra.mxu0 %v5820
      %6267 = vmatprep.subr.bf16.mxu0 0
      %6268 = vmatpush1.bf16.msra.mxu0 %v5821
      %6269 = vmatprep.subr.bf16.mxu0 0
      %6270 = vmatpush1.bf16.msra.mxu0 %v5822
      %6271 = vmatprep.subr.bf16.mxu0 0
      %6272 = vmatpush1.bf16.msra.mxu0 %v5823
      %6273 = vmatprep.subr.bf16.mxu0 0
      %6274 = vmatpush1.bf16.msra.mxu0 %v5824
      %6275 = vmatprep.mubr.bf16.mxu0 %v5206
      %6276 = vmatmul.mubr.bf16.gmra.mrb[0].mxu0 %v5205
      %v6277 = vpop.f32.mrb[0].mxu0
      %v6278 = vadd.f32 %v6117, %v6277
      %v6279 = vpop.f32.mrb[0].mxu0
      %v6280 = vpop.f32.mrb[0].mxu0
      %v6281 = vadd.f32 %v6120, %v6280
      %v6282 = vpop.f32.mrb[0].mxu0
      %6283 = vmatprep.mubr.bf16.mxu0 %v5215
      %6284 = vmatmul.mubr.bf16.gmra.mrb[0].mxu0 %v5214
      %v6285 = vpop.f32.mrb[0].mxu0
      %v6286 = vadd.f32 %v6125, %v6285
      %v6287 = vpop.f32.mrb[0].mxu0
      %v6288 = vpop.f32.mrb[0].mxu0
      %v6289 = vadd.f32 %v6128, %v6288
      %v6290 = vpop.f32.mrb[0].mxu0
      %6291 = vmatprep.mubr.bf16.mxu0 %v5224
      %6292 = vmatmul.mubr.bf16.gmra.mrb[0].mxu0 %v5223
      %v6293 = vpop.f32.mrb[0].mxu0
      %v6294 = vadd.f32 %v6133, %v6293
      %v6295 = vpop.f32.mrb[0].mxu0
      %v6296 = vpop.f32.mrb[0].mxu0
      %v6297 = vadd.f32 %v6136, %v6296
      %v6298 = vpop.f32.mrb[0].mxu0
      %6299 = vmatprep.mubr.bf16.mxu0 %v5233
      %6300 = vmatmul.mubr.bf16.gmra.mrb[0].mxu0 %v5232
      %v6301 = vpop.f32.mrb[0].mxu0
      %v6302 = vadd.f32 %v6141, %v6301
      %v6303 = vpop.f32.mrb[0].mxu0
      %v6304 = vpop.f32.mrb[0].mxu0
      %v6305 = vadd.f32 %v6144, %v6304
      %v6306 = vpop.f32.mrb[0].mxu0
      %6307 = vmatprep.mubr.bf16.mxu0 %v5242
      %6308 = vmatmul.mubr.bf16.gmra.mrb[0].mxu0 %v5241
      %v6309 = vpop.f32.mrb[0].mxu0
      %v6310 = vadd.f32 %v6149, %v6309
      %v6311 = vpop.f32.mrb[0].mxu0
      %v6312 = vpop.f32.mrb[0].mxu0
      %v6313 = vadd.f32 %v6152, %v6312
      %v6314 = vpop.f32.mrb[0].mxu0
      %6315 = vmatprep.mubr.bf16.mxu0 %v5251
      %6316 = vmatmul.mubr.bf16.gmra.mrb[0].mxu0 %v5250
      %v6317 = vpop.f32.mrb[0].mxu0
      %v6318 = vadd.f32 %v6157, %v6317
      %v6319 = vpop.f32.mrb[0].mxu0
      %v6320 = vpop.f32.mrb[0].mxu0
      %v6321 = vadd.f32 %v6160, %v6320
      %v6322 = vpop.f32.mrb[0].mxu0
      %6323 = vmatprep.mubr.bf16.mxu0 %v5260
      %6324 = vmatmul.mubr.bf16.gmra.mrb[0].mxu0 %v5259
      %v6325 = vpop.f32.mrb[0].mxu0
      %v6326 = vadd.f32 %v6165, %v6325
      %v6327 = vpop.f32.mrb[0].mxu0
      %v6328 = vpop.f32.mrb[0].mxu0
      %v6329 = vadd.f32 %v6168, %v6328
      %v6330 = vpop.f32.mrb[0].mxu0
      %6331 = vmatprep.mubr.bf16.mxu0 %v5269
      %6332 = vmatmul.mubr.bf16.gmra.mrb[0].mxu0 %v5268
      %v6333 = vpop.f32.mrb[0].mxu0
      %v6334 = vadd.f32 %v6173, %v6333
      %v6335 = vpop.f32.mrb[0].mxu0
      %v6336 = vpop.f32.mrb[0].mxu0
      %v6337 = vadd.f32 %v6176, %v6336
      %v6338 = vpop.f32.mrb[0].mxu0
      %6339 = vmatprep.mubr.bf16.mxu0 %v5278
      %6340 = vmatmul.mubr.bf16.gmra.mrb[0].mxu0 %v5277
      %v6341 = vpop.f32.mrb[0].mxu0
      %v6342 = vadd.f32 %v6181, %v6341
      %v6343 = vpop.f32.mrb[0].mxu0
      %v6344 = vpop.f32.mrb[0].mxu0
      %v6345 = vadd.f32 %v6184, %v6344
      %v6346 = vpop.f32.mrb[0].mxu0
      %6347 = vmatprep.mubr.bf16.mxu0 %v5287
      %6348 = vmatmul.mubr.bf16.gmra.mrb[0].mxu0 %v5286
      %v6349 = vpop.f32.mrb[0].mxu0
      %v6350 = vadd.f32 %v6189, %v6349
      %v6351 = vpop.f32.mrb[0].mxu0
      %v6352 = vpop.f32.mrb[0].mxu0
      %v6353 = vadd.f32 %v6192, %v6352
      %v6354 = vpop.f32.mrb[0].mxu0
      %6355 = vmatprep.mubr.bf16.mxu0 %v5296
      %6356 = vmatmul.mubr.bf16.gmra.mrb[0].mxu0 %v5295
      %v6357 = vpop.f32.mrb[0].mxu0
      %v6358 = vadd.f32 %v6197, %v6357
      %v6359 = vpop.f32.mrb[0].mxu0
      %v6360 = vpop.f32.mrb[0].mxu0
      %v6361 = vadd.f32 %v6200, %v6360
      %v6362 = vpop.f32.mrb[0].mxu0
      %6363 = vmatprep.mubr.bf16.mxu0 %v5305
      %6364 = vmatmul.mubr.bf16.gmra.mrb[0].mxu0 %v5304
      %v6365 = vpop.f32.mrb[0].mxu0
      %v6366 = vadd.f32 %v6205, %v6365
      %v6367 = vpop.f32.mrb[0].mxu0
      %v6368 = vpop.f32.mrb[0].mxu0
      %v6369 = vadd.f32 %v6208, %v6368
      %v6370 = vpop.f32.mrb[0].mxu0
      %6371 = vmatprep.mubr.bf16.mxu0 %v5314
      %6372 = vmatmul.mubr.bf16.gmra.mrb[0].mxu0 %v5313
      %v6373 = vpop.f32.mrb[0].mxu0
      %v6374 = vadd.f32 %v6213, %v6373
      %v6375 = vpop.f32.mrb[0].mxu0
      %v6376 = vpop.f32.mrb[0].mxu0
      %v6377 = vadd.f32 %v6216, %v6376
      %v6378 = vpop.f32.mrb[0].mxu0
      %6379 = vmatprep.mubr.bf16.mxu0 %v5323
      %6380 = vmatmul.mubr.bf16.gmra.mrb[0].mxu0 %v5322
      %v6381 = vpop.f32.mrb[0].mxu0
      %v6382 = vadd.f32 %v6221, %v6381
      %v6383 = vpop.f32.mrb[0].mxu0
      %v6384 = vpop.f32.mrb[0].mxu0
      %v6385 = vadd.f32 %v6224, %v6384
      %v6386 = vpop.f32.mrb[0].mxu0
      %6387 = vmatprep.mubr.bf16.mxu0 %v5332
      %6388 = vmatmul.mubr.bf16.gmra.mrb[0].mxu0 %v5331
      %v6389 = vpop.f32.mrb[0].mxu0
      %v6390 = vadd.f32 %v6229, %v6389
      %v6391 = vpop.f32.mrb[0].mxu0
      %v6392 = vpop.f32.mrb[0].mxu0
      %v6393 = vadd.f32 %v6232, %v6392
      %v6394 = vpop.f32.mrb[0].mxu0
      %6395 = vmatprep.mubr.bf16.mxu0 %v5341
      %6396 = vmatmul.mubr.bf16.gmra.mrb[0].mxu0 %v5340
      %v6397 = vpop.f32.mrb[0].mxu0
      %v6398 = vadd.f32 %v6237, %v6397
      %v6399 = vpop.f32.mrb[0].mxu0
      %v6400 = vpop.f32.mrb[0].mxu0
      %v6401 = vadd.f32 %v6240, %v6400
      %v6402 = vpop.f32.mrb[0].mxu0
      %6403 = vdwg.mxu0
      %6404 = vmatprep.subr.bf16.mxu0 0
      %6405 = vmatpush1.bf16.msra.mxu0 %v5825
      %6406 = vmatprep.subr.bf16.mxu0 0
      %6407 = vmatpush1.bf16.msra.mxu0 %v5826
      %6408 = vmatprep.subr.bf16.mxu0 0
      %6409 = vmatpush1.bf16.msra.mxu0 %v5827
      %6410 = vmatprep.subr.bf16.mxu0 0
      %6411 = vmatpush1.bf16.msra.mxu0 %v5828
      %6412 = vmatprep.subr.bf16.mxu0 0
      %6413 = vmatpush1.bf16.msra.mxu0 %v5829
      %6414 = vmatprep.subr.bf16.mxu0 0
      %6415 = vmatpush1.bf16.msra.mxu0 %v5830
      %6416 = vmatprep.subr.bf16.mxu0 0
      %6417 = vmatpush1.bf16.msra.mxu0 %v5831
      %6418 = vmatprep.subr.bf16.mxu0 0
      %6419 = vmatpush1.bf16.msra.mxu0 %v5832
      %6420 = vmatprep.subr.bf16.mxu0 0
      %6421 = vmatpush1.bf16.msra.mxu0 %v5833
      %6422 = vmatprep.subr.bf16.mxu0 0
      %6423 = vmatpush1.bf16.msra.mxu0 %v5834
      %6424 = vmatprep.subr.bf16.mxu0 0
      %6425 = vmatpush1.bf16.msra.mxu0 %v5835
      %6426 = vmatprep.subr.bf16.mxu0 0
      %6427 = vmatpush1.bf16.msra.mxu0 %v5836
      %6428 = vmatprep.subr.bf16.mxu0 0
      %6429 = vmatpush1.bf16.msra.mxu0 %v5837
      %6430 = vmatprep.subr.bf16.mxu0 0
      %6431 = vmatpush1.bf16.msra.mxu0 %v5838
      %6432 = vmatprep.subr.bf16.mxu0 0
      %6433 = vmatpush1.bf16.msra.mxu0 %v5839
      %6434 = vmatprep.subr.bf16.mxu0 0
      %6435 = vmatpush1.bf16.msra.mxu0 %v5840
      %6436 = vmatprep.mubr.bf16.mxu0 %v5208
      %6437 = vmatmul.mubr.bf16.gmra.mrb[0].mxu0 %v5207
      %v6438 = vpop.f32.mrb[0].mxu0
      %v6439 = vadd.f32 %v6278, %v6438
      %v6440 = vpop.f32.mrb[0].mxu0
      %v6441 = vpop.f32.mrb[0].mxu0
      %v6442 = vadd.f32 %v6281, %v6441
      %v6443 = vpop.f32.mrb[0].mxu0
      %6444 = vmatprep.mubr.bf16.mxu0 %v5217
      %6445 = vmatmul.mubr.bf16.gmra.mrb[0].mxu0 %v5216
      %v6446 = vpop.f32.mrb[0].mxu0
      %v6447 = vadd.f32 %v6286, %v6446
      %v6448 = vpop.f32.mrb[0].mxu0
      %v6449 = vpop.f32.mrb[0].mxu0
      %v6450 = vadd.f32 %v6289, %v6449
      %v6451 = vpop.f32.mrb[0].mxu0
      %6452 = vmatprep.mubr.bf16.mxu0 %v5226
      %6453 = vmatmul.mubr.bf16.gmra.mrb[0].mxu0 %v5225
      %v6454 = vpop.f32.mrb[0].mxu0
      %v6455 = vadd.f32 %v6294, %v6454
      %v6456 = vpop.f32.mrb[0].mxu0
      %v6457 = vpop.f32.mrb[0].mxu0
      %v6458 = vadd.f32 %v6297, %v6457
      %v6459 = vpop.f32.mrb[0].mxu0
      %6460 = vmatprep.mubr.bf16.mxu0 %v5235
      %6461 = vmatmul.mubr.bf16.gmra.mrb[0].mxu0 %v5234
      %v6462 = vpop.f32.mrb[0].mxu0
      %v6463 = vadd.f32 %v6302, %v6462
      %v6464 = vpop.f32.mrb[0].mxu0
      %v6465 = vpop.f32.mrb[0].mxu0
      %v6466 = vadd.f32 %v6305, %v6465
      %v6467 = vpop.f32.mrb[0].mxu0
      %6468 = vmatprep.mubr.bf16.mxu0 %v5244
      %6469 = vmatmul.mubr.bf16.gmra.mrb[0].mxu0 %v5243
      %v6470 = vpop.f32.mrb[0].mxu0
      %v6471 = vadd.f32 %v6310, %v6470
      %v6472 = vpop.f32.mrb[0].mxu0
      %v6473 = vpop.f32.mrb[0].mxu0
      %v6474 = vadd.f32 %v6313, %v6473
      %v6475 = vpop.f32.mrb[0].mxu0
      %6476 = vmatprep.mubr.bf16.mxu0 %v5253
      %6477 = vmatmul.mubr.bf16.gmra.mrb[0].mxu0 %v5252
      %v6478 = vpop.f32.mrb[0].mxu0
      %v6479 = vadd.f32 %v6318, %v6478
      %v6480 = vpop.f32.mrb[0].mxu0
      %v6481 = vpop.f32.mrb[0].mxu0
      %v6482 = vadd.f32 %v6321, %v6481
      %v6483 = vpop.f32.mrb[0].mxu0
      %6484 = vmatprep.mubr.bf16.mxu0 %v5262
      %6485 = vmatmul.mubr.bf16.gmra.mrb[0].mxu0 %v5261
      %v6486 = vpop.f32.mrb[0].mxu0
      %v6487 = vadd.f32 %v6326, %v6486
      %v6488 = vpop.f32.mrb[0].mxu0
      %v6489 = vpop.f32.mrb[0].mxu0
      %v6490 = vadd.f32 %v6329, %v6489
      %v6491 = vpop.f32.mrb[0].mxu0
      %6492 = vmatprep.mubr.bf16.mxu0 %v5271
      %6493 = vmatmul.mubr.bf16.gmra.mrb[0].mxu0 %v5270
      %v6494 = vpop.f32.mrb[0].mxu0
      %v6495 = vadd.f32 %v6334, %v6494
      %v6496 = vpop.f32.mrb[0].mxu0
      %v6497 = vpop.f32.mrb[0].mxu0
      %v6498 = vadd.f32 %v6337, %v6497
      %v6499 = vpop.f32.mrb[0].mxu0
      %6500 = vmatprep.mubr.bf16.mxu0 %v5280
      %6501 = vmatmul.mubr.bf16.gmra.mrb[0].mxu0 %v5279
      %v6502 = vpop.f32.mrb[0].mxu0
      %v6503 = vadd.f32 %v6342, %v6502
      %v6504 = vpop.f32.mrb[0].mxu0
      %v6505 = vpop.f32.mrb[0].mxu0
      %v6506 = vadd.f32 %v6345, %v6505
      %v6507 = vpop.f32.mrb[0].mxu0
      %6508 = vmatprep.mubr.bf16.mxu0 %v5289
      %6509 = vmatmul.mubr.bf16.gmra.mrb[0].mxu0 %v5288
      %v6510 = vpop.f32.mrb[0].mxu0
      %v6511 = vadd.f32 %v6350, %v6510
      %v6512 = vpop.f32.mrb[0].mxu0
      %v6513 = vpop.f32.mrb[0].mxu0
      %v6514 = vadd.f32 %v6353, %v6513
      %v6515 = vpop.f32.mrb[0].mxu0
      %6516 = vmatprep.mubr.bf16.mxu0 %v5298
      %6517 = vmatmul.mubr.bf16.gmra.mrb[0].mxu0 %v5297
      %v6518 = vpop.f32.mrb[0].mxu0
      %v6519 = vadd.f32 %v6358, %v6518
      %v6520 = vpop.f32.mrb[0].mxu0
      %v6521 = vpop.f32.mrb[0].mxu0
      %v6522 = vadd.f32 %v6361, %v6521
      %v6523 = vpop.f32.mrb[0].mxu0
      %6524 = vmatprep.mubr.bf16.mxu0 %v5307
      %6525 = vmatmul.mubr.bf16.gmra.mrb[0].mxu0 %v5306
      %v6526 = vpop.f32.mrb[0].mxu0
      %v6527 = vadd.f32 %v6366, %v6526
      %v6528 = vpop.f32.mrb[0].mxu0
      %v6529 = vpop.f32.mrb[0].mxu0
      %v6530 = vadd.f32 %v6369, %v6529
      %v6531 = vpop.f32.mrb[0].mxu0
      %6532 = vmatprep.mubr.bf16.mxu0 %v5316
      %6533 = vmatmul.mubr.bf16.gmra.mrb[0].mxu0 %v5315
      %v6534 = vpop.f32.mrb[0].mxu0
      %v6535 = vadd.f32 %v6374, %v6534
      %v6536 = vpop.f32.mrb[0].mxu0
      %v6537 = vpop.f32.mrb[0].mxu0
      %v6538 = vadd.f32 %v6377, %v6537
      %v6539 = vpop.f32.mrb[0].mxu0
      %6540 = vmatprep.mubr.bf16.mxu0 %v5325
      %6541 = vmatmul.mubr.bf16.gmra.mrb[0].mxu0 %v5324
      %v6542 = vpop.f32.mrb[0].mxu0
      %v6543 = vadd.f32 %v6382, %v6542
      %v6544 = vpop.f32.mrb[0].mxu0
      %v6545 = vpop.f32.mrb[0].mxu0
      %v6546 = vadd.f32 %v6385, %v6545
      %v6547 = vpop.f32.mrb[0].mxu0
      %6548 = vmatprep.mubr.bf16.mxu0 %v5334
      %6549 = vmatmul.mubr.bf16.gmra.mrb[0].mxu0 %v5333
      %v6550 = vpop.f32.mrb[0].mxu0
      %v6551 = vadd.f32 %v6390, %v6550
      %v6552 = vpop.f32.mrb[0].mxu0
      %v6553 = vpop.f32.mrb[0].mxu0
      %v6554 = vadd.f32 %v6393, %v6553
      %v6555 = vpop.f32.mrb[0].mxu0
      %6556 = vmatprep.mubr.bf16.mxu0 %v5343
      %6557 = vmatmul.mubr.bf16.gmra.mrb[0].mxu0 %v5342
      %v6558 = vpop.f32.mrb[0].mxu0
      %v6559 = vadd.f32 %v6398, %v6558
      %v6560 = vpop.f32.mrb[0].mxu0
      %v6561 = vpop.f32.mrb[0].mxu0
      %v6562 = vadd.f32 %v6401, %v6561
      %v6563 = vpop.f32.mrb[0].mxu0
      %6564 = vdwg.mxu0
      %6565 = vmatprep.subr.bf16.mxu0 0
      %6566 = vmatpush1.bf16.msra.mxu0 %v5841
      %6567 = vmatprep.subr.bf16.mxu0 0
      %6568 = vmatpush1.bf16.msra.mxu0 %v5842
      %6569 = vmatprep.subr.bf16.mxu0 0
      %6570 = vmatpush1.bf16.msra.mxu0 %v5843
      %6571 = vmatprep.subr.bf16.mxu0 0
      %6572 = vmatpush1.bf16.msra.mxu0 %v5844
      %6573 = vmatprep.subr.bf16.mxu0 0
      %6574 = vmatpush1.bf16.msra.mxu0 %v5845
      %6575 = vmatprep.subr.bf16.mxu0 0
      %6576 = vmatpush1.bf16.msra.mxu0 %v5846
      %6577 = vmatprep.subr.bf16.mxu0 0
      %6578 = vmatpush1.bf16.msra.mxu0 %v5847
      %6579 = vmatprep.subr.bf16.mxu0 0
      %6580 = vmatpush1.bf16.msra.mxu0 %v5848
      %6581 = vmatprep.subr.bf16.mxu0 0
      %6582 = vmatpush1.bf16.msra.mxu0 0
      %6583 = vmatprep.subr.bf16.mxu0 0
      %6584 = vmatpush1.bf16.msra.mxu0 0
      %6585 = vmatprep.subr.bf16.mxu0 0
      %6586 = vmatpush1.bf16.msra.mxu0 0
      %6587 = vmatprep.subr.bf16.mxu0 0
      %6588 = vmatpush1.bf16.msra.mxu0 0
      %6589 = vmatprep.subr.bf16.mxu0 0
      %6590 = vmatpush1.bf16.msra.mxu0 0
      %6591 = vmatprep.subr.bf16.mxu0 0
      %6592 = vmatpush1.bf16.msra.mxu0 0
      %6593 = vmatprep.subr.bf16.mxu0 0
      %6594 = vmatpush1.bf16.msra.mxu0 0
      %6595 = vmatprep.subr.bf16.mxu0 0
      %6596 = vmatpush1.bf16.msra.mxu0 0
      %6597 = vmatprep.mubr.bf16.mxu0 0
      %6598 = vmatmul.mubr.bf16.gmra.mrb[0].mxu0 %v5209
      %v6599 = vpop.f32.mrb[0].mxu0
      %v6600 = vadd.f32 %v6439, %v6599
      %v6601 = vpop.f32.mrb[0].mxu0
      %v6602 = vpop.f32.mrb[0].mxu0
      %v6603 = vadd.f32 %v6442, %v6602
      %v6604 = vpop.f32.mrb[0].mxu0
      %6605 = vmatprep.mubr.bf16.mxu0 0
      %6606 = vmatmul.mubr.bf16.gmra.mrb[0].mxu0 %v5218
      %v6607 = vpop.f32.mrb[0].mxu0
      %v6608 = vadd.f32 %v6447, %v6607
      %v6609 = vpop.f32.mrb[0].mxu0
      %v6610 = vpop.f32.mrb[0].mxu0
      %v6611 = vadd.f32 %v6450, %v6610
      %v6612 = vpop.f32.mrb[0].mxu0
      %6613 = vmatprep.mubr.bf16.mxu0 0
      %6614 = vmatmul.mubr.bf16.gmra.mrb[0].mxu0 %v5227
      %v6615 = vpop.f32.mrb[0].mxu0
      %v6616 = vadd.f32 %v6455, %v6615
      %v6617 = vpop.f32.mrb[0].mxu0
      %v6618 = vpop.f32.mrb[0].mxu0
      %v6619 = vadd.f32 %v6458, %v6618
      %v6620 = vpop.f32.mrb[0].mxu0
      %6621 = vmatprep.mubr.bf16.mxu0 0
      %6622 = vmatmul.mubr.bf16.gmra.mrb[0].mxu0 %v5236
      %v6623 = vpop.f32.mrb[0].mxu0
      %v6624 = vadd.f32 %v6463, %v6623
      %v6625 = vpop.f32.mrb[0].mxu0
      %v6626 = vpop.f32.mrb[0].mxu0
      %v6627 = vadd.f32 %v6466, %v6626
      %v6628 = vpop.f32.mrb[0].mxu0
      %6629 = vmatprep.mubr.bf16.mxu0 0
      %6630 = vmatmul.mubr.bf16.gmra.mrb[0].mxu0 %v5245
      %v6631 = vpop.f32.mrb[0].mxu0
      %v6632 = vadd.f32 %v6471, %v6631
      %v6633 = vpop.f32.mrb[0].mxu0
      %v6634 = vpop.f32.mrb[0].mxu0
      %v6635 = vadd.f32 %v6474, %v6634
      %v6636 = vpop.f32.mrb[0].mxu0
      %6637 = vmatprep.mubr.bf16.mxu0 0
      %6638 = vmatmul.mubr.bf16.gmra.mrb[0].mxu0 %v5254
      %v6639 = vpop.f32.mrb[0].mxu0
      %v6640 = vadd.f32 %v6479, %v6639
      %v6641 = vpop.f32.mrb[0].mxu0
      %v6642 = vpop.f32.mrb[0].mxu0
      %v6643 = vadd.f32 %v6482, %v6642
      %v6644 = vpop.f32.mrb[0].mxu0
      %6645 = vmatprep.mubr.bf16.mxu0 0
      %6646 = vmatmul.mubr.bf16.gmra.mrb[0].mxu0 %v5263
      %v6647 = vpop.f32.mrb[0].mxu0
      %v6648 = vadd.f32 %v6487, %v6647
      %v6649 = vpop.f32.mrb[0].mxu0
      %v6650 = vpop.f32.mrb[0].mxu0
      %v6651 = vadd.f32 %v6490, %v6650
      %v6652 = vpop.f32.mrb[0].mxu0
      %6653 = vmatprep.mubr.bf16.mxu0 0
      %6654 = vmatmul.mubr.bf16.gmra.mrb[0].mxu0 %v5272
      %v6655 = vpop.f32.mrb[0].mxu0
      %v6656 = vadd.f32 %v6495, %v6655
      %v6657 = vpop.f32.mrb[0].mxu0
      %v6658 = vpop.f32.mrb[0].mxu0
      %v6659 = vadd.f32 %v6498, %v6658
      %v6660 = vpop.f32.mrb[0].mxu0
      %6661 = vmatprep.mubr.bf16.mxu0 0
      %6662 = vmatmul.mubr.bf16.gmra.mrb[0].mxu0 %v5281
      %v6663 = vpop.f32.mrb[0].mxu0
      %v6664 = vadd.f32 %v6503, %v6663
      %v6665 = vpop.f32.mrb[0].mxu0
      %v6666 = vpop.f32.mrb[0].mxu0
      %v6667 = vadd.f32 %v6506, %v6666
      %v6668 = vpop.f32.mrb[0].mxu0
      %6669 = vmatprep.mubr.bf16.mxu0 0
      %6670 = vmatmul.mubr.bf16.gmra.mrb[0].mxu0 %v5290
      %v6671 = vpop.f32.mrb[0].mxu0
      %v6672 = vadd.f32 %v6511, %v6671
      %v6673 = vpop.f32.mrb[0].mxu0
      %v6674 = vpop.f32.mrb[0].mxu0
      %v6675 = vadd.f32 %v6514, %v6674
      %v6676 = vpop.f32.mrb[0].mxu0
      %6677 = vmatprep.mubr.bf16.mxu0 0
      %6678 = vmatmul.mubr.bf16.gmra.mrb[0].mxu0 %v5299
      %v6679 = vpop.f32.mrb[0].mxu0
      %v6680 = vadd.f32 %v6519, %v6679
      %v6681 = vpop.f32.mrb[0].mxu0
      %v6682 = vpop.f32.mrb[0].mxu0
      %v6683 = vadd.f32 %v6522, %v6682
      %v6684 = vpop.f32.mrb[0].mxu0
      %6685 = vmatprep.mubr.bf16.mxu0 0
      %6686 = vmatmul.mubr.bf16.gmra.mrb[0].mxu0 %v5308
      %v6687 = vpop.f32.mrb[0].mxu0
      %v6688 = vadd.f32 %v6527, %v6687
      %v6689 = vpop.f32.mrb[0].mxu0
      %v6690 = vpop.f32.mrb[0].mxu0
      %v6691 = vadd.f32 %v6530, %v6690
      %v6692 = vpop.f32.mrb[0].mxu0
      %6693 = vmatprep.mubr.bf16.mxu0 0
      %6694 = vmatmul.mubr.bf16.gmra.mrb[0].mxu0 %v5317
      %v6695 = vpop.f32.mrb[0].mxu0
      %v6696 = vadd.f32 %v6535, %v6695
      %v6697 = vpop.f32.mrb[0].mxu0
      %v6698 = vpop.f32.mrb[0].mxu0
      %v6699 = vadd.f32 %v6538, %v6698
      %v6700 = vpop.f32.mrb[0].mxu0
      %6701 = vmatprep.mubr.bf16.mxu0 0
      %6702 = vmatmul.mubr.bf16.gmra.mrb[0].mxu0 %v5326
      %v6703 = vpop.f32.mrb[0].mxu0
      %v6704 = vadd.f32 %v6543, %v6703
      %v6705 = vpop.f32.mrb[0].mxu0
      %v6706 = vpop.f32.mrb[0].mxu0
      %v6707 = vadd.f32 %v6546, %v6706
      %v6708 = vpop.f32.mrb[0].mxu0
      %6709 = vmatprep.mubr.bf16.mxu0 0
      %6710 = vmatmul.mubr.bf16.gmra.mrb[0].mxu0 %v5335
      %v6711 = vpop.f32.mrb[0].mxu0
      %v6712 = vadd.f32 %v6551, %v6711
      %v6713 = vpop.f32.mrb[0].mxu0
      %v6714 = vpop.f32.mrb[0].mxu0
      %v6715 = vadd.f32 %v6554, %v6714
      %v6716 = vpop.f32.mrb[0].mxu0
      %6717 = vmatprep.mubr.bf16.mxu0 0
      %6718 = vmatmul.mubr.bf16.gmra.mrb[0].mxu0 %v5344
      %v6719 = vpop.f32.mrb[0].mxu0
      %v6720 = vadd.f32 %v6559, %v6719
      %v6721 = vpop.f32.mrb[0].mxu0
      %v6722 = vpop.f32.mrb[0].mxu0
      %v6723 = vadd.f32 %v6562, %v6722
      %v6724 = vpop.f32.mrb[0].mxu0
      %6725 = vdwg.mxu0
      %v6726 = vlaneseq
      %v6727 = vshrl.u32 %v6726, 7
      %v6728 = vsub.s32 2, %v6727
      %v6729 = vrot.slane %v285, %v6728
      %v6730 = vmul.f32 %v6600, %v6729
      %v6731 = vmul.f32 %v6603, %v6729
      %v6732 = vmul.f32 %v6608, %v6729
      %v6733 = vmul.f32 %v6611, %v6729
      %v6734 = vmul.f32 %v6616, %v6729
      %v6735 = vmul.f32 %v6619, %v6729
      %v6736 = vmul.f32 %v6624, %v6729
      %v6737 = vmul.f32 %v6627, %v6729
      %v6738 = vmul.f32 %v6632, %v6729
      %v6739 = vmul.f32 %v6635, %v6729
      %v6740 = vmul.f32 %v6640, %v6729
      %v6741 = vmul.f32 %v6643, %v6729
      %v6742 = vmul.f32 %v6648, %v6729
      %v6743 = vmul.f32 %v6651, %v6729
      %v6744 = vmul.f32 %v6656, %v6729
      %v6745 = vmul.f32 %v6659, %v6729
      %v6746 = vmul.f32 %v6664, %v6729
      %v6747 = vmul.f32 %v6667, %v6729
      %v6748 = vmul.f32 %v6672, %v6729
      %v6749 = vmul.f32 %v6675, %v6729
      %v6750 = vmul.f32 %v6680, %v6729
      %v6751 = vmul.f32 %v6683, %v6729
      %v6752 = vmul.f32 %v6688, %v6729
      %v6753 = vmul.f32 %v6691, %v6729
      %v6754 = vmul.f32 %v6696, %v6729
      %v6755 = vmul.f32 %v6699, %v6729
      %v6756 = vmul.f32 %v6704, %v6729
      %v6757 = vmul.f32 %v6707, %v6729
      %v6758 = vmul.f32 %v6712, %v6729
      %v6759 = vmul.f32 %v6715, %v6729
      %v6760 = vmul.f32 %v6720, %v6729
      %v6761 = vmul.f32 %v6723, %v6729
      %v6762 = vlaneseq
      %v6763 = vshrl.u32 %v6762, 7
      %v6764 = vsub.s32 2, %v6763
      %v6765 = vrot.slane %v286, %v6764
      %v6766 = vadd.f32 %v6730, %v6765
      %v6767 = vadd.f32 %v6731, %v6765
      %v6768 = vadd.f32 %v6732, %v6765
      %v6769 = vadd.f32 %v6733, %v6765
      %v6770 = vadd.f32 %v6734, %v6765
      %v6771 = vadd.f32 %v6735, %v6765
      %v6772 = vadd.f32 %v6736, %v6765
      %v6773 = vadd.f32 %v6737, %v6765
      %v6774 = vadd.f32 %v6738, %v6765
      %v6775 = vadd.f32 %v6739, %v6765
      %v6776 = vadd.f32 %v6740, %v6765
      %v6777 = vadd.f32 %v6741, %v6765
      %v6778 = vadd.f32 %v6742, %v6765
      %v6779 = vadd.f32 %v6743, %v6765
      %v6780 = vadd.f32 %v6744, %v6765
      %v6781 = vadd.f32 %v6745, %v6765
      %v6782 = vadd.f32 %v6746, %v6765
      %v6783 = vadd.f32 %v6747, %v6765
      %v6784 = vadd.f32 %v6748, %v6765
      %v6785 = vadd.f32 %v6749, %v6765
      %v6786 = vadd.f32 %v6750, %v6765
      %v6787 = vadd.f32 %v6751, %v6765
      %v6788 = vadd.f32 %v6752, %v6765
      %v6789 = vadd.f32 %v6753, %v6765
      %v6790 = vadd.f32 %v6754, %v6765
      %v6791 = vadd.f32 %v6755, %v6765
      %v6792 = vadd.f32 %v6756, %v6765
      %v6793 = vadd.f32 %v6757, %v6765
      %v6794 = vadd.f32 %v6758, %v6765
      %v6795 = vadd.f32 %v6759, %v6765
      %v6796 = vadd.f32 %v6760, %v6765
      %v6797 = vadd.f32 %v6761, %v6765
      %v6798 = vld [vmem:[%s273] sm:$0xf]
      %v6799 = vld [vmem:[%s273 + $0x4] sm:$0xf]
      %v6800 = vld [vmem:[%s273 + $0x8] sm:$0xf]
      %v6801 = vld [vmem:[%s273 + $0xc] sm:$0xf]
      %v6802 = vld [vmem:[%s273 + $0x10] sm:$0xf]
      %v6803 = vld [vmem:[%s273 + $0x14] sm:$0xf]
      %v6804 = vld [vmem:[%s273 + $0x18] sm:$0xf]
      %v6805 = vld [vmem:[%s273 + $0x1c] sm:$0xf]
      %v6806 = vld [vmem:[%s273 + $0x20] sm:$0xf]
      %v6807 = vld [vmem:[%s273 + $0x24] sm:$0xf]
      %v6808 = vld [vmem:[%s273 + $0x28] sm:$0xf]
      %v6809 = vld [vmem:[%s273 + $0x2c] sm:$0xf]
      %v6810 = vld [vmem:[%s273 + $0x30] sm:$0xf]
      %v6811 = vld [vmem:[%s273 + $0x34] sm:$0xf]
      %v6812 = vld [vmem:[%s273 + $0x38] sm:$0xf]
      %v6813 = vld [vmem:[%s273 + $0x3c] sm:$0xf]
      %v6814 = vld [vmem:[%s273 + $0x40] sm:$0xf]
      %v6815 = vld [vmem:[%s273 + $0x44] sm:$0xf]
      %v6816 = vld [vmem:[%s273 + $0x48] sm:$0xf]
      %v6817 = vld [vmem:[%s273 + $0x4c] sm:$0xf]
      %v6818 = vld [vmem:[%s273 + $0x50] sm:$0xf]
      %v6819 = vld [vmem:[%s273 + $0x54] sm:$0xf]
      %v6820 = vld [vmem:[%s273 + $0x58] sm:$0xf]
      %v6821 = vld [vmem:[%s273 + $0x5c] sm:$0xf]
      %v6822 = vld [vmem:[%s273 + $0x60] sm:$0xf]
      %v6823 = vld [vmem:[%s273 + $0x64] sm:$0xf]
      %v6824 = vld [vmem:[%s273 + $0x68] sm:$0xf]
      %v6825 = vld [vmem:[%s273 + $0x6c] sm:$0xf]
      %v6826 = vld [vmem:[%s273 + $0x70] sm:$0xf]
      %v6827 = vld [vmem:[%s273 + $0x74] sm:$0xf]
      %v6828 = vld [vmem:[%s273 + $0x78] sm:$0xf]
      %v6829 = vld [vmem:[%s273 + $0x7c] sm:$0xf]
      %v6830 = vld [vmem:[%s4] sm:$0xf]
      %v6831 = vld [vmem:[%s4 + $0x4] sm:$0xf]
      %v6832 = vld [vmem:[%s4 + $0x8] sm:$0xf]
      %v6833 = vld [vmem:[%s4 + $0xc] sm:$0xf]
      %v6834 = vld [vmem:[%s4 + $0x10] sm:$0xf]
      %v6835 = vld [vmem:[%s4 + $0x14] sm:$0xf]
      %v6836 = vld [vmem:[%s4 + $0x18] sm:$0xf]
      %v6837 = vld [vmem:[%s4 + $0x1c] sm:$0xf]
      %v6838 = vld [vmem:[%s4 + $0x20] sm:$0xf]
      %v6839 = vld [vmem:[%s4 + $0x24] sm:$0xf]
      %v6840 = vld [vmem:[%s4 + $0x28] sm:$0xf]
      %v6841 = vld [vmem:[%s4 + $0x2c] sm:$0xf]
      %v6842 = vld [vmem:[%s4 + $0x30] sm:$0xf]
      %v6843 = vld [vmem:[%s4 + $0x34] sm:$0xf]
      %v6844 = vld [vmem:[%s4 + $0x38] sm:$0xf]
      %v6845 = vld [vmem:[%s4 + $0x3c] sm:$0xf]
      %v6878 = vunpack.c.l.b16 %v6798
      %v6879 = vunpack.c.l.b16 %v6799
      %v6880 = vunpack.c.l.b16 %v6800
      %v6881 = vunpack.c.l.b16 %v6801
      %v6882 = vunpack.c.l.b16 %v6802
      %v6883 = vunpack.c.l.b16 %v6803
      %v6884 = vunpack.c.l.b16 %v6804
      %v6885 = vunpack.c.l.b16 %v6805
      %v6886 = vunpack.c.l.b16 %v6806
      %v6887 = vunpack.c.l.b16 %v6807
      %v6888 = vunpack.c.l.b16 %v6808
      %v6889 = vunpack.c.l.b16 %v6809
      %v6890 = vunpack.c.l.b16 %v6810
      %v6891 = vunpack.c.l.b16 %v6811
      %v6892 = vunpack.c.l.b16 %v6812
      %v6893 = vunpack.c.l.b16 %v6813
      %v6894 = vunpack.c.l.b16 %v6814
      %v6895 = vunpack.c.l.b16 %v6815
      %v6896 = vunpack.c.l.b16 %v6816
      %v6897 = vunpack.c.l.b16 %v6817
      %v6898 = vunpack.c.l.b16 %v6818
      %v6899 = vunpack.c.l.b16 %v6819
      %v6900 = vunpack.c.l.b16 %v6820
      %v6901 = vunpack.c.l.b16 %v6821
      %v6902 = vunpack.c.l.b16 %v6822
      %v6903 = vunpack.c.l.b16 %v6823
      %v6904 = vunpack.c.l.b16 %v6824
      %v6905 = vunpack.c.l.b16 %v6825
      %v6906 = vunpack.c.l.b16 %v6826
      %v6907 = vunpack.c.l.b16 %v6827
      %v6908 = vunpack.c.l.b16 %v6828
      %v6909 = vunpack.c.l.b16 %v6829
      %v6910 = vpack.c.b16 %v6879, %v6878
      %v6911 = vpack.c.b16 %v6881, %v6880
      %v6912 = vpack.c.b16 %v6883, %v6882
      %v6913 = vpack.c.b16 %v6885, %v6884
      %v6914 = vpack.c.b16 %v6887, %v6886
      %v6915 = vpack.c.b16 %v6889, %v6888
      %v6916 = vpack.c.b16 %v6891, %v6890
      %v6917 = vpack.c.b16 %v6893, %v6892
      %v6918 = vpack.c.b16 %v6895, %v6894
      %v6919 = vpack.c.b16 %v6897, %v6896
      %v6920 = vpack.c.b16 %v6899, %v6898
      %v6921 = vpack.c.b16 %v6901, %v6900
      %v6922 = vpack.c.b16 %v6903, %v6902
      %v6923 = vpack.c.b16 %v6905, %v6904
      %v6924 = vpack.c.b16 %v6907, %v6906
      %v6925 = vpack.c.b16 %v6909, %v6908
      %v6958 = vunpack.c.l.b16 %v6830
      %v6959 = vunpack.c.l.b16 %v6831
      %v6960 = vunpack.c.l.b16 %v6832
      %v6961 = vunpack.c.l.b16 %v6833
      %v6962 = vunpack.c.l.b16 %v6834
      %v6963 = vunpack.c.l.b16 %v6835
      %v6964 = vunpack.c.l.b16 %v6836
      %v6965 = vunpack.c.l.b16 %v6837
      %v6966 = vunpack.c.l.b16 %v6838
      %v6967 = vunpack.c.l.b16 %v6839
      %v6968 = vunpack.c.l.b16 %v6840
      %v6969 = vunpack.c.l.b16 %v6841
      %v6970 = vunpack.c.l.b16 %v6842
      %v6971 = vunpack.c.l.b16 %v6843
      %v6972 = vunpack.c.l.b16 %v6844
      %v6973 = vunpack.c.l.b16 %v6845
      %v6974 = vpack.c.b16 %v6959, %v6958
      %v6975 = vpack.c.b16 %v6961, %v6960
      %v6976 = vpack.c.b16 %v6963, %v6962
      %v6977 = vpack.c.b16 %v6965, %v6964
      %v6978 = vpack.c.b16 %v6967, %v6966
      %v6979 = vpack.c.b16 %v6969, %v6968
      %v6980 = vpack.c.b16 %v6971, %v6970
      %v6981 = vpack.c.b16 %v6973, %v6972
      %6990 = vmatprep.subr.bf16.mxu0 0
      %6991 = vmatpush1.bf16.msra.mxu0 %v6974
      %6992 = vmatprep.subr.bf16.mxu0 0
      %6993 = vmatpush1.bf16.msra.mxu0 %v6975
      %6994 = vmatprep.subr.bf16.mxu0 0
      %6995 = vmatpush1.bf16.msra.mxu0 %v6976
      %6996 = vmatprep.subr.bf16.mxu0 0
      %6997 = vmatpush1.bf16.msra.mxu0 %v6977
      %6998 = vmatprep.subr.bf16.mxu0 0
      %6999 = vmatpush1.bf16.msra.mxu0 %v6978
      %7000 = vmatprep.subr.bf16.mxu0 0
      %7001 = vmatpush1.bf16.msra.mxu0 %v6979
      %7002 = vmatprep.subr.bf16.mxu0 0
      %7003 = vmatpush1.bf16.msra.mxu0 %v6980
      %7004 = vmatprep.subr.bf16.mxu0 0
      %7005 = vmatpush1.bf16.msra.mxu0 %v6981
      %7006 = vmatprep.subr.bf16.mxu0 0
      %7007 = vmatpush1.bf16.msra.mxu0 0
      %7008 = vmatprep.subr.bf16.mxu0 0
      %7009 = vmatpush1.bf16.msra.mxu0 0
      %7010 = vmatprep.subr.bf16.mxu0 0
      %7011 = vmatpush1.bf16.msra.mxu0 0
      %7012 = vmatprep.subr.bf16.mxu0 0
      %7013 = vmatpush1.bf16.msra.mxu0 0
      %7014 = vmatprep.subr.bf16.mxu0 0
      %7015 = vmatpush1.bf16.msra.mxu0 0
      %7016 = vmatprep.subr.bf16.mxu0 0
      %7017 = vmatpush1.bf16.msra.mxu0 0
      %7018 = vmatprep.subr.bf16.mxu0 0
      %7019 = vmatpush1.bf16.msra.mxu0 0
      %7020 = vmatprep.subr.bf16.mxu0 0
      %7021 = vmatpush1.bf16.msra.mxu0 0
      %7022 = vmatprep.mubr.bf16.mxu0 0
      %7023 = vmatmul.mubr.bf16.gmra.mrb[0].mxu0 %v6910
      %v7024 = vpop.f32.mrb[0].mxu0
      %v7025 = vadd.f32 0.0, %v7024
      %v7026 = vpop.f32.mrb[0].mxu0
      %v7027 = vpop.f32.mrb[0].mxu0
      %v7028 = vadd.f32 0.0, %v7027
      %v7029 = vpop.f32.mrb[0].mxu0
      %7030 = vmatprep.mubr.bf16.mxu0 0
      %7031 = vmatmul.mubr.bf16.gmra.mrb[0].mxu0 %v6911
      %v7032 = vpop.f32.mrb[0].mxu0
      %v7033 = vadd.f32 0.0, %v7032
      %v7034 = vpop.f32.mrb[0].mxu0
      %v7035 = vpop.f32.mrb[0].mxu0
      %v7036 = vadd.f32 0.0, %v7035
      %v7037 = vpop.f32.mrb[0].mxu0
      %7038 = vmatprep.mubr.bf16.mxu0 0
      %7039 = vmatmul.mubr.bf16.gmra.mrb[0].mxu0 %v6912
      %v7040 = vpop.f32.mrb[0].mxu0
      %v7041 = vadd.f32 0.0, %v7040
      %v7042 = vpop.f32.mrb[0].mxu0
      %v7043 = vpop.f32.mrb[0].mxu0
      %v7044 = vadd.f32 0.0, %v7043
      %v7045 = vpop.f32.mrb[0].mxu0
      %7046 = vmatprep.mubr.bf16.mxu0 0
      %7047 = vmatmul.mubr.bf16.gmra.mrb[0].mxu0 %v6913
      %v7048 = vpop.f32.mrb[0].mxu0
      %v7049 = vadd.f32 0.0, %v7048
      %v7050 = vpop.f32.mrb[0].mxu0
      %v7051 = vpop.f32.mrb[0].mxu0
      %v7052 = vadd.f32 0.0, %v7051
      %v7053 = vpop.f32.mrb[0].mxu0
      %7054 = vmatprep.mubr.bf16.mxu0 0
      %7055 = vmatmul.mubr.bf16.gmra.mrb[0].mxu0 %v6914
      %v7056 = vpop.f32.mrb[0].mxu0
      %v7057 = vadd.f32 0.0, %v7056
      %v7058 = vpop.f32.mrb[0].mxu0
      %v7059 = vpop.f32.mrb[0].mxu0
      %v7060 = vadd.f32 0.0, %v7059
      %v7061 = vpop.f32.mrb[0].mxu0
      %7062 = vmatprep.mubr.bf16.mxu0 0
      %7063 = vmatmul.mubr.bf16.gmra.mrb[0].mxu0 %v6915
      %v7064 = vpop.f32.mrb[0].mxu0
      %v7065 = vadd.f32 0.0, %v7064
      %v7066 = vpop.f32.mrb[0].mxu0
      %v7067 = vpop.f32.mrb[0].mxu0
      %v7068 = vadd.f32 0.0, %v7067
      %v7069 = vpop.f32.mrb[0].mxu0
      %7070 = vmatprep.mubr.bf16.mxu0 0
      %7071 = vmatmul.mubr.bf16.gmra.mrb[0].mxu0 %v6916
      %v7072 = vpop.f32.mrb[0].mxu0
      %v7073 = vadd.f32 0.0, %v7072
      %v7074 = vpop.f32.mrb[0].mxu0
      %v7075 = vpop.f32.mrb[0].mxu0
      %v7076 = vadd.f32 0.0, %v7075
      %v7077 = vpop.f32.mrb[0].mxu0
      %7078 = vmatprep.mubr.bf16.mxu0 0
      %7079 = vmatmul.mubr.bf16.gmra.mrb[0].mxu0 %v6917
      %v7080 = vpop.f32.mrb[0].mxu0
      %v7081 = vadd.f32 0.0, %v7080
      %v7082 = vpop.f32.mrb[0].mxu0
      %v7083 = vpop.f32.mrb[0].mxu0
      %v7084 = vadd.f32 0.0, %v7083
      %v7085 = vpop.f32.mrb[0].mxu0
      %7086 = vmatprep.mubr.bf16.mxu0 0
      %7087 = vmatmul.mubr.bf16.gmra.mrb[0].mxu0 %v6918
      %v7088 = vpop.f32.mrb[0].mxu0
      %v7089 = vadd.f32 0.0, %v7088
      %v7090 = vpop.f32.mrb[0].mxu0
      %v7091 = vpop.f32.mrb[0].mxu0
      %v7092 = vadd.f32 0.0, %v7091
      %v7093 = vpop.f32.mrb[0].mxu0
      %7094 = vmatprep.mubr.bf16.mxu0 0
      %7095 = vmatmul.mubr.bf16.gmra.mrb[0].mxu0 %v6919
      %v7096 = vpop.f32.mrb[0].mxu0
      %v7097 = vadd.f32 0.0, %v7096
      %v7098 = vpop.f32.mrb[0].mxu0
      %v7099 = vpop.f32.mrb[0].mxu0
      %v7100 = vadd.f32 0.0, %v7099
      %v7101 = vpop.f32.mrb[0].mxu0
      %7102 = vmatprep.mubr.bf16.mxu0 0
      %7103 = vmatmul.mubr.bf16.gmra.mrb[0].mxu0 %v6920
      %v7104 = vpop.f32.mrb[0].mxu0
      %v7105 = vadd.f32 0.0, %v7104
      %v7106 = vpop.f32.mrb[0].mxu0
      %v7107 = vpop.f32.mrb[0].mxu0
      %v7108 = vadd.f32 0.0, %v7107
      %v7109 = vpop.f32.mrb[0].mxu0
      %7110 = vmatprep.mubr.bf16.mxu0 0
      %7111 = vmatmul.mubr.bf16.gmra.mrb[0].mxu0 %v6921
      %v7112 = vpop.f32.mrb[0].mxu0
      %v7113 = vadd.f32 0.0, %v7112
      %v7114 = vpop.f32.mrb[0].mxu0
      %v7115 = vpop.f32.mrb[0].mxu0
      %v7116 = vadd.f32 0.0, %v7115
      %v7117 = vpop.f32.mrb[0].mxu0
      %7118 = vmatprep.mubr.bf16.mxu0 0
      %7119 = vmatmul.mubr.bf16.gmra.mrb[0].mxu0 %v6922
      %v7120 = vpop.f32.mrb[0].mxu0
      %v7121 = vadd.f32 0.0, %v7120
      %v7122 = vpop.f32.mrb[0].mxu0
      %v7123 = vpop.f32.mrb[0].mxu0
      %v7124 = vadd.f32 0.0, %v7123
      %v7125 = vpop.f32.mrb[0].mxu0
      %7126 = vmatprep.mubr.bf16.mxu0 0
      %7127 = vmatmul.mubr.bf16.gmra.mrb[0].mxu0 %v6923
      %v7128 = vpop.f32.mrb[0].mxu0
      %v7129 = vadd.f32 0.0, %v7128
      %v7130 = vpop.f32.mrb[0].mxu0
      %v7131 = vpop.f32.mrb[0].mxu0
      %v7132 = vadd.f32 0.0, %v7131
      %v7133 = vpop.f32.mrb[0].mxu0
      %7134 = vmatprep.mubr.bf16.mxu0 0
      %7135 = vmatmul.mubr.bf16.gmra.mrb[0].mxu0 %v6924
      %v7136 = vpop.f32.mrb[0].mxu0
      %v7137 = vadd.f32 0.0, %v7136
      %v7138 = vpop.f32.mrb[0].mxu0
      %v7139 = vpop.f32.mrb[0].mxu0
      %v7140 = vadd.f32 0.0, %v7139
      %v7141 = vpop.f32.mrb[0].mxu0
      %7142 = vmatprep.mubr.bf16.mxu0 0
      %7143 = vmatmul.mubr.bf16.gmra.mrb[0].mxu0 %v6925
      %v7144 = vpop.f32.mrb[0].mxu0
      %v7145 = vadd.f32 0.0, %v7144
      %v7146 = vpop.f32.mrb[0].mxu0
      %v7147 = vpop.f32.mrb[0].mxu0
      %v7148 = vadd.f32 0.0, %v7147
      %v7149 = vpop.f32.mrb[0].mxu0
      %7150 = vdwg.mxu0
      %v7151 = vlaneseq
      %v7152 = vshrl.u32 %v7151, 7
      %v7153 = vsub.s32 3, %v7152
      %v7154 = vrot.slane %v285, %v7153
      %v7155 = vmul.f32 %v7025, %v7154
      %v7156 = vmul.f32 %v7028, %v7154
      %v7157 = vmul.f32 %v7033, %v7154
      %v7158 = vmul.f32 %v7036, %v7154
      %v7159 = vmul.f32 %v7041, %v7154
      %v7160 = vmul.f32 %v7044, %v7154
      %v7161 = vmul.f32 %v7049, %v7154
      %v7162 = vmul.f32 %v7052, %v7154
      %v7163 = vmul.f32 %v7057, %v7154
      %v7164 = vmul.f32 %v7060, %v7154
      %v7165 = vmul.f32 %v7065, %v7154
      %v7166 = vmul.f32 %v7068, %v7154
      %v7167 = vmul.f32 %v7073, %v7154
      %v7168 = vmul.f32 %v7076, %v7154
      %v7169 = vmul.f32 %v7081, %v7154
      %v7170 = vmul.f32 %v7084, %v7154
      %v7171 = vmul.f32 %v7089, %v7154
      %v7172 = vmul.f32 %v7092, %v7154
      %v7173 = vmul.f32 %v7097, %v7154
      %v7174 = vmul.f32 %v7100, %v7154
      %v7175 = vmul.f32 %v7105, %v7154
      %v7176 = vmul.f32 %v7108, %v7154
      %v7177 = vmul.f32 %v7113, %v7154
      %v7178 = vmul.f32 %v7116, %v7154
      %v7179 = vmul.f32 %v7121, %v7154
      %v7180 = vmul.f32 %v7124, %v7154
      %v7181 = vmul.f32 %v7129, %v7154
      %v7182 = vmul.f32 %v7132, %v7154
      %v7183 = vmul.f32 %v7137, %v7154
      %v7184 = vmul.f32 %v7140, %v7154
      %v7185 = vmul.f32 %v7145, %v7154
      %v7186 = vmul.f32 %v7148, %v7154
      %v7187 = vlaneseq
      %v7188 = vshrl.u32 %v7187, 7
      %v7189 = vsub.s32 3, %v7188
      %v7190 = vrot.slane %v286, %v7189
      %v7191 = vadd.f32 %v7155, %v7190
      %v7192 = vadd.f32 %v7156, %v7190
      %v7193 = vadd.f32 %v7157, %v7190
      %v7194 = vadd.f32 %v7158, %v7190
      %v7195 = vadd.f32 %v7159, %v7190
      %v7196 = vadd.f32 %v7160, %v7190
      %v7197 = vadd.f32 %v7161, %v7190
      %v7198 = vadd.f32 %v7162, %v7190
      %v7199 = vadd.f32 %v7163, %v7190
      %v7200 = vadd.f32 %v7164, %v7190
      %v7201 = vadd.f32 %v7165, %v7190
      %v7202 = vadd.f32 %v7166, %v7190
      %v7203 = vadd.f32 %v7167, %v7190
      %v7204 = vadd.f32 %v7168, %v7190
      %v7205 = vadd.f32 %v7169, %v7190
      %v7206 = vadd.f32 %v7170, %v7190
      %v7207 = vadd.f32 %v7171, %v7190
      %v7208 = vadd.f32 %v7172, %v7190
      %v7209 = vadd.f32 %v7173, %v7190
      %v7210 = vadd.f32 %v7174, %v7190
      %v7211 = vadd.f32 %v7175, %v7190
      %v7212 = vadd.f32 %v7176, %v7190
      %v7213 = vadd.f32 %v7177, %v7190
      %v7214 = vadd.f32 %v7178, %v7190
      %v7215 = vadd.f32 %v7179, %v7190
      %v7216 = vadd.f32 %v7180, %v7190
      %v7217 = vadd.f32 %v7181, %v7190
      %v7218 = vadd.f32 %v7182, %v7190
      %v7219 = vadd.f32 %v7183, %v7190
      %v7220 = vadd.f32 %v7184, %v7190
      %v7221 = vadd.f32 %v7185, %v7190
      %v7222 = vadd.f32 %v7186, %v7190
      %v7223 = vadd.f32 %v6766, %v7191
      %v7224 = vadd.f32 %v6767, %v7192
      %v7225 = vadd.f32 %v6768, %v7193
      %v7226 = vadd.f32 %v6769, %v7194
      %v7227 = vadd.f32 %v6770, %v7195
      %v7228 = vadd.f32 %v6771, %v7196
      %v7229 = vadd.f32 %v6772, %v7197
      %v7230 = vadd.f32 %v6773, %v7198
      %v7231 = vadd.f32 %v6774, %v7199
      %v7232 = vadd.f32 %v6775, %v7200
      %v7233 = vadd.f32 %v6776, %v7201
      %v7234 = vadd.f32 %v6777, %v7202
      %v7235 = vadd.f32 %v6778, %v7203
      %v7236 = vadd.f32 %v6779, %v7204
      %v7237 = vadd.f32 %v6780, %v7205
      %v7238 = vadd.f32 %v6781, %v7206
      %v7239 = vadd.f32 %v6782, %v7207
      %v7240 = vadd.f32 %v6783, %v7208
      %v7241 = vadd.f32 %v6784, %v7209
      %v7242 = vadd.f32 %v6785, %v7210
      %v7243 = vadd.f32 %v6786, %v7211
      %v7244 = vadd.f32 %v6787, %v7212
      %v7245 = vadd.f32 %v6788, %v7213
      %v7246 = vadd.f32 %v6789, %v7214
      %v7247 = vadd.f32 %v6790, %v7215
      %v7248 = vadd.f32 %v6791, %v7216
      %v7249 = vadd.f32 %v6792, %v7217
      %v7250 = vadd.f32 %v6793, %v7218
      %v7251 = vadd.f32 %v6794, %v7219
      %v7252 = vadd.f32 %v6795, %v7220
      %v7253 = vadd.f32 %v6796, %v7221
      %v7254 = vadd.f32 %v6797, %v7222
      %vm7255 = vcmp.ge.f32.partialorder %v7223, 0.0
      %vm7256 = vcmp.ge.f32.partialorder %v7224, 0.0
      %vm7257 = vcmp.ge.f32.partialorder %v7225, 0.0
      %vm7258 = vcmp.ge.f32.partialorder %v7226, 0.0
      %vm7259 = vcmp.ge.f32.partialorder %v7227, 0.0
      %vm7260 = vcmp.ge.f32.partialorder %v7228, 0.0
      %vm7261 = vcmp.ge.f32.partialorder %v7229, 0.0
      %vm7262 = vcmp.ge.f32.partialorder %v7230, 0.0
      %vm7263 = vcmp.ge.f32.partialorder %v7231, 0.0
      %vm7264 = vcmp.ge.f32.partialorder %v7232, 0.0
      %vm7265 = vcmp.ge.f32.partialorder %v7233, 0.0
      %vm7266 = vcmp.ge.f32.partialorder %v7234, 0.0
      %vm7267 = vcmp.ge.f32.partialorder %v7235, 0.0
      %vm7268 = vcmp.ge.f32.partialorder %v7236, 0.0
      %vm7269 = vcmp.ge.f32.partialorder %v7237, 0.0
      %vm7270 = vcmp.ge.f32.partialorder %v7238, 0.0
      %vm7271 = vcmp.ge.f32.partialorder %v7239, 0.0
      %vm7272 = vcmp.ge.f32.partialorder %v7240, 0.0
      %vm7273 = vcmp.ge.f32.partialorder %v7241, 0.0
      %vm7274 = vcmp.ge.f32.partialorder %v7242, 0.0
      %vm7275 = vcmp.ge.f32.partialorder %v7243, 0.0
      %vm7276 = vcmp.ge.f32.partialorder %v7244, 0.0
      %vm7277 = vcmp.ge.f32.partialorder %v7245, 0.0
      %vm7278 = vcmp.ge.f32.partialorder %v7246, 0.0
      %vm7279 = vcmp.ge.f32.partialorder %v7247, 0.0
      %vm7280 = vcmp.ge.f32.partialorder %v7248, 0.0
      %vm7281 = vcmp.ge.f32.partialorder %v7249, 0.0
      %vm7282 = vcmp.ge.f32.partialorder %v7250, 0.0
      %vm7283 = vcmp.ge.f32.partialorder %v7251, 0.0
      %vm7284 = vcmp.ge.f32.partialorder %v7252, 0.0
      %vm7285 = vcmp.ge.f32.partialorder %v7253, 0.0
      %vm7286 = vcmp.ge.f32.partialorder %v7254, 0.0
      %v7287 = vmul.f32 %v7223, 0.1
      %v7288 = vmul.f32 %v7224, 0.1
      %v7289 = vmul.f32 %v7225, 0.1
      %v7290 = vmul.f32 %v7226, 0.1
      %v7291 = vmul.f32 %v7227, 0.1
      %v7292 = vmul.f32 %v7228, 0.1
      %v7293 = vmul.f32 %v7229, 0.1
      %v7294 = vmul.f32 %v7230, 0.1
      %v7295 = vmul.f32 %v7231, 0.1
      %v7296 = vmul.f32 %v7232, 0.1
      %v7297 = vmul.f32 %v7233, 0.1
      %v7298 = vmul.f32 %v7234, 0.1
      %v7299 = vmul.f32 %v7235, 0.1
      %v7300 = vmul.f32 %v7236, 0.1
      %v7301 = vmul.f32 %v7237, 0.1
      %v7302 = vmul.f32 %v7238, 0.1
      %v7303 = vmul.f32 %v7239, 0.1
      %v7304 = vmul.f32 %v7240, 0.1
      %v7305 = vmul.f32 %v7241, 0.1
      %v7306 = vmul.f32 %v7242, 0.1
      %v7307 = vmul.f32 %v7243, 0.1
      %v7308 = vmul.f32 %v7244, 0.1
      %v7309 = vmul.f32 %v7245, 0.1
      %v7310 = vmul.f32 %v7246, 0.1
      %v7311 = vmul.f32 %v7247, 0.1
      %v7312 = vmul.f32 %v7248, 0.1
      %v7313 = vmul.f32 %v7249, 0.1
      %v7314 = vmul.f32 %v7250, 0.1
      %v7315 = vmul.f32 %v7251, 0.1
      %v7316 = vmul.f32 %v7252, 0.1
      %v7317 = vmul.f32 %v7253, 0.1
      %v7318 = vmul.f32 %v7254, 0.1
      %v7319 = vsel %vm7255, %v7223, %v7287
      %v7320 = vsel %vm7256, %v7224, %v7288
      %v7321 = vsel %vm7257, %v7225, %v7289
      %v7322 = vsel %vm7258, %v7226, %v7290
      %v7323 = vsel %vm7259, %v7227, %v7291
      %v7324 = vsel %vm7260, %v7228, %v7292
      %v7325 = vsel %vm7261, %v7229, %v7293
      %v7326 = vsel %vm7262, %v7230, %v7294
      %v7327 = vsel %vm7263, %v7231, %v7295
      %v7328 = vsel %vm7264, %v7232, %v7296
      %v7329 = vsel %vm7265, %v7233, %v7297
      %v7330 = vsel %vm7266, %v7234, %v7298
      %v7331 = vsel %vm7267, %v7235, %v7299
      %v7332 = vsel %vm7268, %v7236, %v7300
      %v7333 = vsel %vm7269, %v7237, %v7301
      %v7334 = vsel %vm7270, %v7238, %v7302
      %v7335 = vsel %vm7271, %v7239, %v7303
      %v7336 = vsel %vm7272, %v7240, %v7304
      %v7337 = vsel %vm7273, %v7241, %v7305
      %v7338 = vsel %vm7274, %v7242, %v7306
      %v7339 = vsel %vm7275, %v7243, %v7307
      %v7340 = vsel %vm7276, %v7244, %v7308
      %v7341 = vsel %vm7277, %v7245, %v7309
      %v7342 = vsel %vm7278, %v7246, %v7310
      %v7343 = vsel %vm7279, %v7247, %v7311
      %v7344 = vsel %vm7280, %v7248, %v7312
      %v7345 = vsel %vm7281, %v7249, %v7313
      %v7346 = vsel %vm7282, %v7250, %v7314
      %v7347 = vsel %vm7283, %v7251, %v7315
      %v7348 = vsel %vm7284, %v7252, %v7316
      %v7349 = vsel %vm7285, %v7253, %v7317
      %v7350 = vsel %vm7286, %v7254, %v7318
      %v7351 = vmax.f32 %v7319, %v7321
      %v7352 = vmax.f32 %v7320, %v7322
      %v7353 = vmax.f32 %v7323, %v7325
      %v7354 = vmax.f32 %v7324, %v7326
      %v7355 = vmax.f32 %v7327, %v7329
      %v7356 = vmax.f32 %v7328, %v7330
      %v7357 = vmax.f32 %v7331, %v7333
      %v7358 = vmax.f32 %v7332, %v7334
      %v7359 = vmax.f32 %v7335, %v7337
      %v7360 = vmax.f32 %v7336, %v7338
      %v7361 = vmax.f32 %v7339, %v7341
      %v7362 = vmax.f32 %v7340, %v7342
      %v7363 = vmax.f32 %v7343, %v7345
      %v7364 = vmax.f32 %v7344, %v7346
      %v7365 = vmax.f32 %v7347, %v7349
      %v7366 = vmax.f32 %v7348, %v7350
      %v7368 = vunpack.c.l.s4 1966171168
      %v7369 = vunpack.c.0.s8 %v7368
      %v7370 = vlaneseq
      %v7371 = vshrl.u32 %v7370, 7
      %v7372 = vsub.s32 %v7369, %v7371
      %v7373 = vrot.slane %v7351, %v7372
      %v7375 = vunpack.c.l.s4 1966171168
      %v7376 = vunpack.c.0.s8 %v7375
      %v7377 = vlaneseq
      %v7378 = vshrl.u32 %v7377, 7
      %v7379 = vsub.s32 %v7376, %v7378
      %v7380 = vrot.slane %v7352, %v7379
      %v7382 = vunpack.c.l.s4 1966171168
      %v7383 = vunpack.c.0.s8 %v7382
      %v7384 = vlaneseq
      %v7385 = vshrl.u32 %v7384, 7
      %v7386 = vsub.s32 %v7383, %v7385
      %v7387 = vrot.slane %v7353, %v7386
      %v7389 = vunpack.c.l.s4 1966171168
      %v7390 = vunpack.c.0.s8 %v7389
      %v7391 = vlaneseq
      %v7392 = vshrl.u32 %v7391, 7
      %v7393 = vsub.s32 %v7390, %v7392
      %v7394 = vrot.slane %v7354, %v7393
      %v7396 = vunpack.c.l.s4 1966171168
      %v7397 = vunpack.c.0.s8 %v7396
      %v7398 = vlaneseq
      %v7399 = vshrl.u32 %v7398, 7
      %v7400 = vsub.s32 %v7397, %v7399
      %v7401 = vrot.slane %v7355, %v7400
      %v7403 = vunpack.c.l.s4 1966171168
      %v7404 = vunpack.c.0.s8 %v7403
      %v7405 = vlaneseq
      %v7406 = vshrl.u32 %v7405, 7
      %v7407 = vsub.s32 %v7404, %v7406
      %v7408 = vrot.slane %v7356, %v7407
      %v7410 = vunpack.c.l.s4 1966171168
      %v7411 = vunpack.c.0.s8 %v7410
      %v7412 = vlaneseq
      %v7413 = vshrl.u32 %v7412, 7
      %v7414 = vsub.s32 %v7411, %v7413
      %v7415 = vrot.slane %v7357, %v7414
      %v7417 = vunpack.c.l.s4 1966171168
      %v7418 = vunpack.c.0.s8 %v7417
      %v7419 = vlaneseq
      %v7420 = vshrl.u32 %v7419, 7
      %v7421 = vsub.s32 %v7418, %v7420
      %v7422 = vrot.slane %v7358, %v7421
      %v7424 = vunpack.c.l.s4 1966171168
      %v7425 = vunpack.c.0.s8 %v7424
      %v7426 = vlaneseq
      %v7427 = vshrl.u32 %v7426, 7
      %v7428 = vsub.s32 %v7425, %v7427
      %v7429 = vrot.slane %v7359, %v7428
      %v7431 = vunpack.c.l.s4 1966171168
      %v7432 = vunpack.c.0.s8 %v7431
      %v7433 = vlaneseq
      %v7434 = vshrl.u32 %v7433, 7
      %v7435 = vsub.s32 %v7432, %v7434
      %v7436 = vrot.slane %v7360, %v7435
      %v7438 = vunpack.c.l.s4 1966171168
      %v7439 = vunpack.c.0.s8 %v7438
      %v7440 = vlaneseq
      %v7441 = vshrl.u32 %v7440, 7
      %v7442 = vsub.s32 %v7439, %v7441
      %v7443 = vrot.slane %v7361, %v7442
      %v7445 = vunpack.c.l.s4 1966171168
      %v7446 = vunpack.c.0.s8 %v7445
      %v7447 = vlaneseq
      %v7448 = vshrl.u32 %v7447, 7
      %v7449 = vsub.s32 %v7446, %v7448
      %v7450 = vrot.slane %v7362, %v7449
      %v7452 = vunpack.c.l.s4 1966171168
      %v7453 = vunpack.c.0.s8 %v7452
      %v7454 = vlaneseq
      %v7455 = vshrl.u32 %v7454, 7
      %v7456 = vsub.s32 %v7453, %v7455
      %v7457 = vrot.slane %v7363, %v7456
      %v7459 = vunpack.c.l.s4 1966171168
      %v7460 = vunpack.c.0.s8 %v7459
      %v7461 = vlaneseq
      %v7462 = vshrl.u32 %v7461, 7
      %v7463 = vsub.s32 %v7460, %v7462
      %v7464 = vrot.slane %v7364, %v7463
      %v7466 = vunpack.c.l.s4 1966171168
      %v7467 = vunpack.c.0.s8 %v7466
      %v7468 = vlaneseq
      %v7469 = vshrl.u32 %v7468, 7
      %v7470 = vsub.s32 %v7467, %v7469
      %v7471 = vrot.slane %v7365, %v7470
      %v7473 = vunpack.c.l.s4 1966171168
      %v7474 = vunpack.c.0.s8 %v7473
      %v7475 = vlaneseq
      %v7476 = vshrl.u32 %v7475, 7
      %v7477 = vsub.s32 %v7474, %v7476
      %v7478 = vrot.slane %v7366, %v7477
      %v7495 = vrot.slane %v7373, 4
      %v7496 = vrot.slane %v7380, 4
      %v7497 = vrot.slane %v7387, 4
      %v7498 = vrot.slane %v7394, 4
      %v7499 = vrot.slane %v7401, 4
      %v7500 = vrot.slane %v7408, 4
      %v7501 = vrot.slane %v7415, 4
      %v7502 = vrot.slane %v7422, 4
      %v7503 = vrot.slane %v7429, 4
      %v7504 = vrot.slane %v7436, 4
      %v7505 = vrot.slane %v7443, 4
      %v7506 = vrot.slane %v7450, 4
      %v7507 = vrot.slane %v7457, 4
      %v7508 = vrot.slane %v7464, 4
      %v7509 = vrot.slane %v7471, 4
      %v7510 = vrot.slane %v7478, 4
      %v7527 = vmax.f32 %v7373, %v7495
      %v7528 = vmax.f32 %v7380, %v7496
      %v7529 = vmax.f32 %v7387, %v7497
      %v7530 = vmax.f32 %v7394, %v7498
      %v7531 = vmax.f32 %v7401, %v7499
      %v7532 = vmax.f32 %v7408, %v7500
      %v7533 = vmax.f32 %v7415, %v7501
      %v7534 = vmax.f32 %v7422, %v7502
      %v7535 = vmax.f32 %v7429, %v7503
      %v7536 = vmax.f32 %v7436, %v7504
      %v7537 = vmax.f32 %v7443, %v7505
      %v7538 = vmax.f32 %v7450, %v7506
      %v7539 = vmax.f32 %v7457, %v7507
      %v7540 = vmax.f32 %v7464, %v7508
      %v7541 = vmax.f32 %v7471, %v7509
      %v7542 = vmax.f32 %v7478, %v7510
      %v7559 = vcombine.low %v7527, %v7528
      %v7560 = vcombine.low %v7529, %v7530
      %v7561 = vcombine.low %v7531, %v7532
      %v7562 = vcombine.low %v7533, %v7534
      %v7563 = vcombine.low %v7535, %v7536
      %v7564 = vcombine.low %v7537, %v7538
      %v7565 = vcombine.low %v7539, %v7540
      %v7566 = vcombine.low %v7541, %v7542
      %7575 = vst [vmem:[%s278] sm:$0xff] %v7559
      %7576 = vst [vmem:[%s278 + $0x8] sm:$0xff] %v7560
      %7577 = vst [vmem:[%s278 + $0x10] sm:$0xff] %v7561
      %7578 = vst [vmem:[%s278 + $0x18] sm:$0xff] %v7562
      %7579 = vst [vmem:[%s278 + $0x20] sm:$0xff] %v7563
      %7580 = vst [vmem:[%s278 + $0x28] sm:$0xff] %v7564
      %7581 = vst [vmem:[%s278 + $0x30] sm:$0xff] %v7565
      %7582 = vst [vmem:[%s278 + $0x38] sm:$0xff] %v7566
      %p7583 = scmp.lt.s32.totalorder %s18, 1
      %s7584 = scalar_select %p7583, %s18, 1
      %s7585 = smul.addr %s7584, 8
      %s7586 = smul.addr %s7585, 8
      %s7587 = scalar_lea.vmem %s7, %s7586
      // Predicated region
      $region49: #{block_forward.1} parent=47 // pred_check
        %p7588 = pneg %p188
      $region50: #{block_forward.1} parent=47 // pred_check_branch
        %7590 = sbr.rel (%p7588) target = $region52
      $region51: #{block_forward.1} parent=47 // pred_region
        _
      $region52: #{block_forward.1} parent=47 // pred_fallthru
        _
    $region48: #{block_forward.1} parent=5 // pred_fallthru
      _
    %p7591 = scmp.le.s32.totalorder 2, %s13
    // Predicated region
    $region53: #{block_forward.1} parent=5 // pred_check
      %p7592 = pneg %p7591
    $region54: #{block_forward.1} parent=5 // pred_check_branch
      %7594 = sbr.rel (%p7592) target = $region56
    $region55: #{block_forward.1} parent=5 // pred_region
      %s7595 = ssub.s32 %s13, 2
      // Predicated region
      $region57: #{block_forward.1} parent=55 // pred_check
        %p7596 = pneg %p194
      $region58: #{block_forward.1} parent=55 // pred_check_branch
        %7598 = sbr.rel (%p7596) target = $region60
      $region59: #{block_forward.1} parent=55 // pred_region
        %p7599 = scmp.lt.s32.totalorder %s19, 1
        %s7600 = scalar_select %p7599, %s19, 1
        %s7601 = smul.addr %s7600, 8
        %s7602 = smul.addr %s7601, 8
        %s7603 = scalar_lea.vmem %s7, %s7602
      $region60: #{block_forward.1} parent=55 // pred_fallthru
        _
    $region56: #{block_forward.1} parent=5 // pred_fallthru
      _
  $region6: #{block_forward.1} parent=0 // loop_footer
    %s17 = sadd.s32 1, %s13
  $region7: #{block_forward.1} parent=0 // loop_footer_branch
    %12 = sbr.rel target = $region3
  $region8: #{block_forward.1} parent=0 // loop_exit
    _

</llo_original>
